<compile_context>
chip_gen: v7x
topology: tpu7x:2x2x1
jax: 0.10.0
libtpu: 0.0.40
codegen_flags: <defaults>
</compile_context>

<pallas_src>
import functools

import jax
import jax.numpy as jnp
from jax.experimental import pallas as pl
from jax.experimental.pallas import tpu as pltpu


# ----------------------------- device heuristics ---------------------------

def _is_high_vmem_device():
    """True on TPU generations with 128 MiB VMEM per core (v4/v5e/v6e);
    False on v7x (64 MiB) and anything unrecognised (conservative)."""
    try:
        kind = jax.devices()[0].device_kind.lower()
    except Exception:
        return False
    return any(tag in kind for tag in ("v4", "v5", "v6"))


@functools.lru_cache(maxsize=None)
def _single_buffer_supported():
    """Probe whether pipeline_mode=pl.Buffered(1) (single-buffered constant
    blocks) lowers and runs correctly on this backend; silent fallback."""
    try:
        def k(a_ref, o_ref):
            o_ref[...] = a_ref[...] + 1.0

        x = jnp.zeros((8, 128), jnp.float32)
        out = pl.pallas_call(
            k,
            out_shape=jax.ShapeDtypeStruct((8, 128), jnp.float32),
            grid=(2,),
            in_specs=[pl.BlockSpec((8, 128), lambda i: (0, 0),
                                   pipeline_mode=pl.Buffered(1))],
            out_specs=pl.BlockSpec((8, 128), lambda i: (0, 0)),
        )(x)
        jax.block_until_ready(out)
        return bool(jnp.all(out == 1.0))
    except Exception:
        return False


def _const_spec(shape, single_buffer=False):
    """BlockSpec for an operand whose block never changes across the grid
    (weights / biases).  With single_buffer=True (and backend support) the
    operand keeps ONE VMEM buffer instead of being double-buffered."""
    n = len(shape)
    idx = lambda i, _n=n: (0,) * _n
    if single_buffer and _single_buffer_supported():
        return pl.BlockSpec(shape, idx, pipeline_mode=pl.Buffered(1))
    return pl.BlockSpec(shape, idx)


def _pad_to(a, shape):
    pads = [(0, t - s) for s, t in zip(a.shape, shape)]
    if any(p[1] for p in pads):
        return jnp.pad(a, pads)
    return a


def _pick_batch_tile(B, max_tile):
    """Largest 8-aligned divisor of B not exceeding max_tile, else full B."""
    if B <= max_tile:
        return B
    for cand in (512, 256, 128, 64, 32, 16, 8):
        if cand <= max_tile and B % cand == 0:
            return cand
    return B


# ----------------------------- Pallas kernels -----------------------------

@functools.lru_cache(maxsize=None)
def _chain_kernel(ops):
    """Fused relation chain: a static sequence of projection ('r') and
    negation ('n') hops executed inside a single kernel body.  Weights are
    DMA'd once per chain and the intermediate never leaves VMEM."""
    has_r = 'r' in ops
    has_n = 'n' in ops

    def kernel(*refs):
        refs = list(refs)
        q_ref = refs.pop(0)
        r_ref = refs.pop(0) if has_r else None
        if has_r:
            pw1, pb1, pw2, pb2, pw0, pb0 = refs[:6]
            refs = refs[6:]
        if has_n:
            nw1, nb1, nw2, nb2 = refs[:4]
            refs = refs[4:]
        o_ref = refs[0]

        x = q_ref[...]                                       # (tb, D) f32
        ri = 0
        for op in ops:
            if op == 'r':
                # Projection.forward: x = q + r; relu(L1); relu(L2); L0
                xb = (x + r_ref[ri]).astype(jnp.bfloat16)    # cast once / hop
                ri += 1
                h = jnp.maximum(
                    jnp.dot(xb, pw1[...],
                            preferred_element_type=jnp.float32) + pb1[...],
                    0.0)
                h = jnp.maximum(
                    jnp.dot(h.astype(jnp.bfloat16), pw2[...],
                            preferred_element_type=jnp.float32) + pb2[...],
                    0.0)
                x = (jnp.dot(h.astype(jnp.bfloat16), pw0[...],
                             preferred_element_type=jnp.float32) + pb0[...])
            else:
                # Negation.forward: L2(relu(L1(x)))
                h = jnp.maximum(
                    jnp.dot(x.astype(jnp.bfloat16), nw1[...],
                            preferred_element_type=jnp.float32) + nb1[...],
                    0.0)
                x = (jnp.dot(h.astype(jnp.bfloat16), nw2[...],
                             preferred_element_type=jnp.float32) + nb2[...])
        o_ref[...] = x

    return kernel, has_r, has_n


@functools.lru_cache(maxsize=None)
def _intersection_kernel(K, B):
    """Intersection.forward on a (K, B, D) block (B padded to a multiple of 8
    by the wrapper): one MXU matmul per MLP layer over the flattened rows and
    in-lane axis-0 softmax reductions (no sublane-crossing Python slices)."""
    def kernel(f_ref, w1_ref, b1_ref, w2_ref, b2_ref, o_ref):
        f3 = f_ref[...]                                      # (K, B, D) f32
        f2 = f3.reshape(K * B, f3.shape[-1])
        h = jnp.maximum(
            jnp.dot(f2.astype(jnp.bfloat16), w1_ref[...],
                    preferred_element_type=jnp.float32) + b1_ref[...], 0.0)
        logits = (jnp.dot(h.astype(jnp.bfloat16), w2_ref[...],
                          preferred_element_type=jnp.float32) + b2_ref[...])
        lg = logits.reshape(f3.shape)                        # (K, B, D)
        m = jnp.max(lg, axis=0, keepdims=True)
        e = jnp.exp(lg - m)
        att = e / jnp.sum(e, axis=0, keepdims=True)          # exact softmax
        o_ref[...] = jnp.sum(att * f3, axis=0)

    return kernel


def _logit_kernel(ent_ref, qry_ref, gamma_ref, modulus_ref, o_ref):
    # cal_logit: gamma - ||entity - query||_1 * modulus
    # ent: (tb, tn, D), qry: (tb, 1, D)  ->  out: (tb, tn)
    # TODO(synk): on v6e/v7x the D-reduction could be offloaded to the MXU
    # (abs-diff contracted with a ones vector) to free VPU/XLU slots.
    dist = jnp.sum(jnp.abs(ent_ref[...] - qry_ref[...]), axis=-1)
    o_ref[...] = gamma_ref[0] - dist * modulus_ref[0]


# ----------------------------- FLEX in JAX/Pallas --------------------------

class FLEXPallas:
    def __init__(self, nentity, nrelation, hidden_dim, gamma,
                 query_name_dict, proj_hidden=1600, num_layers=2, seed=0,
                 validate_queries=False):
        self.nentity = nentity
        self.nrelation = nrelation
        self.hidden_dim = hidden_dim
        self.entity_dim = hidden_dim
        self.relation_dim = hidden_dim
        self.query_name_dict = query_name_dict
        self.num_layers = num_layers           # TODO(synk): only num_layers=2 supported
        self.proj_hidden = proj_hidden
        self.validate_queries = validate_queries

        self.epsilon = 2.0
        self.gamma = float(gamma)
        self.embedding_range = (self.gamma + self.epsilon) / hidden_dim
        self.modulus = 0.5 * self.embedding_range

        # Generation-aware budgets (v4/v5e/v6e: 128 MiB VMEM; v7x/unknown: 64 MiB)
        high = _is_high_vmem_device()
        self._vmem_chain = (96 << 20) if high else (32 << 20)
        self._vmem_med = (64 << 20) if high else (32 << 20)
        self._chain_max_tile = 512 if high else 256
        self._ent_block_budget = (8 << 20) if high else (6 << 20)

        D, H = hidden_dim, proj_hidden
        Hp = -(-H // 128) * 128                  # 1600 -> 1664: lane-dense MXU tiles
        self.proj_hidden_padded = Hp
        key = jax.random.PRNGKey(seed)
        keys = jax.random.split(key, 16)

        def xavier(k, out_dim, in_dim):
            bound = (6.0 / (in_dim + out_dim)) ** 0.5
            # stored already transposed: (in_dim, out_dim) so kernels do x @ W
            return jax.random.uniform(k, (in_dim, out_dim), jnp.float32,
                                      -bound, bound)

        def bias(k, in_dim, out_dim):
            bound = 1.0 / (in_dim ** 0.5)
            return jax.random.uniform(k, (1, out_dim), jnp.float32,
                                      -bound, bound)

        er = self.embedding_range
        self.entity_feature_embedding = jax.random.uniform(
            keys[0], (nentity, D), jnp.float32, -er, er)
        self.relation_feature_embedding = jax.random.uniform(
            keys[1], (nrelation, D), jnp.float32, -er, er)

        # Weights in bf16 (halve HBM traffic, bf16 MXU); biases stay f32.
        # Projection weights/biases are zero-padded H -> Hp (exact math).
        # TODO(synk): D itself is not padded to 128 (it would change the
        # embedding/logit feature width everywhere).
        self.p_w1 = _pad_to(xavier(keys[2], H, D), (D, Hp)).astype(jnp.bfloat16)
        self.p_b1 = _pad_to(bias(keys[3], D, H), (1, Hp))
        self.p_w2 = _pad_to(xavier(keys[4], H, H), (Hp, Hp)).astype(jnp.bfloat16)
        self.p_b2 = _pad_to(bias(keys[5], H, H), (1, Hp))
        self.p_w0 = _pad_to(xavier(keys[6], D, H), (Hp, D)).astype(jnp.bfloat16)
        self.p_b0 = bias(keys[7], H, D)
        # Intersection: two D->D layers
        self.i_w1 = xavier(keys[8], D, D).astype(jnp.bfloat16)
        self.i_b1 = bias(keys[9], D, D)
        self.i_w2 = xavier(keys[10], D, D).astype(jnp.bfloat16)
        self.i_b2 = bias(keys[11], D, D)
        # Negation: two D->D layers
        self.n_w1 = xavier(keys[12], D, D).astype(jnp.bfloat16)
        self.n_b1 = bias(keys[13], D, D)
        self.n_w2 = xavier(keys[14], D, D).astype(jnp.bfloat16)
        self.n_b2 = bias(keys[15], D, D)

        self.gamma_arr = jnp.array([self.gamma], dtype=jnp.float32)
        self.modulus_arr = jnp.array([self.modulus], dtype=jnp.float32)

    # ---------------- Pallas-backed submodules ----------------

    def relation_chain(self, q_feature, r_stack, ops):
        """Run a fused chain of projection/negation hops in one pallas_call."""
        # TODO(synk): chains from different query structures that share the
        # same ops tuple could be concatenated before this call to amortise
        # the projection-weight DMA across structures.
        ops = tuple(ops)
        if not ops:
            return q_feature
        B, D = q_feature.shape
        kernel, has_r, has_n = _chain_kernel(ops)

        tb = _pick_batch_tile(B, self._chain_max_tile)
        grid = (B // tb,)

        args = [q_feature]
        in_specs = [pl.BlockSpec((tb, D), lambda i: (i, 0))]
        if has_r:
            n_r = r_stack.shape[0]
            args.append(r_stack)
            in_specs.append(pl.BlockSpec((n_r, tb, D), lambda i: (0, i, 0)))
            for w in (self.p_w1, self.p_b1, self.p_w2, self.p_b2,
                      self.p_w0, self.p_b0):
                args.append(w)
                in_specs.append(_const_spec(w.shape, single_buffer=True))
        if has_n:
            for w in (self.n_w1, self.n_b1, self.n_w2, self.n_b2):
                args.append(w)
                in_specs.append(_const_spec(w.shape, single_buffer=True))

        return pl.pallas_call(
            kernel,
            out_shape=jax.ShapeDtypeStruct((B, D), jnp.float32),
            grid=grid,
            in_specs=in_specs,
            out_specs=pl.BlockSpec((tb, D), lambda i: (i, 0)),
            compiler_params=pltpu.CompilerParams(
                dimension_semantics=("parallel",),
                vmem_limit_bytes=self._vmem_chain),
        )(*args)

    def intersection(self, stacked_feature):
        K, B, D = stacked_feature.shape
        Bp = -(-B // 8) * 8                       # sublane-aligned rows
        if Bp != B:
            stacked_feature = jnp.pad(stacked_feature,
                                      ((0, 0), (0, Bp - B), (0, 0)))
        kernel = _intersection_kernel(K, Bp)
        out = pl.pallas_call(
            kernel,
            out_shape=jax.ShapeDtypeStruct((Bp, D), jnp.float32),
            compiler_params=pltpu.CompilerParams(
                vmem_limit_bytes=self._vmem_med),
        )(stacked_feature, self.i_w1, self.i_b1, self.i_w2, self.i_b2)
        return out[:B] if Bp != B else out

    def cal_logit(self, entity_feature, query_feature):
        # entity_feature: (B, N, D), query_feature: (B, 1, D) -> (B, N)
        # Tiled over both batch and N so full-entity ranking fits VMEM on all
        # generations; query block stays resident per batch tile.
        # TODO(synk): for full-entity ranking the (nentity, D) table could be
        # streamed once (indexed only by the N grid axis) instead of gathering
        # a replicated (B, N, D) tensor in the wrapper.
        B, N, D = entity_feature.shape
        budget = self._ent_block_budget
        row_bytes = D * 4

        # ---- N tile (128-multiple, or full N if it fits) ----
        if min(B, 8) * N * row_bytes <= budget:
            tn, Npad = N, N
        else:
            tn = (budget // (min(B, 8) * row_bytes)) // 128 * 128
            tn = int(min(1024, max(128, tn)))
            Npad = -(-N // tn) * tn

        # ---- batch tile (8-aligned, or full B if it fits) ----
        rows_fit = max(1, budget // (tn * row_bytes))
        if rows_fit >= B:
            tb, Bpad = B, B
        else:
            tb = max(8, (rows_fit // 8) * 8)
            Bpad = -(-B // tb) * tb

        if Bpad != B or Npad != N:
            entity_feature = jnp.pad(
                entity_feature, ((0, Bpad - B), (0, Npad - N), (0, 0)))
            query_feature = jnp.pad(
                query_feature, ((0, Bpad - B), (0, 0), (0, 0)))

        grid = (Bpad // tb, Npad // tn)
        out = pl.pallas_call(
            _logit_kernel,
            out_shape=jax.ShapeDtypeStruct((Bpad, Npad), jnp.float32),
            grid=grid,
            in_specs=[
                pl.BlockSpec((tb, tn, D), lambda i, j: (i, j, 0)),
                pl.BlockSpec((tb, 1, D), lambda i, j: (i, 0, 0)),  # resident query
                pl.BlockSpec(memory_space=pltpu.MemorySpace.SMEM),
                pl.BlockSpec(memory_space=pltpu.MemorySpace.SMEM),
            ],
            out_specs=pl.BlockSpec((tb, tn), lambda i, j: (i, j)),
            compiler_params=pltpu.CompilerParams(
                dimension_semantics=("parallel", "parallel"),
                vmem_limit_bytes=self._vmem_med),
        )(entity_feature, query_feature, self.gamma_arr, self.modulus_arr)
        if Bpad != B or Npad != N:
            out = out[:B, :N]
        return out

    # ---------------- query embedding (Python/JAX glue) ----------------

    def embed_query(self, queries, query_structure, idx):
        all_relation_flag = True
        for ele in query_structure[-1]:
            if ele not in ['r', 'n']:
                all_relation_flag = False
                break
        if all_relation_flag:
            if query_structure[0] == 'e':
                q_feature = jnp.take(self.entity_feature_embedding,
                                     queries[:, idx], axis=0)
                idx += 1
            else:
                q_feature, idx = self.embed_query(queries, query_structure[0], idx)

            ops, rel_cols = [], []
            for i in range(len(query_structure[-1])):
                op = query_structure[-1][i]
                ops.append(op)
                if op == 'n':
                    if self.validate_queries:   # off the hot path (host sync)
                        assert bool(jnp.all(queries[:, idx] == -2))
                else:
                    rel_cols.append(queries[:, idx])
                idx += 1

            if rel_cols:
                rel_ids = jnp.stack(rel_cols, axis=0)                 # (n_r, B)
                r_stack = jnp.take(self.relation_feature_embedding,
                                   rel_ids, axis=0)                   # (n_r,B,D)
            else:
                r_stack = None
            q_feature = self.relation_chain(q_feature, r_stack, tuple(ops))
        else:
            feature_list = []
            for i in range(len(query_structure)):
                q_feature, idx = self.embed_query(queries, query_structure[i], idx)
                feature_list.append(q_feature)
            stacked_feature = jnp.stack(feature_list)                 # (K, B, D)
            q_feature = self.intersection(stacked_feature)
        return q_feature, idx

    def transform_union_query(self, queries, query_structure):
        if self.query_name_dict[query_structure] == '2u-DNF':
            queries = queries[:, :-1]
        elif self.query_name_dict[query_structure] == 'up-DNF':
            queries = jnp.concatenate(
                [jnp.concatenate([queries[:, :2], queries[:, 5:6]], axis=1),
                 jnp.concatenate([queries[:, 2:4], queries[:, 5:6]], axis=1)],
                axis=1)
        queries = jnp.reshape(queries, (queries.shape[0] * 2, -1))
        return queries

    def transform_union_structure(self, query_structure):
        if self.query_name_dict[query_structure] == '2u-DNF':
            return ('e', ('r',))
        elif self.query_name_dict[query_structure] == 'up-DNF':
            return ('e', ('r', 'r'))

    # ---------------- forward ----------------

    def forward(self, positive_sample, negative_sample, subsampling_weight,
                batch_queries_dict, batch_idxs_dict):
        D = self.entity_dim
        all_idxs, all_feature = [], []
        all_union_idxs, all_union_feature = [], []
        for qs in batch_queries_dict:
            name = self.query_name_dict[qs]
            if 'u' in name and 'DNF' in name:
                feature, _ = self.embed_query(
                    self.transform_union_query(batch_queries_dict[qs], qs),
                    self.transform_union_structure(qs), 0)
                all_union_idxs.extend(batch_idxs_dict[qs])
                all_union_feature.append(feature)
            else:
                feature, _ = self.embed_query(batch_queries_dict[qs], qs, 0)
                all_idxs.extend(batch_idxs_dict[qs])
                all_feature.append(feature)

        have_reg = len(all_feature) > 0
        have_union = len(all_union_feature) > 0
        if have_reg:
            all_feature = jnp.concatenate(all_feature, axis=0)[:, None, :]   # (Br,1,D)
        if have_union:
            auf = jnp.concatenate(all_union_feature, axis=0)[:, None, :]     # (2Bu,1,D)
            all_union_feature = auf.reshape(auf.shape[0] // 2, 2, 1, -1)     # (Bu,2,1,D)

        if subsampling_weight is not None:
            subsampling_weight = subsampling_weight[
                jnp.array(all_idxs + all_union_idxs, dtype=jnp.int32)]

        want_pos = positive_sample is not None
        want_neg = negative_sample is not None

        pos_reg = pos_uni = neg_reg = neg_uni = None

        # ---- regular branch: single fused cal_logit over [pos | neg] ----
        if have_reg and (want_pos or want_neg):
            idxs_arr = jnp.array(all_idxs, dtype=jnp.int32)
            ent_blocks = []
            if want_pos:
                pos_ids = positive_sample[idxs_arr]
                ent_blocks.append(jnp.take(self.entity_feature_embedding,
                                           pos_ids, axis=0)[:, None, :])
            if want_neg:
                neg_ids = negative_sample[idxs_arr]
                bsz, nsz = neg_ids.shape
                ent_blocks.append(jnp.take(self.entity_feature_embedding,
                                           neg_ids.reshape(-1), axis=0
                                           ).reshape(bsz, nsz, D))
            ent = (jnp.concatenate(ent_blocks, axis=1)
                   if len(ent_blocks) > 1 else ent_blocks[0])
            logit = self.cal_logit(ent, all_feature)                  # (Br, Np+Ns)
            off = 0
            if want_pos:
                pos_reg = logit[:, :1]
                off = 1
            if want_neg:
                neg_reg = logit[:, off:]

        # ---- union branch: single fused cal_logit over [pos | neg] ----
        if have_union and (want_pos or want_neg):
            uidxs_arr = jnp.array(all_union_idxs, dtype=jnp.int32)
            Bu = all_union_feature.shape[0]
            ent_blocks = []
            if want_pos:
                pos_ids = positive_sample[uidxs_arr]
                pf = jnp.take(self.entity_feature_embedding, pos_ids, axis=0)
                ent_blocks.append(jnp.broadcast_to(pf[:, None, None, :],
                                                   (Bu, 2, 1, D)))
            if want_neg:
                neg_ids = negative_sample[uidxs_arr]
                _, nsz = neg_ids.shape
                nf = jnp.take(self.entity_feature_embedding,
                              neg_ids.reshape(-1), axis=0).reshape(Bu, nsz, D)
                ent_blocks.append(jnp.broadcast_to(nf[:, None, :, :],
                                                   (Bu, 2, nsz, D)))
            ent = (jnp.concatenate(ent_blocks, axis=2)
                   if len(ent_blocks) > 1 else ent_blocks[0])         # (Bu,2,Nt,D)
            ntot = ent.shape[2]
            ent = ent.reshape(Bu * 2, ntot, D)
            qry = all_union_feature.reshape(Bu * 2, 1, D)
            logit = self.cal_logit(ent, qry).reshape(Bu, 2, ntot)
            logit = jnp.max(logit, axis=1)                            # (Bu, Nt)
            off = 0
            if want_pos:
                pos_uni = logit[:, :1]
                off = 1
            if want_neg:
                neg_uni = logit[:, off:]

        positive_logit = None
        if want_pos:
            parts = [p for p in (pos_reg, pos_uni) if p is not None]
            positive_logit = (jnp.concatenate(parts, axis=0)
                              if parts else jnp.zeros((0, 1), jnp.float32))
        negative_logit = None
        if want_neg:
            parts = [p for p in (neg_reg, neg_uni) if p is not None]
            negative_logit = (jnp.concatenate(parts, axis=0)
                              if parts else jnp.zeros((0, 0), jnp.float32))

        return positive_logit, negative_logit, subsampling_weight, \
            all_idxs + all_union_idxs


# ----------------------------- demo / smoke test ---------------------------

if __name__ == "__main__":
    nentity, nrelation, hidden_dim, gamma = 64, 16, 32, 12.0
    s1p = ('e', ('r',))
    s2i = (('e', ('r',)), ('e', ('r',)))
    s2in = (('e', ('r',)), ('e', ('r', 'n')))
    s2u = (('e', ('r',)), ('e', ('r',)), ('u',))
    query_name_dict = {s1p: '1p', s2i: '2i', s2in: '2in', s2u: '2u-DNF'}

    model = FLEXPallas(nentity, nrelation, hidden_dim, gamma, query_name_dict,
                       proj_hidden=1600, num_layers=2, seed=0)

    # batch: 2x 1p, 2x 2i, 1x 2in, 1x 2u-DNF  -> 6 queries total
    batch_queries_dict = {
        s1p: jnp.array([[3, 1], [10, 5]], dtype=jnp.int32),
        s2i: jnp.array([[4, 2, 7, 0], [8, 9, 11, 3]], dtype=jnp.int32),
        s2in: jnp.array([[5, 4, 6, 7, -2]], dtype=jnp.int32),
        s2u: jnp.array([[12, 2, 20, 6, -1]], dtype=jnp.int32),
    }
    batch_idxs_dict = {s1p: [0, 1], s2i: [2, 3], s2in: [4], s2u: [5]}

    total, neg_size = 6, 8
    key = jax.random.PRNGKey(0)
    k1, k2, k3 = jax.random.split(key, 3)
    positive_sample = jax.random.randint(k1, (total,), 0, nentity, dtype=jnp.int32)
    negative_sample = jax.random.randint(k2, (total, neg_size), 0, nentity,
                                         dtype=jnp.int32)
    subsampling_weight = jax.random.uniform(k3, (total,), jnp.float32)

    pos_logit, neg_logit, ssw, idxs = model.forward(
        positive_sample, negative_sample, subsampling_weight,
        batch_queries_dict, batch_idxs_dict)

    jax.block_until_ready((pos_logit, neg_logit, ssw))
    assert pos_logit.shape == (total, 1)
    assert neg_logit.shape == (total, neg_size)
    assert ssw.shape == (total,)
    print("KERNEL_OK")
</pallas_src>

<mosaic_0001>
module attributes {stable_mosaic.version = 11 : i64} {
  func.func @k(%arg0: i32, %arg1: memref<8x128xf32, #tpu.memory_space<vmem>>, %arg2: memref<8x128xf32, #tpu.memory_space<vmem>>) attributes {dimension_semantics = [#tpu.dimension_semantics<arbitrary>], iteration_bounds = array<i64: 2>, scalar_prefetch = 0 : i64, scratch_operands = 0 : i64, tpu.core_type = #tpu.core_type<tc>, window_params = [{pipeline_mode = #tpu.pipeline_mode<synchronous>, transform_indices = @transform_0, window_bounds = array<i64: 8, 128>}, {pipeline_mode = #tpu.pipeline_mode<synchronous>, transform_indices = @transform_1, window_bounds = array<i64: 8, 128>}]} {
    %c0 = arith.constant 0 : index
    %c0_0 = arith.constant 0 : index
    %0 = vector.load %arg1[%c0, %c0_0] : memref<8x128xf32, #tpu.memory_space<vmem>>, vector<8x128xf32>
    %cst = arith.constant 1.000000e+00 : f32
    %1 = vector.broadcast %cst : f32 to vector<8x128xf32>
    %2 = arith.addf %0, %1 : vector<8x128xf32>
    %c0_1 = arith.constant 0 : index
    %c0_2 = arith.constant 0 : index
    %3 = vector.load %arg2[%c0_1, %c0_2] : memref<8x128xf32, #tpu.memory_space<vmem>>, vector<8x128xf32>
    tpu.vector_store %arg2[%c0_1, %c0_2], %2 {strides = array<i32>} : memref<8x128xf32, #tpu.memory_space<vmem>>, vector<8x128xf32>,
    return
  }
  func.func @transform_0(%arg0: i32) -> (i32, i32) {
    %c0_i32 = arith.constant 0 : i32
    %c0_i32_0 = arith.constant 0 : i32
    %c0_i32_1 = arith.constant 0 : i32
    return %c0_i32, %c0_i32_0 : i32, i32
  }
  func.func @transform_1(%arg0: i32) -> (i32, i32) {
    %c0_i32 = arith.constant 0 : i32
    %c0_i32_0 = arith.constant 0 : i32
    %c0_i32_1 = arith.constant 0 : i32
    return %c0_i32, %c0_i32_0 : i32, i32
  }
}

module attributes {stable_mosaic.version = 11 : i64} {
  func.func @kernel(%arg0: i32, %arg1: memref<2x32xf32, #tpu.memory_space<vmem>>, %arg2: memref<1x2x32xf32, #tpu.memory_space<vmem>>, %arg3: memref<32x1664xbf16, #tpu.memory_space<vmem>>, %arg4: memref<1x1664xf32, #tpu.memory_space<vmem>>, %arg5: memref<1664x1664xbf16, #tpu.memory_space<vmem>>, %arg6: memref<1x1664xf32, #tpu.memory_space<vmem>>, %arg7: memref<1664x32xbf16, #tpu.memory_space<vmem>>, %arg8: memref<1x32xf32, #tpu.memory_space<vmem>>, %arg9: memref<2x32xf32, #tpu.memory_space<vmem>>) attributes {dimension_semantics = [#tpu.dimension_semantics<parallel>], iteration_bounds = array<i64: 1>, scalar_prefetch = 0 : i64, scratch_operands = 0 : i64, tpu.core_type = #tpu.core_type<tc>, window_params = [{transform_indices = @transform_0, window_bounds = array<i64: 2, 32>}, {transform_indices = @transform_1, window_bounds = array<i64: 1, 2, 32>}, {pipeline_mode = #tpu.pipeline_mode<synchronous>, transform_indices = @transform_2, window_bounds = array<i64: 32, 1664>}, {pipeline_mode = #tpu.pipeline_mode<synchronous>, transform_indices = @transform_3, window_bounds = array<i64: 1, 1664>}, {pipeline_mode = #tpu.pipeline_mode<synchronous>, transform_indices = @transform_4, window_bounds = array<i64: 1664, 1664>}, {pipeline_mode = #tpu.pipeline_mode<synchronous>, transform_indices = @transform_5, window_bounds = array<i64: 1, 1664>}, {pipeline_mode = #tpu.pipeline_mode<synchronous>, transform_indices = @transform_6, window_bounds = array<i64: 1664, 32>}, {pipeline_mode = #tpu.pipeline_mode<synchronous>, transform_indices = @transform_7, window_bounds = array<i64: 1, 32>}, {transform_indices = @transform_8, window_bounds = array<i64: 2, 32>}]} {
    %c0 = arith.constant 0 : index
    %c0_0 = arith.constant 0 : index
    %0 = vector.load %arg1[%c0, %c0_0] : memref<2x32xf32, #tpu.memory_space<vmem>>, vector<2x32xf32>
    %c0_1 = arith.constant 0 : index
    %c0_2 = arith.constant 0 : index
    %c0_3 = arith.constant 0 : index
    %1 = vector.load %arg2[%c0_1, %c0_2, %c0_3] : memref<1x2x32xf32, #tpu.memory_space<vmem>>, vector<1x2x32xf32>
    %2 = vector.shape_cast %1 : vector<1x2x32xf32> to vector<2x32xf32>
    %3 = arith.addf %0, %2 : vector<2x32xf32>
    %4 = arith.truncf %3 : vector<2x32xf32> to vector<2x32xbf16>
    %c0_4 = arith.constant 0 : index
    %c0_5 = arith.constant 0 : index
    %5 = vector.load %arg3[%c0_4, %c0_5] : memref<32x1664xbf16, #tpu.memory_space<vmem>>, vector<32x1664xbf16>
    %cst = arith.constant dense<0.000000e+00> : vector<2x1664xf32>
    %6 = tpu.matmul %4, %5, %cst {dimension_numbers = #tpu.dot_dimension_numbers<[1], [0], [0], [1], [0, 0, 1, 1], [], []>} : vector<2x32xbf16>, vector<32x1664xbf16>, vector<2x1664xf32> -> vector<2x1664xf32>
    %c0_6 = arith.constant 0 : index
    %c0_7 = arith.constant 0 : index
    %7 = vector.load %arg4[%c0_6, %c0_7] : memref<1x1664xf32, #tpu.memory_space<vmem>>, vector<1x1664xf32>
    %8 = vector.broadcast %7 : vector<1x1664xf32> to vector<2x1664xf32>
    %9 = arith.addf %6, %8 : vector<2x1664xf32>
    %cst_8 = arith.constant 0.000000e+00 : f32
    %10 = vector.broadcast %cst_8 : f32 to vector<2x1664xf32>
    %11 = arith.maximumf %9, %10 : vector<2x1664xf32>
    %12 = arith.truncf %11 : vector<2x1664xf32> to vector<2x1664xbf16>
    %c0_9 = arith.constant 0 : index
    %c0_10 = arith.constant 0 : index
    %13 = vector.load %arg5[%c0_9, %c0_10] : memref<1664x1664xbf16, #tpu.memory_space<vmem>>, vector<1664x1664xbf16>
    %cst_11 = arith.constant dense<0.000000e+00> : vector<2x1664xf32>
    %14 = tpu.matmul %12, %13, %cst_11 {dimension_numbers = #tpu.dot_dimension_numbers<[1], [0], [0], [1], [0, 0, 1, 1], [], []>} : vector<2x1664xbf16>, vector<1664x1664xbf16>, vector<2x1664xf32> -> vector<2x1664xf32>
    %c0_12 = arith.constant 0 : index
    %c0_13 = arith.constant 0 : index
    %15 = vector.load %arg6[%c0_12, %c0_13] : memref<1x1664xf32, #tpu.memory_space<vmem>>, vector<1x1664xf32>
    %16 = vector.broadcast %15 : vector<1x1664xf32> to vector<2x1664xf32>
    %17 = arith.addf %14, %16 : vector<2x1664xf32>
    %cst_14 = arith.constant 0.000000e+00 : f32
    %18 = vector.broadcast %cst_14 : f32 to vector<2x1664xf32>
    %19 = arith.maximumf %17, %18 : vector<2x1664xf32>
    %20 = arith.truncf %19 : vector<2x1664xf32> to vector<2x1664xbf16>
    %c0_15 = arith.constant 0 : index
    %c0_16 = arith.constant 0 : index
    %21 = vector.load %arg7[%c0_15, %c0_16] : memref<1664x32xbf16, #tpu.memory_space<vmem>>, vector<1664x32xbf16>
    %cst_17 = arith.constant dense<0.000000e+00> : vector<2x32xf32>
    %22 = tpu.matmul %20, %21, %cst_17 {dimension_numbers = #tpu.dot_dimension_numbers<[1], [0], [0], [1], [0, 0, 1, 1], [], []>} : vector<2x1664xbf16>, vector<1664x32xbf16>, vector<2x32xf32> -> vector<2x32xf32>
    %c0_18 = arith.constant 0 : index
    %c0_19 = arith.constant 0 : index
    %23 = vector.load %arg8[%c0_18, %c0_19] : memref<1x32xf32, #tpu.memory_space<vmem>>, vector<1x32xf32>
    %24 = vector.broadcast %23 : vector<1x32xf32> to vector<2x32xf32>
    %25 = arith.addf %22, %24 : vector<2x32xf32>
    %c0_20 = arith.constant 0 : index
    %c0_21 = arith.constant 0 : index
    %26 = vector.load %arg9[%c0_20, %c0_21] : memref<2x32xf32, #tpu.memory_space<vmem>>, vector<2x32xf32>
    tpu.vector_store %arg9[%c0_20, %c0_21], %25 {strides = array<i32>} : memref<2x32xf32, #tpu.memory_space<vmem>>, vector<2x32xf32>,
    return
  }
  func.func @transform_0(%arg0: i32) -> (i32, i32) {
    %c0_i32 = arith.constant 0 : i32
    %c0_i32_0 = arith.constant 0 : i32
    return %arg0, %c0_i32 : i32, i32
  }
  func.func @transform_1(%arg0: i32) -> (i32, i32, i32) {
    %c0_i32 = arith.constant 0 : i32
    %c0_i32_0 = arith.constant 0 : i32
    %c0_i32_1 = arith.constant 0 : i32
    return %c0_i32, %arg0, %c0_i32_0 : i32, i32, i32
  }
  func.func @transform_2(%arg0: i32) -> (i32, i32) {
    %c0_i32 = arith.constant 0 : i32
    %c0_i32_0 = arith.constant 0 : i32
    %c0_i32_1 = arith.constant 0 : i32
    return %c0_i32, %c0_i32_0 : i32, i32
  }
  func.func @transform_3(%arg0: i32) -> (i32, i32) {
    %c0_i32 = arith.constant 0 : i32
    %c0_i32_0 = arith.constant 0 : i32
    %c0_i32_1 = arith.constant 0 : i32
    return %c0_i32, %c0_i32_0 : i32, i32
  }
  func.func @transform_4(%arg0: i32) -> (i32, i32) {
    %c0_i32 = arith.constant 0 : i32
    %c0_i32_0 = arith.constant 0 : i32
    %c0_i32_1 = arith.constant 0 : i32
    return %c0_i32, %c0_i32_0 : i32, i32
  }
  func.func @transform_5(%arg0: i32) -> (i32, i32) {
    %c0_i32 = arith.constant 0 : i32
    %c0_i32_0 = arith.constant 0 : i32
    %c0_i32_1 = arith.constant 0 : i32
    return %c0_i32, %c0_i32_0 : i32, i32
  }
  func.func @transform_6(%arg0: i32) -> (i32, i32) {
    %c0_i32 = arith.constant 0 : i32
    %c0_i32_0 = arith.constant 0 : i32
    %c0_i32_1 = arith.constant 0 : i32
    return %c0_i32, %c0_i32_0 : i32, i32
  }
  func.func @transform_7(%arg0: i32) -> (i32, i32) {
    %c0_i32 = arith.constant 0 : i32
    %c0_i32_0 = arith.constant 0 : i32
    %c0_i32_1 = arith.constant 0 : i32
    return %c0_i32, %c0_i32_0 : i32, i32
  }
  func.func @transform_8(%arg0: i32) -> (i32, i32) {
    %c0_i32 = arith.constant 0 : i32
    %c0_i32_0 = arith.constant 0 : i32
    return %arg0, %c0_i32 : i32, i32
  }
}

</mosaic_0001>

<llo_original>
// kernel: tpu_custom_call.1
$region0: #{tpu_custom_call.1}
  #allocation0 [shape = 'u32[]', space=smem, size = 0x4, offset = 0x4, fixed_abs, tag = 'smem constant byte address 0x4 - core index']
  #allocation1 [shape = 'u32[144,128]{1,0:T(1,128)}', space=vmem, size = 0x12000, scoped, tag = 'internal scratch']
  %s0 = inlined_call_operand.hbm [shape: f32[8,128], index: 0, kind: input, shape index: {}]
  %s1 = inlined_call_operand.hbm [shape: f32[8,128], index: 1, kind: output, shape index: {}]
  %s2 = sld [smem:[#allocation0]]
  $region41: #{tpu_custom_call.1} parent=0
    _
  %s4 = ssub.s32 1, %s2
  %s5 = scalar_select 0, %s4, %s2
  $region1: #{tpu_custom_call.1} parent=0
    #allocation2 [shape = 'u8[4096]{0}', space=vmem, size = 0x1000, scoped, tag = 'input window, operand 0, single buffered']
    #allocation3 [shape = 's32[2]{0}', space=sflag, size = 0x8, scoped, tag = 'scoped memory for tpu_custom_call.1']
    #allocation4 [shape = 's32[2]{0}', space=sflag, size = 0x8, scoped, tag = 'scoped memory for tpu_custom_call.1']
    #allocation5 [shape = 'u8[4096]{0}', space=vmem, size = 0x1000, scoped, tag = 'output window, operand 0, single buffered']
    %6 = vsyncpa [#allocation3], 0
    %7 = vsyncpa [#allocation4], 0
    loop: start=0, step=1, limit=4
    $region2: #{tpu_custom_call.1} parent=1 // loop_pre_header
      _
    $region3: #{tpu_custom_call.1} parent=1 // loop_header
      %s9 = sphi 0, %s13
      %p10 = scmp.ge.s32.totalorder %s9, 4
      %s17 = sphi 0, %s17
      %s19 = sphi 0, %s17
      %s20 = sphi 0, %s19
      %s34 = sphi 0, %s20
      %s38 = sphi 0, %s38
      %s40 = sphi 0, %s38
      %s41 = sphi 0, %s40
      %s55 = sphi 0, %s41
    $region4: #{tpu_custom_call.1} parent=1 // loop_header_branch
      %12 = sbr.rel (%p10) target = $region8
    $region5: #{tpu_custom_call.1} parent=1 // loop_body
      %s14 = ssub.s32 %s9, 1
      %s15 = ssub.s32 %s9, 2
      %s16 = sadd.s32 %s9, 1
      %s18 = sadd.s32 %s17, 1
      %p21 = scmp.eq.s32.totalorder %s9, 1
      %p22 = scmp.ne.s32.totalorder %s17, %s19
      %p23 = scmp.eq.s32.totalorder %s9, 0
      %p24 = por %p22, %p23
      %p25 = scmp.ne.s32.totalorder %s17, %s19
      %p26 = scmp.eq.s32.totalorder %s14, 1
      %p27 = por %p25, %p26
      %p28 = scmp.ne.s32.totalorder %s19, %s20
      %p29 = scmp.eq.s32.totalorder %s14, 0
      %p30 = por %p28, %p29
      %p31 = scmp.ne.s32.totalorder %s19, %s20
      %p32 = scmp.eq.s32.totalorder %s15, 1
      %p33 = por %p31, %p32
      %p35 = scmp.ne.s32.totalorder %s20, %s34
      %p36 = scmp.eq.s32.totalorder %s15, 0
      %p37 = por %p35, %p36
      %s39 = sadd.s32 %s38, 1
      %p42 = scmp.eq.s32.totalorder %s9, 1
      %p43 = scmp.ne.s32.totalorder %s38, %s40
      %p44 = scmp.eq.s32.totalorder %s9, 0
      %p45 = por %p43, %p44
      %p46 = scmp.ne.s32.totalorder %s38, %s40
      %p47 = scmp.eq.s32.totalorder %s14, 1
      %p48 = por %p46, %p47
      %p49 = scmp.ne.s32.totalorder %s40, %s41
      %p50 = scmp.eq.s32.totalorder %s14, 0
      %p51 = por %p49, %p50
      %p52 = scmp.ne.s32.totalorder %s40, %s41
      %p53 = scmp.eq.s32.totalorder %s15, 1
      %p54 = por %p52, %p53
      %p56 = scmp.ne.s32.totalorder %s41, %s55
      %p57 = scmp.eq.s32.totalorder %s15, 0
      %p58 = por %p56, %p57
      %p59 = scmp.le.s32.totalorder 1, %s9
      %p60 = scmp.lt.s32.totalorder %s9, 3
      %p61 = pnand %p59, %p60
      %p62 = pneg %p61
      // Predicated region
      $region9: #{tpu_custom_call.1} parent=5 // pred_check
        _
      $region10: #{tpu_custom_call.1} parent=5 // pred_check_branch
        %64 = sbr.rel (%p61) target = $region12
      $region11: #{tpu_custom_call.1} parent=5 // pred_region
        %s65 = ssub.s32 %s9, 1
        // Predicated region
        $region13: #{tpu_custom_call.1} parent=11 // pred_check
          %p66 = pneg %p30
        $region14: #{tpu_custom_call.1} parent=11 // pred_check_branch
          %68 = sbr.rel (%p66) target = $region16
        $region15: #{tpu_custom_call.1} parent=11 // pred_region
          %s70 = ssub.s32 128, 128
          %71 = vsyncadd [#allocation3], %s70
          %s73 = sshll.u32 [#allocation2], 4
          %s74 = int_to_ptr.vmem [resolvable:$true] %s73
          %76 = dma.hbm_to_vmem [thread:$0]  %s0, 128, %s74, [#allocation3]
        $region16: #{tpu_custom_call.1} parent=11 // pred_fallthru
          _
      $region12: #{tpu_custom_call.1} parent=5 // pred_fallthru
        _
      %p77 = scmp.lt.s32.totalorder %s9, 2
      // Predicated region
      $region17: #{tpu_custom_call.1} parent=5 // pred_check
        %p78 = pneg %p77
      $region18: #{tpu_custom_call.1} parent=5 // pred_check_branch
        %80 = sbr.rel (%p78) target = $region20
      $region19: #{tpu_custom_call.1} parent=5 // pred_region
        _
      $region20: #{tpu_custom_call.1} parent=5 // pred_fallthru
        _
      %p81 = scmp.le.s32.totalorder 1, %s9
      %p82 = scmp.lt.s32.totalorder %s9, 3
      %p83 = pnand %p81, %p82
      %p84 = pneg %p83
      // Predicated region
      $region21: #{tpu_custom_call.1} parent=5 // pred_check
        _
      $region22: #{tpu_custom_call.1} parent=5 // pred_check_branch
        %86 = sbr.rel (%p83) target = $region24
      $region23: #{tpu_custom_call.1} parent=5 // pred_region
        %s87 = ssub.s32 %s9, 1
        // Predicated region
        $region25: #{tpu_custom_call.1} parent=23 // pred_check
          %p88 = pneg %p30
        $region26: #{tpu_custom_call.1} parent=23 // pred_check_branch
          %90 = sbr.rel (%p88) target = $region28
        $region27: #{tpu_custom_call.1} parent=23 // pred_region
          %91 = dma.done [#allocation3], 128
        $region28: #{tpu_custom_call.1} parent=23 // pred_fallthru
          _
        %p92 = pneg %p30
        %p93 = pneg %p27
        %p94 = pneg %p51
        %p95 = pneg %p48
        %v96 = vld [vmem:[#allocation2] sm:$0xff]
        %v97 = vadd.f32 %v96, 1.0
        %98 = vst [vmem:[#allocation5] sm:$0xff] %v97
        // Predicated region
        $region29: #{tpu_custom_call.1} parent=23 // pred_check
          %p99 = pneg %p48
        $region30: #{tpu_custom_call.1} parent=23 // pred_check_branch
          %101 = sbr.rel (%p99) target = $region32
        $region31: #{tpu_custom_call.1} parent=23 // pred_region
          %s103 = ssub.s32 128, 128
          %104 = vsyncadd [#allocation4], %s103
          %s106 = sshll.u32 [#allocation5], 4
          %s107 = int_to_ptr.vmem [resolvable:$true] %s106
          %109 = dma.vmem_to_hbm [thread:$0]  %s107, 128, %s1, [#allocation4]
        $region32: #{tpu_custom_call.1} parent=23 // pred_fallthru
          _
        // Predicated region
        $region33: #{tpu_custom_call.1} parent=23 // pred_check
          %p110 = pneg %p48
        $region34: #{tpu_custom_call.1} parent=23 // pred_check_branch
          %112 = sbr.rel (%p110) target = $region36
        $region35: #{tpu_custom_call.1} parent=23 // pred_region
          %113 = dma.done [#allocation4], 128
        $region36: #{tpu_custom_call.1} parent=23 // pred_fallthru
          _
      $region24: #{tpu_custom_call.1} parent=5 // pred_fallthru
        _
      %p114 = scmp.le.s32.totalorder 2, %s9
      // Predicated region
      $region37: #{tpu_custom_call.1} parent=5 // pred_check
        %p115 = pneg %p114
      $region38: #{tpu_custom_call.1} parent=5 // pred_check_branch
        %117 = sbr.rel (%p115) target = $region40
      $region39: #{tpu_custom_call.1} parent=5 // pred_region
        %s118 = ssub.s32 %s9, 2
      $region40: #{tpu_custom_call.1} parent=5 // pred_fallthru
        _
    $region6: #{tpu_custom_call.1} parent=1 // loop_footer
      %s13 = sadd.s32 1, %s9
    $region7: #{tpu_custom_call.1} parent=1 // loop_footer_branch
      %8 = sbr.rel target = $region3
    $region8: #{tpu_custom_call.1} parent=1 // loop_exit
      _
    %119 = vsyncpa [#allocation3], 1
    %s120 = scalar_lea.sflag [#allocation3], 1
    %121 = vsyncpa %s120, 1
    %122 = vsyncpa [#allocation4], 1
    %s123 = scalar_lea.sflag [#allocation4], 1
    %124 = vsyncpa %s123, 1

// kernel: tpu_custom_call.1
$region0: #{tpu_custom_call.1}
  #allocation0 [shape = 'u32[]', space=smem, size = 0x4, offset = 0x4, fixed_abs, tag = 'smem constant byte address 0x4 - core index']
  #allocation1 [shape = 'u32[144,128]{1,0:T(1,128)}', space=vmem, size = 0x12000, scoped, tag = 'internal scratch']
  %s0 = inlined_call_operand.hbm [shape: f32[2,32], index: 0, kind: input, shape index: {}]
  %s1 = inlined_call_operand.hbm [shape: f32[1,2,32], index: 1, kind: input, shape index: {}]
  %s2 = inlined_call_operand.hbm [shape: bf16[32,1664], index: 2, kind: input, shape index: {}]
  %s3 = inlined_call_operand.hbm [shape: f32[1,1664], index: 3, kind: input, shape index: {}]
  %s4 = inlined_call_operand.hbm [shape: bf16[1664,1664], index: 4, kind: input, shape index: {}]
  %s5 = inlined_call_operand.hbm [shape: f32[1,1664], index: 5, kind: input, shape index: {}]
  %s6 = inlined_call_operand.vmem [shape: bf16[1664,32], index: 6, kind: input, shape index: {}]
  %s7 = inlined_call_operand.hbm [shape: f32[1,32], index: 7, kind: input, shape index: {}]
  %s8 = inlined_call_operand.hbm [shape: f32[2,32], index: 8, kind: output, shape index: {}]
  %s9 = sld [smem:[#allocation0]]
  $region70: #{tpu_custom_call.1} parent=0
    _
  %s11 = ssub.s32 1, %s9
  %s12 = scalar_select 0, %s11, %s9
  $region1: #{tpu_custom_call.1} parent=0
    #allocation2 [shape = 'u8[1024]{0}', space=vmem, size = 0x400, scoped, tag = 'input window, operand 0, single buffered']
    #allocation3 [shape = 's32[1]{0}', space=sflag, size = 0x4, scoped, tag = 'scoped memory for tpu_custom_call.1']
    #allocation4 [shape = 's32[1]{0}', space=sflag, size = 0x4, scoped, tag = 'scoped memory for tpu_custom_call.1']
    #allocation5 [shape = 'u8[1024]{0}', space=vmem, size = 0x400, scoped, tag = 'input window, operand 1, single buffered']
    #allocation6 [shape = 's32[1]{0}', space=sflag, size = 0x4, scoped, tag = 'scoped memory for tpu_custom_call.1']
    #allocation7 [shape = 'u8[106496]{0}', space=vmem, size = 0x1a000, scoped, tag = 'input window, operand 2, single buffered']
    #allocation8 [shape = 'u8[6656]{0}', space=vmem, size = 0x1c00, scoped, tag = 'input window, operand 3, single buffered']
    #allocation9 [shape = 's32[1]{0}', space=sflag, size = 0x4, scoped, tag = 'scoped memory for tpu_custom_call.1']
    #allocation10 [shape = 'u8[5537792]{0}', space=vmem, size = 0x548000, scoped, tag = 'input window, operand 4, single buffered']
    #allocation11 [shape = 'u8[6656]{0}', space=vmem, size = 0x1c00, scoped, tag = 'input window, operand 5, single buffered']
    #allocation12 [shape = 's32[1]{0}', space=sflag, size = 0x4, scoped, tag = 'scoped memory for tpu_custom_call.1']
    #allocation13 [shape = 'u8[512]{0}', space=vmem, size = 0x400, scoped, tag = 'input window, operand 7, single buffered']
    #allocation14 [shape = 'u8[1024]{0}', space=vmem, size = 0x400, scoped, tag = 'output window, operand 0, single buffered']
    %13 = vsyncpa [#allocation3], 0
    %14 = vsyncpa [#allocation6], 0
    %15 = vsyncpa [#allocation9], 0
    %16 = vsyncpa [#allocation12], 0
    %17 = vsyncpa [#allocation4], 0
    // Predicated region
    $region2: #{tpu_custom_call.1} parent=1 // pred_check
      _
    $region3: #{tpu_custom_call.1} parent=1 // pred_check_branch
      %19 = sbr.rel (0) target = $region5
    $region4: #{tpu_custom_call.1} parent=1 // pred_region
      %s21 = ssub.s32 32, 32
      %22 = vsyncadd [#allocation3], %s21
      %s24 = sshll.u32 [#allocation2], 4
      %s25 = int_to_ptr.vmem [resolvable:$true] %s24
      %27 = dma.hbm_to_vmem [thread:$0]  %s0, 32, %s25, [#allocation3]
    $region5: #{tpu_custom_call.1} parent=1 // pred_fallthru
      _
    // Predicated region
    $region6: #{tpu_custom_call.1} parent=1 // pred_check
      _
    $region7: #{tpu_custom_call.1} parent=1 // pred_check_branch
      %29 = sbr.rel (0) target = $region9
    $region8: #{tpu_custom_call.1} parent=1 // pred_region
      %s31 = ssub.s32 32, 32
      %32 = vsyncadd [#allocation6], %s31
      %s34 = sshll.u32 [#allocation5], 4
      %s35 = int_to_ptr.vmem [resolvable:$true] %s34
      %37 = dma.hbm_to_vmem [thread:$0]  %s1, 32, %s35, [#allocation6]
    $region9: #{tpu_custom_call.1} parent=1 // pred_fallthru
      _
    // Predicated region
    $region10: #{tpu_custom_call.1} parent=1 // pred_check
      _
    $region11: #{tpu_custom_call.1} parent=1 // pred_check_branch
      %39 = sbr.rel (0) target = $region13
    $region12: #{tpu_custom_call.1} parent=1 // pred_region
      %s41 = ssub.s32 3328, 3328
      %42 = vsyncadd [#allocation6], %s41
      %s43 = sshll.u32 [#allocation7], 4
      %s44 = int_to_ptr.vmem [resolvable:$true] %s43
      %49 = dma.hbm_to_vmem [thread:$0]  %s2, 3328, %s44, [#allocation6], 832, 832, 52
    $region13: #{tpu_custom_call.1} parent=1 // pred_fallthru
      _
    // Predicated region
    $region14: #{tpu_custom_call.1} parent=1 // pred_check
      _
    $region15: #{tpu_custom_call.1} parent=1 // pred_check_branch
      %51 = sbr.rel (0) target = $region17
    $region16: #{tpu_custom_call.1} parent=1 // pred_region
      %s53 = ssub.s32 208, 208
      %54 = vsyncadd [#allocation9], %s53
      %s56 = sshll.u32 [#allocation8], 4
      %s57 = int_to_ptr.vmem [resolvable:$true] %s56
      %59 = dma.hbm_to_vmem [thread:$0]  %s3, 208, %s57, [#allocation9]
    $region17: #{tpu_custom_call.1} parent=1 // pred_fallthru
      _
    // Predicated region
    $region18: #{tpu_custom_call.1} parent=1 // pred_check
      _
    $region19: #{tpu_custom_call.1} parent=1 // pred_check_branch
      %61 = sbr.rel (0) target = $region21
    $region20: #{tpu_custom_call.1} parent=1 // pred_region
      %s63 = ssub.s32 173056, 173056
      %64 = vsyncadd [#allocation9], %s63
      %s65 = sshll.u32 [#allocation10], 4
      %s66 = int_to_ptr.vmem [resolvable:$true] %s65
      %71 = dma.hbm_to_vmem [thread:$0]  %s4, 173056, %s66, [#allocation9], 832, 832, 52
    $region21: #{tpu_custom_call.1} parent=1 // pred_fallthru
      _
    // Predicated region
    $region22: #{tpu_custom_call.1} parent=1 // pred_check
      _
    $region23: #{tpu_custom_call.1} parent=1 // pred_check_branch
      %73 = sbr.rel (0) target = $region25
    $region24: #{tpu_custom_call.1} parent=1 // pred_region
      %s75 = ssub.s32 208, 208
      %76 = vsyncadd [#allocation12], %s75
      %s78 = sshll.u32 [#allocation11], 4
      %s79 = int_to_ptr.vmem [resolvable:$true] %s78
      %81 = dma.hbm_to_vmem [thread:$0]  %s5, 208, %s79, [#allocation12]
    $region25: #{tpu_custom_call.1} parent=1 // pred_fallthru
      _
    // Predicated region
    $region26: #{tpu_custom_call.1} parent=1 // pred_check
      _
    $region27: #{tpu_custom_call.1} parent=1 // pred_check_branch
      %83 = sbr.rel (0) target = $region29
    $region28: #{tpu_custom_call.1} parent=1 // pred_region
      _
    $region29: #{tpu_custom_call.1} parent=1 // pred_fallthru
      _
    // Predicated region
    $region30: #{tpu_custom_call.1} parent=1 // pred_check
      _
    $region31: #{tpu_custom_call.1} parent=1 // pred_check_branch
      %85 = sbr.rel (0) target = $region33
    $region32: #{tpu_custom_call.1} parent=1 // pred_region
      %s87 = ssub.s32 16, 16
      %88 = vsyncadd [#allocation12], %s87
      %s90 = sshll.u32 [#allocation13], 4
      %s91 = int_to_ptr.vmem [resolvable:$true] %s90
      %93 = dma.hbm_to_vmem [thread:$0]  %s7, 16, %s91, [#allocation12]
    $region33: #{tpu_custom_call.1} parent=1 // pred_fallthru
      _
    // Predicated region
    $region34: #{tpu_custom_call.1} parent=1 // pred_check
      _
    $region35: #{tpu_custom_call.1} parent=1 // pred_check_branch
      %95 = sbr.rel (0) target = $region37
    $region36: #{tpu_custom_call.1} parent=1 // pred_region
      %96 = dma.done [#allocation3], 32
    $region37: #{tpu_custom_call.1} parent=1 // pred_fallthru
      _
    // Predicated region
    $region38: #{tpu_custom_call.1} parent=1 // pred_check
      _
    $region39: #{tpu_custom_call.1} parent=1 // pred_check_branch
      %98 = sbr.rel (0) target = $region41
    $region40: #{tpu_custom_call.1} parent=1 // pred_region
      %99 = dma.done [#allocation6], 32
    $region41: #{tpu_custom_call.1} parent=1 // pred_fallthru
      _
    // Predicated region
    $region42: #{tpu_custom_call.1} parent=1 // pred_check
      _
    $region43: #{tpu_custom_call.1} parent=1 // pred_check_branch
      %101 = sbr.rel (0) target = $region45
    $region44: #{tpu_custom_call.1} parent=1 // pred_region
      %102 = dma.done [#allocation6], 3328
    $region45: #{tpu_custom_call.1} parent=1 // pred_fallthru
      _
    // Predicated region
    $region46: #{tpu_custom_call.1} parent=1 // pred_check
      _
    $region47: #{tpu_custom_call.1} parent=1 // pred_check_branch
      %104 = sbr.rel (0) target = $region49
    $region48: #{tpu_custom_call.1} parent=1 // pred_region
      %105 = dma.done [#allocation9], 208
    $region49: #{tpu_custom_call.1} parent=1 // pred_fallthru
      _
    // Predicated region
    $region50: #{tpu_custom_call.1} parent=1 // pred_check
      _
    $region51: #{tpu_custom_call.1} parent=1 // pred_check_branch
      %107 = sbr.rel (0) target = $region53
    $region52: #{tpu_custom_call.1} parent=1 // pred_region
      %108 = dma.done [#allocation9], 173056
    $region53: #{tpu_custom_call.1} parent=1 // pred_fallthru
      _
    // Predicated region
    $region54: #{tpu_custom_call.1} parent=1 // pred_check
      _
    $region55: #{tpu_custom_call.1} parent=1 // pred_check_branch
      %110 = sbr.rel (0) target = $region57
    $region56: #{tpu_custom_call.1} parent=1 // pred_region
      %111 = dma.done [#allocation12], 208
    $region57: #{tpu_custom_call.1} parent=1 // pred_fallthru
      _
    // Predicated region
    $region58: #{tpu_custom_call.1} parent=1 // pred_check
      _
    $region59: #{tpu_custom_call.1} parent=1 // pred_check_branch
      %113 = sbr.rel (0) target = $region61
    $region60: #{tpu_custom_call.1} parent=1 // pred_region
      %114 = dma.done [#allocation12], 16
    $region61: #{tpu_custom_call.1} parent=1 // pred_fallthru
      _
    %v116 = vld [vmem:[#allocation2] sm:$0x3]
    %v117 = vld [vmem:[#allocation5] sm:$0x3]
    %v118 = vadd.f32 %v116, %v117
    %v119 = vpack.c.bf16 %v118, %v118
    %v120 = vld [vmem:[#allocation7] sm:$0xff]
    %v121 = vld [vmem:[#allocation7 + $0x8] sm:$0xff]
    %v122 = vld [vmem:[#allocation7 + $0x10] sm:$0xff]
    %v123 = vld [vmem:[#allocation7 + $0x18] sm:$0xff]
    %v124 = vld [vmem:[#allocation7 + $0x20] sm:$0xff]
    %v125 = vld [vmem:[#allocation7 + $0x28] sm:$0xff]
    %v126 = vld [vmem:[#allocation7 + $0x30] sm:$0xf]
    %v127 = vld [vmem:[#allocation7 + $0x34] sm:$0xff]
    %v128 = vld [vmem:[#allocation7 + $0x3c] sm:$0xff]
    %v129 = vld [vmem:[#allocation7 + $0x44] sm:$0xff]
    %v130 = vld [vmem:[#allocation7 + $0x4c] sm:$0xff]
    %v131 = vld [vmem:[#allocation7 + $0x54] sm:$0xff]
    %v132 = vld [vmem:[#allocation7 + $0x5c] sm:$0xff]
    %v133 = vld [vmem:[#allocation7 + $0x64] sm:$0xf]
    %v134 = vld [vmem:[#allocation7 + $0x68] sm:$0xff]
    %v135 = vld [vmem:[#allocation7 + $0x70] sm:$0xff]
    %v136 = vld [vmem:[#allocation7 + $0x78] sm:$0xff]
    %v137 = vld [vmem:[#allocation7 + $0x80] sm:$0xff]
    %v138 = vld [vmem:[#allocation7 + $0x88] sm:$0xff]
    %v139 = vld [vmem:[#allocation7 + $0x90] sm:$0xff]
    %v140 = vld [vmem:[#allocation7 + $0x98] sm:$0xf]
    %v141 = vld [vmem:[#allocation7 + $0x9c] sm:$0xff]
    %v142 = vld [vmem:[#allocation7 + $0xa4] sm:$0xff]
    %v143 = vld [vmem:[#allocation7 + $0xac] sm:$0xff]
    %v144 = vld [vmem:[#allocation7 + $0xb4] sm:$0xff]
    %v145 = vld [vmem:[#allocation7 + $0xbc] sm:$0xff]
    %v146 = vld [vmem:[#allocation7 + $0xc4] sm:$0xff]
    %v147 = vld [vmem:[#allocation7 + $0xcc] sm:$0xf]
    %v148 = vld [vmem:[#allocation8] sm:$0xff]
    %v149 = vld [vmem:[#allocation8 + $0x8] sm:$0x1f]
    %v152 = vlaneseq
    %v153 = vshrl.u32 %v152, 7
    %v154 = vsub.s32 0, %v153
    %v155 = vrot.slane %v148, %v154
    %v156 = vlaneseq
    %v157 = vshrl.u32 %v156, 7
    %v158 = vsub.s32 1, %v157
    %v159 = vrot.slane %v148, %v158
    %v160 = vlaneseq
    %v161 = vshrl.u32 %v160, 7
    %v162 = vsub.s32 2, %v161
    %v163 = vrot.slane %v148, %v162
    %v164 = vlaneseq
    %v165 = vshrl.u32 %v164, 7
    %v166 = vsub.s32 3, %v165
    %v167 = vrot.slane %v148, %v166
    %v168 = vlaneseq
    %v169 = vshrl.u32 %v168, 7
    %v170 = vsub.s32 4, %v169
    %v171 = vrot.slane %v148, %v170
    %v172 = vlaneseq
    %v173 = vshrl.u32 %v172, 7
    %v174 = vsub.s32 5, %v173
    %v175 = vrot.slane %v148, %v174
    %v176 = vlaneseq
    %v177 = vshrl.u32 %v176, 7
    %v178 = vsub.s32 6, %v177
    %v179 = vrot.slane %v148, %v178
    %v180 = vlaneseq
    %v181 = vshrl.u32 %v180, 7
    %v182 = vsub.s32 7, %v181
    %v183 = vrot.slane %v148, %v182
    %v184 = vlaneseq
    %v185 = vshrl.u32 %v184, 7
    %v186 = vsub.s32 0, %v185
    %v187 = vrot.slane %v149, %v186
    %v188 = vlaneseq
    %v189 = vshrl.u32 %v188, 7
    %v190 = vsub.s32 1, %v189
    %v191 = vrot.slane %v149, %v190
    %v192 = vlaneseq
    %v193 = vshrl.u32 %v192, 7
    %v194 = vsub.s32 2, %v193
    %v195 = vrot.slane %v149, %v194
    %v196 = vlaneseq
    %v197 = vshrl.u32 %v196, 7
    %v198 = vsub.s32 3, %v197
    %v199 = vrot.slane %v149, %v198
    %v200 = vlaneseq
    %v201 = vshrl.u32 %v200, 7
    %v202 = vsub.s32 4, %v201
    %v203 = vrot.slane %v149, %v202
    %v245 = vunpack.c.l.b16 %v120
    %v246 = vunpack.c.h.b16 %v120
    %v247 = vunpack.c.l.b16 %v121
    %v248 = vunpack.c.h.b16 %v121
    %v249 = vunpack.c.l.b16 %v122
    %v250 = vunpack.c.h.b16 %v122
    %v251 = vunpack.c.l.b16 %v123
    %v252 = vunpack.c.h.b16 %v123
    %v253 = vunpack.c.l.b16 %v124
    %v254 = vunpack.c.h.b16 %v124
    %v255 = vunpack.c.l.b16 %v125
    %v256 = vunpack.c.h.b16 %v125
    %v257 = vunpack.c.l.b16 %v126
    %v258 = vunpack.c.l.b16 %v127
    %v259 = vunpack.c.h.b16 %v127
    %v260 = vunpack.c.l.b16 %v128
    %v261 = vunpack.c.h.b16 %v128
    %v262 = vunpack.c.l.b16 %v129
    %v263 = vunpack.c.h.b16 %v129
    %v264 = vunpack.c.l.b16 %v130
    %v265 = vunpack.c.h.b16 %v130
    %v266 = vunpack.c.l.b16 %v131
    %v267 = vunpack.c.h.b16 %v131
    %v268 = vunpack.c.l.b16 %v132
    %v269 = vunpack.c.h.b16 %v132
    %v270 = vunpack.c.l.b16 %v133
    %v271 = vunpack.c.l.b16 %v134
    %v272 = vunpack.c.h.b16 %v134
    %v273 = vunpack.c.l.b16 %v135
    %v274 = vunpack.c.h.b16 %v135
    %v275 = vunpack.c.l.b16 %v136
    %v276 = vunpack.c.h.b16 %v136
    %v277 = vunpack.c.l.b16 %v137
    %v278 = vunpack.c.h.b16 %v137
    %v279 = vunpack.c.l.b16 %v138
    %v280 = vunpack.c.h.b16 %v138
    %v281 = vunpack.c.l.b16 %v139
    %v282 = vunpack.c.h.b16 %v139
    %v283 = vunpack.c.l.b16 %v140
    %v284 = vunpack.c.l.b16 %v141
    %v285 = vunpack.c.h.b16 %v141
    %v286 = vunpack.c.l.b16 %v142
    %v287 = vunpack.c.h.b16 %v142
    %v288 = vunpack.c.l.b16 %v143
    %v289 = vunpack.c.h.b16 %v143
    %v290 = vunpack.c.l.b16 %v144
    %v291 = vunpack.c.h.b16 %v144
    %v292 = vunpack.c.l.b16 %v145
    %v293 = vunpack.c.h.b16 %v145
    %v294 = vunpack.c.l.b16 %v146
    %v295 = vunpack.c.h.b16 %v146
    %v296 = vunpack.c.l.b16 %v147
    %v297 = vpack.c.b16 %v258, %v245
    %v298 = vpack.c.b16 %v259, %v246
    %v299 = vpack.c.b16 %v260, %v247
    %v300 = vpack.c.b16 %v261, %v248
    %v301 = vpack.c.b16 %v262, %v249
    %v302 = vpack.c.b16 %v263, %v250
    %v303 = vpack.c.b16 %v264, %v251
    %v304 = vpack.c.b16 %v265, %v252
    %v305 = vpack.c.b16 %v266, %v253
    %v306 = vpack.c.b16 %v267, %v254
    %v307 = vpack.c.b16 %v268, %v255
    %v308 = vpack.c.b16 %v269, %v256
    %v309 = vpack.c.b16 %v270, %v257
    %v310 = vpack.c.b16 %v284, %v271
    %v311 = vpack.c.b16 %v285, %v272
    %v312 = vpack.c.b16 %v286, %v273
    %v313 = vpack.c.b16 %v287, %v274
    %v314 = vpack.c.b16 %v288, %v275
    %v315 = vpack.c.b16 %v289, %v276
    %v316 = vpack.c.b16 %v290, %v277
    %v317 = vpack.c.b16 %v291, %v278
    %v318 = vpack.c.b16 %v292, %v279
    %v319 = vpack.c.b16 %v293, %v280
    %v320 = vpack.c.b16 %v294, %v281
    %v321 = vpack.c.b16 %v295, %v282
    %v322 = vpack.c.b16 %v296, %v283
    %vm349 = vcmask 261120
    %v351 = vsel %vm349, %v119, 0
    %353 = vmatprep.subr.bf16.mxu0 %v298
    %354 = vmatpush1.bf16.msra.mxu0 %v297
    %355 = vmatprep.subr.bf16.mxu0 %v311
    %356 = vmatpush1.bf16.msra.mxu0 %v310
    %357 = vmatprep.subr.bf16.mxu0 0
    %358 = vmatpush1.bf16.msra.mxu0 0
    %359 = vmatprep.subr.bf16.mxu0 0
    %360 = vmatpush1.bf16.msra.mxu0 0
    %361 = vmatprep.subr.bf16.mxu0 0
    %362 = vmatpush1.bf16.msra.mxu0 0
    %363 = vmatprep.subr.bf16.mxu0 0
    %364 = vmatpush1.bf16.msra.mxu0 0
    %365 = vmatprep.subr.bf16.mxu0 0
    %366 = vmatpush1.bf16.msra.mxu0 0
    %367 = vmatprep.subr.bf16.mxu0 0
    %368 = vmatpush1.bf16.msra.mxu0 0
    %369 = vmatprep.subr.bf16.mxu0 0
    %370 = vmatpush1.bf16.msra.mxu0 0
    %371 = vmatprep.subr.bf16.mxu0 0
    %372 = vmatpush1.bf16.msra.mxu0 0
    %373 = vmatprep.subr.bf16.mxu0 0
    %374 = vmatpush1.bf16.msra.mxu0 0
    %375 = vmatprep.subr.bf16.mxu0 0
    %376 = vmatpush1.bf16.msra.mxu0 0
    %377 = vmatprep.subr.bf16.mxu0 0
    %378 = vmatpush1.bf16.msra.mxu0 0
    %379 = vmatprep.subr.bf16.mxu0 0
    %380 = vmatpush1.bf16.msra.mxu0 0
    %381 = vmatprep.subr.bf16.mxu0 0
    %382 = vmatpush1.bf16.msra.mxu0 0
    %383 = vmatprep.subr.bf16.mxu0 0
    %384 = vmatpush1.bf16.msra.mxu0 0
    %385 = vmatprep.mubr.bf16.mxu0 0
    %386 = vmatmul.mubr.bf16.gmra.mrb[0].mxu0 %v351
    %v387 = vpop.f32.mrb[0].mxu0
    %v388 = vadd.f32 %v155, %v387
    %v389 = vpop.f32.mrb[0].mxu0
    %v390 = vadd.f32 %v159, %v389
    %v391 = vpop.f32.mrb[0].mxu0
    %v392 = vpop.f32.mrb[0].mxu0
    %393 = vdwg.mxu0
    %394 = vmatprep.subr.bf16.mxu0 %v300
    %395 = vmatpush1.bf16.msra.mxu0 %v299
    %396 = vmatprep.subr.bf16.mxu0 %v313
    %397 = vmatpush1.bf16.msra.mxu0 %v312
    %398 = vmatprep.subr.bf16.mxu0 0
    %399 = vmatpush1.bf16.msra.mxu0 0
    %400 = vmatprep.subr.bf16.mxu0 0
    %401 = vmatpush1.bf16.msra.mxu0 0
    %402 = vmatprep.subr.bf16.mxu0 0
    %403 = vmatpush1.bf16.msra.mxu0 0
    %404 = vmatprep.subr.bf16.mxu0 0
    %405 = vmatpush1.bf16.msra.mxu0 0
    %406 = vmatprep.subr.bf16.mxu0 0
    %407 = vmatpush1.bf16.msra.mxu0 0
    %408 = vmatprep.subr.bf16.mxu0 0
    %409 = vmatpush1.bf16.msra.mxu0 0
    %410 = vmatprep.subr.bf16.mxu0 0
    %411 = vmatpush1.bf16.msra.mxu0 0
    %412 = vmatprep.subr.bf16.mxu0 0
    %413 = vmatpush1.bf16.msra.mxu0 0
    %414 = vmatprep.subr.bf16.mxu0 0
    %415 = vmatpush1.bf16.msra.mxu0 0
    %416 = vmatprep.subr.bf16.mxu0 0
    %417 = vmatpush1.bf16.msra.mxu0 0
    %418 = vmatprep.subr.bf16.mxu0 0
    %419 = vmatpush1.bf16.msra.mxu0 0
    %420 = vmatprep.subr.bf16.mxu0 0
    %421 = vmatpush1.bf16.msra.mxu0 0
    %422 = vmatprep.subr.bf16.mxu0 0
    %423 = vmatpush1.bf16.msra.mxu0 0
    %424 = vmatprep.subr.bf16.mxu0 0
    %425 = vmatpush1.bf16.msra.mxu0 0
    %426 = vmatprep.mubr.bf16.mxu0 0
    %427 = vmatmul.mubr.bf16.gmra.mrb[0].mxu0 %v351
    %v428 = vpop.f32.mrb[0].mxu0
    %v429 = vadd.f32 %v163, %v428
    %v430 = vpop.f32.mrb[0].mxu0
    %v431 = vadd.f32 %v167, %v430
    %v432 = vpop.f32.mrb[0].mxu0
    %v433 = vpop.f32.mrb[0].mxu0
    %434 = vdwg.mxu0
    %435 = vmatprep.subr.bf16.mxu0 %v302
    %436 = vmatpush1.bf16.msra.mxu0 %v301
    %437 = vmatprep.subr.bf16.mxu0 %v315
    %438 = vmatpush1.bf16.msra.mxu0 %v314
    %439 = vmatprep.subr.bf16.mxu0 0
    %440 = vmatpush1.bf16.msra.mxu0 0
    %441 = vmatprep.subr.bf16.mxu0 0
    %442 = vmatpush1.bf16.msra.mxu0 0
    %443 = vmatprep.subr.bf16.mxu0 0
    %444 = vmatpush1.bf16.msra.mxu0 0
    %445 = vmatprep.subr.bf16.mxu0 0
    %446 = vmatpush1.bf16.msra.mxu0 0
    %447 = vmatprep.subr.bf16.mxu0 0
    %448 = vmatpush1.bf16.msra.mxu0 0
    %449 = vmatprep.subr.bf16.mxu0 0
    %450 = vmatpush1.bf16.msra.mxu0 0
    %451 = vmatprep.subr.bf16.mxu0 0
    %452 = vmatpush1.bf16.msra.mxu0 0
    %453 = vmatprep.subr.bf16.mxu0 0
    %454 = vmatpush1.bf16.msra.mxu0 0
    %455 = vmatprep.subr.bf16.mxu0 0
    %456 = vmatpush1.bf16.msra.mxu0 0
    %457 = vmatprep.subr.bf16.mxu0 0
    %458 = vmatpush1.bf16.msra.mxu0 0
    %459 = vmatprep.subr.bf16.mxu0 0
    %460 = vmatpush1.bf16.msra.mxu0 0
    %461 = vmatprep.subr.bf16.mxu0 0
    %462 = vmatpush1.bf16.msra.mxu0 0
    %463 = vmatprep.subr.bf16.mxu0 0
    %464 = vmatpush1.bf16.msra.mxu0 0
    %465 = vmatprep.subr.bf16.mxu0 0
    %466 = vmatpush1.bf16.msra.mxu0 0
    %467 = vmatprep.mubr.bf16.mxu0 0
    %468 = vmatmul.mubr.bf16.gmra.mrb[0].mxu0 %v351
    %v469 = vpop.f32.mrb[0].mxu0
    %v470 = vadd.f32 %v171, %v469
    %v471 = vpop.f32.mrb[0].mxu0
    %v472 = vadd.f32 %v175, %v471
    %v473 = vpop.f32.mrb[0].mxu0
    %v474 = vpop.f32.mrb[0].mxu0
    %475 = vdwg.mxu0
    %476 = vmatprep.subr.bf16.mxu0 %v304
    %477 = vmatpush1.bf16.msra.mxu0 %v303
    %478 = vmatprep.subr.bf16.mxu0 %v317
    %479 = vmatpush1.bf16.msra.mxu0 %v316
    %480 = vmatprep.subr.bf16.mxu0 0
    %481 = vmatpush1.bf16.msra.mxu0 0
    %482 = vmatprep.subr.bf16.mxu0 0
    %483 = vmatpush1.bf16.msra.mxu0 0
    %484 = vmatprep.subr.bf16.mxu0 0
    %485 = vmatpush1.bf16.msra.mxu0 0
    %486 = vmatprep.subr.bf16.mxu0 0
    %487 = vmatpush1.bf16.msra.mxu0 0
    %488 = vmatprep.subr.bf16.mxu0 0
    %489 = vmatpush1.bf16.msra.mxu0 0
    %490 = vmatprep.subr.bf16.mxu0 0
    %491 = vmatpush1.bf16.msra.mxu0 0
    %492 = vmatprep.subr.bf16.mxu0 0
    %493 = vmatpush1.bf16.msra.mxu0 0
    %494 = vmatprep.subr.bf16.mxu0 0
    %495 = vmatpush1.bf16.msra.mxu0 0
    %496 = vmatprep.subr.bf16.mxu0 0
    %497 = vmatpush1.bf16.msra.mxu0 0
    %498 = vmatprep.subr.bf16.mxu0 0
    %499 = vmatpush1.bf16.msra.mxu0 0
    %500 = vmatprep.subr.bf16.mxu0 0
    %501 = vmatpush1.bf16.msra.mxu0 0
    %502 = vmatprep.subr.bf16.mxu0 0
    %503 = vmatpush1.bf16.msra.mxu0 0
    %504 = vmatprep.subr.bf16.mxu0 0
    %505 = vmatpush1.bf16.msra.mxu0 0
    %506 = vmatprep.subr.bf16.mxu0 0
    %507 = vmatpush1.bf16.msra.mxu0 0
    %508 = vmatprep.mubr.bf16.mxu0 0
    %509 = vmatmul.mubr.bf16.gmra.mrb[0].mxu0 %v351
    %v510 = vpop.f32.mrb[0].mxu0
    %v511 = vadd.f32 %v179, %v510
    %v512 = vpop.f32.mrb[0].mxu0
    %v513 = vadd.f32 %v183, %v512
    %v514 = vpop.f32.mrb[0].mxu0
    %v515 = vpop.f32.mrb[0].mxu0
    %516 = vdwg.mxu0
    %517 = vmatprep.subr.bf16.mxu0 %v306
    %518 = vmatpush1.bf16.msra.mxu0 %v305
    %519 = vmatprep.subr.bf16.mxu0 %v319
    %520 = vmatpush1.bf16.msra.mxu0 %v318
    %521 = vmatprep.subr.bf16.mxu0 0
    %522 = vmatpush1.bf16.msra.mxu0 0
    %523 = vmatprep.subr.bf16.mxu0 0
    %524 = vmatpush1.bf16.msra.mxu0 0
    %525 = vmatprep.subr.bf16.mxu0 0
    %526 = vmatpush1.bf16.msra.mxu0 0
    %527 = vmatprep.subr.bf16.mxu0 0
    %528 = vmatpush1.bf16.msra.mxu0 0
    %529 = vmatprep.subr.bf16.mxu0 0
    %530 = vmatpush1.bf16.msra.mxu0 0
    %531 = vmatprep.subr.bf16.mxu0 0
    %532 = vmatpush1.bf16.msra.mxu0 0
    %533 = vmatprep.subr.bf16.mxu0 0
    %534 = vmatpush1.bf16.msra.mxu0 0
    %535 = vmatprep.subr.bf16.mxu0 0
    %536 = vmatpush1.bf16.msra.mxu0 0
    %537 = vmatprep.subr.bf16.mxu0 0
    %538 = vmatpush1.bf16.msra.mxu0 0
    %539 = vmatprep.subr.bf16.mxu0 0
    %540 = vmatpush1.bf16.msra.mxu0 0
    %541 = vmatprep.subr.bf16.mxu0 0
    %542 = vmatpush1.bf16.msra.mxu0 0
    %543 = vmatprep.subr.bf16.mxu0 0
    %544 = vmatpush1.bf16.msra.mxu0 0
    %545 = vmatprep.subr.bf16.mxu0 0
    %546 = vmatpush1.bf16.msra.mxu0 0
    %547 = vmatprep.subr.bf16.mxu0 0
    %548 = vmatpush1.bf16.msra.mxu0 0
    %549 = vmatprep.mubr.bf16.mxu0 0
    %550 = vmatmul.mubr.bf16.gmra.mrb[0].mxu0 %v351
    %v551 = vpop.f32.mrb[0].mxu0
    %v552 = vadd.f32 %v187, %v551
    %v553 = vpop.f32.mrb[0].mxu0
    %v554 = vadd.f32 %v191, %v553
    %v555 = vpop.f32.mrb[0].mxu0
    %v556 = vpop.f32.mrb[0].mxu0
    %557 = vdwg.mxu0
    %558 = vmatprep.subr.bf16.mxu0 %v308
    %559 = vmatpush1.bf16.msra.mxu0 %v307
    %560 = vmatprep.subr.bf16.mxu0 %v321
    %561 = vmatpush1.bf16.msra.mxu0 %v320
    %562 = vmatprep.subr.bf16.mxu0 0
    %563 = vmatpush1.bf16.msra.mxu0 0
    %564 = vmatprep.subr.bf16.mxu0 0
    %565 = vmatpush1.bf16.msra.mxu0 0
    %566 = vmatprep.subr.bf16.mxu0 0
    %567 = vmatpush1.bf16.msra.mxu0 0
    %568 = vmatprep.subr.bf16.mxu0 0
    %569 = vmatpush1.bf16.msra.mxu0 0
    %570 = vmatprep.subr.bf16.mxu0 0
    %571 = vmatpush1.bf16.msra.mxu0 0
    %572 = vmatprep.subr.bf16.mxu0 0
    %573 = vmatpush1.bf16.msra.mxu0 0
    %574 = vmatprep.subr.bf16.mxu0 0
    %575 = vmatpush1.bf16.msra.mxu0 0
    %576 = vmatprep.subr.bf16.mxu0 0
    %577 = vmatpush1.bf16.msra.mxu0 0
    %578 = vmatprep.subr.bf16.mxu0 0
    %579 = vmatpush1.bf16.msra.mxu0 0
    %580 = vmatprep.subr.bf16.mxu0 0
    %581 = vmatpush1.bf16.msra.mxu0 0
    %582 = vmatprep.subr.bf16.mxu0 0
    %583 = vmatpush1.bf16.msra.mxu0 0
    %584 = vmatprep.subr.bf16.mxu0 0
    %585 = vmatpush1.bf16.msra.mxu0 0
    %586 = vmatprep.subr.bf16.mxu0 0
    %587 = vmatpush1.bf16.msra.mxu0 0
    %588 = vmatprep.subr.bf16.mxu0 0
    %589 = vmatpush1.bf16.msra.mxu0 0
    %590 = vmatprep.mubr.bf16.mxu0 0
    %591 = vmatmul.mubr.bf16.gmra.mrb[0].mxu0 %v351
    %v592 = vpop.f32.mrb[0].mxu0
    %v593 = vadd.f32 %v195, %v592
    %v594 = vpop.f32.mrb[0].mxu0
    %v595 = vadd.f32 %v199, %v594
    %v596 = vpop.f32.mrb[0].mxu0
    %v597 = vpop.f32.mrb[0].mxu0
    %598 = vdwg.mxu0
    %599 = vmatprep.subr.bf16.mxu0 0
    %600 = vmatpush1.bf16.msra.mxu0 %v309
    %601 = vmatprep.subr.bf16.mxu0 0
    %602 = vmatpush1.bf16.msra.mxu0 %v322
    %603 = vmatprep.subr.bf16.mxu0 0
    %604 = vmatpush1.bf16.msra.mxu0 0
    %605 = vmatprep.subr.bf16.mxu0 0
    %606 = vmatpush1.bf16.msra.mxu0 0
    %607 = vmatprep.subr.bf16.mxu0 0
    %608 = vmatpush1.bf16.msra.mxu0 0
    %609 = vmatprep.subr.bf16.mxu0 0
    %610 = vmatpush1.bf16.msra.mxu0 0
    %611 = vmatprep.subr.bf16.mxu0 0
    %612 = vmatpush1.bf16.msra.mxu0 0
    %613 = vmatprep.subr.bf16.mxu0 0
    %614 = vmatpush1.bf16.msra.mxu0 0
    %615 = vmatprep.subr.bf16.mxu0 0
    %616 = vmatpush1.bf16.msra.mxu0 0
    %617 = vmatprep.subr.bf16.mxu0 0
    %618 = vmatpush1.bf16.msra.mxu0 0
    %619 = vmatprep.subr.bf16.mxu0 0
    %620 = vmatpush1.bf16.msra.mxu0 0
    %621 = vmatprep.subr.bf16.mxu0 0
    %622 = vmatpush1.bf16.msra.mxu0 0
    %623 = vmatprep.subr.bf16.mxu0 0
    %624 = vmatpush1.bf16.msra.mxu0 0
    %625 = vmatprep.subr.bf16.mxu0 0
    %626 = vmatpush1.bf16.msra.mxu0 0
    %627 = vmatprep.subr.bf16.mxu0 0
    %628 = vmatpush1.bf16.msra.mxu0 0
    %629 = vmatprep.subr.bf16.mxu0 0
    %630 = vmatpush1.bf16.msra.mxu0 0
    %631 = vmatprep.mubr.bf16.mxu0 0
    %632 = vmatmul.mubr.bf16.gmra.mrb[0].mxu0 %v351
    %v633 = vpop.f32.mrb[0].mxu0
    %v634 = vadd.f32 %v203, %v633
    %v635 = vpop.f32.mrb[0].mxu0
    %v636 = vpop.f32.mrb[0].mxu0
    %v637 = vpop.f32.mrb[0].mxu0
    %638 = vdwg.mxu0
    %v639 = vmax.f32 %v388, 0.0
    %v640 = vmax.f32 %v390, 0.0
    %v641 = vmax.f32 %v429, 0.0
    %v642 = vmax.f32 %v431, 0.0
    %v643 = vmax.f32 %v470, 0.0
    %v644 = vmax.f32 %v472, 0.0
    %v645 = vmax.f32 %v511, 0.0
    %v646 = vmax.f32 %v513, 0.0
    %v647 = vmax.f32 %v552, 0.0
    %v648 = vmax.f32 %v554, 0.0
    %v649 = vmax.f32 %v593, 0.0
    %v650 = vmax.f32 %v595, 0.0
    %v651 = vmax.f32 %v634, 0.0
    %v652 = vpack.c.bf16 %v639, %v639
    %v653 = vpack.c.bf16 %v640, %v640
    %v654 = vpack.c.bf16 %v641, %v641
    %v655 = vpack.c.bf16 %v642, %v642
    %v656 = vpack.c.bf16 %v643, %v643
    %v657 = vpack.c.bf16 %v644, %v644
    %v658 = vpack.c.bf16 %v645, %v645
    %v659 = vpack.c.bf16 %v646, %v646
    %v660 = vpack.c.bf16 %v647, %v647
    %v661 = vpack.c.bf16 %v648, %v648
    %v662 = vpack.c.bf16 %v649, %v649
    %v663 = vpack.c.bf16 %v650, %v650
    %v664 = vpack.c.bf16 %v651, %v651
    %v665 = vld [vmem:[#allocation10] sm:$0xff]
    %v666 = vld [vmem:[#allocation10 + $0x8] sm:$0xff]
    %v667 = vld [vmem:[#allocation10 + $0x10] sm:$0xff]
    %v668 = vld [vmem:[#allocation10 + $0x18] sm:$0xff]
    %v669 = vld [vmem:[#allocation10 + $0x20] sm:$0xff]
    %v670 = vld [vmem:[#allocation10 + $0x28] sm:$0xff]
    %v671 = vld [vmem:[#allocation10 + $0x30] sm:$0xf]
    %v672 = vld [vmem:[#allocation10 + $0x34] sm:$0xff]
    %v673 = vld [vmem:[#allocation10 + $0x3c] sm:$0xff]
    %v674 = vld [vmem:[#allocation10 + $0x44] sm:$0xff]
    %v675 = vld [vmem:[#allocation10 + $0x4c] sm:$0xff]
    %v676 = vld [vmem:[#allocation10 + $0x54] sm:$0xff]
    %v677 = vld [vmem:[#allocation10 + $0x5c] sm:$0xff]
    %v678 = vld [vmem:[#allocation10 + $0x64] sm:$0xf]
    %v679 = vld [vmem:[#allocation10 + $0x68] sm:$0xff]
    %v680 = vld [vmem:[#allocation10 + $0x70] sm:$0xff]
    %v681 = vld [vmem:[#allocation10 + $0x78] sm:$0xff]
    %v682 = vld [vmem:[#allocation10 + $0x80] sm:$0xff]
    %v683 = vld [vmem:[#allocation10 + $0x88] sm:$0xff]
    %v684 = vld [vmem:[#allocation10 + $0x90] sm:$0xff]
    %v685 = vld [vmem:[#allocation10 + $0x98] sm:$0xf]
    %v686 = vld [vmem:[#allocation10 + $0x9c] sm:$0xff]
    %v687 = vld [vmem:[#allocation10 + $0xa4] sm:$0xff]
    %v688 = vld [vmem:[#allocation10 + $0xac] sm:$0xff]
    %v689 = vld [vmem:[#allocation10 + $0xb4] sm:$0xff]
    %v690 = vld [vmem:[#allocation10 + $0xbc] sm:$0xff]
    %v691 = vld [vmem:[#allocation10 + $0xc4] sm:$0xff]
    %v692 = vld [vmem:[#allocation10 + $0xcc] sm:$0xf]
    %v693 = vld [vmem:[#allocation10 + $0xd0] sm:$0xff]
    %v694 = vld [vmem:[#allocation10 + $0xd8] sm:$0xff]
    %v695 = vld [vmem:[#allocation10 + $0xe0] sm:$0xff]
    %v696 = vld [vmem:[#allocation10 + $0xe8] sm:$0xff]
    %v697 = vld [vmem:[#allocation10 + $0xf0] sm:$0xff]
    %v698 = vld [vmem:[#allocation10 + $0xf8] sm:$0xff]
    %v699 = vld [vmem:[#allocation10 + $0x100] sm:$0xf]
    %v700 = vld [vmem:[#allocation10 + $0x104] sm:$0xff]
    %v701 = vld [vmem:[#allocation10 + $0x10c] sm:$0xff]
    %v702 = vld [vmem:[#allocation10 + $0x114] sm:$0xff]
    %v703 = vld [vmem:[#allocation10 + $0x11c] sm:$0xff]
    %v704 = vld [vmem:[#allocation10 + $0x124] sm:$0xff]
    %v705 = vld [vmem:[#allocation10 + $0x12c] sm:$0xff]
    %v706 = vld [vmem:[#allocation10 + $0x134] sm:$0xf]
    %v707 = vld [vmem:[#allocation10 + $0x138] sm:$0xff]
    %v708 = vld [vmem:[#allocation10 + $0x140] sm:$0xff]
    %v709 = vld [vmem:[#allocation10 + $0x148] sm:$0xff]
    %v710 = vld [vmem:[#allocation10 + $0x150] sm:$0xff]
    %v711 = vld [vmem:[#allocation10 + $0x158] sm:$0xff]
    %v712 = vld [vmem:[#allocation10 + $0x160] sm:$0xff]
    %v713 = vld [vmem:[#allocation10 + $0x168] sm:$0xf]
    %v714 = vld [vmem:[#allocation10 + $0x16c] sm:$0xff]
    %v715 = vld [vmem:[#allocation10 + $0x174] sm:$0xff]
    %v716 = vld [vmem:[#allocation10 + $0x17c] sm:$0xff]
    %v717 = vld [vmem:[#allocation10 + $0x184] sm:$0xff]
    %v718 = vld [vmem:[#allocation10 + $0x18c] sm:$0xff]
    %v719 = vld [vmem:[#allocation10 + $0x194] sm:$0xff]
    %v720 = vld [vmem:[#allocation10 + $0x19c] sm:$0xf]
    %v721 = vld [vmem:[#allocation10 + $0x1a0] sm:$0xff]
    %v722 = vld [vmem:[#allocation10 + $0x1a8] sm:$0xff]
    %v723 = vld [vmem:[#allocation10 + $0x1b0] sm:$0xff]
    %v724 = vld [vmem:[#allocation10 + $0x1b8] sm:$0xff]
    %v725 = vld [vmem:[#allocation10 + $0x1c0] sm:$0xff]
    %v726 = vld [vmem:[#allocation10 + $0x1c8] sm:$0xff]
    %v727 = vld [vmem:[#allocation10 + $0x1d0] sm:$0xf]
    %v728 = vld [vmem:[#allocation10 + $0x1d4] sm:$0xff]
    %v729 = vld [vmem:[#allocation10 + $0x1dc] sm:$0xff]
    %v730 = vld [vmem:[#allocation10 + $0x1e4] sm:$0xff]
    %v731 = vld [vmem:[#allocation10 + $0x1ec] sm:$0xff]
    %v732 = vld [vmem:[#allocation10 + $0x1f4] sm:$0xff]
    %v733 = vld [vmem:[#allocation10 + $0x1fc] sm:$0xff]
    %v734 = vld [vmem:[#allocation10 + $0x204] sm:$0xf]
    %v735 = vld [vmem:[#allocation10 + $0x208] sm:$0xff]
    %v736 = vld [vmem:[#allocation10 + $0x210] sm:$0xff]
    %v737 = vld [vmem:[#allocation10 + $0x218] sm:$0xff]
    %v738 = vld [vmem:[#allocation10 + $0x220] sm:$0xff]
    %v739 = vld [vmem:[#allocation10 + $0x228] sm:$0xff]
    %v740 = vld [vmem:[#allocation10 + $0x230] sm:$0xff]
    %v741 = vld [vmem:[#allocation10 + $0x238] sm:$0xf]
    %v742 = vld [vmem:[#allocation10 + $0x23c] sm:$0xff]
    %v743 = vld [vmem:[#allocation10 + $0x244] sm:$0xff]
    %v744 = vld [vmem:[#allocation10 + $0x24c] sm:$0xff]
    %v745 = vld [vmem:[#allocation10 + $0x254] sm:$0xff]
    %v746 = vld [vmem:[#allocation10 + $0x25c] sm:$0xff]
    %v747 = vld [vmem:[#allocation10 + $0x264] sm:$0xff]
    %v748 = vld [vmem:[#allocation10 + $0x26c] sm:$0xf]
    %v749 = vld [vmem:[#allocation10 + $0x270] sm:$0xff]
    %v750 = vld [vmem:[#allocation10 + $0x278] sm:$0xff]
    %v751 = vld [vmem:[#allocation10 + $0x280] sm:$0xff]
    %v752 = vld [vmem:[#allocation10 + $0x288] sm:$0xff]
    %v753 = vld [vmem:[#allocation10 + $0x290] sm:$0xff]
    %v754 = vld [vmem:[#allocation10 + $0x298] sm:$0xff]
    %v755 = vld [vmem:[#allocation10 + $0x2a0] sm:$0xf]
    %v756 = vld [vmem:[#allocation10 + $0x2a4] sm:$0xff]
    %v757 = vld [vmem:[#allocation10 + $0x2ac] sm:$0xff]
    %v758 = vld [vmem:[#allocation10 + $0x2b4] sm:$0xff]
    %v759 = vld [vmem:[#allocation10 + $0x2bc] sm:$0xff]
    %v760 = vld [vmem:[#allocation10 + $0x2c4] sm:$0xff]
    %v761 = vld [vmem:[#allocation10 + $0x2cc] sm:$0xff]
    %v762 = vld [vmem:[#allocation10 + $0x2d4] sm:$0xf]
    %v763 = vld [vmem:[#allocation10 + $0x2d8] sm:$0xff]
    %v764 = vld [vmem:[#allocation10 + $0x2e0] sm:$0xff]
    %v765 = vld [vmem:[#allocation10 + $0x2e8] sm:$0xff]
    %v766 = vld [vmem:[#allocation10 + $0x2f0] sm:$0xff]
    %v767 = vld [vmem:[#allocation10 + $0x2f8] sm:$0xff]
    %v768 = vld [vmem:[#allocation10 + $0x300] sm:$0xff]
    %v769 = vld [vmem:[#allocation10 + $0x308] sm:$0xf]
    %v770 = vld [vmem:[#allocation10 + $0x30c] sm:$0xff]
    %v771 = vld [vmem:[#allocation10 + $0x314] sm:$0xff]
    %v772 = vld [vmem:[#allocation10 + $0x31c] sm:$0xff]
    %v773 = vld [vmem:[#allocation10 + $0x324] sm:$0xff]
    %v774 = vld [vmem:[#allocation10 + $0x32c] sm:$0xff]
    %v775 = vld [vmem:[#allocation10 + $0x334] sm:$0xff]
    %v776 = vld [vmem:[#allocation10 + $0x33c] sm:$0xf]
    %v777 = vld [vmem:[#allocation10 + $0x340] sm:$0xff]
    %v778 = vld [vmem:[#allocation10 + $0x348] sm:$0xff]
    %v779 = vld [vmem:[#allocation10 + $0x350] sm:$0xff]
    %v780 = vld [vmem:[#allocation10 + $0x358] sm:$0xff]
    %v781 = vld [vmem:[#allocation10 + $0x360] sm:$0xff]
    %v782 = vld [vmem:[#allocation10 + $0x368] sm:$0xff]
    %v783 = vld [vmem:[#allocation10 + $0x370] sm:$0xf]
    %v784 = vld [vmem:[#allocation10 + $0x374] sm:$0xff]
    %v785 = vld [vmem:[#allocation10 + $0x37c] sm:$0xff]
    %v786 = vld [vmem:[#allocation10 + $0x384] sm:$0xff]
    %v787 = vld [vmem:[#allocation10 + $0x38c] sm:$0xff]
    %v788 = vld [vmem:[#allocation10 + $0x394] sm:$0xff]
    %v789 = vld [vmem:[#allocation10 + $0x39c] sm:$0xff]
    %v790 = vld [vmem:[#allocation10 + $0x3a4] sm:$0xf]
    %v791 = vld [vmem:[#allocation10 + $0x3a8] sm:$0xff]
    %v792 = vld [vmem:[#allocation10 + $0x3b0] sm:$0xff]
    %v793 = vld [vmem:[#allocation10 + $0x3b8] sm:$0xff]
    %v794 = vld [vmem:[#allocation10 + $0x3c0] sm:$0xff]
    %v795 = vld [vmem:[#allocation10 + $0x3c8] sm:$0xff]
    %v796 = vld [vmem:[#allocation10 + $0x3d0] sm:$0xff]
    %v797 = vld [vmem:[#allocation10 + $0x3d8] sm:$0xf]
    %v798 = vld [vmem:[#allocation10 + $0x3dc] sm:$0xff]
    %v799 = vld [vmem:[#allocation10 + $0x3e4] sm:$0xff]
    %v800 = vld [vmem:[#allocation10 + $0x3ec] sm:$0xff]
    %v801 = vld [vmem:[#allocation10 + $0x3f4] sm:$0xff]
    %v802 = vld [vmem:[#allocation10 + $0x3fc] sm:$0xff]
    %v803 = vld [vmem:[#allocation10 + $0x404] sm:$0xff]
    %v804 = vld [vmem:[#allocation10 + $0x40c] sm:$0xf]
    %v805 = vld [vmem:[#allocation10 + $0x410] sm:$0xff]
    %v806 = vld [vmem:[#allocation10 + $0x418] sm:$0xff]
    %v807 = vld [vmem:[#allocation10 + $0x420] sm:$0xff]
    %v808 = vld [vmem:[#allocation10 + $0x428] sm:$0xff]
    %v809 = vld [vmem:[#allocation10 + $0x430] sm:$0xff]
    %v810 = vld [vmem:[#allocation10 + $0x438] sm:$0xff]
    %v811 = vld [vmem:[#allocation10 + $0x440] sm:$0xf]
    %v812 = vld [vmem:[#allocation10 + $0x444] sm:$0xff]
    %v813 = vld [vmem:[#allocation10 + $0x44c] sm:$0xff]
    %v814 = vld [vmem:[#allocation10 + $0x454] sm:$0xff]
    %v815 = vld [vmem:[#allocation10 + $0x45c] sm:$0xff]
    %v816 = vld [vmem:[#allocation10 + $0x464] sm:$0xff]
    %v817 = vld [vmem:[#allocation10 + $0x46c] sm:$0xff]
    %v818 = vld [vmem:[#allocation10 + $0x474] sm:$0xf]
    %v819 = vld [vmem:[#allocation10 + $0x478] sm:$0xff]
    %v820 = vld [vmem:[#allocation10 + $0x480] sm:$0xff]
    %v821 = vld [vmem:[#allocation10 + $0x488] sm:$0xff]
    %v822 = vld [vmem:[#allocation10 + $0x490] sm:$0xff]
    %v823 = vld [vmem:[#allocation10 + $0x498] sm:$0xff]
    %v824 = vld [vmem:[#allocation10 + $0x4a0] sm:$0xff]
    %v825 = vld [vmem:[#allocation10 + $0x4a8] sm:$0xf]
    %v826 = vld [vmem:[#allocation10 + $0x4ac] sm:$0xff]
    %v827 = vld [vmem:[#allocation10 + $0x4b4] sm:$0xff]
    %v828 = vld [vmem:[#allocation10 + $0x4bc] sm:$0xff]
    %v829 = vld [vmem:[#allocation10 + $0x4c4] sm:$0xff]
    %v830 = vld [vmem:[#allocation10 + $0x4cc] sm:$0xff]
    %v831 = vld [vmem:[#allocation10 + $0x4d4] sm:$0xff]
    %v832 = vld [vmem:[#allocation10 + $0x4dc] sm:$0xf]
    %v833 = vld [vmem:[#allocation10 + $0x4e0] sm:$0xff]
    %v834 = vld [vmem:[#allocation10 + $0x4e8] sm:$0xff]
    %v835 = vld [vmem:[#allocation10 + $0x4f0] sm:$0xff]
    %v836 = vld [vmem:[#allocation10 + $0x4f8] sm:$0xff]
    %v837 = vld [vmem:[#allocation10 + $0x500] sm:$0xff]
    %v838 = vld [vmem:[#allocation10 + $0x508] sm:$0xff]
    %v839 = vld [vmem:[#allocation10 + $0x510] sm:$0xf]
    %v840 = vld [vmem:[#allocation10 + $0x514] sm:$0xff]
    %v841 = vld [vmem:[#allocation10 + $0x51c] sm:$0xff]
    %v842 = vld [vmem:[#allocation10 + $0x524] sm:$0xff]
    %v843 = vld [vmem:[#allocation10 + $0x52c] sm:$0xff]
    %v844 = vld [vmem:[#allocation10 + $0x534] sm:$0xff]
    %v845 = vld [vmem:[#allocation10 + $0x53c] sm:$0xff]
    %v846 = vld [vmem:[#allocation10 + $0x544] sm:$0xf]
    %v847 = vld [vmem:[#allocation10 + $0x548] sm:$0xff]
    %v848 = vld [vmem:[#allocation10 + $0x550] sm:$0xff]
    %v849 = vld [vmem:[#allocation10 + $0x558] sm:$0xff]
    %v850 = vld [vmem:[#allocation10 + $0x560] sm:$0xff]
    %v851 = vld [vmem:[#allocation10 + $0x568] sm:$0xff]
    %v852 = vld [vmem:[#allocation10 + $0x570] sm:$0xff]
    %v853 = vld [vmem:[#allocation10 + $0x578] sm:$0xf]
    %v854 = vld [vmem:[#allocation10 + $0x57c] sm:$0xff]
    %v855 = vld [vmem:[#allocation10 + $0x584] sm:$0xff]
    %v856 = vld [vmem:[#allocation10 + $0x58c] sm:$0xff]
    %v857 = vld [vmem:[#allocation10 + $0x594] sm:$0xff]
    %v858 = vld [vmem:[#allocation10 + $0x59c] sm:$0xff]
    %v859 = vld [vmem:[#allocation10 + $0x5a4] sm:$0xff]
    %v860 = vld [vmem:[#allocation10 + $0x5ac] sm:$0xf]
    %v861 = vld [vmem:[#allocation10 + $0x5b0] sm:$0xff]
    %v862 = vld [vmem:[#allocation10 + $0x5b8] sm:$0xff]
    %v863 = vld [vmem:[#allocation10 + $0x5c0] sm:$0xff]
    %v864 = vld [vmem:[#allocation10 + $0x5c8] sm:$0xff]
    %v865 = vld [vmem:[#allocation10 + $0x5d0] sm:$0xff]
    %v866 = vld [vmem:[#allocation10 + $0x5d8] sm:$0xff]
    %v867 = vld [vmem:[#allocation10 + $0x5e0] sm:$0xf]
    %v868 = vld [vmem:[#allocation10 + $0x5e4] sm:$0xff]
    %v869 = vld [vmem:[#allocation10 + $0x5ec] sm:$0xff]
    %v870 = vld [vmem:[#allocation10 + $0x5f4] sm:$0xff]
    %v871 = vld [vmem:[#allocation10 + $0x5fc] sm:$0xff]
    %v872 = vld [vmem:[#allocation10 + $0x604] sm:$0xff]
    %v873 = vld [vmem:[#allocation10 + $0x60c] sm:$0xff]
    %v874 = vld [vmem:[#allocation10 + $0x614] sm:$0xf]
    %v875 = vld [vmem:[#allocation10 + $0x618] sm:$0xff]
    %v876 = vld [vmem:[#allocation10 + $0x620] sm:$0xff]
    %v877 = vld [vmem:[#allocation10 + $0x628] sm:$0xff]
    %v878 = vld [vmem:[#allocation10 + $0x630] sm:$0xff]
    %v879 = vld [vmem:[#allocation10 + $0x638] sm:$0xff]
    %v880 = vld [vmem:[#allocation10 + $0x640] sm:$0xff]
    %v881 = vld [vmem:[#allocation10 + $0x648] sm:$0xf]
    %v882 = vld [vmem:[#allocation10 + $0x64c] sm:$0xff]
    %v883 = vld [vmem:[#allocation10 + $0x654] sm:$0xff]
    %v884 = vld [vmem:[#allocation10 + $0x65c] sm:$0xff]
    %v885 = vld [vmem:[#allocation10 + $0x664] sm:$0xff]
    %v886 = vld [vmem:[#allocation10 + $0x66c] sm:$0xff]
    %v887 = vld [vmem:[#allocation10 + $0x674] sm:$0xff]
    %v888 = vld [vmem:[#allocation10 + $0x67c] sm:$0xf]
    %v889 = vld [vmem:[#allocation10 + $0x680] sm:$0xff]
    %v890 = vld [vmem:[#allocation10 + $0x688] sm:$0xff]
    %v891 = vld [vmem:[#allocation10 + $0x690] sm:$0xff]
    %v892 = vld [vmem:[#allocation10 + $0x698] sm:$0xff]
    %v893 = vld [vmem:[#allocation10 + $0x6a0] sm:$0xff]
    %v894 = vld [vmem:[#allocation10 + $0x6a8] sm:$0xff]
    %v895 = vld [vmem:[#allocation10 + $0x6b0] sm:$0xf]
    %v896 = vld [vmem:[#allocation10 + $0x6b4] sm:$0xff]
    %v897 = vld [vmem:[#allocation10 + $0x6bc] sm:$0xff]
    %v898 = vld [vmem:[#allocation10 + $0x6c4] sm:$0xff]
    %v899 = vld [vmem:[#allocation10 + $0x6cc] sm:$0xff]
    %v900 = vld [vmem:[#allocation10 + $0x6d4] sm:$0xff]
    %v901 = vld [vmem:[#allocation10 + $0x6dc] sm:$0xff]
    %v902 = vld [vmem:[#allocation10 + $0x6e4] sm:$0xf]
    %v903 = vld [vmem:[#allocation10 + $0x6e8] sm:$0xff]
    %v904 = vld [vmem:[#allocation10 + $0x6f0] sm:$0xff]
    %v905 = vld [vmem:[#allocation10 + $0x6f8] sm:$0xff]
    %v906 = vld [vmem:[#allocation10 + $0x700] sm:$0xff]
    %v907 = vld [vmem:[#allocation10 + $0x708] sm:$0xff]
    %v908 = vld [vmem:[#allocation10 + $0x710] sm:$0xff]
    %v909 = vld [vmem:[#allocation10 + $0x718] sm:$0xf]
    %v910 = vld [vmem:[#allocation10 + $0x71c] sm:$0xff]
    %v911 = vld [vmem:[#allocation10 + $0x724] sm:$0xff]
    %v912 = vld [vmem:[#allocation10 + $0x72c] sm:$0xff]
    %v913 = vld [vmem:[#allocation10 + $0x734] sm:$0xff]
    %v914 = vld [vmem:[#allocation10 + $0x73c] sm:$0xff]
    %v915 = vld [vmem:[#allocation10 + $0x744] sm:$0xff]
    %v916 = vld [vmem:[#allocation10 + $0x74c] sm:$0xf]
    %v917 = vld [vmem:[#allocation10 + $0x750] sm:$0xff]
    %v918 = vld [vmem:[#allocation10 + $0x758] sm:$0xff]
    %v919 = vld [vmem:[#allocation10 + $0x760] sm:$0xff]
    %v920 = vld [vmem:[#allocation10 + $0x768] sm:$0xff]
    %v921 = vld [vmem:[#allocation10 + $0x770] sm:$0xff]
    %v922 = vld [vmem:[#allocation10 + $0x778] sm:$0xff]
    %v923 = vld [vmem:[#allocation10 + $0x780] sm:$0xf]
    %v924 = vld [vmem:[#allocation10 + $0x784] sm:$0xff]
    %v925 = vld [vmem:[#allocation10 + $0x78c] sm:$0xff]
    %v926 = vld [vmem:[#allocation10 + $0x794] sm:$0xff]
    %v927 = vld [vmem:[#allocation10 + $0x79c] sm:$0xff]
    %v928 = vld [vmem:[#allocation10 + $0x7a4] sm:$0xff]
    %v929 = vld [vmem:[#allocation10 + $0x7ac] sm:$0xff]
    %v930 = vld [vmem:[#allocation10 + $0x7b4] sm:$0xf]
    %v931 = vld [vmem:[#allocation10 + $0x7b8] sm:$0xff]
    %v932 = vld [vmem:[#allocation10 + $0x7c0] sm:$0xff]
    %v933 = vld [vmem:[#allocation10 + $0x7c8] sm:$0xff]
    %v934 = vld [vmem:[#allocation10 + $0x7d0] sm:$0xff]
    %v935 = vld [vmem:[#allocation10 + $0x7d8] sm:$0xff]
    %v936 = vld [vmem:[#allocation10 + $0x7e0] sm:$0xff]
    %v937 = vld [vmem:[#allocation10 + $0x7e8] sm:$0xf]
    %v938 = vld [vmem:[#allocation10 + $0x7ec] sm:$0xff]
    %v939 = vld [vmem:[#allocation10 + $0x7f4] sm:$0xff]
    %v940 = vld [vmem:[#allocation10 + $0x7fc] sm:$0xff]
    %v941 = vld [vmem:[#allocation10 + $0x804] sm:$0xff]
    %v942 = vld [vmem:[#allocation10 + $0x80c] sm:$0xff]
    %v943 = vld [vmem:[#allocation10 + $0x814] sm:$0xff]
    %v944 = vld [vmem:[#allocation10 + $0x81c] sm:$0xf]
    %v945 = vld [vmem:[#allocation10 + $0x820] sm:$0xff]
    %v946 = vld [vmem:[#allocation10 + $0x828] sm:$0xff]
    %v947 = vld [vmem:[#allocation10 + $0x830] sm:$0xff]
    %v948 = vld [vmem:[#allocation10 + $0x838] sm:$0xff]
    %v949 = vld [vmem:[#allocation10 + $0x840] sm:$0xff]
    %v950 = vld [vmem:[#allocation10 + $0x848] sm:$0xff]
    %v951 = vld [vmem:[#allocation10 + $0x850] sm:$0xf]
    %v952 = vld [vmem:[#allocation10 + $0x854] sm:$0xff]
    %v953 = vld [vmem:[#allocation10 + $0x85c] sm:$0xff]
    %v954 = vld [vmem:[#allocation10 + $0x864] sm:$0xff]
    %v955 = vld [vmem:[#allocation10 + $0x86c] sm:$0xff]
    %v956 = vld [vmem:[#allocation10 + $0x874] sm:$0xff]
    %v957 = vld [vmem:[#allocation10 + $0x87c] sm:$0xff]
    %v958 = vld [vmem:[#allocation10 + $0x884] sm:$0xf]
    %v959 = vld [vmem:[#allocation10 + $0x888] sm:$0xff]
    %v960 = vld [vmem:[#allocation10 + $0x890] sm:$0xff]
    %v961 = vld [vmem:[#allocation10 + $0x898] sm:$0xff]
    %v962 = vld [vmem:[#allocation10 + $0x8a0] sm:$0xff]
    %v963 = vld [vmem:[#allocation10 + $0x8a8] sm:$0xff]
    %v964 = vld [vmem:[#allocation10 + $0x8b0] sm:$0xff]
    %v965 = vld [vmem:[#allocation10 + $0x8b8] sm:$0xf]
    %v966 = vld [vmem:[#allocation10 + $0x8bc] sm:$0xff]
    %v967 = vld [vmem:[#allocation10 + $0x8c4] sm:$0xff]
    %v968 = vld [vmem:[#allocation10 + $0x8cc] sm:$0xff]
    %v969 = vld [vmem:[#allocation10 + $0x8d4] sm:$0xff]
    %v970 = vld [vmem:[#allocation10 + $0x8dc] sm:$0xff]
    %v971 = vld [vmem:[#allocation10 + $0x8e4] sm:$0xff]
    %v972 = vld [vmem:[#allocation10 + $0x8ec] sm:$0xf]
    %v973 = vld [vmem:[#allocation10 + $0x8f0] sm:$0xff]
    %v974 = vld [vmem:[#allocation10 + $0x8f8] sm:$0xff]
    %v975 = vld [vmem:[#allocation10 + $0x900] sm:$0xff]
    %v976 = vld [vmem:[#allocation10 + $0x908] sm:$0xff]
    %v977 = vld [vmem:[#allocation10 + $0x910] sm:$0xff]
    %v978 = vld [vmem:[#allocation10 + $0x918] sm:$0xff]
    %v979 = vld [vmem:[#allocation10 + $0x920] sm:$0xf]
    %v980 = vld [vmem:[#allocation10 + $0x924] sm:$0xff]
    %v981 = vld [vmem:[#allocation10 + $0x92c] sm:$0xff]
    %v982 = vld [vmem:[#allocation10 + $0x934] sm:$0xff]
    %v983 = vld [vmem:[#allocation10 + $0x93c] sm:$0xff]
    %v984 = vld [vmem:[#allocation10 + $0x944] sm:$0xff]
    %v985 = vld [vmem:[#allocation10 + $0x94c] sm:$0xff]
    %v986 = vld [vmem:[#allocation10 + $0x954] sm:$0xf]
    %v987 = vld [vmem:[#allocation10 + $0x958] sm:$0xff]
    %v988 = vld [vmem:[#allocation10 + $0x960] sm:$0xff]
    %v989 = vld [vmem:[#allocation10 + $0x968] sm:$0xff]
    %v990 = vld [vmem:[#allocation10 + $0x970] sm:$0xff]
    %v991 = vld [vmem:[#allocation10 + $0x978] sm:$0xff]
    %v992 = vld [vmem:[#allocation10 + $0x980] sm:$0xff]
    %v993 = vld [vmem:[#allocation10 + $0x988] sm:$0xf]
    %v994 = vld [vmem:[#allocation10 + $0x98c] sm:$0xff]
    %v995 = vld [vmem:[#allocation10 + $0x994] sm:$0xff]
    %v996 = vld [vmem:[#allocation10 + $0x99c] sm:$0xff]
    %v997 = vld [vmem:[#allocation10 + $0x9a4] sm:$0xff]
    %v998 = vld [vmem:[#allocation10 + $0x9ac] sm:$0xff]
    %v999 = vld [vmem:[#allocation10 + $0x9b4] sm:$0xff]
    %v1000 = vld [vmem:[#allocation10 + $0x9bc] sm:$0xf]
    %v1001 = vld [vmem:[#allocation10 + $0x9c0] sm:$0xff]
    %v1002 = vld [vmem:[#allocation10 + $0x9c8] sm:$0xff]
    %v1003 = vld [vmem:[#allocation10 + $0x9d0] sm:$0xff]
    %v1004 = vld [vmem:[#allocation10 + $0x9d8] sm:$0xff]
    %v1005 = vld [vmem:[#allocation10 + $0x9e0] sm:$0xff]
    %v1006 = vld [vmem:[#allocation10 + $0x9e8] sm:$0xff]
    %v1007 = vld [vmem:[#allocation10 + $0x9f0] sm:$0xf]
    %v1008 = vld [vmem:[#allocation10 + $0x9f4] sm:$0xff]
    %v1009 = vld [vmem:[#allocation10 + $0x9fc] sm:$0xff]
    %v1010 = vld [vmem:[#allocation10 + $0xa04] sm:$0xff]
    %v1011 = vld [vmem:[#allocation10 + $0xa0c] sm:$0xff]
    %v1012 = vld [vmem:[#allocation10 + $0xa14] sm:$0xff]
    %v1013 = vld [vmem:[#allocation10 + $0xa1c] sm:$0xff]
    %v1014 = vld [vmem:[#allocation10 + $0xa24] sm:$0xf]
    %v1015 = vld [vmem:[#allocation10 + $0xa28] sm:$0xff]
    %v1016 = vld [vmem:[#allocation10 + $0xa30] sm:$0xff]
    %v1017 = vld [vmem:[#allocation10 + $0xa38] sm:$0xff]
    %v1018 = vld [vmem:[#allocation10 + $0xa40] sm:$0xff]
    %v1019 = vld [vmem:[#allocation10 + $0xa48] sm:$0xff]
    %v1020 = vld [vmem:[#allocation10 + $0xa50] sm:$0xff]
    %v1021 = vld [vmem:[#allocation10 + $0xa58] sm:$0xf]
    %v1022 = vld [vmem:[#allocation10 + $0xa5c] sm:$0xff]
    %v1023 = vld [vmem:[#allocation10 + $0xa64] sm:$0xff]
    %v1024 = vld [vmem:[#allocation10 + $0xa6c] sm:$0xff]
    %v1025 = vld [vmem:[#allocation10 + $0xa74] sm:$0xff]
    %v1026 = vld [vmem:[#allocation10 + $0xa7c] sm:$0xff]
    %v1027 = vld [vmem:[#allocation10 + $0xa84] sm:$0xff]
    %v1028 = vld [vmem:[#allocation10 + $0xa8c] sm:$0xf]
    %v1029 = vld [vmem:[#allocation10 + $0xa90] sm:$0xff]
    %v1030 = vld [vmem:[#allocation10 + $0xa98] sm:$0xff]
    %v1031 = vld [vmem:[#allocation10 + $0xaa0] sm:$0xff]
    %v1032 = vld [vmem:[#allocation10 + $0xaa8] sm:$0xff]
    %v1033 = vld [vmem:[#allocation10 + $0xab0] sm:$0xff]
    %v1034 = vld [vmem:[#allocation10 + $0xab8] sm:$0xff]
    %v1035 = vld [vmem:[#allocation10 + $0xac0] sm:$0xf]
    %v1036 = vld [vmem:[#allocation10 + $0xac4] sm:$0xff]
    %v1037 = vld [vmem:[#allocation10 + $0xacc] sm:$0xff]
    %v1038 = vld [vmem:[#allocation10 + $0xad4] sm:$0xff]
    %v1039 = vld [vmem:[#allocation10 + $0xadc] sm:$0xff]
    %v1040 = vld [vmem:[#allocation10 + $0xae4] sm:$0xff]
    %v1041 = vld [vmem:[#allocation10 + $0xaec] sm:$0xff]
    %v1042 = vld [vmem:[#allocation10 + $0xaf4] sm:$0xf]
    %v1043 = vld [vmem:[#allocation10 + $0xaf8] sm:$0xff]
    %v1044 = vld [vmem:[#allocation10 + $0xb00] sm:$0xff]
    %v1045 = vld [vmem:[#allocation10 + $0xb08] sm:$0xff]
    %v1046 = vld [vmem:[#allocation10 + $0xb10] sm:$0xff]
    %v1047 = vld [vmem:[#allocation10 + $0xb18] sm:$0xff]
    %v1048 = vld [vmem:[#allocation10 + $0xb20] sm:$0xff]
    %v1049 = vld [vmem:[#allocation10 + $0xb28] sm:$0xf]
    %v1050 = vld [vmem:[#allocation10 + $0xb2c] sm:$0xff]
    %v1051 = vld [vmem:[#allocation10 + $0xb34] sm:$0xff]
    %v1052 = vld [vmem:[#allocation10 + $0xb3c] sm:$0xff]
    %v1053 = vld [vmem:[#allocation10 + $0xb44] sm:$0xff]
    %v1054 = vld [vmem:[#allocation10 + $0xb4c] sm:$0xff]
    %v1055 = vld [vmem:[#allocation10 + $0xb54] sm:$0xff]
    %v1056 = vld [vmem:[#allocation10 + $0xb5c] sm:$0xf]
    %v1057 = vld [vmem:[#allocation10 + $0xb60] sm:$0xff]
    %v1058 = vld [vmem:[#allocation10 + $0xb68] sm:$0xff]
    %v1059 = vld [vmem:[#allocation10 + $0xb70] sm:$0xff]
    %v1060 = vld [vmem:[#allocation10 + $0xb78] sm:$0xff]
    %v1061 = vld [vmem:[#allocation10 + $0xb80] sm:$0xff]
    %v1062 = vld [vmem:[#allocation10 + $0xb88] sm:$0xff]
    %v1063 = vld [vmem:[#allocation10 + $0xb90] sm:$0xf]
    %v1064 = vld [vmem:[#allocation10 + $0xb94] sm:$0xff]
    %v1065 = vld [vmem:[#allocation10 + $0xb9c] sm:$0xff]
    %v1066 = vld [vmem:[#allocation10 + $0xba4] sm:$0xff]
    %v1067 = vld [vmem:[#allocation10 + $0xbac] sm:$0xff]
    %v1068 = vld [vmem:[#allocation10 + $0xbb4] sm:$0xff]
    %v1069 = vld [vmem:[#allocation10 + $0xbbc] sm:$0xff]
    %v1070 = vld [vmem:[#allocation10 + $0xbc4] sm:$0xf]
    %v1071 = vld [vmem:[#allocation10 + $0xbc8] sm:$0xff]
    %v1072 = vld [vmem:[#allocation10 + $0xbd0] sm:$0xff]
    %v1073 = vld [vmem:[#allocation10 + $0xbd8] sm:$0xff]
    %v1074 = vld [vmem:[#allocation10 + $0xbe0] sm:$0xff]
    %v1075 = vld [vmem:[#allocation10 + $0xbe8] sm:$0xff]
    %v1076 = vld [vmem:[#allocation10 + $0xbf0] sm:$0xff]
    %v1077 = vld [vmem:[#allocation10 + $0xbf8] sm:$0xf]
    %v1078 = vld [vmem:[#allocation10 + $0xbfc] sm:$0xff]
    %v1079 = vld [vmem:[#allocation10 + $0xc04] sm:$0xff]
    %v1080 = vld [vmem:[#allocation10 + $0xc0c] sm:$0xff]
    %v1081 = vld [vmem:[#allocation10 + $0xc14] sm:$0xff]
    %v1082 = vld [vmem:[#allocation10 + $0xc1c] sm:$0xff]
    %v1083 = vld [vmem:[#allocation10 + $0xc24] sm:$0xff]
    %v1084 = vld [vmem:[#allocation10 + $0xc2c] sm:$0xf]
    %v1085 = vld [vmem:[#allocation10 + $0xc30] sm:$0xff]
    %v1086 = vld [vmem:[#allocation10 + $0xc38] sm:$0xff]
    %v1087 = vld [vmem:[#allocation10 + $0xc40] sm:$0xff]
    %v1088 = vld [vmem:[#allocation10 + $0xc48] sm:$0xff]
    %v1089 = vld [vmem:[#allocation10 + $0xc50] sm:$0xff]
    %v1090 = vld [vmem:[#allocation10 + $0xc58] sm:$0xff]
    %v1091 = vld [vmem:[#allocation10 + $0xc60] sm:$0xf]
    %v1092 = vld [vmem:[#allocation10 + $0xc64] sm:$0xff]
    %v1093 = vld [vmem:[#allocation10 + $0xc6c] sm:$0xff]
    %v1094 = vld [vmem:[#allocation10 + $0xc74] sm:$0xff]
    %v1095 = vld [vmem:[#allocation10 + $0xc7c] sm:$0xff]
    %v1096 = vld [vmem:[#allocation10 + $0xc84] sm:$0xff]
    %v1097 = vld [vmem:[#allocation10 + $0xc8c] sm:$0xff]
    %v1098 = vld [vmem:[#allocation10 + $0xc94] sm:$0xf]
    %v1099 = vld [vmem:[#allocation10 + $0xc98] sm:$0xff]
    %v1100 = vld [vmem:[#allocation10 + $0xca0] sm:$0xff]
    %v1101 = vld [vmem:[#allocation10 + $0xca8] sm:$0xff]
    %v1102 = vld [vmem:[#allocation10 + $0xcb0] sm:$0xff]
    %v1103 = vld [vmem:[#allocation10 + $0xcb8] sm:$0xff]
    %v1104 = vld [vmem:[#allocation10 + $0xcc0] sm:$0xff]
    %v1105 = vld [vmem:[#allocation10 + $0xcc8] sm:$0xf]
    %v1106 = vld [vmem:[#allocation10 + $0xccc] sm:$0xff]
    %v1107 = vld [vmem:[#allocation10 + $0xcd4] sm:$0xff]
    %v1108 = vld [vmem:[#allocation10 + $0xcdc] sm:$0xff]
    %v1109 = vld [vmem:[#allocation10 + $0xce4] sm:$0xff]
    %v1110 = vld [vmem:[#allocation10 + $0xcec] sm:$0xff]
    %v1111 = vld [vmem:[#allocation10 + $0xcf4] sm:$0xff]
    %v1112 = vld [vmem:[#allocation10 + $0xcfc] sm:$0xf]
    %v1113 = vld [vmem:[#allocation10 + $0xd00] sm:$0xff]
    %v1114 = vld [vmem:[#allocation10 + $0xd08] sm:$0xff]
    %v1115 = vld [vmem:[#allocation10 + $0xd10] sm:$0xff]
    %v1116 = vld [vmem:[#allocation10 + $0xd18] sm:$0xff]
    %v1117 = vld [vmem:[#allocation10 + $0xd20] sm:$0xff]
    %v1118 = vld [vmem:[#allocation10 + $0xd28] sm:$0xff]
    %v1119 = vld [vmem:[#allocation10 + $0xd30] sm:$0xf]
    %v1120 = vld [vmem:[#allocation10 + $0xd34] sm:$0xff]
    %v1121 = vld [vmem:[#allocation10 + $0xd3c] sm:$0xff]
    %v1122 = vld [vmem:[#allocation10 + $0xd44] sm:$0xff]
    %v1123 = vld [vmem:[#allocation10 + $0xd4c] sm:$0xff]
    %v1124 = vld [vmem:[#allocation10 + $0xd54] sm:$0xff]
    %v1125 = vld [vmem:[#allocation10 + $0xd5c] sm:$0xff]
    %v1126 = vld [vmem:[#allocation10 + $0xd64] sm:$0xf]
    %v1127 = vld [vmem:[#allocation10 + $0xd68] sm:$0xff]
    %v1128 = vld [vmem:[#allocation10 + $0xd70] sm:$0xff]
    %v1129 = vld [vmem:[#allocation10 + $0xd78] sm:$0xff]
    %v1130 = vld [vmem:[#allocation10 + $0xd80] sm:$0xff]
    %v1131 = vld [vmem:[#allocation10 + $0xd88] sm:$0xff]
    %v1132 = vld [vmem:[#allocation10 + $0xd90] sm:$0xff]
    %v1133 = vld [vmem:[#allocation10 + $0xd98] sm:$0xf]
    %v1134 = vld [vmem:[#allocation10 + $0xd9c] sm:$0xff]
    %v1135 = vld [vmem:[#allocation10 + $0xda4] sm:$0xff]
    %v1136 = vld [vmem:[#allocation10 + $0xdac] sm:$0xff]
    %v1137 = vld [vmem:[#allocation10 + $0xdb4] sm:$0xff]
    %v1138 = vld [vmem:[#allocation10 + $0xdbc] sm:$0xff]
    %v1139 = vld [vmem:[#allocation10 + $0xdc4] sm:$0xff]
    %v1140 = vld [vmem:[#allocation10 + $0xdcc] sm:$0xf]
    %v1141 = vld [vmem:[#allocation10 + $0xdd0] sm:$0xff]
    %v1142 = vld [vmem:[#allocation10 + $0xdd8] sm:$0xff]
    %v1143 = vld [vmem:[#allocation10 + $0xde0] sm:$0xff]
    %v1144 = vld [vmem:[#allocation10 + $0xde8] sm:$0xff]
    %v1145 = vld [vmem:[#allocation10 + $0xdf0] sm:$0xff]
    %v1146 = vld [vmem:[#allocation10 + $0xdf8] sm:$0xff]
    %v1147 = vld [vmem:[#allocation10 + $0xe00] sm:$0xf]
    %v1148 = vld [vmem:[#allocation10 + $0xe04] sm:$0xff]
    %v1149 = vld [vmem:[#allocation10 + $0xe0c] sm:$0xff]
    %v1150 = vld [vmem:[#allocation10 + $0xe14] sm:$0xff]
    %v1151 = vld [vmem:[#allocation10 + $0xe1c] sm:$0xff]
    %v1152 = vld [vmem:[#allocation10 + $0xe24] sm:$0xff]
    %v1153 = vld [vmem:[#allocation10 + $0xe2c] sm:$0xff]
    %v1154 = vld [vmem:[#allocation10 + $0xe34] sm:$0xf]
    %v1155 = vld [vmem:[#allocation10 + $0xe38] sm:$0xff]
    %v1156 = vld [vmem:[#allocation10 + $0xe40] sm:$0xff]
    %v1157 = vld [vmem:[#allocation10 + $0xe48] sm:$0xff]
    %v1158 = vld [vmem:[#allocation10 + $0xe50] sm:$0xff]
    %v1159 = vld [vmem:[#allocation10 + $0xe58] sm:$0xff]
    %v1160 = vld [vmem:[#allocation10 + $0xe60] sm:$0xff]
    %v1161 = vld [vmem:[#allocation10 + $0xe68] sm:$0xf]
    %v1162 = vld [vmem:[#allocation10 + $0xe6c] sm:$0xff]
    %v1163 = vld [vmem:[#allocation10 + $0xe74] sm:$0xff]
    %v1164 = vld [vmem:[#allocation10 + $0xe7c] sm:$0xff]
    %v1165 = vld [vmem:[#allocation10 + $0xe84] sm:$0xff]
    %v1166 = vld [vmem:[#allocation10 + $0xe8c] sm:$0xff]
    %v1167 = vld [vmem:[#allocation10 + $0xe94] sm:$0xff]
    %v1168 = vld [vmem:[#allocation10 + $0xe9c] sm:$0xf]
    %v1169 = vld [vmem:[#allocation10 + $0xea0] sm:$0xff]
    %v1170 = vld [vmem:[#allocation10 + $0xea8] sm:$0xff]
    %v1171 = vld [vmem:[#allocation10 + $0xeb0] sm:$0xff]
    %v1172 = vld [vmem:[#allocation10 + $0xeb8] sm:$0xff]
    %v1173 = vld [vmem:[#allocation10 + $0xec0] sm:$0xff]
    %v1174 = vld [vmem:[#allocation10 + $0xec8] sm:$0xff]
    %v1175 = vld [vmem:[#allocation10 + $0xed0] sm:$0xf]
    %v1176 = vld [vmem:[#allocation10 + $0xed4] sm:$0xff]
    %v1177 = vld [vmem:[#allocation10 + $0xedc] sm:$0xff]
    %v1178 = vld [vmem:[#allocation10 + $0xee4] sm:$0xff]
    %v1179 = vld [vmem:[#allocation10 + $0xeec] sm:$0xff]
    %v1180 = vld [vmem:[#allocation10 + $0xef4] sm:$0xff]
    %v1181 = vld [vmem:[#allocation10 + $0xefc] sm:$0xff]
    %v1182 = vld [vmem:[#allocation10 + $0xf04] sm:$0xf]
    %v1183 = vld [vmem:[#allocation10 + $0xf08] sm:$0xff]
    %v1184 = vld [vmem:[#allocation10 + $0xf10] sm:$0xff]
    %v1185 = vld [vmem:[#allocation10 + $0xf18] sm:$0xff]
    %v1186 = vld [vmem:[#allocation10 + $0xf20] sm:$0xff]
    %v1187 = vld [vmem:[#allocation10 + $0xf28] sm:$0xff]
    %v1188 = vld [vmem:[#allocation10 + $0xf30] sm:$0xff]
    %v1189 = vld [vmem:[#allocation10 + $0xf38] sm:$0xf]
    %v1190 = vld [vmem:[#allocation10 + $0xf3c] sm:$0xff]
    %v1191 = vld [vmem:[#allocation10 + $0xf44] sm:$0xff]
    %v1192 = vld [vmem:[#allocation10 + $0xf4c] sm:$0xff]
    %v1193 = vld [vmem:[#allocation10 + $0xf54] sm:$0xff]
    %v1194 = vld [vmem:[#allocation10 + $0xf5c] sm:$0xff]
    %v1195 = vld [vmem:[#allocation10 + $0xf64] sm:$0xff]
    %v1196 = vld [vmem:[#allocation10 + $0xf6c] sm:$0xf]
    %v1197 = vld [vmem:[#allocation10 + $0xf70] sm:$0xff]
    %v1198 = vld [vmem:[#allocation10 + $0xf78] sm:$0xff]
    %v1199 = vld [vmem:[#allocation10 + $0xf80] sm:$0xff]
    %v1200 = vld [vmem:[#allocation10 + $0xf88] sm:$0xff]
    %v1201 = vld [vmem:[#allocation10 + $0xf90] sm:$0xff]
    %v1202 = vld [vmem:[#allocation10 + $0xf98] sm:$0xff]
    %v1203 = vld [vmem:[#allocation10 + $0xfa0] sm:$0xf]
    %v1204 = vld [vmem:[#allocation10 + $0xfa4] sm:$0xff]
    %v1205 = vld [vmem:[#allocation10 + $0xfac] sm:$0xff]
    %v1206 = vld [vmem:[#allocation10 + $0xfb4] sm:$0xff]
    %v1207 = vld [vmem:[#allocation10 + $0xfbc] sm:$0xff]
    %v1208 = vld [vmem:[#allocation10 + $0xfc4] sm:$0xff]
    %v1209 = vld [vmem:[#allocation10 + $0xfcc] sm:$0xff]
    %v1210 = vld [vmem:[#allocation10 + $0xfd4] sm:$0xf]
    %v1211 = vld [vmem:[#allocation10 + $0xfd8] sm:$0xff]
    %v1212 = vld [vmem:[#allocation10 + $0xfe0] sm:$0xff]
    %v1213 = vld [vmem:[#allocation10 + $0xfe8] sm:$0xff]
    %v1214 = vld [vmem:[#allocation10 + $0xff0] sm:$0xff]
    %v1215 = vld [vmem:[#allocation10 + $0xff8] sm:$0xff]
    %v1216 = vld [vmem:[#allocation10 + $0x1000] sm:$0xff]
    %v1217 = vld [vmem:[#allocation10 + $0x1008] sm:$0xf]
    %v1218 = vld [vmem:[#allocation10 + $0x100c] sm:$0xff]
    %v1219 = vld [vmem:[#allocation10 + $0x1014] sm:$0xff]
    %v1220 = vld [vmem:[#allocation10 + $0x101c] sm:$0xff]
    %v1221 = vld [vmem:[#allocation10 + $0x1024] sm:$0xff]
    %v1222 = vld [vmem:[#allocation10 + $0x102c] sm:$0xff]
    %v1223 = vld [vmem:[#allocation10 + $0x1034] sm:$0xff]
    %v1224 = vld [vmem:[#allocation10 + $0x103c] sm:$0xf]
    %v1225 = vld [vmem:[#allocation10 + $0x1040] sm:$0xff]
    %v1226 = vld [vmem:[#allocation10 + $0x1048] sm:$0xff]
    %v1227 = vld [vmem:[#allocation10 + $0x1050] sm:$0xff]
    %v1228 = vld [vmem:[#allocation10 + $0x1058] sm:$0xff]
    %v1229 = vld [vmem:[#allocation10 + $0x1060] sm:$0xff]
    %v1230 = vld [vmem:[#allocation10 + $0x1068] sm:$0xff]
    %v1231 = vld [vmem:[#allocation10 + $0x1070] sm:$0xf]
    %v1232 = vld [vmem:[#allocation10 + $0x1074] sm:$0xff]
    %v1233 = vld [vmem:[#allocation10 + $0x107c] sm:$0xff]
    %v1234 = vld [vmem:[#allocation10 + $0x1084] sm:$0xff]
    %v1235 = vld [vmem:[#allocation10 + $0x108c] sm:$0xff]
    %v1236 = vld [vmem:[#allocation10 + $0x1094] sm:$0xff]
    %v1237 = vld [vmem:[#allocation10 + $0x109c] sm:$0xff]
    %v1238 = vld [vmem:[#allocation10 + $0x10a4] sm:$0xf]
    %v1239 = vld [vmem:[#allocation10 + $0x10a8] sm:$0xff]
    %v1240 = vld [vmem:[#allocation10 + $0x10b0] sm:$0xff]
    %v1241 = vld [vmem:[#allocation10 + $0x10b8] sm:$0xff]
    %v1242 = vld [vmem:[#allocation10 + $0x10c0] sm:$0xff]
    %v1243 = vld [vmem:[#allocation10 + $0x10c8] sm:$0xff]
    %v1244 = vld [vmem:[#allocation10 + $0x10d0] sm:$0xff]
    %v1245 = vld [vmem:[#allocation10 + $0x10d8] sm:$0xf]
    %v1246 = vld [vmem:[#allocation10 + $0x10dc] sm:$0xff]
    %v1247 = vld [vmem:[#allocation10 + $0x10e4] sm:$0xff]
    %v1248 = vld [vmem:[#allocation10 + $0x10ec] sm:$0xff]
    %v1249 = vld [vmem:[#allocation10 + $0x10f4] sm:$0xff]
    %v1250 = vld [vmem:[#allocation10 + $0x10fc] sm:$0xff]
    %v1251 = vld [vmem:[#allocation10 + $0x1104] sm:$0xff]
    %v1252 = vld [vmem:[#allocation10 + $0x110c] sm:$0xf]
    %v1253 = vld [vmem:[#allocation10 + $0x1110] sm:$0xff]
    %v1254 = vld [vmem:[#allocation10 + $0x1118] sm:$0xff]
    %v1255 = vld [vmem:[#allocation10 + $0x1120] sm:$0xff]
    %v1256 = vld [vmem:[#allocation10 + $0x1128] sm:$0xff]
    %v1257 = vld [vmem:[#allocation10 + $0x1130] sm:$0xff]
    %v1258 = vld [vmem:[#allocation10 + $0x1138] sm:$0xff]
    %v1259 = vld [vmem:[#allocation10 + $0x1140] sm:$0xf]
    %v1260 = vld [vmem:[#allocation10 + $0x1144] sm:$0xff]
    %v1261 = vld [vmem:[#allocation10 + $0x114c] sm:$0xff]
    %v1262 = vld [vmem:[#allocation10 + $0x1154] sm:$0xff]
    %v1263 = vld [vmem:[#allocation10 + $0x115c] sm:$0xff]
    %v1264 = vld [vmem:[#allocation10 + $0x1164] sm:$0xff]
    %v1265 = vld [vmem:[#allocation10 + $0x116c] sm:$0xff]
    %v1266 = vld [vmem:[#allocation10 + $0x1174] sm:$0xf]
    %v1267 = vld [vmem:[#allocation10 + $0x1178] sm:$0xff]
    %v1268 = vld [vmem:[#allocation10 + $0x1180] sm:$0xff]
    %v1269 = vld [vmem:[#allocation10 + $0x1188] sm:$0xff]
    %v1270 = vld [vmem:[#allocation10 + $0x1190] sm:$0xff]
    %v1271 = vld [vmem:[#allocation10 + $0x1198] sm:$0xff]
    %v1272 = vld [vmem:[#allocation10 + $0x11a0] sm:$0xff]
    %v1273 = vld [vmem:[#allocation10 + $0x11a8] sm:$0xf]
    %v1274 = vld [vmem:[#allocation10 + $0x11ac] sm:$0xff]
    %v1275 = vld [vmem:[#allocation10 + $0x11b4] sm:$0xff]
    %v1276 = vld [vmem:[#allocation10 + $0x11bc] sm:$0xff]
    %v1277 = vld [vmem:[#allocation10 + $0x11c4] sm:$0xff]
    %v1278 = vld [vmem:[#allocation10 + $0x11cc] sm:$0xff]
    %v1279 = vld [vmem:[#allocation10 + $0x11d4] sm:$0xff]
    %v1280 = vld [vmem:[#allocation10 + $0x11dc] sm:$0xf]
    %v1281 = vld [vmem:[#allocation10 + $0x11e0] sm:$0xff]
    %v1282 = vld [vmem:[#allocation10 + $0x11e8] sm:$0xff]
    %v1283 = vld [vmem:[#allocation10 + $0x11f0] sm:$0xff]
    %v1284 = vld [vmem:[#allocation10 + $0x11f8] sm:$0xff]
    %v1285 = vld [vmem:[#allocation10 + $0x1200] sm:$0xff]
    %v1286 = vld [vmem:[#allocation10 + $0x1208] sm:$0xff]
    %v1287 = vld [vmem:[#allocation10 + $0x1210] sm:$0xf]
    %v1288 = vld [vmem:[#allocation10 + $0x1214] sm:$0xff]
    %v1289 = vld [vmem:[#allocation10 + $0x121c] sm:$0xff]
    %v1290 = vld [vmem:[#allocation10 + $0x1224] sm:$0xff]
    %v1291 = vld [vmem:[#allocation10 + $0x122c] sm:$0xff]
    %v1292 = vld [vmem:[#allocation10 + $0x1234] sm:$0xff]
    %v1293 = vld [vmem:[#allocation10 + $0x123c] sm:$0xff]
    %v1294 = vld [vmem:[#allocation10 + $0x1244] sm:$0xf]
    %v1295 = vld [vmem:[#allocation10 + $0x1248] sm:$0xff]
    %v1296 = vld [vmem:[#allocation10 + $0x1250] sm:$0xff]
    %v1297 = vld [vmem:[#allocation10 + $0x1258] sm:$0xff]
    %v1298 = vld [vmem:[#allocation10 + $0x1260] sm:$0xff]
    %v1299 = vld [vmem:[#allocation10 + $0x1268] sm:$0xff]
    %v1300 = vld [vmem:[#allocation10 + $0x1270] sm:$0xff]
    %v1301 = vld [vmem:[#allocation10 + $0x1278] sm:$0xf]
    %v1302 = vld [vmem:[#allocation10 + $0x127c] sm:$0xff]
    %v1303 = vld [vmem:[#allocation10 + $0x1284] sm:$0xff]
    %v1304 = vld [vmem:[#allocation10 + $0x128c] sm:$0xff]
    %v1305 = vld [vmem:[#allocation10 + $0x1294] sm:$0xff]
    %v1306 = vld [vmem:[#allocation10 + $0x129c] sm:$0xff]
    %v1307 = vld [vmem:[#allocation10 + $0x12a4] sm:$0xff]
    %v1308 = vld [vmem:[#allocation10 + $0x12ac] sm:$0xf]
    %v1309 = vld [vmem:[#allocation10 + $0x12b0] sm:$0xff]
    %v1310 = vld [vmem:[#allocation10 + $0x12b8] sm:$0xff]
    %v1311 = vld [vmem:[#allocation10 + $0x12c0] sm:$0xff]
    %v1312 = vld [vmem:[#allocation10 + $0x12c8] sm:$0xff]
    %v1313 = vld [vmem:[#allocation10 + $0x12d0] sm:$0xff]
    %v1314 = vld [vmem:[#allocation10 + $0x12d8] sm:$0xff]
    %v1315 = vld [vmem:[#allocation10 + $0x12e0] sm:$0xf]
    %v1316 = vld [vmem:[#allocation10 + $0x12e4] sm:$0xff]
    %v1317 = vld [vmem:[#allocation10 + $0x12ec] sm:$0xff]
    %v1318 = vld [vmem:[#allocation10 + $0x12f4] sm:$0xff]
    %v1319 = vld [vmem:[#allocation10 + $0x12fc] sm:$0xff]
    %v1320 = vld [vmem:[#allocation10 + $0x1304] sm:$0xff]
    %v1321 = vld [vmem:[#allocation10 + $0x130c] sm:$0xff]
    %v1322 = vld [vmem:[#allocation10 + $0x1314] sm:$0xf]
    %v1323 = vld [vmem:[#allocation10 + $0x1318] sm:$0xff]
    %v1324 = vld [vmem:[#allocation10 + $0x1320] sm:$0xff]
    %v1325 = vld [vmem:[#allocation10 + $0x1328] sm:$0xff]
    %v1326 = vld [vmem:[#allocation10 + $0x1330] sm:$0xff]
    %v1327 = vld [vmem:[#allocation10 + $0x1338] sm:$0xff]
    %v1328 = vld [vmem:[#allocation10 + $0x1340] sm:$0xff]
    %v1329 = vld [vmem:[#allocation10 + $0x1348] sm:$0xf]
    %v1330 = vld [vmem:[#allocation10 + $0x134c] sm:$0xff]
    %v1331 = vld [vmem:[#allocation10 + $0x1354] sm:$0xff]
    %v1332 = vld [vmem:[#allocation10 + $0x135c] sm:$0xff]
    %v1333 = vld [vmem:[#allocation10 + $0x1364] sm:$0xff]
    %v1334 = vld [vmem:[#allocation10 + $0x136c] sm:$0xff]
    %v1335 = vld [vmem:[#allocation10 + $0x1374] sm:$0xff]
    %v1336 = vld [vmem:[#allocation10 + $0x137c] sm:$0xf]
    %v1337 = vld [vmem:[#allocation10 + $0x1380] sm:$0xff]
    %v1338 = vld [vmem:[#allocation10 + $0x1388] sm:$0xff]
    %v1339 = vld [vmem:[#allocation10 + $0x1390] sm:$0xff]
    %v1340 = vld [vmem:[#allocation10 + $0x1398] sm:$0xff]
    %v1341 = vld [vmem:[#allocation10 + $0x13a0] sm:$0xff]
    %v1342 = vld [vmem:[#allocation10 + $0x13a8] sm:$0xff]
    %v1343 = vld [vmem:[#allocation10 + $0x13b0] sm:$0xf]
    %v1344 = vld [vmem:[#allocation10 + $0x13b4] sm:$0xff]
    %v1345 = vld [vmem:[#allocation10 + $0x13bc] sm:$0xff]
    %v1346 = vld [vmem:[#allocation10 + $0x13c4] sm:$0xff]
    %v1347 = vld [vmem:[#allocation10 + $0x13cc] sm:$0xff]
    %v1348 = vld [vmem:[#allocation10 + $0x13d4] sm:$0xff]
    %v1349 = vld [vmem:[#allocation10 + $0x13dc] sm:$0xff]
    %v1350 = vld [vmem:[#allocation10 + $0x13e4] sm:$0xf]
    %v1351 = vld [vmem:[#allocation10 + $0x13e8] sm:$0xff]
    %v1352 = vld [vmem:[#allocation10 + $0x13f0] sm:$0xff]
    %v1353 = vld [vmem:[#allocation10 + $0x13f8] sm:$0xff]
    %v1354 = vld [vmem:[#allocation10 + $0x1400] sm:$0xff]
    %v1355 = vld [vmem:[#allocation10 + $0x1408] sm:$0xff]
    %v1356 = vld [vmem:[#allocation10 + $0x1410] sm:$0xff]
    %v1357 = vld [vmem:[#allocation10 + $0x1418] sm:$0xf]
    %v1358 = vld [vmem:[#allocation10 + $0x141c] sm:$0xff]
    %v1359 = vld [vmem:[#allocation10 + $0x1424] sm:$0xff]
    %v1360 = vld [vmem:[#allocation10 + $0x142c] sm:$0xff]
    %v1361 = vld [vmem:[#allocation10 + $0x1434] sm:$0xff]
    %v1362 = vld [vmem:[#allocation10 + $0x143c] sm:$0xff]
    %v1363 = vld [vmem:[#allocation10 + $0x1444] sm:$0xff]
    %v1364 = vld [vmem:[#allocation10 + $0x144c] sm:$0xf]
    %v1365 = vld [vmem:[#allocation10 + $0x1450] sm:$0xff]
    %v1366 = vld [vmem:[#allocation10 + $0x1458] sm:$0xff]
    %v1367 = vld [vmem:[#allocation10 + $0x1460] sm:$0xff]
    %v1368 = vld [vmem:[#allocation10 + $0x1468] sm:$0xff]
    %v1369 = vld [vmem:[#allocation10 + $0x1470] sm:$0xff]
    %v1370 = vld [vmem:[#allocation10 + $0x1478] sm:$0xff]
    %v1371 = vld [vmem:[#allocation10 + $0x1480] sm:$0xf]
    %v1372 = vld [vmem:[#allocation10 + $0x1484] sm:$0xff]
    %v1373 = vld [vmem:[#allocation10 + $0x148c] sm:$0xff]
    %v1374 = vld [vmem:[#allocation10 + $0x1494] sm:$0xff]
    %v1375 = vld [vmem:[#allocation10 + $0x149c] sm:$0xff]
    %v1376 = vld [vmem:[#allocation10 + $0x14a4] sm:$0xff]
    %v1377 = vld [vmem:[#allocation10 + $0x14ac] sm:$0xff]
    %v1378 = vld [vmem:[#allocation10 + $0x14b4] sm:$0xf]
    %v1379 = vld [vmem:[#allocation10 + $0x14b8] sm:$0xff]
    %v1380 = vld [vmem:[#allocation10 + $0x14c0] sm:$0xff]
    %v1381 = vld [vmem:[#allocation10 + $0x14c8] sm:$0xff]
    %v1382 = vld [vmem:[#allocation10 + $0x14d0] sm:$0xff]
    %v1383 = vld [vmem:[#allocation10 + $0x14d8] sm:$0xff]
    %v1384 = vld [vmem:[#allocation10 + $0x14e0] sm:$0xff]
    %v1385 = vld [vmem:[#allocation10 + $0x14e8] sm:$0xf]
    %v1386 = vld [vmem:[#allocation10 + $0x14ec] sm:$0xff]
    %v1387 = vld [vmem:[#allocation10 + $0x14f4] sm:$0xff]
    %v1388 = vld [vmem:[#allocation10 + $0x14fc] sm:$0xff]
    %v1389 = vld [vmem:[#allocation10 + $0x1504] sm:$0xff]
    %v1390 = vld [vmem:[#allocation10 + $0x150c] sm:$0xff]
    %v1391 = vld [vmem:[#allocation10 + $0x1514] sm:$0xff]
    %v1392 = vld [vmem:[#allocation10 + $0x151c] sm:$0xf]
    %v1393 = vld [vmem:[#allocation10 + $0x1520] sm:$0xff]
    %v1394 = vld [vmem:[#allocation10 + $0x1528] sm:$0xff]
    %v1395 = vld [vmem:[#allocation10 + $0x1530] sm:$0xff]
    %v1396 = vld [vmem:[#allocation10 + $0x1538] sm:$0xff]
    %v1397 = vld [vmem:[#allocation10 + $0x1540] sm:$0xff]
    %v1398 = vld [vmem:[#allocation10 + $0x1548] sm:$0xff]
    %v1399 = vld [vmem:[#allocation10 + $0x1550] sm:$0xf]
    %v1400 = vld [vmem:[#allocation10 + $0x1554] sm:$0xff]
    %v1401 = vld [vmem:[#allocation10 + $0x155c] sm:$0xff]
    %v1402 = vld [vmem:[#allocation10 + $0x1564] sm:$0xff]
    %v1403 = vld [vmem:[#allocation10 + $0x156c] sm:$0xff]
    %v1404 = vld [vmem:[#allocation10 + $0x1574] sm:$0xff]
    %v1405 = vld [vmem:[#allocation10 + $0x157c] sm:$0xff]
    %v1406 = vld [vmem:[#allocation10 + $0x1584] sm:$0xf]
    %v1407 = vld [vmem:[#allocation10 + $0x1588] sm:$0xff]
    %v1408 = vld [vmem:[#allocation10 + $0x1590] sm:$0xff]
    %v1409 = vld [vmem:[#allocation10 + $0x1598] sm:$0xff]
    %v1410 = vld [vmem:[#allocation10 + $0x15a0] sm:$0xff]
    %v1411 = vld [vmem:[#allocation10 + $0x15a8] sm:$0xff]
    %v1412 = vld [vmem:[#allocation10 + $0x15b0] sm:$0xff]
    %v1413 = vld [vmem:[#allocation10 + $0x15b8] sm:$0xf]
    %v1414 = vld [vmem:[#allocation10 + $0x15bc] sm:$0xff]
    %v1415 = vld [vmem:[#allocation10 + $0x15c4] sm:$0xff]
    %v1416 = vld [vmem:[#allocation10 + $0x15cc] sm:$0xff]
    %v1417 = vld [vmem:[#allocation10 + $0x15d4] sm:$0xff]
    %v1418 = vld [vmem:[#allocation10 + $0x15dc] sm:$0xff]
    %v1419 = vld [vmem:[#allocation10 + $0x15e4] sm:$0xff]
    %v1420 = vld [vmem:[#allocation10 + $0x15ec] sm:$0xf]
    %v1421 = vld [vmem:[#allocation10 + $0x15f0] sm:$0xff]
    %v1422 = vld [vmem:[#allocation10 + $0x15f8] sm:$0xff]
    %v1423 = vld [vmem:[#allocation10 + $0x1600] sm:$0xff]
    %v1424 = vld [vmem:[#allocation10 + $0x1608] sm:$0xff]
    %v1425 = vld [vmem:[#allocation10 + $0x1610] sm:$0xff]
    %v1426 = vld [vmem:[#allocation10 + $0x1618] sm:$0xff]
    %v1427 = vld [vmem:[#allocation10 + $0x1620] sm:$0xf]
    %v1428 = vld [vmem:[#allocation10 + $0x1624] sm:$0xff]
    %v1429 = vld [vmem:[#allocation10 + $0x162c] sm:$0xff]
    %v1430 = vld [vmem:[#allocation10 + $0x1634] sm:$0xff]
    %v1431 = vld [vmem:[#allocation10 + $0x163c] sm:$0xff]
    %v1432 = vld [vmem:[#allocation10 + $0x1644] sm:$0xff]
    %v1433 = vld [vmem:[#allocation10 + $0x164c] sm:$0xff]
    %v1434 = vld [vmem:[#allocation10 + $0x1654] sm:$0xf]
    %v1435 = vld [vmem:[#allocation10 + $0x1658] sm:$0xff]
    %v1436 = vld [vmem:[#allocation10 + $0x1660] sm:$0xff]
    %v1437 = vld [vmem:[#allocation10 + $0x1668] sm:$0xff]
    %v1438 = vld [vmem:[#allocation10 + $0x1670] sm:$0xff]
    %v1439 = vld [vmem:[#allocation10 + $0x1678] sm:$0xff]
    %v1440 = vld [vmem:[#allocation10 + $0x1680] sm:$0xff]
    %v1441 = vld [vmem:[#allocation10 + $0x1688] sm:$0xf]
    %v1442 = vld [vmem:[#allocation10 + $0x168c] sm:$0xff]
    %v1443 = vld [vmem:[#allocation10 + $0x1694] sm:$0xff]
    %v1444 = vld [vmem:[#allocation10 + $0x169c] sm:$0xff]
    %v1445 = vld [vmem:[#allocation10 + $0x16a4] sm:$0xff]
    %v1446 = vld [vmem:[#allocation10 + $0x16ac] sm:$0xff]
    %v1447 = vld [vmem:[#allocation10 + $0x16b4] sm:$0xff]
    %v1448 = vld [vmem:[#allocation10 + $0x16bc] sm:$0xf]
    %v1449 = vld [vmem:[#allocation10 + $0x16c0] sm:$0xff]
    %v1450 = vld [vmem:[#allocation10 + $0x16c8] sm:$0xff]
    %v1451 = vld [vmem:[#allocation10 + $0x16d0] sm:$0xff]
    %v1452 = vld [vmem:[#allocation10 + $0x16d8] sm:$0xff]
    %v1453 = vld [vmem:[#allocation10 + $0x16e0] sm:$0xff]
    %v1454 = vld [vmem:[#allocation10 + $0x16e8] sm:$0xff]
    %v1455 = vld [vmem:[#allocation10 + $0x16f0] sm:$0xf]
    %v1456 = vld [vmem:[#allocation10 + $0x16f4] sm:$0xff]
    %v1457 = vld [vmem:[#allocation10 + $0x16fc] sm:$0xff]
    %v1458 = vld [vmem:[#allocation10 + $0x1704] sm:$0xff]
    %v1459 = vld [vmem:[#allocation10 + $0x170c] sm:$0xff]
    %v1460 = vld [vmem:[#allocation10 + $0x1714] sm:$0xff]
    %v1461 = vld [vmem:[#allocation10 + $0x171c] sm:$0xff]
    %v1462 = vld [vmem:[#allocation10 + $0x1724] sm:$0xf]
    %v1463 = vld [vmem:[#allocation10 + $0x1728] sm:$0xff]
    %v1464 = vld [vmem:[#allocation10 + $0x1730] sm:$0xff]
    %v1465 = vld [vmem:[#allocation10 + $0x1738] sm:$0xff]
    %v1466 = vld [vmem:[#allocation10 + $0x1740] sm:$0xff]
    %v1467 = vld [vmem:[#allocation10 + $0x1748] sm:$0xff]
    %v1468 = vld [vmem:[#allocation10 + $0x1750] sm:$0xff]
    %v1469 = vld [vmem:[#allocation10 + $0x1758] sm:$0xf]
    %v1470 = vld [vmem:[#allocation10 + $0x175c] sm:$0xff]
    %v1471 = vld [vmem:[#allocation10 + $0x1764] sm:$0xff]
    %v1472 = vld [vmem:[#allocation10 + $0x176c] sm:$0xff]
    %v1473 = vld [vmem:[#allocation10 + $0x1774] sm:$0xff]
    %v1474 = vld [vmem:[#allocation10 + $0x177c] sm:$0xff]
    %v1475 = vld [vmem:[#allocation10 + $0x1784] sm:$0xff]
    %v1476 = vld [vmem:[#allocation10 + $0x178c] sm:$0xf]
    %v1477 = vld [vmem:[#allocation10 + $0x1790] sm:$0xff]
    %v1478 = vld [vmem:[#allocation10 + $0x1798] sm:$0xff]
    %v1479 = vld [vmem:[#allocation10 + $0x17a0] sm:$0xff]
    %v1480 = vld [vmem:[#allocation10 + $0x17a8] sm:$0xff]
    %v1481 = vld [vmem:[#allocation10 + $0x17b0] sm:$0xff]
    %v1482 = vld [vmem:[#allocation10 + $0x17b8] sm:$0xff]
    %v1483 = vld [vmem:[#allocation10 + $0x17c0] sm:$0xf]
    %v1484 = vld [vmem:[#allocation10 + $0x17c4] sm:$0xff]
    %v1485 = vld [vmem:[#allocation10 + $0x17cc] sm:$0xff]
    %v1486 = vld [vmem:[#allocation10 + $0x17d4] sm:$0xff]
    %v1487 = vld [vmem:[#allocation10 + $0x17dc] sm:$0xff]
    %v1488 = vld [vmem:[#allocation10 + $0x17e4] sm:$0xff]
    %v1489 = vld [vmem:[#allocation10 + $0x17ec] sm:$0xff]
    %v1490 = vld [vmem:[#allocation10 + $0x17f4] sm:$0xf]
    %v1491 = vld [vmem:[#allocation10 + $0x17f8] sm:$0xff]
    %v1492 = vld [vmem:[#allocation10 + $0x1800] sm:$0xff]
    %v1493 = vld [vmem:[#allocation10 + $0x1808] sm:$0xff]
    %v1494 = vld [vmem:[#allocation10 + $0x1810] sm:$0xff]
    %v1495 = vld [vmem:[#allocation10 + $0x1818] sm:$0xff]
    %v1496 = vld [vmem:[#allocation10 + $0x1820] sm:$0xff]
    %v1497 = vld [vmem:[#allocation10 + $0x1828] sm:$0xf]
    %v1498 = vld [vmem:[#allocation10 + $0x182c] sm:$0xff]
    %v1499 = vld [vmem:[#allocation10 + $0x1834] sm:$0xff]
    %v1500 = vld [vmem:[#allocation10 + $0x183c] sm:$0xff]
    %v1501 = vld [vmem:[#allocation10 + $0x1844] sm:$0xff]
    %v1502 = vld [vmem:[#allocation10 + $0x184c] sm:$0xff]
    %v1503 = vld [vmem:[#allocation10 + $0x1854] sm:$0xff]
    %v1504 = vld [vmem:[#allocation10 + $0x185c] sm:$0xf]
    %v1505 = vld [vmem:[#allocation10 + $0x1860] sm:$0xff]
    %v1506 = vld [vmem:[#allocation10 + $0x1868] sm:$0xff]
    %v1507 = vld [vmem:[#allocation10 + $0x1870] sm:$0xff]
    %v1508 = vld [vmem:[#allocation10 + $0x1878] sm:$0xff]
    %v1509 = vld [vmem:[#allocation10 + $0x1880] sm:$0xff]
    %v1510 = vld [vmem:[#allocation10 + $0x1888] sm:$0xff]
    %v1511 = vld [vmem:[#allocation10 + $0x1890] sm:$0xf]
    %v1512 = vld [vmem:[#allocation10 + $0x1894] sm:$0xff]
    %v1513 = vld [vmem:[#allocation10 + $0x189c] sm:$0xff]
    %v1514 = vld [vmem:[#allocation10 + $0x18a4] sm:$0xff]
    %v1515 = vld [vmem:[#allocation10 + $0x18ac] sm:$0xff]
    %v1516 = vld [vmem:[#allocation10 + $0x18b4] sm:$0xff]
    %v1517 = vld [vmem:[#allocation10 + $0x18bc] sm:$0xff]
    %v1518 = vld [vmem:[#allocation10 + $0x18c4] sm:$0xf]
    %v1519 = vld [vmem:[#allocation10 + $0x18c8] sm:$0xff]
    %v1520 = vld [vmem:[#allocation10 + $0x18d0] sm:$0xff]
    %v1521 = vld [vmem:[#allocation10 + $0x18d8] sm:$0xff]
    %v1522 = vld [vmem:[#allocation10 + $0x18e0] sm:$0xff]
    %v1523 = vld [vmem:[#allocation10 + $0x18e8] sm:$0xff]
    %v1524 = vld [vmem:[#allocation10 + $0x18f0] sm:$0xff]
    %v1525 = vld [vmem:[#allocation10 + $0x18f8] sm:$0xf]
    %v1526 = vld [vmem:[#allocation10 + $0x18fc] sm:$0xff]
    %v1527 = vld [vmem:[#allocation10 + $0x1904] sm:$0xff]
    %v1528 = vld [vmem:[#allocation10 + $0x190c] sm:$0xff]
    %v1529 = vld [vmem:[#allocation10 + $0x1914] sm:$0xff]
    %v1530 = vld [vmem:[#allocation10 + $0x191c] sm:$0xff]
    %v1531 = vld [vmem:[#allocation10 + $0x1924] sm:$0xff]
    %v1532 = vld [vmem:[#allocation10 + $0x192c] sm:$0xf]
    %v1533 = vld [vmem:[#allocation10 + $0x1930] sm:$0xff]
    %v1534 = vld [vmem:[#allocation10 + $0x1938] sm:$0xff]
    %v1535 = vld [vmem:[#allocation10 + $0x1940] sm:$0xff]
    %v1536 = vld [vmem:[#allocation10 + $0x1948] sm:$0xff]
    %v1537 = vld [vmem:[#allocation10 + $0x1950] sm:$0xff]
    %v1538 = vld [vmem:[#allocation10 + $0x1958] sm:$0xff]
    %v1539 = vld [vmem:[#allocation10 + $0x1960] sm:$0xf]
    %v1540 = vld [vmem:[#allocation10 + $0x1964] sm:$0xff]
    %v1541 = vld [vmem:[#allocation10 + $0x196c] sm:$0xff]
    %v1542 = vld [vmem:[#allocation10 + $0x1974] sm:$0xff]
    %v1543 = vld [vmem:[#allocation10 + $0x197c] sm:$0xff]
    %v1544 = vld [vmem:[#allocation10 + $0x1984] sm:$0xff]
    %v1545 = vld [vmem:[#allocation10 + $0x198c] sm:$0xff]
    %v1546 = vld [vmem:[#allocation10 + $0x1994] sm:$0xf]
    %v1547 = vld [vmem:[#allocation10 + $0x1998] sm:$0xff]
    %v1548 = vld [vmem:[#allocation10 + $0x19a0] sm:$0xff]
    %v1549 = vld [vmem:[#allocation10 + $0x19a8] sm:$0xff]
    %v1550 = vld [vmem:[#allocation10 + $0x19b0] sm:$0xff]
    %v1551 = vld [vmem:[#allocation10 + $0x19b8] sm:$0xff]
    %v1552 = vld [vmem:[#allocation10 + $0x19c0] sm:$0xff]
    %v1553 = vld [vmem:[#allocation10 + $0x19c8] sm:$0xf]
    %v1554 = vld [vmem:[#allocation10 + $0x19cc] sm:$0xff]
    %v1555 = vld [vmem:[#allocation10 + $0x19d4] sm:$0xff]
    %v1556 = vld [vmem:[#allocation10 + $0x19dc] sm:$0xff]
    %v1557 = vld [vmem:[#allocation10 + $0x19e4] sm:$0xff]
    %v1558 = vld [vmem:[#allocation10 + $0x19ec] sm:$0xff]
    %v1559 = vld [vmem:[#allocation10 + $0x19f4] sm:$0xff]
    %v1560 = vld [vmem:[#allocation10 + $0x19fc] sm:$0xf]
    %v1561 = vld [vmem:[#allocation10 + $0x1a00] sm:$0xff]
    %v1562 = vld [vmem:[#allocation10 + $0x1a08] sm:$0xff]
    %v1563 = vld [vmem:[#allocation10 + $0x1a10] sm:$0xff]
    %v1564 = vld [vmem:[#allocation10 + $0x1a18] sm:$0xff]
    %v1565 = vld [vmem:[#allocation10 + $0x1a20] sm:$0xff]
    %v1566 = vld [vmem:[#allocation10 + $0x1a28] sm:$0xff]
    %v1567 = vld [vmem:[#allocation10 + $0x1a30] sm:$0xf]
    %v1568 = vld [vmem:[#allocation10 + $0x1a34] sm:$0xff]
    %v1569 = vld [vmem:[#allocation10 + $0x1a3c] sm:$0xff]
    %v1570 = vld [vmem:[#allocation10 + $0x1a44] sm:$0xff]
    %v1571 = vld [vmem:[#allocation10 + $0x1a4c] sm:$0xff]
    %v1572 = vld [vmem:[#allocation10 + $0x1a54] sm:$0xff]
    %v1573 = vld [vmem:[#allocation10 + $0x1a5c] sm:$0xff]
    %v1574 = vld [vmem:[#allocation10 + $0x1a64] sm:$0xf]
    %v1575 = vld [vmem:[#allocation10 + $0x1a68] sm:$0xff]
    %v1576 = vld [vmem:[#allocation10 + $0x1a70] sm:$0xff]
    %v1577 = vld [vmem:[#allocation10 + $0x1a78] sm:$0xff]
    %v1578 = vld [vmem:[#allocation10 + $0x1a80] sm:$0xff]
    %v1579 = vld [vmem:[#allocation10 + $0x1a88] sm:$0xff]
    %v1580 = vld [vmem:[#allocation10 + $0x1a90] sm:$0xff]
    %v1581 = vld [vmem:[#allocation10 + $0x1a98] sm:$0xf]
    %v1582 = vld [vmem:[#allocation10 + $0x1a9c] sm:$0xff]
    %v1583 = vld [vmem:[#allocation10 + $0x1aa4] sm:$0xff]
    %v1584 = vld [vmem:[#allocation10 + $0x1aac] sm:$0xff]
    %v1585 = vld [vmem:[#allocation10 + $0x1ab4] sm:$0xff]
    %v1586 = vld [vmem:[#allocation10 + $0x1abc] sm:$0xff]
    %v1587 = vld [vmem:[#allocation10 + $0x1ac4] sm:$0xff]
    %v1588 = vld [vmem:[#allocation10 + $0x1acc] sm:$0xf]
    %v1589 = vld [vmem:[#allocation10 + $0x1ad0] sm:$0xff]
    %v1590 = vld [vmem:[#allocation10 + $0x1ad8] sm:$0xff]
    %v1591 = vld [vmem:[#allocation10 + $0x1ae0] sm:$0xff]
    %v1592 = vld [vmem:[#allocation10 + $0x1ae8] sm:$0xff]
    %v1593 = vld [vmem:[#allocation10 + $0x1af0] sm:$0xff]
    %v1594 = vld [vmem:[#allocation10 + $0x1af8] sm:$0xff]
    %v1595 = vld [vmem:[#allocation10 + $0x1b00] sm:$0xf]
    %v1596 = vld [vmem:[#allocation10 + $0x1b04] sm:$0xff]
    %v1597 = vld [vmem:[#allocation10 + $0x1b0c] sm:$0xff]
    %v1598 = vld [vmem:[#allocation10 + $0x1b14] sm:$0xff]
    %v1599 = vld [vmem:[#allocation10 + $0x1b1c] sm:$0xff]
    %v1600 = vld [vmem:[#allocation10 + $0x1b24] sm:$0xff]
    %v1601 = vld [vmem:[#allocation10 + $0x1b2c] sm:$0xff]
    %v1602 = vld [vmem:[#allocation10 + $0x1b34] sm:$0xf]
    %v1603 = vld [vmem:[#allocation10 + $0x1b38] sm:$0xff]
    %v1604 = vld [vmem:[#allocation10 + $0x1b40] sm:$0xff]
    %v1605 = vld [vmem:[#allocation10 + $0x1b48] sm:$0xff]
    %v1606 = vld [vmem:[#allocation10 + $0x1b50] sm:$0xff]
    %v1607 = vld [vmem:[#allocation10 + $0x1b58] sm:$0xff]
    %v1608 = vld [vmem:[#allocation10 + $0x1b60] sm:$0xff]
    %v1609 = vld [vmem:[#allocation10 + $0x1b68] sm:$0xf]
    %v1610 = vld [vmem:[#allocation10 + $0x1b6c] sm:$0xff]
    %v1611 = vld [vmem:[#allocation10 + $0x1b74] sm:$0xff]
    %v1612 = vld [vmem:[#allocation10 + $0x1b7c] sm:$0xff]
    %v1613 = vld [vmem:[#allocation10 + $0x1b84] sm:$0xff]
    %v1614 = vld [vmem:[#allocation10 + $0x1b8c] sm:$0xff]
    %v1615 = vld [vmem:[#allocation10 + $0x1b94] sm:$0xff]
    %v1616 = vld [vmem:[#allocation10 + $0x1b9c] sm:$0xf]
    %v1617 = vld [vmem:[#allocation10 + $0x1ba0] sm:$0xff]
    %v1618 = vld [vmem:[#allocation10 + $0x1ba8] sm:$0xff]
    %v1619 = vld [vmem:[#allocation10 + $0x1bb0] sm:$0xff]
    %v1620 = vld [vmem:[#allocation10 + $0x1bb8] sm:$0xff]
    %v1621 = vld [vmem:[#allocation10 + $0x1bc0] sm:$0xff]
    %v1622 = vld [vmem:[#allocation10 + $0x1bc8] sm:$0xff]
    %v1623 = vld [vmem:[#allocation10 + $0x1bd0] sm:$0xf]
    %v1624 = vld [vmem:[#allocation10 + $0x1bd4] sm:$0xff]
    %v1625 = vld [vmem:[#allocation10 + $0x1bdc] sm:$0xff]
    %v1626 = vld [vmem:[#allocation10 + $0x1be4] sm:$0xff]
    %v1627 = vld [vmem:[#allocation10 + $0x1bec] sm:$0xff]
    %v1628 = vld [vmem:[#allocation10 + $0x1bf4] sm:$0xff]
    %v1629 = vld [vmem:[#allocation10 + $0x1bfc] sm:$0xff]
    %v1630 = vld [vmem:[#allocation10 + $0x1c04] sm:$0xf]
    %v1631 = vld [vmem:[#allocation10 + $0x1c08] sm:$0xff]
    %v1632 = vld [vmem:[#allocation10 + $0x1c10] sm:$0xff]
    %v1633 = vld [vmem:[#allocation10 + $0x1c18] sm:$0xff]
    %v1634 = vld [vmem:[#allocation10 + $0x1c20] sm:$0xff]
    %v1635 = vld [vmem:[#allocation10 + $0x1c28] sm:$0xff]
    %v1636 = vld [vmem:[#allocation10 + $0x1c30] sm:$0xff]
    %v1637 = vld [vmem:[#allocation10 + $0x1c38] sm:$0xf]
    %v1638 = vld [vmem:[#allocation10 + $0x1c3c] sm:$0xff]
    %v1639 = vld [vmem:[#allocation10 + $0x1c44] sm:$0xff]
    %v1640 = vld [vmem:[#allocation10 + $0x1c4c] sm:$0xff]
    %v1641 = vld [vmem:[#allocation10 + $0x1c54] sm:$0xff]
    %v1642 = vld [vmem:[#allocation10 + $0x1c5c] sm:$0xff]
    %v1643 = vld [vmem:[#allocation10 + $0x1c64] sm:$0xff]
    %v1644 = vld [vmem:[#allocation10 + $0x1c6c] sm:$0xf]
    %v1645 = vld [vmem:[#allocation10 + $0x1c70] sm:$0xff]
    %v1646 = vld [vmem:[#allocation10 + $0x1c78] sm:$0xff]
    %v1647 = vld [vmem:[#allocation10 + $0x1c80] sm:$0xff]
    %v1648 = vld [vmem:[#allocation10 + $0x1c88] sm:$0xff]
    %v1649 = vld [vmem:[#allocation10 + $0x1c90] sm:$0xff]
    %v1650 = vld [vmem:[#allocation10 + $0x1c98] sm:$0xff]
    %v1651 = vld [vmem:[#allocation10 + $0x1ca0] sm:$0xf]
    %v1652 = vld [vmem:[#allocation10 + $0x1ca4] sm:$0xff]
    %v1653 = vld [vmem:[#allocation10 + $0x1cac] sm:$0xff]
    %v1654 = vld [vmem:[#allocation10 + $0x1cb4] sm:$0xff]
    %v1655 = vld [vmem:[#allocation10 + $0x1cbc] sm:$0xff]
    %v1656 = vld [vmem:[#allocation10 + $0x1cc4] sm:$0xff]
    %v1657 = vld [vmem:[#allocation10 + $0x1ccc] sm:$0xff]
    %v1658 = vld [vmem:[#allocation10 + $0x1cd4] sm:$0xf]
    %v1659 = vld [vmem:[#allocation10 + $0x1cd8] sm:$0xff]
    %v1660 = vld [vmem:[#allocation10 + $0x1ce0] sm:$0xff]
    %v1661 = vld [vmem:[#allocation10 + $0x1ce8] sm:$0xff]
    %v1662 = vld [vmem:[#allocation10 + $0x1cf0] sm:$0xff]
    %v1663 = vld [vmem:[#allocation10 + $0x1cf8] sm:$0xff]
    %v1664 = vld [vmem:[#allocation10 + $0x1d00] sm:$0xff]
    %v1665 = vld [vmem:[#allocation10 + $0x1d08] sm:$0xf]
    %v1666 = vld [vmem:[#allocation10 + $0x1d0c] sm:$0xff]
    %v1667 = vld [vmem:[#allocation10 + $0x1d14] sm:$0xff]
    %v1668 = vld [vmem:[#allocation10 + $0x1d1c] sm:$0xff]
    %v1669 = vld [vmem:[#allocation10 + $0x1d24] sm:$0xff]
    %v1670 = vld [vmem:[#allocation10 + $0x1d2c] sm:$0xff]
    %v1671 = vld [vmem:[#allocation10 + $0x1d34] sm:$0xff]
    %v1672 = vld [vmem:[#allocation10 + $0x1d3c] sm:$0xf]
    %v1673 = vld [vmem:[#allocation10 + $0x1d40] sm:$0xff]
    %v1674 = vld [vmem:[#allocation10 + $0x1d48] sm:$0xff]
    %v1675 = vld [vmem:[#allocation10 + $0x1d50] sm:$0xff]
    %v1676 = vld [vmem:[#allocation10 + $0x1d58] sm:$0xff]
    %v1677 = vld [vmem:[#allocation10 + $0x1d60] sm:$0xff]
    %v1678 = vld [vmem:[#allocation10 + $0x1d68] sm:$0xff]
    %v1679 = vld [vmem:[#allocation10 + $0x1d70] sm:$0xf]
    %v1680 = vld [vmem:[#allocation10 + $0x1d74] sm:$0xff]
    %v1681 = vld [vmem:[#allocation10 + $0x1d7c] sm:$0xff]
    %v1682 = vld [vmem:[#allocation10 + $0x1d84] sm:$0xff]
    %v1683 = vld [vmem:[#allocation10 + $0x1d8c] sm:$0xff]
    %v1684 = vld [vmem:[#allocation10 + $0x1d94] sm:$0xff]
    %v1685 = vld [vmem:[#allocation10 + $0x1d9c] sm:$0xff]
    %v1686 = vld [vmem:[#allocation10 + $0x1da4] sm:$0xf]
    %v1687 = vld [vmem:[#allocation10 + $0x1da8] sm:$0xff]
    %v1688 = vld [vmem:[#allocation10 + $0x1db0] sm:$0xff]
    %v1689 = vld [vmem:[#allocation10 + $0x1db8] sm:$0xff]
    %v1690 = vld [vmem:[#allocation10 + $0x1dc0] sm:$0xff]
    %v1691 = vld [vmem:[#allocation10 + $0x1dc8] sm:$0xff]
    %v1692 = vld [vmem:[#allocation10 + $0x1dd0] sm:$0xff]
    %v1693 = vld [vmem:[#allocation10 + $0x1dd8] sm:$0xf]
    %v1694 = vld [vmem:[#allocation10 + $0x1ddc] sm:$0xff]
    %v1695 = vld [vmem:[#allocation10 + $0x1de4] sm:$0xff]
    %v1696 = vld [vmem:[#allocation10 + $0x1dec] sm:$0xff]
    %v1697 = vld [vmem:[#allocation10 + $0x1df4] sm:$0xff]
    %v1698 = vld [vmem:[#allocation10 + $0x1dfc] sm:$0xff]
    %v1699 = vld [vmem:[#allocation10 + $0x1e04] sm:$0xff]
    %v1700 = vld [vmem:[#allocation10 + $0x1e0c] sm:$0xf]
    %v1701 = vld [vmem:[#allocation10 + $0x1e10] sm:$0xff]
    %v1702 = vld [vmem:[#allocation10 + $0x1e18] sm:$0xff]
    %v1703 = vld [vmem:[#allocation10 + $0x1e20] sm:$0xff]
    %v1704 = vld [vmem:[#allocation10 + $0x1e28] sm:$0xff]
    %v1705 = vld [vmem:[#allocation10 + $0x1e30] sm:$0xff]
    %v1706 = vld [vmem:[#allocation10 + $0x1e38] sm:$0xff]
    %v1707 = vld [vmem:[#allocation10 + $0x1e40] sm:$0xf]
    %v1708 = vld [vmem:[#allocation10 + $0x1e44] sm:$0xff]
    %v1709 = vld [vmem:[#allocation10 + $0x1e4c] sm:$0xff]
    %v1710 = vld [vmem:[#allocation10 + $0x1e54] sm:$0xff]
    %v1711 = vld [vmem:[#allocation10 + $0x1e5c] sm:$0xff]
    %v1712 = vld [vmem:[#allocation10 + $0x1e64] sm:$0xff]
    %v1713 = vld [vmem:[#allocation10 + $0x1e6c] sm:$0xff]
    %v1714 = vld [vmem:[#allocation10 + $0x1e74] sm:$0xf]
    %v1715 = vld [vmem:[#allocation10 + $0x1e78] sm:$0xff]
    %v1716 = vld [vmem:[#allocation10 + $0x1e80] sm:$0xff]
    %v1717 = vld [vmem:[#allocation10 + $0x1e88] sm:$0xff]
    %v1718 = vld [vmem:[#allocation10 + $0x1e90] sm:$0xff]
    %v1719 = vld [vmem:[#allocation10 + $0x1e98] sm:$0xff]
    %v1720 = vld [vmem:[#allocation10 + $0x1ea0] sm:$0xff]
    %v1721 = vld [vmem:[#allocation10 + $0x1ea8] sm:$0xf]
    %v1722 = vld [vmem:[#allocation10 + $0x1eac] sm:$0xff]
    %v1723 = vld [vmem:[#allocation10 + $0x1eb4] sm:$0xff]
    %v1724 = vld [vmem:[#allocation10 + $0x1ebc] sm:$0xff]
    %v1725 = vld [vmem:[#allocation10 + $0x1ec4] sm:$0xff]
    %v1726 = vld [vmem:[#allocation10 + $0x1ecc] sm:$0xff]
    %v1727 = vld [vmem:[#allocation10 + $0x1ed4] sm:$0xff]
    %v1728 = vld [vmem:[#allocation10 + $0x1edc] sm:$0xf]
    %v1729 = vld [vmem:[#allocation10 + $0x1ee0] sm:$0xff]
    %v1730 = vld [vmem:[#allocation10 + $0x1ee8] sm:$0xff]
    %v1731 = vld [vmem:[#allocation10 + $0x1ef0] sm:$0xff]
    %v1732 = vld [vmem:[#allocation10 + $0x1ef8] sm:$0xff]
    %v1733 = vld [vmem:[#allocation10 + $0x1f00] sm:$0xff]
    %v1734 = vld [vmem:[#allocation10 + $0x1f08] sm:$0xff]
    %v1735 = vld [vmem:[#allocation10 + $0x1f10] sm:$0xf]
    %v1736 = vld [vmem:[#allocation10 + $0x1f14] sm:$0xff]
    %v1737 = vld [vmem:[#allocation10 + $0x1f1c] sm:$0xff]
    %v1738 = vld [vmem:[#allocation10 + $0x1f24] sm:$0xff]
    %v1739 = vld [vmem:[#allocation10 + $0x1f2c] sm:$0xff]
    %v1740 = vld [vmem:[#allocation10 + $0x1f34] sm:$0xff]
    %v1741 = vld [vmem:[#allocation10 + $0x1f3c] sm:$0xff]
    %v1742 = vld [vmem:[#allocation10 + $0x1f44] sm:$0xf]
    %v1743 = vld [vmem:[#allocation10 + $0x1f48] sm:$0xff]
    %v1744 = vld [vmem:[#allocation10 + $0x1f50] sm:$0xff]
    %v1745 = vld [vmem:[#allocation10 + $0x1f58] sm:$0xff]
    %v1746 = vld [vmem:[#allocation10 + $0x1f60] sm:$0xff]
    %v1747 = vld [vmem:[#allocation10 + $0x1f68] sm:$0xff]
    %v1748 = vld [vmem:[#allocation10 + $0x1f70] sm:$0xff]
    %v1749 = vld [vmem:[#allocation10 + $0x1f78] sm:$0xf]
    %v1750 = vld [vmem:[#allocation10 + $0x1f7c] sm:$0xff]
    %v1751 = vld [vmem:[#allocation10 + $0x1f84] sm:$0xff]
    %v1752 = vld [vmem:[#allocation10 + $0x1f8c] sm:$0xff]
    %v1753 = vld [vmem:[#allocation10 + $0x1f94] sm:$0xff]
    %v1754 = vld [vmem:[#allocation10 + $0x1f9c] sm:$0xff]
    %v1755 = vld [vmem:[#allocation10 + $0x1fa4] sm:$0xff]
    %v1756 = vld [vmem:[#allocation10 + $0x1fac] sm:$0xf]
    %v1757 = vld [vmem:[#allocation10 + $0x1fb0] sm:$0xff]
    %v1758 = vld [vmem:[#allocation10 + $0x1fb8] sm:$0xff]
    %v1759 = vld [vmem:[#allocation10 + $0x1fc0] sm:$0xff]
    %v1760 = vld [vmem:[#allocation10 + $0x1fc8] sm:$0xff]
    %v1761 = vld [vmem:[#allocation10 + $0x1fd0] sm:$0xff]
    %v1762 = vld [vmem:[#allocation10 + $0x1fd8] sm:$0xff]
    %v1763 = vld [vmem:[#allocation10 + $0x1fe0] sm:$0xf]
    %v1764 = vld [vmem:[#allocation10 + $0x1fe4] sm:$0xff]
    %v1765 = vld [vmem:[#allocation10 + $0x1fec] sm:$0xff]
    %v1766 = vld [vmem:[#allocation10 + $0x1ff4] sm:$0xff]
    %v1767 = vld [vmem:[#allocation10 + $0x1ffc] sm:$0xff]
    %v1768 = vld [vmem:[#allocation10 + $0x2004] sm:$0xff]
    %v1769 = vld [vmem:[#allocation10 + $0x200c] sm:$0xff]
    %v1770 = vld [vmem:[#allocation10 + $0x2014] sm:$0xf]
    %v1771 = vld [vmem:[#allocation10 + $0x2018] sm:$0xff]
    %v1772 = vld [vmem:[#allocation10 + $0x2020] sm:$0xff]
    %v1773 = vld [vmem:[#allocation10 + $0x2028] sm:$0xff]
    %v1774 = vld [vmem:[#allocation10 + $0x2030] sm:$0xff]
    %v1775 = vld [vmem:[#allocation10 + $0x2038] sm:$0xff]
    %v1776 = vld [vmem:[#allocation10 + $0x2040] sm:$0xff]
    %v1777 = vld [vmem:[#allocation10 + $0x2048] sm:$0xf]
    %v1778 = vld [vmem:[#allocation10 + $0x204c] sm:$0xff]
    %v1779 = vld [vmem:[#allocation10 + $0x2054] sm:$0xff]
    %v1780 = vld [vmem:[#allocation10 + $0x205c] sm:$0xff]
    %v1781 = vld [vmem:[#allocation10 + $0x2064] sm:$0xff]
    %v1782 = vld [vmem:[#allocation10 + $0x206c] sm:$0xff]
    %v1783 = vld [vmem:[#allocation10 + $0x2074] sm:$0xff]
    %v1784 = vld [vmem:[#allocation10 + $0x207c] sm:$0xf]
    %v1785 = vld [vmem:[#allocation10 + $0x2080] sm:$0xff]
    %v1786 = vld [vmem:[#allocation10 + $0x2088] sm:$0xff]
    %v1787 = vld [vmem:[#allocation10 + $0x2090] sm:$0xff]
    %v1788 = vld [vmem:[#allocation10 + $0x2098] sm:$0xff]
    %v1789 = vld [vmem:[#allocation10 + $0x20a0] sm:$0xff]
    %v1790 = vld [vmem:[#allocation10 + $0x20a8] sm:$0xff]
    %v1791 = vld [vmem:[#allocation10 + $0x20b0] sm:$0xf]
    %v1792 = vld [vmem:[#allocation10 + $0x20b4] sm:$0xff]
    %v1793 = vld [vmem:[#allocation10 + $0x20bc] sm:$0xff]
    %v1794 = vld [vmem:[#allocation10 + $0x20c4] sm:$0xff]
    %v1795 = vld [vmem:[#allocation10 + $0x20cc] sm:$0xff]
    %v1796 = vld [vmem:[#allocation10 + $0x20d4] sm:$0xff]
    %v1797 = vld [vmem:[#allocation10 + $0x20dc] sm:$0xff]
    %v1798 = vld [vmem:[#allocation10 + $0x20e4] sm:$0xf]
    %v1799 = vld [vmem:[#allocation10 + $0x20e8] sm:$0xff]
    %v1800 = vld [vmem:[#allocation10 + $0x20f0] sm:$0xff]
    %v1801 = vld [vmem:[#allocation10 + $0x20f8] sm:$0xff]
    %v1802 = vld [vmem:[#allocation10 + $0x2100] sm:$0xff]
    %v1803 = vld [vmem:[#allocation10 + $0x2108] sm:$0xff]
    %v1804 = vld [vmem:[#allocation10 + $0x2110] sm:$0xff]
    %v1805 = vld [vmem:[#allocation10 + $0x2118] sm:$0xf]
    %v1806 = vld [vmem:[#allocation10 + $0x211c] sm:$0xff]
    %v1807 = vld [vmem:[#allocation10 + $0x2124] sm:$0xff]
    %v1808 = vld [vmem:[#allocation10 + $0x212c] sm:$0xff]
    %v1809 = vld [vmem:[#allocation10 + $0x2134] sm:$0xff]
    %v1810 = vld [vmem:[#allocation10 + $0x213c] sm:$0xff]
    %v1811 = vld [vmem:[#allocation10 + $0x2144] sm:$0xff]
    %v1812 = vld [vmem:[#allocation10 + $0x214c] sm:$0xf]
    %v1813 = vld [vmem:[#allocation10 + $0x2150] sm:$0xff]
    %v1814 = vld [vmem:[#allocation10 + $0x2158] sm:$0xff]
    %v1815 = vld [vmem:[#allocation10 + $0x2160] sm:$0xff]
    %v1816 = vld [vmem:[#allocation10 + $0x2168] sm:$0xff]
    %v1817 = vld [vmem:[#allocation10 + $0x2170] sm:$0xff]
    %v1818 = vld [vmem:[#allocation10 + $0x2178] sm:$0xff]
    %v1819 = vld [vmem:[#allocation10 + $0x2180] sm:$0xf]
    %v1820 = vld [vmem:[#allocation10 + $0x2184] sm:$0xff]
    %v1821 = vld [vmem:[#allocation10 + $0x218c] sm:$0xff]
    %v1822 = vld [vmem:[#allocation10 + $0x2194] sm:$0xff]
    %v1823 = vld [vmem:[#allocation10 + $0x219c] sm:$0xff]
    %v1824 = vld [vmem:[#allocation10 + $0x21a4] sm:$0xff]
    %v1825 = vld [vmem:[#allocation10 + $0x21ac] sm:$0xff]
    %v1826 = vld [vmem:[#allocation10 + $0x21b4] sm:$0xf]
    %v1827 = vld [vmem:[#allocation10 + $0x21b8] sm:$0xff]
    %v1828 = vld [vmem:[#allocation10 + $0x21c0] sm:$0xff]
    %v1829 = vld [vmem:[#allocation10 + $0x21c8] sm:$0xff]
    %v1830 = vld [vmem:[#allocation10 + $0x21d0] sm:$0xff]
    %v1831 = vld [vmem:[#allocation10 + $0x21d8] sm:$0xff]
    %v1832 = vld [vmem:[#allocation10 + $0x21e0] sm:$0xff]
    %v1833 = vld [vmem:[#allocation10 + $0x21e8] sm:$0xf]
    %v1834 = vld [vmem:[#allocation10 + $0x21ec] sm:$0xff]
    %v1835 = vld [vmem:[#allocation10 + $0x21f4] sm:$0xff]
    %v1836 = vld [vmem:[#allocation10 + $0x21fc] sm:$0xff]
    %v1837 = vld [vmem:[#allocation10 + $0x2204] sm:$0xff]
    %v1838 = vld [vmem:[#allocation10 + $0x220c] sm:$0xff]
    %v1839 = vld [vmem:[#allocation10 + $0x2214] sm:$0xff]
    %v1840 = vld [vmem:[#allocation10 + $0x221c] sm:$0xf]
    %v1841 = vld [vmem:[#allocation10 + $0x2220] sm:$0xff]
    %v1842 = vld [vmem:[#allocation10 + $0x2228] sm:$0xff]
    %v1843 = vld [vmem:[#allocation10 + $0x2230] sm:$0xff]
    %v1844 = vld [vmem:[#allocation10 + $0x2238] sm:$0xff]
    %v1845 = vld [vmem:[#allocation10 + $0x2240] sm:$0xff]
    %v1846 = vld [vmem:[#allocation10 + $0x2248] sm:$0xff]
    %v1847 = vld [vmem:[#allocation10 + $0x2250] sm:$0xf]
    %v1848 = vld [vmem:[#allocation10 + $0x2254] sm:$0xff]
    %v1849 = vld [vmem:[#allocation10 + $0x225c] sm:$0xff]
    %v1850 = vld [vmem:[#allocation10 + $0x2264] sm:$0xff]
    %v1851 = vld [vmem:[#allocation10 + $0x226c] sm:$0xff]
    %v1852 = vld [vmem:[#allocation10 + $0x2274] sm:$0xff]
    %v1853 = vld [vmem:[#allocation10 + $0x227c] sm:$0xff]
    %v1854 = vld [vmem:[#allocation10 + $0x2284] sm:$0xf]
    %v1855 = vld [vmem:[#allocation10 + $0x2288] sm:$0xff]
    %v1856 = vld [vmem:[#allocation10 + $0x2290] sm:$0xff]
    %v1857 = vld [vmem:[#allocation10 + $0x2298] sm:$0xff]
    %v1858 = vld [vmem:[#allocation10 + $0x22a0] sm:$0xff]
    %v1859 = vld [vmem:[#allocation10 + $0x22a8] sm:$0xff]
    %v1860 = vld [vmem:[#allocation10 + $0x22b0] sm:$0xff]
    %v1861 = vld [vmem:[#allocation10 + $0x22b8] sm:$0xf]
    %v1862 = vld [vmem:[#allocation10 + $0x22bc] sm:$0xff]
    %v1863 = vld [vmem:[#allocation10 + $0x22c4] sm:$0xff]
    %v1864 = vld [vmem:[#allocation10 + $0x22cc] sm:$0xff]
    %v1865 = vld [vmem:[#allocation10 + $0x22d4] sm:$0xff]
    %v1866 = vld [vmem:[#allocation10 + $0x22dc] sm:$0xff]
    %v1867 = vld [vmem:[#allocation10 + $0x22e4] sm:$0xff]
    %v1868 = vld [vmem:[#allocation10 + $0x22ec] sm:$0xf]
    %v1869 = vld [vmem:[#allocation10 + $0x22f0] sm:$0xff]
    %v1870 = vld [vmem:[#allocation10 + $0x22f8] sm:$0xff]
    %v1871 = vld [vmem:[#allocation10 + $0x2300] sm:$0xff]
    %v1872 = vld [vmem:[#allocation10 + $0x2308] sm:$0xff]
    %v1873 = vld [vmem:[#allocation10 + $0x2310] sm:$0xff]
    %v1874 = vld [vmem:[#allocation10 + $0x2318] sm:$0xff]
    %v1875 = vld [vmem:[#allocation10 + $0x2320] sm:$0xf]
    %v1876 = vld [vmem:[#allocation10 + $0x2324] sm:$0xff]
    %v1877 = vld [vmem:[#allocation10 + $0x232c] sm:$0xff]
    %v1878 = vld [vmem:[#allocation10 + $0x2334] sm:$0xff]
    %v1879 = vld [vmem:[#allocation10 + $0x233c] sm:$0xff]
    %v1880 = vld [vmem:[#allocation10 + $0x2344] sm:$0xff]
    %v1881 = vld [vmem:[#allocation10 + $0x234c] sm:$0xff]
    %v1882 = vld [vmem:[#allocation10 + $0x2354] sm:$0xf]
    %v1883 = vld [vmem:[#allocation10 + $0x2358] sm:$0xff]
    %v1884 = vld [vmem:[#allocation10 + $0x2360] sm:$0xff]
    %v1885 = vld [vmem:[#allocation10 + $0x2368] sm:$0xff]
    %v1886 = vld [vmem:[#allocation10 + $0x2370] sm:$0xff]
    %v1887 = vld [vmem:[#allocation10 + $0x2378] sm:$0xff]
    %v1888 = vld [vmem:[#allocation10 + $0x2380] sm:$0xff]
    %v1889 = vld [vmem:[#allocation10 + $0x2388] sm:$0xf]
    %v1890 = vld [vmem:[#allocation10 + $0x238c] sm:$0xff]
    %v1891 = vld [vmem:[#allocation10 + $0x2394] sm:$0xff]
    %v1892 = vld [vmem:[#allocation10 + $0x239c] sm:$0xff]
    %v1893 = vld [vmem:[#allocation10 + $0x23a4] sm:$0xff]
    %v1894 = vld [vmem:[#allocation10 + $0x23ac] sm:$0xff]
    %v1895 = vld [vmem:[#allocation10 + $0x23b4] sm:$0xff]
    %v1896 = vld [vmem:[#allocation10 + $0x23bc] sm:$0xf]
    %v1897 = vld [vmem:[#allocation10 + $0x23c0] sm:$0xff]
    %v1898 = vld [vmem:[#allocation10 + $0x23c8] sm:$0xff]
    %v1899 = vld [vmem:[#allocation10 + $0x23d0] sm:$0xff]
    %v1900 = vld [vmem:[#allocation10 + $0x23d8] sm:$0xff]
    %v1901 = vld [vmem:[#allocation10 + $0x23e0] sm:$0xff]
    %v1902 = vld [vmem:[#allocation10 + $0x23e8] sm:$0xff]
    %v1903 = vld [vmem:[#allocation10 + $0x23f0] sm:$0xf]
    %v1904 = vld [vmem:[#allocation10 + $0x23f4] sm:$0xff]
    %v1905 = vld [vmem:[#allocation10 + $0x23fc] sm:$0xff]
    %v1906 = vld [vmem:[#allocation10 + $0x2404] sm:$0xff]
    %v1907 = vld [vmem:[#allocation10 + $0x240c] sm:$0xff]
    %v1908 = vld [vmem:[#allocation10 + $0x2414] sm:$0xff]
    %v1909 = vld [vmem:[#allocation10 + $0x241c] sm:$0xff]
    %v1910 = vld [vmem:[#allocation10 + $0x2424] sm:$0xf]
    %v1911 = vld [vmem:[#allocation10 + $0x2428] sm:$0xff]
    %v1912 = vld [vmem:[#allocation10 + $0x2430] sm:$0xff]
    %v1913 = vld [vmem:[#allocation10 + $0x2438] sm:$0xff]
    %v1914 = vld [vmem:[#allocation10 + $0x2440] sm:$0xff]
    %v1915 = vld [vmem:[#allocation10 + $0x2448] sm:$0xff]
    %v1916 = vld [vmem:[#allocation10 + $0x2450] sm:$0xff]
    %v1917 = vld [vmem:[#allocation10 + $0x2458] sm:$0xf]
    %v1918 = vld [vmem:[#allocation10 + $0x245c] sm:$0xff]
    %v1919 = vld [vmem:[#allocation10 + $0x2464] sm:$0xff]
    %v1920 = vld [vmem:[#allocation10 + $0x246c] sm:$0xff]
    %v1921 = vld [vmem:[#allocation10 + $0x2474] sm:$0xff]
    %v1922 = vld [vmem:[#allocation10 + $0x247c] sm:$0xff]
    %v1923 = vld [vmem:[#allocation10 + $0x2484] sm:$0xff]
    %v1924 = vld [vmem:[#allocation10 + $0x248c] sm:$0xf]
    %v1925 = vld [vmem:[#allocation10 + $0x2490] sm:$0xff]
    %v1926 = vld [vmem:[#allocation10 + $0x2498] sm:$0xff]
    %v1927 = vld [vmem:[#allocation10 + $0x24a0] sm:$0xff]
    %v1928 = vld [vmem:[#allocation10 + $0x24a8] sm:$0xff]
    %v1929 = vld [vmem:[#allocation10 + $0x24b0] sm:$0xff]
    %v1930 = vld [vmem:[#allocation10 + $0x24b8] sm:$0xff]
    %v1931 = vld [vmem:[#allocation10 + $0x24c0] sm:$0xf]
    %v1932 = vld [vmem:[#allocation10 + $0x24c4] sm:$0xff]
    %v1933 = vld [vmem:[#allocation10 + $0x24cc] sm:$0xff]
    %v1934 = vld [vmem:[#allocation10 + $0x24d4] sm:$0xff]
    %v1935 = vld [vmem:[#allocation10 + $0x24dc] sm:$0xff]
    %v1936 = vld [vmem:[#allocation10 + $0x24e4] sm:$0xff]
    %v1937 = vld [vmem:[#allocation10 + $0x24ec] sm:$0xff]
    %v1938 = vld [vmem:[#allocation10 + $0x24f4] sm:$0xf]
    %v1939 = vld [vmem:[#allocation10 + $0x24f8] sm:$0xff]
    %v1940 = vld [vmem:[#allocation10 + $0x2500] sm:$0xff]
    %v1941 = vld [vmem:[#allocation10 + $0x2508] sm:$0xff]
    %v1942 = vld [vmem:[#allocation10 + $0x2510] sm:$0xff]
    %v1943 = vld [vmem:[#allocation10 + $0x2518] sm:$0xff]
    %v1944 = vld [vmem:[#allocation10 + $0x2520] sm:$0xff]
    %v1945 = vld [vmem:[#allocation10 + $0x2528] sm:$0xf]
    %v1946 = vld [vmem:[#allocation10 + $0x252c] sm:$0xff]
    %v1947 = vld [vmem:[#allocation10 + $0x2534] sm:$0xff]
    %v1948 = vld [vmem:[#allocation10 + $0x253c] sm:$0xff]
    %v1949 = vld [vmem:[#allocation10 + $0x2544] sm:$0xff]
    %v1950 = vld [vmem:[#allocation10 + $0x254c] sm:$0xff]
    %v1951 = vld [vmem:[#allocation10 + $0x2554] sm:$0xff]
    %v1952 = vld [vmem:[#allocation10 + $0x255c] sm:$0xf]
    %v1953 = vld [vmem:[#allocation10 + $0x2560] sm:$0xff]
    %v1954 = vld [vmem:[#allocation10 + $0x2568] sm:$0xff]
    %v1955 = vld [vmem:[#allocation10 + $0x2570] sm:$0xff]
    %v1956 = vld [vmem:[#allocation10 + $0x2578] sm:$0xff]
    %v1957 = vld [vmem:[#allocation10 + $0x2580] sm:$0xff]
    %v1958 = vld [vmem:[#allocation10 + $0x2588] sm:$0xff]
    %v1959 = vld [vmem:[#allocation10 + $0x2590] sm:$0xf]
    %v1960 = vld [vmem:[#allocation10 + $0x2594] sm:$0xff]
    %v1961 = vld [vmem:[#allocation10 + $0x259c] sm:$0xff]
    %v1962 = vld [vmem:[#allocation10 + $0x25a4] sm:$0xff]
    %v1963 = vld [vmem:[#allocation10 + $0x25ac] sm:$0xff]
    %v1964 = vld [vmem:[#allocation10 + $0x25b4] sm:$0xff]
    %v1965 = vld [vmem:[#allocation10 + $0x25bc] sm:$0xff]
    %v1966 = vld [vmem:[#allocation10 + $0x25c4] sm:$0xf]
    %v1967 = vld [vmem:[#allocation10 + $0x25c8] sm:$0xff]
    %v1968 = vld [vmem:[#allocation10 + $0x25d0] sm:$0xff]
    %v1969 = vld [vmem:[#allocation10 + $0x25d8] sm:$0xff]
    %v1970 = vld [vmem:[#allocation10 + $0x25e0] sm:$0xff]
    %v1971 = vld [vmem:[#allocation10 + $0x25e8] sm:$0xff]
    %v1972 = vld [vmem:[#allocation10 + $0x25f0] sm:$0xff]
    %v1973 = vld [vmem:[#allocation10 + $0x25f8] sm:$0xf]
    %v1974 = vld [vmem:[#allocation10 + $0x25fc] sm:$0xff]
    %v1975 = vld [vmem:[#allocation10 + $0x2604] sm:$0xff]
    %v1976 = vld [vmem:[#allocation10 + $0x260c] sm:$0xff]
    %v1977 = vld [vmem:[#allocation10 + $0x2614] sm:$0xff]
    %v1978 = vld [vmem:[#allocation10 + $0x261c] sm:$0xff]
    %v1979 = vld [vmem:[#allocation10 + $0x2624] sm:$0xff]
    %v1980 = vld [vmem:[#allocation10 + $0x262c] sm:$0xf]
    %v1981 = vld [vmem:[#allocation10 + $0x2630] sm:$0xff]
    %v1982 = vld [vmem:[#allocation10 + $0x2638] sm:$0xff]
    %v1983 = vld [vmem:[#allocation10 + $0x2640] sm:$0xff]
    %v1984 = vld [vmem:[#allocation10 + $0x2648] sm:$0xff]
    %v1985 = vld [vmem:[#allocation10 + $0x2650] sm:$0xff]
    %v1986 = vld [vmem:[#allocation10 + $0x2658] sm:$0xff]
    %v1987 = vld [vmem:[#allocation10 + $0x2660] sm:$0xf]
    %v1988 = vld [vmem:[#allocation10 + $0x2664] sm:$0xff]
    %v1989 = vld [vmem:[#allocation10 + $0x266c] sm:$0xff]
    %v1990 = vld [vmem:[#allocation10 + $0x2674] sm:$0xff]
    %v1991 = vld [vmem:[#allocation10 + $0x267c] sm:$0xff]
    %v1992 = vld [vmem:[#allocation10 + $0x2684] sm:$0xff]
    %v1993 = vld [vmem:[#allocation10 + $0x268c] sm:$0xff]
    %v1994 = vld [vmem:[#allocation10 + $0x2694] sm:$0xf]
    %v1995 = vld [vmem:[#allocation10 + $0x2698] sm:$0xff]
    %v1996 = vld [vmem:[#allocation10 + $0x26a0] sm:$0xff]
    %v1997 = vld [vmem:[#allocation10 + $0x26a8] sm:$0xff]
    %v1998 = vld [vmem:[#allocation10 + $0x26b0] sm:$0xff]
    %v1999 = vld [vmem:[#allocation10 + $0x26b8] sm:$0xff]
    %v2000 = vld [vmem:[#allocation10 + $0x26c0] sm:$0xff]
    %v2001 = vld [vmem:[#allocation10 + $0x26c8] sm:$0xf]
    %v2002 = vld [vmem:[#allocation10 + $0x26cc] sm:$0xff]
    %v2003 = vld [vmem:[#allocation10 + $0x26d4] sm:$0xff]
    %v2004 = vld [vmem:[#allocation10 + $0x26dc] sm:$0xff]
    %v2005 = vld [vmem:[#allocation10 + $0x26e4] sm:$0xff]
    %v2006 = vld [vmem:[#allocation10 + $0x26ec] sm:$0xff]
    %v2007 = vld [vmem:[#allocation10 + $0x26f4] sm:$0xff]
    %v2008 = vld [vmem:[#allocation10 + $0x26fc] sm:$0xf]
    %v2009 = vld [vmem:[#allocation10 + $0x2700] sm:$0xff]
    %v2010 = vld [vmem:[#allocation10 + $0x2708] sm:$0xff]
    %v2011 = vld [vmem:[#allocation10 + $0x2710] sm:$0xff]
    %v2012 = vld [vmem:[#allocation10 + $0x2718] sm:$0xff]
    %v2013 = vld [vmem:[#allocation10 + $0x2720] sm:$0xff]
    %v2014 = vld [vmem:[#allocation10 + $0x2728] sm:$0xff]
    %v2015 = vld [vmem:[#allocation10 + $0x2730] sm:$0xf]
    %v2016 = vld [vmem:[#allocation10 + $0x2734] sm:$0xff]
    %v2017 = vld [vmem:[#allocation10 + $0x273c] sm:$0xff]
    %v2018 = vld [vmem:[#allocation10 + $0x2744] sm:$0xff]
    %v2019 = vld [vmem:[#allocation10 + $0x274c] sm:$0xff]
    %v2020 = vld [vmem:[#allocation10 + $0x2754] sm:$0xff]
    %v2021 = vld [vmem:[#allocation10 + $0x275c] sm:$0xff]
    %v2022 = vld [vmem:[#allocation10 + $0x2764] sm:$0xf]
    %v2023 = vld [vmem:[#allocation10 + $0x2768] sm:$0xff]
    %v2024 = vld [vmem:[#allocation10 + $0x2770] sm:$0xff]
    %v2025 = vld [vmem:[#allocation10 + $0x2778] sm:$0xff]
    %v2026 = vld [vmem:[#allocation10 + $0x2780] sm:$0xff]
    %v2027 = vld [vmem:[#allocation10 + $0x2788] sm:$0xff]
    %v2028 = vld [vmem:[#allocation10 + $0x2790] sm:$0xff]
    %v2029 = vld [vmem:[#allocation10 + $0x2798] sm:$0xf]
    %v2030 = vld [vmem:[#allocation10 + $0x279c] sm:$0xff]
    %v2031 = vld [vmem:[#allocation10 + $0x27a4] sm:$0xff]
    %v2032 = vld [vmem:[#allocation10 + $0x27ac] sm:$0xff]
    %v2033 = vld [vmem:[#allocation10 + $0x27b4] sm:$0xff]
    %v2034 = vld [vmem:[#allocation10 + $0x27bc] sm:$0xff]
    %v2035 = vld [vmem:[#allocation10 + $0x27c4] sm:$0xff]
    %v2036 = vld [vmem:[#allocation10 + $0x27cc] sm:$0xf]
    %v2037 = vld [vmem:[#allocation10 + $0x27d0] sm:$0xff]
    %v2038 = vld [vmem:[#allocation10 + $0x27d8] sm:$0xff]
    %v2039 = vld [vmem:[#allocation10 + $0x27e0] sm:$0xff]
    %v2040 = vld [vmem:[#allocation10 + $0x27e8] sm:$0xff]
    %v2041 = vld [vmem:[#allocation10 + $0x27f0] sm:$0xff]
    %v2042 = vld [vmem:[#allocation10 + $0x27f8] sm:$0xff]
    %v2043 = vld [vmem:[#allocation10 + $0x2800] sm:$0xf]
    %v2044 = vld [vmem:[#allocation10 + $0x2804] sm:$0xff]
    %v2045 = vld [vmem:[#allocation10 + $0x280c] sm:$0xff]
    %v2046 = vld [vmem:[#allocation10 + $0x2814] sm:$0xff]
    %v2047 = vld [vmem:[#allocation10 + $0x281c] sm:$0xff]
    %v2048 = vld [vmem:[#allocation10 + $0x2824] sm:$0xff]
    %v2049 = vld [vmem:[#allocation10 + $0x282c] sm:$0xff]
    %v2050 = vld [vmem:[#allocation10 + $0x2834] sm:$0xf]
    %v2051 = vld [vmem:[#allocation10 + $0x2838] sm:$0xff]
    %v2052 = vld [vmem:[#allocation10 + $0x2840] sm:$0xff]
    %v2053 = vld [vmem:[#allocation10 + $0x2848] sm:$0xff]
    %v2054 = vld [vmem:[#allocation10 + $0x2850] sm:$0xff]
    %v2055 = vld [vmem:[#allocation10 + $0x2858] sm:$0xff]
    %v2056 = vld [vmem:[#allocation10 + $0x2860] sm:$0xff]
    %v2057 = vld [vmem:[#allocation10 + $0x2868] sm:$0xf]
    %v2058 = vld [vmem:[#allocation10 + $0x286c] sm:$0xff]
    %v2059 = vld [vmem:[#allocation10 + $0x2874] sm:$0xff]
    %v2060 = vld [vmem:[#allocation10 + $0x287c] sm:$0xff]
    %v2061 = vld [vmem:[#allocation10 + $0x2884] sm:$0xff]
    %v2062 = vld [vmem:[#allocation10 + $0x288c] sm:$0xff]
    %v2063 = vld [vmem:[#allocation10 + $0x2894] sm:$0xff]
    %v2064 = vld [vmem:[#allocation10 + $0x289c] sm:$0xf]
    %v2065 = vld [vmem:[#allocation10 + $0x28a0] sm:$0xff]
    %v2066 = vld [vmem:[#allocation10 + $0x28a8] sm:$0xff]
    %v2067 = vld [vmem:[#allocation10 + $0x28b0] sm:$0xff]
    %v2068 = vld [vmem:[#allocation10 + $0x28b8] sm:$0xff]
    %v2069 = vld [vmem:[#allocation10 + $0x28c0] sm:$0xff]
    %v2070 = vld [vmem:[#allocation10 + $0x28c8] sm:$0xff]
    %v2071 = vld [vmem:[#allocation10 + $0x28d0] sm:$0xf]
    %v2072 = vld [vmem:[#allocation10 + $0x28d4] sm:$0xff]
    %v2073 = vld [vmem:[#allocation10 + $0x28dc] sm:$0xff]
    %v2074 = vld [vmem:[#allocation10 + $0x28e4] sm:$0xff]
    %v2075 = vld [vmem:[#allocation10 + $0x28ec] sm:$0xff]
    %v2076 = vld [vmem:[#allocation10 + $0x28f4] sm:$0xff]
    %v2077 = vld [vmem:[#allocation10 + $0x28fc] sm:$0xff]
    %v2078 = vld [vmem:[#allocation10 + $0x2904] sm:$0xf]
    %v2079 = vld [vmem:[#allocation10 + $0x2908] sm:$0xff]
    %v2080 = vld [vmem:[#allocation10 + $0x2910] sm:$0xff]
    %v2081 = vld [vmem:[#allocation10 + $0x2918] sm:$0xff]
    %v2082 = vld [vmem:[#allocation10 + $0x2920] sm:$0xff]
    %v2083 = vld [vmem:[#allocation10 + $0x2928] sm:$0xff]
    %v2084 = vld [vmem:[#allocation10 + $0x2930] sm:$0xff]
    %v2085 = vld [vmem:[#allocation10 + $0x2938] sm:$0xf]
    %v2086 = vld [vmem:[#allocation10 + $0x293c] sm:$0xff]
    %v2087 = vld [vmem:[#allocation10 + $0x2944] sm:$0xff]
    %v2088 = vld [vmem:[#allocation10 + $0x294c] sm:$0xff]
    %v2089 = vld [vmem:[#allocation10 + $0x2954] sm:$0xff]
    %v2090 = vld [vmem:[#allocation10 + $0x295c] sm:$0xff]
    %v2091 = vld [vmem:[#allocation10 + $0x2964] sm:$0xff]
    %v2092 = vld [vmem:[#allocation10 + $0x296c] sm:$0xf]
    %v2093 = vld [vmem:[#allocation10 + $0x2970] sm:$0xff]
    %v2094 = vld [vmem:[#allocation10 + $0x2978] sm:$0xff]
    %v2095 = vld [vmem:[#allocation10 + $0x2980] sm:$0xff]
    %v2096 = vld [vmem:[#allocation10 + $0x2988] sm:$0xff]
    %v2097 = vld [vmem:[#allocation10 + $0x2990] sm:$0xff]
    %v2098 = vld [vmem:[#allocation10 + $0x2998] sm:$0xff]
    %v2099 = vld [vmem:[#allocation10 + $0x29a0] sm:$0xf]
    %v2100 = vld [vmem:[#allocation10 + $0x29a4] sm:$0xff]
    %v2101 = vld [vmem:[#allocation10 + $0x29ac] sm:$0xff]
    %v2102 = vld [vmem:[#allocation10 + $0x29b4] sm:$0xff]
    %v2103 = vld [vmem:[#allocation10 + $0x29bc] sm:$0xff]
    %v2104 = vld [vmem:[#allocation10 + $0x29c4] sm:$0xff]
    %v2105 = vld [vmem:[#allocation10 + $0x29cc] sm:$0xff]
    %v2106 = vld [vmem:[#allocation10 + $0x29d4] sm:$0xf]
    %v2107 = vld [vmem:[#allocation10 + $0x29d8] sm:$0xff]
    %v2108 = vld [vmem:[#allocation10 + $0x29e0] sm:$0xff]
    %v2109 = vld [vmem:[#allocation10 + $0x29e8] sm:$0xff]
    %v2110 = vld [vmem:[#allocation10 + $0x29f0] sm:$0xff]
    %v2111 = vld [vmem:[#allocation10 + $0x29f8] sm:$0xff]
    %v2112 = vld [vmem:[#allocation10 + $0x2a00] sm:$0xff]
    %v2113 = vld [vmem:[#allocation10 + $0x2a08] sm:$0xf]
    %v2114 = vld [vmem:[#allocation10 + $0x2a0c] sm:$0xff]
    %v2115 = vld [vmem:[#allocation10 + $0x2a14] sm:$0xff]
    %v2116 = vld [vmem:[#allocation10 + $0x2a1c] sm:$0xff]
    %v2117 = vld [vmem:[#allocation10 + $0x2a24] sm:$0xff]
    %v2118 = vld [vmem:[#allocation10 + $0x2a2c] sm:$0xff]
    %v2119 = vld [vmem:[#allocation10 + $0x2a34] sm:$0xff]
    %v2120 = vld [vmem:[#allocation10 + $0x2a3c] sm:$0xf]
    %v2121 = vld [vmem:[#allocation11] sm:$0xff]
    %v2122 = vld [vmem:[#allocation11 + $0x8] sm:$0x1f]
    %v2125 = vlaneseq
    %v2126 = vshrl.u32 %v2125, 7
    %v2127 = vsub.s32 0, %v2126
    %v2128 = vrot.slane %v2121, %v2127
    %v2129 = vlaneseq
    %v2130 = vshrl.u32 %v2129, 7
    %v2131 = vsub.s32 1, %v2130
    %v2132 = vrot.slane %v2121, %v2131
    %v2133 = vlaneseq
    %v2134 = vshrl.u32 %v2133, 7
    %v2135 = vsub.s32 2, %v2134
    %v2136 = vrot.slane %v2121, %v2135
    %v2137 = vlaneseq
    %v2138 = vshrl.u32 %v2137, 7
    %v2139 = vsub.s32 3, %v2138
    %v2140 = vrot.slane %v2121, %v2139
    %v2141 = vlaneseq
    %v2142 = vshrl.u32 %v2141, 7
    %v2143 = vsub.s32 4, %v2142
    %v2144 = vrot.slane %v2121, %v2143
    %v2145 = vlaneseq
    %v2146 = vshrl.u32 %v2145, 7
    %v2147 = vsub.s32 5, %v2146
    %v2148 = vrot.slane %v2121, %v2147
    %v2149 = vlaneseq
    %v2150 = vshrl.u32 %v2149, 7
    %v2151 = vsub.s32 6, %v2150
    %v2152 = vrot.slane %v2121, %v2151
    %v2153 = vlaneseq
    %v2154 = vshrl.u32 %v2153, 7
    %v2155 = vsub.s32 7, %v2154
    %v2156 = vrot.slane %v2121, %v2155
    %v2157 = vlaneseq
    %v2158 = vshrl.u32 %v2157, 7
    %v2159 = vsub.s32 0, %v2158
    %v2160 = vrot.slane %v2122, %v2159
    %v2161 = vlaneseq
    %v2162 = vshrl.u32 %v2161, 7
    %v2163 = vsub.s32 1, %v2162
    %v2164 = vrot.slane %v2122, %v2163
    %v2165 = vlaneseq
    %v2166 = vshrl.u32 %v2165, 7
    %v2167 = vsub.s32 2, %v2166
    %v2168 = vrot.slane %v2122, %v2167
    %v2169 = vlaneseq
    %v2170 = vshrl.u32 %v2169, 7
    %v2171 = vsub.s32 3, %v2170
    %v2172 = vrot.slane %v2122, %v2171
    %v2173 = vlaneseq
    %v2174 = vshrl.u32 %v2173, 7
    %v2175 = vsub.s32 4, %v2174
    %v2176 = vrot.slane %v2122, %v2175
    %v3646 = vunpack.c.l.b16 %v665
    %v3647 = vunpack.c.h.b16 %v665
    %v3648 = vunpack.c.l.b16 %v666
    %v3649 = vunpack.c.h.b16 %v666
    %v3650 = vunpack.c.l.b16 %v667
    %v3651 = vunpack.c.h.b16 %v667
    %v3652 = vunpack.c.l.b16 %v668
    %v3653 = vunpack.c.h.b16 %v668
    %v3654 = vunpack.c.l.b16 %v669
    %v3655 = vunpack.c.h.b16 %v669
    %v3656 = vunpack.c.l.b16 %v670
    %v3657 = vunpack.c.h.b16 %v670
    %v3658 = vunpack.c.l.b16 %v671
    %v3659 = vunpack.c.l.b16 %v672
    %v3660 = vunpack.c.h.b16 %v672
    %v3661 = vunpack.c.l.b16 %v673
    %v3662 = vunpack.c.h.b16 %v673
    %v3663 = vunpack.c.l.b16 %v674
    %v3664 = vunpack.c.h.b16 %v674
    %v3665 = vunpack.c.l.b16 %v675
    %v3666 = vunpack.c.h.b16 %v675
    %v3667 = vunpack.c.l.b16 %v676
    %v3668 = vunpack.c.h.b16 %v676
    %v3669 = vunpack.c.l.b16 %v677
    %v3670 = vunpack.c.h.b16 %v677
    %v3671 = vunpack.c.l.b16 %v678
    %v3672 = vunpack.c.l.b16 %v679
    %v3673 = vunpack.c.h.b16 %v679
    %v3674 = vunpack.c.l.b16 %v680
    %v3675 = vunpack.c.h.b16 %v680
    %v3676 = vunpack.c.l.b16 %v681
    %v3677 = vunpack.c.h.b16 %v681
    %v3678 = vunpack.c.l.b16 %v682
    %v3679 = vunpack.c.h.b16 %v682
    %v3680 = vunpack.c.l.b16 %v683
    %v3681 = vunpack.c.h.b16 %v683
    %v3682 = vunpack.c.l.b16 %v684
    %v3683 = vunpack.c.h.b16 %v684
    %v3684 = vunpack.c.l.b16 %v685
    %v3685 = vunpack.c.l.b16 %v686
    %v3686 = vunpack.c.h.b16 %v686
    %v3687 = vunpack.c.l.b16 %v687
    %v3688 = vunpack.c.h.b16 %v687
    %v3689 = vunpack.c.l.b16 %v688
    %v3690 = vunpack.c.h.b16 %v688
    %v3691 = vunpack.c.l.b16 %v689
    %v3692 = vunpack.c.h.b16 %v689
    %v3693 = vunpack.c.l.b16 %v690
    %v3694 = vunpack.c.h.b16 %v690
    %v3695 = vunpack.c.l.b16 %v691
    %v3696 = vunpack.c.h.b16 %v691
    %v3697 = vunpack.c.l.b16 %v692
    %v3698 = vunpack.c.l.b16 %v693
    %v3699 = vunpack.c.h.b16 %v693
    %v3700 = vunpack.c.l.b16 %v694
    %v3701 = vunpack.c.h.b16 %v694
    %v3702 = vunpack.c.l.b16 %v695
    %v3703 = vunpack.c.h.b16 %v695
    %v3704 = vunpack.c.l.b16 %v696
    %v3705 = vunpack.c.h.b16 %v696
    %v3706 = vunpack.c.l.b16 %v697
    %v3707 = vunpack.c.h.b16 %v697
    %v3708 = vunpack.c.l.b16 %v698
    %v3709 = vunpack.c.h.b16 %v698
    %v3710 = vunpack.c.l.b16 %v699
    %v3711 = vunpack.c.l.b16 %v700
    %v3712 = vunpack.c.h.b16 %v700
    %v3713 = vunpack.c.l.b16 %v701
    %v3714 = vunpack.c.h.b16 %v701
    %v3715 = vunpack.c.l.b16 %v702
    %v3716 = vunpack.c.h.b16 %v702
    %v3717 = vunpack.c.l.b16 %v703
    %v3718 = vunpack.c.h.b16 %v703
    %v3719 = vunpack.c.l.b16 %v704
    %v3720 = vunpack.c.h.b16 %v704
    %v3721 = vunpack.c.l.b16 %v705
    %v3722 = vunpack.c.h.b16 %v705
    %v3723 = vunpack.c.l.b16 %v706
    %v3724 = vunpack.c.l.b16 %v707
    %v3725 = vunpack.c.h.b16 %v707
    %v3726 = vunpack.c.l.b16 %v708
    %v3727 = vunpack.c.h.b16 %v708
    %v3728 = vunpack.c.l.b16 %v709
    %v3729 = vunpack.c.h.b16 %v709
    %v3730 = vunpack.c.l.b16 %v710
    %v3731 = vunpack.c.h.b16 %v710
    %v3732 = vunpack.c.l.b16 %v711
    %v3733 = vunpack.c.h.b16 %v711
    %v3734 = vunpack.c.l.b16 %v712
    %v3735 = vunpack.c.h.b16 %v712
    %v3736 = vunpack.c.l.b16 %v713
    %v3737 = vunpack.c.l.b16 %v714
    %v3738 = vunpack.c.h.b16 %v714
    %v3739 = vunpack.c.l.b16 %v715
    %v3740 = vunpack.c.h.b16 %v715
    %v3741 = vunpack.c.l.b16 %v716
    %v3742 = vunpack.c.h.b16 %v716
    %v3743 = vunpack.c.l.b16 %v717
    %v3744 = vunpack.c.h.b16 %v717
    %v3745 = vunpack.c.l.b16 %v718
    %v3746 = vunpack.c.h.b16 %v718
    %v3747 = vunpack.c.l.b16 %v719
    %v3748 = vunpack.c.h.b16 %v719
    %v3749 = vunpack.c.l.b16 %v720
    %v3750 = vunpack.c.l.b16 %v721
    %v3751 = vunpack.c.h.b16 %v721
    %v3752 = vunpack.c.l.b16 %v722
    %v3753 = vunpack.c.h.b16 %v722
    %v3754 = vunpack.c.l.b16 %v723
    %v3755 = vunpack.c.h.b16 %v723
    %v3756 = vunpack.c.l.b16 %v724
    %v3757 = vunpack.c.h.b16 %v724
    %v3758 = vunpack.c.l.b16 %v725
    %v3759 = vunpack.c.h.b16 %v725
    %v3760 = vunpack.c.l.b16 %v726
    %v3761 = vunpack.c.h.b16 %v726
    %v3762 = vunpack.c.l.b16 %v727
    %v3763 = vunpack.c.l.b16 %v728
    %v3764 = vunpack.c.h.b16 %v728
    %v3765 = vunpack.c.l.b16 %v729
    %v3766 = vunpack.c.h.b16 %v729
    %v3767 = vunpack.c.l.b16 %v730
    %v3768 = vunpack.c.h.b16 %v730
    %v3769 = vunpack.c.l.b16 %v731
    %v3770 = vunpack.c.h.b16 %v731
    %v3771 = vunpack.c.l.b16 %v732
    %v3772 = vunpack.c.h.b16 %v732
    %v3773 = vunpack.c.l.b16 %v733
    %v3774 = vunpack.c.h.b16 %v733
    %v3775 = vunpack.c.l.b16 %v734
    %v3776 = vunpack.c.l.b16 %v735
    %v3777 = vunpack.c.h.b16 %v735
    %v3778 = vunpack.c.l.b16 %v736
    %v3779 = vunpack.c.h.b16 %v736
    %v3780 = vunpack.c.l.b16 %v737
    %v3781 = vunpack.c.h.b16 %v737
    %v3782 = vunpack.c.l.b16 %v738
    %v3783 = vunpack.c.h.b16 %v738
    %v3784 = vunpack.c.l.b16 %v739
    %v3785 = vunpack.c.h.b16 %v739
    %v3786 = vunpack.c.l.b16 %v740
    %v3787 = vunpack.c.h.b16 %v740
    %v3788 = vunpack.c.l.b16 %v741
    %v3789 = vunpack.c.l.b16 %v742
    %v3790 = vunpack.c.h.b16 %v742
    %v3791 = vunpack.c.l.b16 %v743
    %v3792 = vunpack.c.h.b16 %v743
    %v3793 = vunpack.c.l.b16 %v744
    %v3794 = vunpack.c.h.b16 %v744
    %v3795 = vunpack.c.l.b16 %v745
    %v3796 = vunpack.c.h.b16 %v745
    %v3797 = vunpack.c.l.b16 %v746
    %v3798 = vunpack.c.h.b16 %v746
    %v3799 = vunpack.c.l.b16 %v747
    %v3800 = vunpack.c.h.b16 %v747
    %v3801 = vunpack.c.l.b16 %v748
    %v3802 = vunpack.c.l.b16 %v749
    %v3803 = vunpack.c.h.b16 %v749
    %v3804 = vunpack.c.l.b16 %v750
    %v3805 = vunpack.c.h.b16 %v750
    %v3806 = vunpack.c.l.b16 %v751
    %v3807 = vunpack.c.h.b16 %v751
    %v3808 = vunpack.c.l.b16 %v752
    %v3809 = vunpack.c.h.b16 %v752
    %v3810 = vunpack.c.l.b16 %v753
    %v3811 = vunpack.c.h.b16 %v753
    %v3812 = vunpack.c.l.b16 %v754
    %v3813 = vunpack.c.h.b16 %v754
    %v3814 = vunpack.c.l.b16 %v755
    %v3815 = vunpack.c.l.b16 %v756
    %v3816 = vunpack.c.h.b16 %v756
    %v3817 = vunpack.c.l.b16 %v757
    %v3818 = vunpack.c.h.b16 %v757
    %v3819 = vunpack.c.l.b16 %v758
    %v3820 = vunpack.c.h.b16 %v758
    %v3821 = vunpack.c.l.b16 %v759
    %v3822 = vunpack.c.h.b16 %v759
    %v3823 = vunpack.c.l.b16 %v760
    %v3824 = vunpack.c.h.b16 %v760
    %v3825 = vunpack.c.l.b16 %v761
    %v3826 = vunpack.c.h.b16 %v761
    %v3827 = vunpack.c.l.b16 %v762
    %v3828 = vunpack.c.l.b16 %v763
    %v3829 = vunpack.c.h.b16 %v763
    %v3830 = vunpack.c.l.b16 %v764
    %v3831 = vunpack.c.h.b16 %v764
    %v3832 = vunpack.c.l.b16 %v765
    %v3833 = vunpack.c.h.b16 %v765
    %v3834 = vunpack.c.l.b16 %v766
    %v3835 = vunpack.c.h.b16 %v766
    %v3836 = vunpack.c.l.b16 %v767
    %v3837 = vunpack.c.h.b16 %v767
    %v3838 = vunpack.c.l.b16 %v768
    %v3839 = vunpack.c.h.b16 %v768
    %v3840 = vunpack.c.l.b16 %v769
    %v3841 = vunpack.c.l.b16 %v770
    %v3842 = vunpack.c.h.b16 %v770
    %v3843 = vunpack.c.l.b16 %v771
    %v3844 = vunpack.c.h.b16 %v771
    %v3845 = vunpack.c.l.b16 %v772
    %v3846 = vunpack.c.h.b16 %v772
    %v3847 = vunpack.c.l.b16 %v773
    %v3848 = vunpack.c.h.b16 %v773
    %v3849 = vunpack.c.l.b16 %v774
    %v3850 = vunpack.c.h.b16 %v774
    %v3851 = vunpack.c.l.b16 %v775
    %v3852 = vunpack.c.h.b16 %v775
    %v3853 = vunpack.c.l.b16 %v776
    %v3854 = vunpack.c.l.b16 %v777
    %v3855 = vunpack.c.h.b16 %v777
    %v3856 = vunpack.c.l.b16 %v778
    %v3857 = vunpack.c.h.b16 %v778
    %v3858 = vunpack.c.l.b16 %v779
    %v3859 = vunpack.c.h.b16 %v779
    %v3860 = vunpack.c.l.b16 %v780
    %v3861 = vunpack.c.h.b16 %v780
    %v3862 = vunpack.c.l.b16 %v781
    %v3863 = vunpack.c.h.b16 %v781
    %v3864 = vunpack.c.l.b16 %v782
    %v3865 = vunpack.c.h.b16 %v782
    %v3866 = vunpack.c.l.b16 %v783
    %v3867 = vunpack.c.l.b16 %v784
    %v3868 = vunpack.c.h.b16 %v784
    %v3869 = vunpack.c.l.b16 %v785
    %v3870 = vunpack.c.h.b16 %v785
    %v3871 = vunpack.c.l.b16 %v786
    %v3872 = vunpack.c.h.b16 %v786
    %v3873 = vunpack.c.l.b16 %v787
    %v3874 = vunpack.c.h.b16 %v787
    %v3875 = vunpack.c.l.b16 %v788
    %v3876 = vunpack.c.h.b16 %v788
    %v3877 = vunpack.c.l.b16 %v789
    %v3878 = vunpack.c.h.b16 %v789
    %v3879 = vunpack.c.l.b16 %v790
    %v3880 = vunpack.c.l.b16 %v791
    %v3881 = vunpack.c.h.b16 %v791
    %v3882 = vunpack.c.l.b16 %v792
    %v3883 = vunpack.c.h.b16 %v792
    %v3884 = vunpack.c.l.b16 %v793
    %v3885 = vunpack.c.h.b16 %v793
    %v3886 = vunpack.c.l.b16 %v794
    %v3887 = vunpack.c.h.b16 %v794
    %v3888 = vunpack.c.l.b16 %v795
    %v3889 = vunpack.c.h.b16 %v795
    %v3890 = vunpack.c.l.b16 %v796
    %v3891 = vunpack.c.h.b16 %v796
    %v3892 = vunpack.c.l.b16 %v797
    %v3893 = vunpack.c.l.b16 %v798
    %v3894 = vunpack.c.h.b16 %v798
    %v3895 = vunpack.c.l.b16 %v799
    %v3896 = vunpack.c.h.b16 %v799
    %v3897 = vunpack.c.l.b16 %v800
    %v3898 = vunpack.c.h.b16 %v800
    %v3899 = vunpack.c.l.b16 %v801
    %v3900 = vunpack.c.h.b16 %v801
    %v3901 = vunpack.c.l.b16 %v802
    %v3902 = vunpack.c.h.b16 %v802
    %v3903 = vunpack.c.l.b16 %v803
    %v3904 = vunpack.c.h.b16 %v803
    %v3905 = vunpack.c.l.b16 %v804
    %v3906 = vunpack.c.l.b16 %v805
    %v3907 = vunpack.c.h.b16 %v805
    %v3908 = vunpack.c.l.b16 %v806
    %v3909 = vunpack.c.h.b16 %v806
    %v3910 = vunpack.c.l.b16 %v807
    %v3911 = vunpack.c.h.b16 %v807
    %v3912 = vunpack.c.l.b16 %v808
    %v3913 = vunpack.c.h.b16 %v808
    %v3914 = vunpack.c.l.b16 %v809
    %v3915 = vunpack.c.h.b16 %v809
    %v3916 = vunpack.c.l.b16 %v810
    %v3917 = vunpack.c.h.b16 %v810
    %v3918 = vunpack.c.l.b16 %v811
    %v3919 = vunpack.c.l.b16 %v812
    %v3920 = vunpack.c.h.b16 %v812
    %v3921 = vunpack.c.l.b16 %v813
    %v3922 = vunpack.c.h.b16 %v813
    %v3923 = vunpack.c.l.b16 %v814
    %v3924 = vunpack.c.h.b16 %v814
    %v3925 = vunpack.c.l.b16 %v815
    %v3926 = vunpack.c.h.b16 %v815
    %v3927 = vunpack.c.l.b16 %v816
    %v3928 = vunpack.c.h.b16 %v816
    %v3929 = vunpack.c.l.b16 %v817
    %v3930 = vunpack.c.h.b16 %v817
    %v3931 = vunpack.c.l.b16 %v818
    %v3932 = vunpack.c.l.b16 %v819
    %v3933 = vunpack.c.h.b16 %v819
    %v3934 = vunpack.c.l.b16 %v820
    %v3935 = vunpack.c.h.b16 %v820
    %v3936 = vunpack.c.l.b16 %v821
    %v3937 = vunpack.c.h.b16 %v821
    %v3938 = vunpack.c.l.b16 %v822
    %v3939 = vunpack.c.h.b16 %v822
    %v3940 = vunpack.c.l.b16 %v823
    %v3941 = vunpack.c.h.b16 %v823
    %v3942 = vunpack.c.l.b16 %v824
    %v3943 = vunpack.c.h.b16 %v824
    %v3944 = vunpack.c.l.b16 %v825
    %v3945 = vunpack.c.l.b16 %v826
    %v3946 = vunpack.c.h.b16 %v826
    %v3947 = vunpack.c.l.b16 %v827
    %v3948 = vunpack.c.h.b16 %v827
    %v3949 = vunpack.c.l.b16 %v828
    %v3950 = vunpack.c.h.b16 %v828
    %v3951 = vunpack.c.l.b16 %v829
    %v3952 = vunpack.c.h.b16 %v829
    %v3953 = vunpack.c.l.b16 %v830
    %v3954 = vunpack.c.h.b16 %v830
    %v3955 = vunpack.c.l.b16 %v831
    %v3956 = vunpack.c.h.b16 %v831
    %v3957 = vunpack.c.l.b16 %v832
    %v3958 = vunpack.c.l.b16 %v833
    %v3959 = vunpack.c.h.b16 %v833
    %v3960 = vunpack.c.l.b16 %v834
    %v3961 = vunpack.c.h.b16 %v834
    %v3962 = vunpack.c.l.b16 %v835
    %v3963 = vunpack.c.h.b16 %v835
    %v3964 = vunpack.c.l.b16 %v836
    %v3965 = vunpack.c.h.b16 %v836
    %v3966 = vunpack.c.l.b16 %v837
    %v3967 = vunpack.c.h.b16 %v837
    %v3968 = vunpack.c.l.b16 %v838
    %v3969 = vunpack.c.h.b16 %v838
    %v3970 = vunpack.c.l.b16 %v839
    %v3971 = vunpack.c.l.b16 %v840
    %v3972 = vunpack.c.h.b16 %v840
    %v3973 = vunpack.c.l.b16 %v841
    %v3974 = vunpack.c.h.b16 %v841
    %v3975 = vunpack.c.l.b16 %v842
    %v3976 = vunpack.c.h.b16 %v842
    %v3977 = vunpack.c.l.b16 %v843
    %v3978 = vunpack.c.h.b16 %v843
    %v3979 = vunpack.c.l.b16 %v844
    %v3980 = vunpack.c.h.b16 %v844
    %v3981 = vunpack.c.l.b16 %v845
    %v3982 = vunpack.c.h.b16 %v845
    %v3983 = vunpack.c.l.b16 %v846
    %v3984 = vunpack.c.l.b16 %v847
    %v3985 = vunpack.c.h.b16 %v847
    %v3986 = vunpack.c.l.b16 %v848
    %v3987 = vunpack.c.h.b16 %v848
    %v3988 = vunpack.c.l.b16 %v849
    %v3989 = vunpack.c.h.b16 %v849
    %v3990 = vunpack.c.l.b16 %v850
    %v3991 = vunpack.c.h.b16 %v850
    %v3992 = vunpack.c.l.b16 %v851
    %v3993 = vunpack.c.h.b16 %v851
    %v3994 = vunpack.c.l.b16 %v852
    %v3995 = vunpack.c.h.b16 %v852
    %v3996 = vunpack.c.l.b16 %v853
    %v3997 = vunpack.c.l.b16 %v854
    %v3998 = vunpack.c.h.b16 %v854
    %v3999 = vunpack.c.l.b16 %v855
    %v4000 = vunpack.c.h.b16 %v855
    %v4001 = vunpack.c.l.b16 %v856
    %v4002 = vunpack.c.h.b16 %v856
    %v4003 = vunpack.c.l.b16 %v857
    %v4004 = vunpack.c.h.b16 %v857
    %v4005 = vunpack.c.l.b16 %v858
    %v4006 = vunpack.c.h.b16 %v858
    %v4007 = vunpack.c.l.b16 %v859
    %v4008 = vunpack.c.h.b16 %v859
    %v4009 = vunpack.c.l.b16 %v860
    %v4010 = vunpack.c.l.b16 %v861
    %v4011 = vunpack.c.h.b16 %v861
    %v4012 = vunpack.c.l.b16 %v862
    %v4013 = vunpack.c.h.b16 %v862
    %v4014 = vunpack.c.l.b16 %v863
    %v4015 = vunpack.c.h.b16 %v863
    %v4016 = vunpack.c.l.b16 %v864
    %v4017 = vunpack.c.h.b16 %v864
    %v4018 = vunpack.c.l.b16 %v865
    %v4019 = vunpack.c.h.b16 %v865
    %v4020 = vunpack.c.l.b16 %v866
    %v4021 = vunpack.c.h.b16 %v866
    %v4022 = vunpack.c.l.b16 %v867
    %v4023 = vunpack.c.l.b16 %v868
    %v4024 = vunpack.c.h.b16 %v868
    %v4025 = vunpack.c.l.b16 %v869
    %v4026 = vunpack.c.h.b16 %v869
    %v4027 = vunpack.c.l.b16 %v870
    %v4028 = vunpack.c.h.b16 %v870
    %v4029 = vunpack.c.l.b16 %v871
    %v4030 = vunpack.c.h.b16 %v871
    %v4031 = vunpack.c.l.b16 %v872
    %v4032 = vunpack.c.h.b16 %v872
    %v4033 = vunpack.c.l.b16 %v873
    %v4034 = vunpack.c.h.b16 %v873
    %v4035 = vunpack.c.l.b16 %v874
    %v4036 = vunpack.c.l.b16 %v875
    %v4037 = vunpack.c.h.b16 %v875
    %v4038 = vunpack.c.l.b16 %v876
    %v4039 = vunpack.c.h.b16 %v876
    %v4040 = vunpack.c.l.b16 %v877
    %v4041 = vunpack.c.h.b16 %v877
    %v4042 = vunpack.c.l.b16 %v878
    %v4043 = vunpack.c.h.b16 %v878
    %v4044 = vunpack.c.l.b16 %v879
    %v4045 = vunpack.c.h.b16 %v879
    %v4046 = vunpack.c.l.b16 %v880
    %v4047 = vunpack.c.h.b16 %v880
    %v4048 = vunpack.c.l.b16 %v881
    %v4049 = vunpack.c.l.b16 %v882
    %v4050 = vunpack.c.h.b16 %v882
    %v4051 = vunpack.c.l.b16 %v883
    %v4052 = vunpack.c.h.b16 %v883
    %v4053 = vunpack.c.l.b16 %v884
    %v4054 = vunpack.c.h.b16 %v884
    %v4055 = vunpack.c.l.b16 %v885
    %v4056 = vunpack.c.h.b16 %v885
    %v4057 = vunpack.c.l.b16 %v886
    %v4058 = vunpack.c.h.b16 %v886
    %v4059 = vunpack.c.l.b16 %v887
    %v4060 = vunpack.c.h.b16 %v887
    %v4061 = vunpack.c.l.b16 %v888
    %v4062 = vunpack.c.l.b16 %v889
    %v4063 = vunpack.c.h.b16 %v889
    %v4064 = vunpack.c.l.b16 %v890
    %v4065 = vunpack.c.h.b16 %v890
    %v4066 = vunpack.c.l.b16 %v891
    %v4067 = vunpack.c.h.b16 %v891
    %v4068 = vunpack.c.l.b16 %v892
    %v4069 = vunpack.c.h.b16 %v892
    %v4070 = vunpack.c.l.b16 %v893
    %v4071 = vunpack.c.h.b16 %v893
    %v4072 = vunpack.c.l.b16 %v894
    %v4073 = vunpack.c.h.b16 %v894
    %v4074 = vunpack.c.l.b16 %v895
    %v4075 = vunpack.c.l.b16 %v896
    %v4076 = vunpack.c.h.b16 %v896
    %v4077 = vunpack.c.l.b16 %v897
    %v4078 = vunpack.c.h.b16 %v897
    %v4079 = vunpack.c.l.b16 %v898
    %v4080 = vunpack.c.h.b16 %v898
    %v4081 = vunpack.c.l.b16 %v899
    %v4082 = vunpack.c.h.b16 %v899
    %v4083 = vunpack.c.l.b16 %v900
    %v4084 = vunpack.c.h.b16 %v900
    %v4085 = vunpack.c.l.b16 %v901
    %v4086 = vunpack.c.h.b16 %v901
    %v4087 = vunpack.c.l.b16 %v902
    %v4088 = vunpack.c.l.b16 %v903
    %v4089 = vunpack.c.h.b16 %v903
    %v4090 = vunpack.c.l.b16 %v904
    %v4091 = vunpack.c.h.b16 %v904
    %v4092 = vunpack.c.l.b16 %v905
    %v4093 = vunpack.c.h.b16 %v905
    %v4094 = vunpack.c.l.b16 %v906
    %v4095 = vunpack.c.h.b16 %v906
    %v4096 = vunpack.c.l.b16 %v907
    %v4097 = vunpack.c.h.b16 %v907
    %v4098 = vunpack.c.l.b16 %v908
    %v4099 = vunpack.c.h.b16 %v908
    %v4100 = vunpack.c.l.b16 %v909
    %v4101 = vunpack.c.l.b16 %v910
    %v4102 = vunpack.c.h.b16 %v910
    %v4103 = vunpack.c.l.b16 %v911
    %v4104 = vunpack.c.h.b16 %v911
    %v4105 = vunpack.c.l.b16 %v912
    %v4106 = vunpack.c.h.b16 %v912
    %v4107 = vunpack.c.l.b16 %v913
    %v4108 = vunpack.c.h.b16 %v913
    %v4109 = vunpack.c.l.b16 %v914
    %v4110 = vunpack.c.h.b16 %v914
    %v4111 = vunpack.c.l.b16 %v915
    %v4112 = vunpack.c.h.b16 %v915
    %v4113 = vunpack.c.l.b16 %v916
    %v4114 = vunpack.c.l.b16 %v917
    %v4115 = vunpack.c.h.b16 %v917
    %v4116 = vunpack.c.l.b16 %v918
    %v4117 = vunpack.c.h.b16 %v918
    %v4118 = vunpack.c.l.b16 %v919
    %v4119 = vunpack.c.h.b16 %v919
    %v4120 = vunpack.c.l.b16 %v920
    %v4121 = vunpack.c.h.b16 %v920
    %v4122 = vunpack.c.l.b16 %v921
    %v4123 = vunpack.c.h.b16 %v921
    %v4124 = vunpack.c.l.b16 %v922
    %v4125 = vunpack.c.h.b16 %v922
    %v4126 = vunpack.c.l.b16 %v923
    %v4127 = vunpack.c.l.b16 %v924
    %v4128 = vunpack.c.h.b16 %v924
    %v4129 = vunpack.c.l.b16 %v925
    %v4130 = vunpack.c.h.b16 %v925
    %v4131 = vunpack.c.l.b16 %v926
    %v4132 = vunpack.c.h.b16 %v926
    %v4133 = vunpack.c.l.b16 %v927
    %v4134 = vunpack.c.h.b16 %v927
    %v4135 = vunpack.c.l.b16 %v928
    %v4136 = vunpack.c.h.b16 %v928
    %v4137 = vunpack.c.l.b16 %v929
    %v4138 = vunpack.c.h.b16 %v929
    %v4139 = vunpack.c.l.b16 %v930
    %v4140 = vunpack.c.l.b16 %v931
    %v4141 = vunpack.c.h.b16 %v931
    %v4142 = vunpack.c.l.b16 %v932
    %v4143 = vunpack.c.h.b16 %v932
    %v4144 = vunpack.c.l.b16 %v933
    %v4145 = vunpack.c.h.b16 %v933
    %v4146 = vunpack.c.l.b16 %v934
    %v4147 = vunpack.c.h.b16 %v934
    %v4148 = vunpack.c.l.b16 %v935
    %v4149 = vunpack.c.h.b16 %v935
    %v4150 = vunpack.c.l.b16 %v936
    %v4151 = vunpack.c.h.b16 %v936
    %v4152 = vunpack.c.l.b16 %v937
    %v4153 = vunpack.c.l.b16 %v938
    %v4154 = vunpack.c.h.b16 %v938
    %v4155 = vunpack.c.l.b16 %v939
    %v4156 = vunpack.c.h.b16 %v939
    %v4157 = vunpack.c.l.b16 %v940
    %v4158 = vunpack.c.h.b16 %v940
    %v4159 = vunpack.c.l.b16 %v941
    %v4160 = vunpack.c.h.b16 %v941
    %v4161 = vunpack.c.l.b16 %v942
    %v4162 = vunpack.c.h.b16 %v942
    %v4163 = vunpack.c.l.b16 %v943
    %v4164 = vunpack.c.h.b16 %v943
    %v4165 = vunpack.c.l.b16 %v944
    %v4166 = vunpack.c.l.b16 %v945
    %v4167 = vunpack.c.h.b16 %v945
    %v4168 = vunpack.c.l.b16 %v946
    %v4169 = vunpack.c.h.b16 %v946
    %v4170 = vunpack.c.l.b16 %v947
    %v4171 = vunpack.c.h.b16 %v947
    %v4172 = vunpack.c.l.b16 %v948
    %v4173 = vunpack.c.h.b16 %v948
    %v4174 = vunpack.c.l.b16 %v949
    %v4175 = vunpack.c.h.b16 %v949
    %v4176 = vunpack.c.l.b16 %v950
    %v4177 = vunpack.c.h.b16 %v950
    %v4178 = vunpack.c.l.b16 %v951
    %v4179 = vunpack.c.l.b16 %v952
    %v4180 = vunpack.c.h.b16 %v952
    %v4181 = vunpack.c.l.b16 %v953
    %v4182 = vunpack.c.h.b16 %v953
    %v4183 = vunpack.c.l.b16 %v954
    %v4184 = vunpack.c.h.b16 %v954
    %v4185 = vunpack.c.l.b16 %v955
    %v4186 = vunpack.c.h.b16 %v955
    %v4187 = vunpack.c.l.b16 %v956
    %v4188 = vunpack.c.h.b16 %v956
    %v4189 = vunpack.c.l.b16 %v957
    %v4190 = vunpack.c.h.b16 %v957
    %v4191 = vunpack.c.l.b16 %v958
    %v4192 = vunpack.c.l.b16 %v959
    %v4193 = vunpack.c.h.b16 %v959
    %v4194 = vunpack.c.l.b16 %v960
    %v4195 = vunpack.c.h.b16 %v960
    %v4196 = vunpack.c.l.b16 %v961
    %v4197 = vunpack.c.h.b16 %v961
    %v4198 = vunpack.c.l.b16 %v962
    %v4199 = vunpack.c.h.b16 %v962
    %v4200 = vunpack.c.l.b16 %v963
    %v4201 = vunpack.c.h.b16 %v963
    %v4202 = vunpack.c.l.b16 %v964
    %v4203 = vunpack.c.h.b16 %v964
    %v4204 = vunpack.c.l.b16 %v965
    %v4205 = vunpack.c.l.b16 %v966
    %v4206 = vunpack.c.h.b16 %v966
    %v4207 = vunpack.c.l.b16 %v967
    %v4208 = vunpack.c.h.b16 %v967
    %v4209 = vunpack.c.l.b16 %v968
    %v4210 = vunpack.c.h.b16 %v968
    %v4211 = vunpack.c.l.b16 %v969
    %v4212 = vunpack.c.h.b16 %v969
    %v4213 = vunpack.c.l.b16 %v970
    %v4214 = vunpack.c.h.b16 %v970
    %v4215 = vunpack.c.l.b16 %v971
    %v4216 = vunpack.c.h.b16 %v971
    %v4217 = vunpack.c.l.b16 %v972
    %v4218 = vunpack.c.l.b16 %v973
    %v4219 = vunpack.c.h.b16 %v973
    %v4220 = vunpack.c.l.b16 %v974
    %v4221 = vunpack.c.h.b16 %v974
    %v4222 = vunpack.c.l.b16 %v975
    %v4223 = vunpack.c.h.b16 %v975
    %v4224 = vunpack.c.l.b16 %v976
    %v4225 = vunpack.c.h.b16 %v976
    %v4226 = vunpack.c.l.b16 %v977
    %v4227 = vunpack.c.h.b16 %v977
    %v4228 = vunpack.c.l.b16 %v978
    %v4229 = vunpack.c.h.b16 %v978
    %v4230 = vunpack.c.l.b16 %v979
    %v4231 = vunpack.c.l.b16 %v980
    %v4232 = vunpack.c.h.b16 %v980
    %v4233 = vunpack.c.l.b16 %v981
    %v4234 = vunpack.c.h.b16 %v981
    %v4235 = vunpack.c.l.b16 %v982
    %v4236 = vunpack.c.h.b16 %v982
    %v4237 = vunpack.c.l.b16 %v983
    %v4238 = vunpack.c.h.b16 %v983
    %v4239 = vunpack.c.l.b16 %v984
    %v4240 = vunpack.c.h.b16 %v984
    %v4241 = vunpack.c.l.b16 %v985
    %v4242 = vunpack.c.h.b16 %v985
    %v4243 = vunpack.c.l.b16 %v986
    %v4244 = vunpack.c.l.b16 %v987
    %v4245 = vunpack.c.h.b16 %v987
    %v4246 = vunpack.c.l.b16 %v988
    %v4247 = vunpack.c.h.b16 %v988
    %v4248 = vunpack.c.l.b16 %v989
    %v4249 = vunpack.c.h.b16 %v989
    %v4250 = vunpack.c.l.b16 %v990
    %v4251 = vunpack.c.h.b16 %v990
    %v4252 = vunpack.c.l.b16 %v991
    %v4253 = vunpack.c.h.b16 %v991
    %v4254 = vunpack.c.l.b16 %v992
    %v4255 = vunpack.c.h.b16 %v992
    %v4256 = vunpack.c.l.b16 %v993
    %v4257 = vunpack.c.l.b16 %v994
    %v4258 = vunpack.c.h.b16 %v994
    %v4259 = vunpack.c.l.b16 %v995
    %v4260 = vunpack.c.h.b16 %v995
    %v4261 = vunpack.c.l.b16 %v996
    %v4262 = vunpack.c.h.b16 %v996
    %v4263 = vunpack.c.l.b16 %v997
    %v4264 = vunpack.c.h.b16 %v997
    %v4265 = vunpack.c.l.b16 %v998
    %v4266 = vunpack.c.h.b16 %v998
    %v4267 = vunpack.c.l.b16 %v999
    %v4268 = vunpack.c.h.b16 %v999
    %v4269 = vunpack.c.l.b16 %v1000
    %v4270 = vunpack.c.l.b16 %v1001
    %v4271 = vunpack.c.h.b16 %v1001
    %v4272 = vunpack.c.l.b16 %v1002
    %v4273 = vunpack.c.h.b16 %v1002
    %v4274 = vunpack.c.l.b16 %v1003
    %v4275 = vunpack.c.h.b16 %v1003
    %v4276 = vunpack.c.l.b16 %v1004
    %v4277 = vunpack.c.h.b16 %v1004
    %v4278 = vunpack.c.l.b16 %v1005
    %v4279 = vunpack.c.h.b16 %v1005
    %v4280 = vunpack.c.l.b16 %v1006
    %v4281 = vunpack.c.h.b16 %v1006
    %v4282 = vunpack.c.l.b16 %v1007
    %v4283 = vunpack.c.l.b16 %v1008
    %v4284 = vunpack.c.h.b16 %v1008
    %v4285 = vunpack.c.l.b16 %v1009
    %v4286 = vunpack.c.h.b16 %v1009
    %v4287 = vunpack.c.l.b16 %v1010
    %v4288 = vunpack.c.h.b16 %v1010
    %v4289 = vunpack.c.l.b16 %v1011
    %v4290 = vunpack.c.h.b16 %v1011
    %v4291 = vunpack.c.l.b16 %v1012
    %v4292 = vunpack.c.h.b16 %v1012
    %v4293 = vunpack.c.l.b16 %v1013
    %v4294 = vunpack.c.h.b16 %v1013
    %v4295 = vunpack.c.l.b16 %v1014
    %v4296 = vunpack.c.l.b16 %v1015
    %v4297 = vunpack.c.h.b16 %v1015
    %v4298 = vunpack.c.l.b16 %v1016
    %v4299 = vunpack.c.h.b16 %v1016
    %v4300 = vunpack.c.l.b16 %v1017
    %v4301 = vunpack.c.h.b16 %v1017
    %v4302 = vunpack.c.l.b16 %v1018
    %v4303 = vunpack.c.h.b16 %v1018
    %v4304 = vunpack.c.l.b16 %v1019
    %v4305 = vunpack.c.h.b16 %v1019
    %v4306 = vunpack.c.l.b16 %v1020
    %v4307 = vunpack.c.h.b16 %v1020
    %v4308 = vunpack.c.l.b16 %v1021
    %v4309 = vunpack.c.l.b16 %v1022
    %v4310 = vunpack.c.h.b16 %v1022
    %v4311 = vunpack.c.l.b16 %v1023
    %v4312 = vunpack.c.h.b16 %v1023
    %v4313 = vunpack.c.l.b16 %v1024
    %v4314 = vunpack.c.h.b16 %v1024
    %v4315 = vunpack.c.l.b16 %v1025
    %v4316 = vunpack.c.h.b16 %v1025
    %v4317 = vunpack.c.l.b16 %v1026
    %v4318 = vunpack.c.h.b16 %v1026
    %v4319 = vunpack.c.l.b16 %v1027
    %v4320 = vunpack.c.h.b16 %v1027
    %v4321 = vunpack.c.l.b16 %v1028
    %v4322 = vunpack.c.l.b16 %v1029
    %v4323 = vunpack.c.h.b16 %v1029
    %v4324 = vunpack.c.l.b16 %v1030
    %v4325 = vunpack.c.h.b16 %v1030
    %v4326 = vunpack.c.l.b16 %v1031
    %v4327 = vunpack.c.h.b16 %v1031
    %v4328 = vunpack.c.l.b16 %v1032
    %v4329 = vunpack.c.h.b16 %v1032
    %v4330 = vunpack.c.l.b16 %v1033
    %v4331 = vunpack.c.h.b16 %v1033
    %v4332 = vunpack.c.l.b16 %v1034
    %v4333 = vunpack.c.h.b16 %v1034
    %v4334 = vunpack.c.l.b16 %v1035
    %v4335 = vunpack.c.l.b16 %v1036
    %v4336 = vunpack.c.h.b16 %v1036
    %v4337 = vunpack.c.l.b16 %v1037
    %v4338 = vunpack.c.h.b16 %v1037
    %v4339 = vunpack.c.l.b16 %v1038
    %v4340 = vunpack.c.h.b16 %v1038
    %v4341 = vunpack.c.l.b16 %v1039
    %v4342 = vunpack.c.h.b16 %v1039
    %v4343 = vunpack.c.l.b16 %v1040
    %v4344 = vunpack.c.h.b16 %v1040
    %v4345 = vunpack.c.l.b16 %v1041
    %v4346 = vunpack.c.h.b16 %v1041
    %v4347 = vunpack.c.l.b16 %v1042
    %v4348 = vunpack.c.l.b16 %v1043
    %v4349 = vunpack.c.h.b16 %v1043
    %v4350 = vunpack.c.l.b16 %v1044
    %v4351 = vunpack.c.h.b16 %v1044
    %v4352 = vunpack.c.l.b16 %v1045
    %v4353 = vunpack.c.h.b16 %v1045
    %v4354 = vunpack.c.l.b16 %v1046
    %v4355 = vunpack.c.h.b16 %v1046
    %v4356 = vunpack.c.l.b16 %v1047
    %v4357 = vunpack.c.h.b16 %v1047
    %v4358 = vunpack.c.l.b16 %v1048
    %v4359 = vunpack.c.h.b16 %v1048
    %v4360 = vunpack.c.l.b16 %v1049
    %v4361 = vunpack.c.l.b16 %v1050
    %v4362 = vunpack.c.h.b16 %v1050
    %v4363 = vunpack.c.l.b16 %v1051
    %v4364 = vunpack.c.h.b16 %v1051
    %v4365 = vunpack.c.l.b16 %v1052
    %v4366 = vunpack.c.h.b16 %v1052
    %v4367 = vunpack.c.l.b16 %v1053
    %v4368 = vunpack.c.h.b16 %v1053
    %v4369 = vunpack.c.l.b16 %v1054
    %v4370 = vunpack.c.h.b16 %v1054
    %v4371 = vunpack.c.l.b16 %v1055
    %v4372 = vunpack.c.h.b16 %v1055
    %v4373 = vunpack.c.l.b16 %v1056
    %v4374 = vunpack.c.l.b16 %v1057
    %v4375 = vunpack.c.h.b16 %v1057
    %v4376 = vunpack.c.l.b16 %v1058
    %v4377 = vunpack.c.h.b16 %v1058
    %v4378 = vunpack.c.l.b16 %v1059
    %v4379 = vunpack.c.h.b16 %v1059
    %v4380 = vunpack.c.l.b16 %v1060
    %v4381 = vunpack.c.h.b16 %v1060
    %v4382 = vunpack.c.l.b16 %v1061
    %v4383 = vunpack.c.h.b16 %v1061
    %v4384 = vunpack.c.l.b16 %v1062
    %v4385 = vunpack.c.h.b16 %v1062
    %v4386 = vunpack.c.l.b16 %v1063
    %v4387 = vunpack.c.l.b16 %v1064
    %v4388 = vunpack.c.h.b16 %v1064
    %v4389 = vunpack.c.l.b16 %v1065
    %v4390 = vunpack.c.h.b16 %v1065
    %v4391 = vunpack.c.l.b16 %v1066
    %v4392 = vunpack.c.h.b16 %v1066
    %v4393 = vunpack.c.l.b16 %v1067
    %v4394 = vunpack.c.h.b16 %v1067
    %v4395 = vunpack.c.l.b16 %v1068
    %v4396 = vunpack.c.h.b16 %v1068
    %v4397 = vunpack.c.l.b16 %v1069
    %v4398 = vunpack.c.h.b16 %v1069
    %v4399 = vunpack.c.l.b16 %v1070
    %v4400 = vunpack.c.l.b16 %v1071
    %v4401 = vunpack.c.h.b16 %v1071
    %v4402 = vunpack.c.l.b16 %v1072
    %v4403 = vunpack.c.h.b16 %v1072
    %v4404 = vunpack.c.l.b16 %v1073
    %v4405 = vunpack.c.h.b16 %v1073
    %v4406 = vunpack.c.l.b16 %v1074
    %v4407 = vunpack.c.h.b16 %v1074
    %v4408 = vunpack.c.l.b16 %v1075
    %v4409 = vunpack.c.h.b16 %v1075
    %v4410 = vunpack.c.l.b16 %v1076
    %v4411 = vunpack.c.h.b16 %v1076
    %v4412 = vunpack.c.l.b16 %v1077
    %v4413 = vunpack.c.l.b16 %v1078
    %v4414 = vunpack.c.h.b16 %v1078
    %v4415 = vunpack.c.l.b16 %v1079
    %v4416 = vunpack.c.h.b16 %v1079
    %v4417 = vunpack.c.l.b16 %v1080
    %v4418 = vunpack.c.h.b16 %v1080
    %v4419 = vunpack.c.l.b16 %v1081
    %v4420 = vunpack.c.h.b16 %v1081
    %v4421 = vunpack.c.l.b16 %v1082
    %v4422 = vunpack.c.h.b16 %v1082
    %v4423 = vunpack.c.l.b16 %v1083
    %v4424 = vunpack.c.h.b16 %v1083
    %v4425 = vunpack.c.l.b16 %v1084
    %v4426 = vunpack.c.l.b16 %v1085
    %v4427 = vunpack.c.h.b16 %v1085
    %v4428 = vunpack.c.l.b16 %v1086
    %v4429 = vunpack.c.h.b16 %v1086
    %v4430 = vunpack.c.l.b16 %v1087
    %v4431 = vunpack.c.h.b16 %v1087
    %v4432 = vunpack.c.l.b16 %v1088
    %v4433 = vunpack.c.h.b16 %v1088
    %v4434 = vunpack.c.l.b16 %v1089
    %v4435 = vunpack.c.h.b16 %v1089
    %v4436 = vunpack.c.l.b16 %v1090
    %v4437 = vunpack.c.h.b16 %v1090
    %v4438 = vunpack.c.l.b16 %v1091
    %v4439 = vunpack.c.l.b16 %v1092
    %v4440 = vunpack.c.h.b16 %v1092
    %v4441 = vunpack.c.l.b16 %v1093
    %v4442 = vunpack.c.h.b16 %v1093
    %v4443 = vunpack.c.l.b16 %v1094
    %v4444 = vunpack.c.h.b16 %v1094
    %v4445 = vunpack.c.l.b16 %v1095
    %v4446 = vunpack.c.h.b16 %v1095
    %v4447 = vunpack.c.l.b16 %v1096
    %v4448 = vunpack.c.h.b16 %v1096
    %v4449 = vunpack.c.l.b16 %v1097
    %v4450 = vunpack.c.h.b16 %v1097
    %v4451 = vunpack.c.l.b16 %v1098
    %v4452 = vunpack.c.l.b16 %v1099
    %v4453 = vunpack.c.h.b16 %v1099
    %v4454 = vunpack.c.l.b16 %v1100
    %v4455 = vunpack.c.h.b16 %v1100
    %v4456 = vunpack.c.l.b16 %v1101
    %v4457 = vunpack.c.h.b16 %v1101
    %v4458 = vunpack.c.l.b16 %v1102
    %v4459 = vunpack.c.h.b16 %v1102
    %v4460 = vunpack.c.l.b16 %v1103
    %v4461 = vunpack.c.h.b16 %v1103
    %v4462 = vunpack.c.l.b16 %v1104
    %v4463 = vunpack.c.h.b16 %v1104
    %v4464 = vunpack.c.l.b16 %v1105
    %v4465 = vunpack.c.l.b16 %v1106
    %v4466 = vunpack.c.h.b16 %v1106
    %v4467 = vunpack.c.l.b16 %v1107
    %v4468 = vunpack.c.h.b16 %v1107
    %v4469 = vunpack.c.l.b16 %v1108
    %v4470 = vunpack.c.h.b16 %v1108
    %v4471 = vunpack.c.l.b16 %v1109
    %v4472 = vunpack.c.h.b16 %v1109
    %v4473 = vunpack.c.l.b16 %v1110
    %v4474 = vunpack.c.h.b16 %v1110
    %v4475 = vunpack.c.l.b16 %v1111
    %v4476 = vunpack.c.h.b16 %v1111
    %v4477 = vunpack.c.l.b16 %v1112
    %v4478 = vunpack.c.l.b16 %v1113
    %v4479 = vunpack.c.h.b16 %v1113
    %v4480 = vunpack.c.l.b16 %v1114
    %v4481 = vunpack.c.h.b16 %v1114
    %v4482 = vunpack.c.l.b16 %v1115
    %v4483 = vunpack.c.h.b16 %v1115
    %v4484 = vunpack.c.l.b16 %v1116
    %v4485 = vunpack.c.h.b16 %v1116
    %v4486 = vunpack.c.l.b16 %v1117
    %v4487 = vunpack.c.h.b16 %v1117
    %v4488 = vunpack.c.l.b16 %v1118
    %v4489 = vunpack.c.h.b16 %v1118
    %v4490 = vunpack.c.l.b16 %v1119
    %v4491 = vunpack.c.l.b16 %v1120
    %v4492 = vunpack.c.h.b16 %v1120
    %v4493 = vunpack.c.l.b16 %v1121
    %v4494 = vunpack.c.h.b16 %v1121
    %v4495 = vunpack.c.l.b16 %v1122
    %v4496 = vunpack.c.h.b16 %v1122
    %v4497 = vunpack.c.l.b16 %v1123
    %v4498 = vunpack.c.h.b16 %v1123
    %v4499 = vunpack.c.l.b16 %v1124
    %v4500 = vunpack.c.h.b16 %v1124
    %v4501 = vunpack.c.l.b16 %v1125
    %v4502 = vunpack.c.h.b16 %v1125
    %v4503 = vunpack.c.l.b16 %v1126
    %v4504 = vunpack.c.l.b16 %v1127
    %v4505 = vunpack.c.h.b16 %v1127
    %v4506 = vunpack.c.l.b16 %v1128
    %v4507 = vunpack.c.h.b16 %v1128
    %v4508 = vunpack.c.l.b16 %v1129
    %v4509 = vunpack.c.h.b16 %v1129
    %v4510 = vunpack.c.l.b16 %v1130
    %v4511 = vunpack.c.h.b16 %v1130
    %v4512 = vunpack.c.l.b16 %v1131
    %v4513 = vunpack.c.h.b16 %v1131
    %v4514 = vunpack.c.l.b16 %v1132
    %v4515 = vunpack.c.h.b16 %v1132
    %v4516 = vunpack.c.l.b16 %v1133
    %v4517 = vunpack.c.l.b16 %v1134
    %v4518 = vunpack.c.h.b16 %v1134
    %v4519 = vunpack.c.l.b16 %v1135
    %v4520 = vunpack.c.h.b16 %v1135
    %v4521 = vunpack.c.l.b16 %v1136
    %v4522 = vunpack.c.h.b16 %v1136
    %v4523 = vunpack.c.l.b16 %v1137
    %v4524 = vunpack.c.h.b16 %v1137
    %v4525 = vunpack.c.l.b16 %v1138
    %v4526 = vunpack.c.h.b16 %v1138
    %v4527 = vunpack.c.l.b16 %v1139
    %v4528 = vunpack.c.h.b16 %v1139
    %v4529 = vunpack.c.l.b16 %v1140
    %v4530 = vunpack.c.l.b16 %v1141
    %v4531 = vunpack.c.h.b16 %v1141
    %v4532 = vunpack.c.l.b16 %v1142
    %v4533 = vunpack.c.h.b16 %v1142
    %v4534 = vunpack.c.l.b16 %v1143
    %v4535 = vunpack.c.h.b16 %v1143
    %v4536 = vunpack.c.l.b16 %v1144
    %v4537 = vunpack.c.h.b16 %v1144
    %v4538 = vunpack.c.l.b16 %v1145
    %v4539 = vunpack.c.h.b16 %v1145
    %v4540 = vunpack.c.l.b16 %v1146
    %v4541 = vunpack.c.h.b16 %v1146
    %v4542 = vunpack.c.l.b16 %v1147
    %v4543 = vunpack.c.l.b16 %v1148
    %v4544 = vunpack.c.h.b16 %v1148
    %v4545 = vunpack.c.l.b16 %v1149
    %v4546 = vunpack.c.h.b16 %v1149
    %v4547 = vunpack.c.l.b16 %v1150
    %v4548 = vunpack.c.h.b16 %v1150
    %v4549 = vunpack.c.l.b16 %v1151
    %v4550 = vunpack.c.h.b16 %v1151
    %v4551 = vunpack.c.l.b16 %v1152
    %v4552 = vunpack.c.h.b16 %v1152
    %v4553 = vunpack.c.l.b16 %v1153
    %v4554 = vunpack.c.h.b16 %v1153
    %v4555 = vunpack.c.l.b16 %v1154
    %v4556 = vunpack.c.l.b16 %v1155
    %v4557 = vunpack.c.h.b16 %v1155
    %v4558 = vunpack.c.l.b16 %v1156
    %v4559 = vunpack.c.h.b16 %v1156
    %v4560 = vunpack.c.l.b16 %v1157
    %v4561 = vunpack.c.h.b16 %v1157
    %v4562 = vunpack.c.l.b16 %v1158
    %v4563 = vunpack.c.h.b16 %v1158
    %v4564 = vunpack.c.l.b16 %v1159
    %v4565 = vunpack.c.h.b16 %v1159
    %v4566 = vunpack.c.l.b16 %v1160
    %v4567 = vunpack.c.h.b16 %v1160
    %v4568 = vunpack.c.l.b16 %v1161
    %v4569 = vunpack.c.l.b16 %v1162
    %v4570 = vunpack.c.h.b16 %v1162
    %v4571 = vunpack.c.l.b16 %v1163
    %v4572 = vunpack.c.h.b16 %v1163
    %v4573 = vunpack.c.l.b16 %v1164
    %v4574 = vunpack.c.h.b16 %v1164
    %v4575 = vunpack.c.l.b16 %v1165
    %v4576 = vunpack.c.h.b16 %v1165
    %v4577 = vunpack.c.l.b16 %v1166
    %v4578 = vunpack.c.h.b16 %v1166
    %v4579 = vunpack.c.l.b16 %v1167
    %v4580 = vunpack.c.h.b16 %v1167
    %v4581 = vunpack.c.l.b16 %v1168
    %v4582 = vunpack.c.l.b16 %v1169
    %v4583 = vunpack.c.h.b16 %v1169
    %v4584 = vunpack.c.l.b16 %v1170
    %v4585 = vunpack.c.h.b16 %v1170
    %v4586 = vunpack.c.l.b16 %v1171
    %v4587 = vunpack.c.h.b16 %v1171
    %v4588 = vunpack.c.l.b16 %v1172
    %v4589 = vunpack.c.h.b16 %v1172
    %v4590 = vunpack.c.l.b16 %v1173
    %v4591 = vunpack.c.h.b16 %v1173
    %v4592 = vunpack.c.l.b16 %v1174
    %v4593 = vunpack.c.h.b16 %v1174
    %v4594 = vunpack.c.l.b16 %v1175
    %v4595 = vunpack.c.l.b16 %v1176
    %v4596 = vunpack.c.h.b16 %v1176
    %v4597 = vunpack.c.l.b16 %v1177
    %v4598 = vunpack.c.h.b16 %v1177
    %v4599 = vunpack.c.l.b16 %v1178
    %v4600 = vunpack.c.h.b16 %v1178
    %v4601 = vunpack.c.l.b16 %v1179
    %v4602 = vunpack.c.h.b16 %v1179
    %v4603 = vunpack.c.l.b16 %v1180
    %v4604 = vunpack.c.h.b16 %v1180
    %v4605 = vunpack.c.l.b16 %v1181
    %v4606 = vunpack.c.h.b16 %v1181
    %v4607 = vunpack.c.l.b16 %v1182
    %v4608 = vunpack.c.l.b16 %v1183
    %v4609 = vunpack.c.h.b16 %v1183
    %v4610 = vunpack.c.l.b16 %v1184
    %v4611 = vunpack.c.h.b16 %v1184
    %v4612 = vunpack.c.l.b16 %v1185
    %v4613 = vunpack.c.h.b16 %v1185
    %v4614 = vunpack.c.l.b16 %v1186
    %v4615 = vunpack.c.h.b16 %v1186
    %v4616 = vunpack.c.l.b16 %v1187
    %v4617 = vunpack.c.h.b16 %v1187
    %v4618 = vunpack.c.l.b16 %v1188
    %v4619 = vunpack.c.h.b16 %v1188
    %v4620 = vunpack.c.l.b16 %v1189
    %v4621 = vunpack.c.l.b16 %v1190
    %v4622 = vunpack.c.h.b16 %v1190
    %v4623 = vunpack.c.l.b16 %v1191
    %v4624 = vunpack.c.h.b16 %v1191
    %v4625 = vunpack.c.l.b16 %v1192
    %v4626 = vunpack.c.h.b16 %v1192
    %v4627 = vunpack.c.l.b16 %v1193
    %v4628 = vunpack.c.h.b16 %v1193
    %v4629 = vunpack.c.l.b16 %v1194
    %v4630 = vunpack.c.h.b16 %v1194
    %v4631 = vunpack.c.l.b16 %v1195
    %v4632 = vunpack.c.h.b16 %v1195
    %v4633 = vunpack.c.l.b16 %v1196
    %v4634 = vunpack.c.l.b16 %v1197
    %v4635 = vunpack.c.h.b16 %v1197
    %v4636 = vunpack.c.l.b16 %v1198
    %v4637 = vunpack.c.h.b16 %v1198
    %v4638 = vunpack.c.l.b16 %v1199
    %v4639 = vunpack.c.h.b16 %v1199
    %v4640 = vunpack.c.l.b16 %v1200
    %v4641 = vunpack.c.h.b16 %v1200
    %v4642 = vunpack.c.l.b16 %v1201
    %v4643 = vunpack.c.h.b16 %v1201
    %v4644 = vunpack.c.l.b16 %v1202
    %v4645 = vunpack.c.h.b16 %v1202
    %v4646 = vunpack.c.l.b16 %v1203
    %v4647 = vunpack.c.l.b16 %v1204
    %v4648 = vunpack.c.h.b16 %v1204
    %v4649 = vunpack.c.l.b16 %v1205
    %v4650 = vunpack.c.h.b16 %v1205
    %v4651 = vunpack.c.l.b16 %v1206
    %v4652 = vunpack.c.h.b16 %v1206
    %v4653 = vunpack.c.l.b16 %v1207
    %v4654 = vunpack.c.h.b16 %v1207
    %v4655 = vunpack.c.l.b16 %v1208
    %v4656 = vunpack.c.h.b16 %v1208
    %v4657 = vunpack.c.l.b16 %v1209
    %v4658 = vunpack.c.h.b16 %v1209
    %v4659 = vunpack.c.l.b16 %v1210
    %v4660 = vunpack.c.l.b16 %v1211
    %v4661 = vunpack.c.h.b16 %v1211
    %v4662 = vunpack.c.l.b16 %v1212
    %v4663 = vunpack.c.h.b16 %v1212
    %v4664 = vunpack.c.l.b16 %v1213
    %v4665 = vunpack.c.h.b16 %v1213
    %v4666 = vunpack.c.l.b16 %v1214
    %v4667 = vunpack.c.h.b16 %v1214
    %v4668 = vunpack.c.l.b16 %v1215
    %v4669 = vunpack.c.h.b16 %v1215
    %v4670 = vunpack.c.l.b16 %v1216
    %v4671 = vunpack.c.h.b16 %v1216
    %v4672 = vunpack.c.l.b16 %v1217
    %v4673 = vunpack.c.l.b16 %v1218
    %v4674 = vunpack.c.h.b16 %v1218
    %v4675 = vunpack.c.l.b16 %v1219
    %v4676 = vunpack.c.h.b16 %v1219
    %v4677 = vunpack.c.l.b16 %v1220
    %v4678 = vunpack.c.h.b16 %v1220
    %v4679 = vunpack.c.l.b16 %v1221
    %v4680 = vunpack.c.h.b16 %v1221
    %v4681 = vunpack.c.l.b16 %v1222
    %v4682 = vunpack.c.h.b16 %v1222
    %v4683 = vunpack.c.l.b16 %v1223
    %v4684 = vunpack.c.h.b16 %v1223
    %v4685 = vunpack.c.l.b16 %v1224
    %v4686 = vunpack.c.l.b16 %v1225
    %v4687 = vunpack.c.h.b16 %v1225
    %v4688 = vunpack.c.l.b16 %v1226
    %v4689 = vunpack.c.h.b16 %v1226
    %v4690 = vunpack.c.l.b16 %v1227
    %v4691 = vunpack.c.h.b16 %v1227
    %v4692 = vunpack.c.l.b16 %v1228
    %v4693 = vunpack.c.h.b16 %v1228
    %v4694 = vunpack.c.l.b16 %v1229
    %v4695 = vunpack.c.h.b16 %v1229
    %v4696 = vunpack.c.l.b16 %v1230
    %v4697 = vunpack.c.h.b16 %v1230
    %v4698 = vunpack.c.l.b16 %v1231
    %v4699 = vunpack.c.l.b16 %v1232
    %v4700 = vunpack.c.h.b16 %v1232
    %v4701 = vunpack.c.l.b16 %v1233
    %v4702 = vunpack.c.h.b16 %v1233
    %v4703 = vunpack.c.l.b16 %v1234
    %v4704 = vunpack.c.h.b16 %v1234
    %v4705 = vunpack.c.l.b16 %v1235
    %v4706 = vunpack.c.h.b16 %v1235
    %v4707 = vunpack.c.l.b16 %v1236
    %v4708 = vunpack.c.h.b16 %v1236
    %v4709 = vunpack.c.l.b16 %v1237
    %v4710 = vunpack.c.h.b16 %v1237
    %v4711 = vunpack.c.l.b16 %v1238
    %v4712 = vunpack.c.l.b16 %v1239
    %v4713 = vunpack.c.h.b16 %v1239
    %v4714 = vunpack.c.l.b16 %v1240
    %v4715 = vunpack.c.h.b16 %v1240
    %v4716 = vunpack.c.l.b16 %v1241
    %v4717 = vunpack.c.h.b16 %v1241
    %v4718 = vunpack.c.l.b16 %v1242
    %v4719 = vunpack.c.h.b16 %v1242
    %v4720 = vunpack.c.l.b16 %v1243
    %v4721 = vunpack.c.h.b16 %v1243
    %v4722 = vunpack.c.l.b16 %v1244
    %v4723 = vunpack.c.h.b16 %v1244
    %v4724 = vunpack.c.l.b16 %v1245
    %v4725 = vunpack.c.l.b16 %v1246
    %v4726 = vunpack.c.h.b16 %v1246
    %v4727 = vunpack.c.l.b16 %v1247
    %v4728 = vunpack.c.h.b16 %v1247
    %v4729 = vunpack.c.l.b16 %v1248
    %v4730 = vunpack.c.h.b16 %v1248
    %v4731 = vunpack.c.l.b16 %v1249
    %v4732 = vunpack.c.h.b16 %v1249
    %v4733 = vunpack.c.l.b16 %v1250
    %v4734 = vunpack.c.h.b16 %v1250
    %v4735 = vunpack.c.l.b16 %v1251
    %v4736 = vunpack.c.h.b16 %v1251
    %v4737 = vunpack.c.l.b16 %v1252
    %v4738 = vunpack.c.l.b16 %v1253
    %v4739 = vunpack.c.h.b16 %v1253
    %v4740 = vunpack.c.l.b16 %v1254
    %v4741 = vunpack.c.h.b16 %v1254
    %v4742 = vunpack.c.l.b16 %v1255
    %v4743 = vunpack.c.h.b16 %v1255
    %v4744 = vunpack.c.l.b16 %v1256
    %v4745 = vunpack.c.h.b16 %v1256
    %v4746 = vunpack.c.l.b16 %v1257
    %v4747 = vunpack.c.h.b16 %v1257
    %v4748 = vunpack.c.l.b16 %v1258
    %v4749 = vunpack.c.h.b16 %v1258
    %v4750 = vunpack.c.l.b16 %v1259
    %v4751 = vunpack.c.l.b16 %v1260
    %v4752 = vunpack.c.h.b16 %v1260
    %v4753 = vunpack.c.l.b16 %v1261
    %v4754 = vunpack.c.h.b16 %v1261
    %v4755 = vunpack.c.l.b16 %v1262
    %v4756 = vunpack.c.h.b16 %v1262
    %v4757 = vunpack.c.l.b16 %v1263
    %v4758 = vunpack.c.h.b16 %v1263
    %v4759 = vunpack.c.l.b16 %v1264
    %v4760 = vunpack.c.h.b16 %v1264
    %v4761 = vunpack.c.l.b16 %v1265
    %v4762 = vunpack.c.h.b16 %v1265
    %v4763 = vunpack.c.l.b16 %v1266
    %v4764 = vunpack.c.l.b16 %v1267
    %v4765 = vunpack.c.h.b16 %v1267
    %v4766 = vunpack.c.l.b16 %v1268
    %v4767 = vunpack.c.h.b16 %v1268
    %v4768 = vunpack.c.l.b16 %v1269
    %v4769 = vunpack.c.h.b16 %v1269
    %v4770 = vunpack.c.l.b16 %v1270
    %v4771 = vunpack.c.h.b16 %v1270
    %v4772 = vunpack.c.l.b16 %v1271
    %v4773 = vunpack.c.h.b16 %v1271
    %v4774 = vunpack.c.l.b16 %v1272
    %v4775 = vunpack.c.h.b16 %v1272
    %v4776 = vunpack.c.l.b16 %v1273
    %v4777 = vunpack.c.l.b16 %v1274
    %v4778 = vunpack.c.h.b16 %v1274
    %v4779 = vunpack.c.l.b16 %v1275
    %v4780 = vunpack.c.h.b16 %v1275
    %v4781 = vunpack.c.l.b16 %v1276
    %v4782 = vunpack.c.h.b16 %v1276
    %v4783 = vunpack.c.l.b16 %v1277
    %v4784 = vunpack.c.h.b16 %v1277
    %v4785 = vunpack.c.l.b16 %v1278
    %v4786 = vunpack.c.h.b16 %v1278
    %v4787 = vunpack.c.l.b16 %v1279
    %v4788 = vunpack.c.h.b16 %v1279
    %v4789 = vunpack.c.l.b16 %v1280
    %v4790 = vunpack.c.l.b16 %v1281
    %v4791 = vunpack.c.h.b16 %v1281
    %v4792 = vunpack.c.l.b16 %v1282
    %v4793 = vunpack.c.h.b16 %v1282
    %v4794 = vunpack.c.l.b16 %v1283
    %v4795 = vunpack.c.h.b16 %v1283
    %v4796 = vunpack.c.l.b16 %v1284
    %v4797 = vunpack.c.h.b16 %v1284
    %v4798 = vunpack.c.l.b16 %v1285
    %v4799 = vunpack.c.h.b16 %v1285
    %v4800 = vunpack.c.l.b16 %v1286
    %v4801 = vunpack.c.h.b16 %v1286
    %v4802 = vunpack.c.l.b16 %v1287
    %v4803 = vunpack.c.l.b16 %v1288
    %v4804 = vunpack.c.h.b16 %v1288
    %v4805 = vunpack.c.l.b16 %v1289
    %v4806 = vunpack.c.h.b16 %v1289
    %v4807 = vunpack.c.l.b16 %v1290
    %v4808 = vunpack.c.h.b16 %v1290
    %v4809 = vunpack.c.l.b16 %v1291
    %v4810 = vunpack.c.h.b16 %v1291
    %v4811 = vunpack.c.l.b16 %v1292
    %v4812 = vunpack.c.h.b16 %v1292
    %v4813 = vunpack.c.l.b16 %v1293
    %v4814 = vunpack.c.h.b16 %v1293
    %v4815 = vunpack.c.l.b16 %v1294
    %v4816 = vunpack.c.l.b16 %v1295
    %v4817 = vunpack.c.h.b16 %v1295
    %v4818 = vunpack.c.l.b16 %v1296
    %v4819 = vunpack.c.h.b16 %v1296
    %v4820 = vunpack.c.l.b16 %v1297
    %v4821 = vunpack.c.h.b16 %v1297
    %v4822 = vunpack.c.l.b16 %v1298
    %v4823 = vunpack.c.h.b16 %v1298
    %v4824 = vunpack.c.l.b16 %v1299
    %v4825 = vunpack.c.h.b16 %v1299
    %v4826 = vunpack.c.l.b16 %v1300
    %v4827 = vunpack.c.h.b16 %v1300
    %v4828 = vunpack.c.l.b16 %v1301
    %v4829 = vunpack.c.l.b16 %v1302
    %v4830 = vunpack.c.h.b16 %v1302
    %v4831 = vunpack.c.l.b16 %v1303
    %v4832 = vunpack.c.h.b16 %v1303
    %v4833 = vunpack.c.l.b16 %v1304
    %v4834 = vunpack.c.h.b16 %v1304
    %v4835 = vunpack.c.l.b16 %v1305
    %v4836 = vunpack.c.h.b16 %v1305
    %v4837 = vunpack.c.l.b16 %v1306
    %v4838 = vunpack.c.h.b16 %v1306
    %v4839 = vunpack.c.l.b16 %v1307
    %v4840 = vunpack.c.h.b16 %v1307
    %v4841 = vunpack.c.l.b16 %v1308
    %v4842 = vunpack.c.l.b16 %v1309
    %v4843 = vunpack.c.h.b16 %v1309
    %v4844 = vunpack.c.l.b16 %v1310
    %v4845 = vunpack.c.h.b16 %v1310
    %v4846 = vunpack.c.l.b16 %v1311
    %v4847 = vunpack.c.h.b16 %v1311
    %v4848 = vunpack.c.l.b16 %v1312
    %v4849 = vunpack.c.h.b16 %v1312
    %v4850 = vunpack.c.l.b16 %v1313
    %v4851 = vunpack.c.h.b16 %v1313
    %v4852 = vunpack.c.l.b16 %v1314
    %v4853 = vunpack.c.h.b16 %v1314
    %v4854 = vunpack.c.l.b16 %v1315
    %v4855 = vunpack.c.l.b16 %v1316
    %v4856 = vunpack.c.h.b16 %v1316
    %v4857 = vunpack.c.l.b16 %v1317
    %v4858 = vunpack.c.h.b16 %v1317
    %v4859 = vunpack.c.l.b16 %v1318
    %v4860 = vunpack.c.h.b16 %v1318
    %v4861 = vunpack.c.l.b16 %v1319
    %v4862 = vunpack.c.h.b16 %v1319
    %v4863 = vunpack.c.l.b16 %v1320
    %v4864 = vunpack.c.h.b16 %v1320
    %v4865 = vunpack.c.l.b16 %v1321
    %v4866 = vunpack.c.h.b16 %v1321
    %v4867 = vunpack.c.l.b16 %v1322
    %v4868 = vunpack.c.l.b16 %v1323
    %v4869 = vunpack.c.h.b16 %v1323
    %v4870 = vunpack.c.l.b16 %v1324
    %v4871 = vunpack.c.h.b16 %v1324
    %v4872 = vunpack.c.l.b16 %v1325
    %v4873 = vunpack.c.h.b16 %v1325
    %v4874 = vunpack.c.l.b16 %v1326
    %v4875 = vunpack.c.h.b16 %v1326
    %v4876 = vunpack.c.l.b16 %v1327
    %v4877 = vunpack.c.h.b16 %v1327
    %v4878 = vunpack.c.l.b16 %v1328
    %v4879 = vunpack.c.h.b16 %v1328
    %v4880 = vunpack.c.l.b16 %v1329
    %v4881 = vunpack.c.l.b16 %v1330
    %v4882 = vunpack.c.h.b16 %v1330
    %v4883 = vunpack.c.l.b16 %v1331
    %v4884 = vunpack.c.h.b16 %v1331
    %v4885 = vunpack.c.l.b16 %v1332
    %v4886 = vunpack.c.h.b16 %v1332
    %v4887 = vunpack.c.l.b16 %v1333
    %v4888 = vunpack.c.h.b16 %v1333
    %v4889 = vunpack.c.l.b16 %v1334
    %v4890 = vunpack.c.h.b16 %v1334
    %v4891 = vunpack.c.l.b16 %v1335
    %v4892 = vunpack.c.h.b16 %v1335
    %v4893 = vunpack.c.l.b16 %v1336
    %v4894 = vunpack.c.l.b16 %v1337
    %v4895 = vunpack.c.h.b16 %v1337
    %v4896 = vunpack.c.l.b16 %v1338
    %v4897 = vunpack.c.h.b16 %v1338
    %v4898 = vunpack.c.l.b16 %v1339
    %v4899 = vunpack.c.h.b16 %v1339
    %v4900 = vunpack.c.l.b16 %v1340
    %v4901 = vunpack.c.h.b16 %v1340
    %v4902 = vunpack.c.l.b16 %v1341
    %v4903 = vunpack.c.h.b16 %v1341
    %v4904 = vunpack.c.l.b16 %v1342
    %v4905 = vunpack.c.h.b16 %v1342
    %v4906 = vunpack.c.l.b16 %v1343
    %v4907 = vunpack.c.l.b16 %v1344
    %v4908 = vunpack.c.h.b16 %v1344
    %v4909 = vunpack.c.l.b16 %v1345
    %v4910 = vunpack.c.h.b16 %v1345
    %v4911 = vunpack.c.l.b16 %v1346
    %v4912 = vunpack.c.h.b16 %v1346
    %v4913 = vunpack.c.l.b16 %v1347
    %v4914 = vunpack.c.h.b16 %v1347
    %v4915 = vunpack.c.l.b16 %v1348
    %v4916 = vunpack.c.h.b16 %v1348
    %v4917 = vunpack.c.l.b16 %v1349
    %v4918 = vunpack.c.h.b16 %v1349
    %v4919 = vunpack.c.l.b16 %v1350
    %v4920 = vunpack.c.l.b16 %v1351
    %v4921 = vunpack.c.h.b16 %v1351
    %v4922 = vunpack.c.l.b16 %v1352
    %v4923 = vunpack.c.h.b16 %v1352
    %v4924 = vunpack.c.l.b16 %v1353
    %v4925 = vunpack.c.h.b16 %v1353
    %v4926 = vunpack.c.l.b16 %v1354
    %v4927 = vunpack.c.h.b16 %v1354
    %v4928 = vunpack.c.l.b16 %v1355
    %v4929 = vunpack.c.h.b16 %v1355
    %v4930 = vunpack.c.l.b16 %v1356
    %v4931 = vunpack.c.h.b16 %v1356
    %v4932 = vunpack.c.l.b16 %v1357
    %v4933 = vunpack.c.l.b16 %v1358
    %v4934 = vunpack.c.h.b16 %v1358
    %v4935 = vunpack.c.l.b16 %v1359
    %v4936 = vunpack.c.h.b16 %v1359
    %v4937 = vunpack.c.l.b16 %v1360
    %v4938 = vunpack.c.h.b16 %v1360
    %v4939 = vunpack.c.l.b16 %v1361
    %v4940 = vunpack.c.h.b16 %v1361
    %v4941 = vunpack.c.l.b16 %v1362
    %v4942 = vunpack.c.h.b16 %v1362
    %v4943 = vunpack.c.l.b16 %v1363
    %v4944 = vunpack.c.h.b16 %v1363
    %v4945 = vunpack.c.l.b16 %v1364
    %v4946 = vunpack.c.l.b16 %v1365
    %v4947 = vunpack.c.h.b16 %v1365
    %v4948 = vunpack.c.l.b16 %v1366
    %v4949 = vunpack.c.h.b16 %v1366
    %v4950 = vunpack.c.l.b16 %v1367
    %v4951 = vunpack.c.h.b16 %v1367
    %v4952 = vunpack.c.l.b16 %v1368
    %v4953 = vunpack.c.h.b16 %v1368
    %v4954 = vunpack.c.l.b16 %v1369
    %v4955 = vunpack.c.h.b16 %v1369
    %v4956 = vunpack.c.l.b16 %v1370
    %v4957 = vunpack.c.h.b16 %v1370
    %v4958 = vunpack.c.l.b16 %v1371
    %v4959 = vunpack.c.l.b16 %v1372
    %v4960 = vunpack.c.h.b16 %v1372
    %v4961 = vunpack.c.l.b16 %v1373
    %v4962 = vunpack.c.h.b16 %v1373
    %v4963 = vunpack.c.l.b16 %v1374
    %v4964 = vunpack.c.h.b16 %v1374
    %v4965 = vunpack.c.l.b16 %v1375
    %v4966 = vunpack.c.h.b16 %v1375
    %v4967 = vunpack.c.l.b16 %v1376
    %v4968 = vunpack.c.h.b16 %v1376
    %v4969 = vunpack.c.l.b16 %v1377
    %v4970 = vunpack.c.h.b16 %v1377
    %v4971 = vunpack.c.l.b16 %v1378
    %v4972 = vunpack.c.l.b16 %v1379
    %v4973 = vunpack.c.h.b16 %v1379
    %v4974 = vunpack.c.l.b16 %v1380
    %v4975 = vunpack.c.h.b16 %v1380
    %v4976 = vunpack.c.l.b16 %v1381
    %v4977 = vunpack.c.h.b16 %v1381
    %v4978 = vunpack.c.l.b16 %v1382
    %v4979 = vunpack.c.h.b16 %v1382
    %v4980 = vunpack.c.l.b16 %v1383
    %v4981 = vunpack.c.h.b16 %v1383
    %v4982 = vunpack.c.l.b16 %v1384
    %v4983 = vunpack.c.h.b16 %v1384
    %v4984 = vunpack.c.l.b16 %v1385
    %v4985 = vunpack.c.l.b16 %v1386
    %v4986 = vunpack.c.h.b16 %v1386
    %v4987 = vunpack.c.l.b16 %v1387
    %v4988 = vunpack.c.h.b16 %v1387
    %v4989 = vunpack.c.l.b16 %v1388
    %v4990 = vunpack.c.h.b16 %v1388
    %v4991 = vunpack.c.l.b16 %v1389
    %v4992 = vunpack.c.h.b16 %v1389
    %v4993 = vunpack.c.l.b16 %v1390
    %v4994 = vunpack.c.h.b16 %v1390
    %v4995 = vunpack.c.l.b16 %v1391
    %v4996 = vunpack.c.h.b16 %v1391
    %v4997 = vunpack.c.l.b16 %v1392
    %v4998 = vunpack.c.l.b16 %v1393
    %v4999 = vunpack.c.h.b16 %v1393
    %v5000 = vunpack.c.l.b16 %v1394
    %v5001 = vunpack.c.h.b16 %v1394
    %v5002 = vunpack.c.l.b16 %v1395
    %v5003 = vunpack.c.h.b16 %v1395
    %v5004 = vunpack.c.l.b16 %v1396
    %v5005 = vunpack.c.h.b16 %v1396
    %v5006 = vunpack.c.l.b16 %v1397
    %v5007 = vunpack.c.h.b16 %v1397
    %v5008 = vunpack.c.l.b16 %v1398
    %v5009 = vunpack.c.h.b16 %v1398
    %v5010 = vunpack.c.l.b16 %v1399
    %v5011 = vunpack.c.l.b16 %v1400
    %v5012 = vunpack.c.h.b16 %v1400
    %v5013 = vunpack.c.l.b16 %v1401
    %v5014 = vunpack.c.h.b16 %v1401
    %v5015 = vunpack.c.l.b16 %v1402
    %v5016 = vunpack.c.h.b16 %v1402
    %v5017 = vunpack.c.l.b16 %v1403
    %v5018 = vunpack.c.h.b16 %v1403
    %v5019 = vunpack.c.l.b16 %v1404
    %v5020 = vunpack.c.h.b16 %v1404
    %v5021 = vunpack.c.l.b16 %v1405
    %v5022 = vunpack.c.h.b16 %v1405
    %v5023 = vunpack.c.l.b16 %v1406
    %v5024 = vunpack.c.l.b16 %v1407
    %v5025 = vunpack.c.h.b16 %v1407
    %v5026 = vunpack.c.l.b16 %v1408
    %v5027 = vunpack.c.h.b16 %v1408
    %v5028 = vunpack.c.l.b16 %v1409
    %v5029 = vunpack.c.h.b16 %v1409
    %v5030 = vunpack.c.l.b16 %v1410
    %v5031 = vunpack.c.h.b16 %v1410
    %v5032 = vunpack.c.l.b16 %v1411
    %v5033 = vunpack.c.h.b16 %v1411
    %v5034 = vunpack.c.l.b16 %v1412
    %v5035 = vunpack.c.h.b16 %v1412
    %v5036 = vunpack.c.l.b16 %v1413
    %v5037 = vunpack.c.l.b16 %v1414
    %v5038 = vunpack.c.h.b16 %v1414
    %v5039 = vunpack.c.l.b16 %v1415
    %v5040 = vunpack.c.h.b16 %v1415
    %v5041 = vunpack.c.l.b16 %v1416
    %v5042 = vunpack.c.h.b16 %v1416
    %v5043 = vunpack.c.l.b16 %v1417
    %v5044 = vunpack.c.h.b16 %v1417
    %v5045 = vunpack.c.l.b16 %v1418
    %v5046 = vunpack.c.h.b16 %v1418
    %v5047 = vunpack.c.l.b16 %v1419
    %v5048 = vunpack.c.h.b16 %v1419
    %v5049 = vunpack.c.l.b16 %v1420
    %v5050 = vunpack.c.l.b16 %v1421
    %v5051 = vunpack.c.h.b16 %v1421
    %v5052 = vunpack.c.l.b16 %v1422
    %v5053 = vunpack.c.h.b16 %v1422
    %v5054 = vunpack.c.l.b16 %v1423
    %v5055 = vunpack.c.h.b16 %v1423
    %v5056 = vunpack.c.l.b16 %v1424
    %v5057 = vunpack.c.h.b16 %v1424
    %v5058 = vunpack.c.l.b16 %v1425
    %v5059 = vunpack.c.h.b16 %v1425
    %v5060 = vunpack.c.l.b16 %v1426
    %v5061 = vunpack.c.h.b16 %v1426
    %v5062 = vunpack.c.l.b16 %v1427
    %v5063 = vunpack.c.l.b16 %v1428
    %v5064 = vunpack.c.h.b16 %v1428
    %v5065 = vunpack.c.l.b16 %v1429
    %v5066 = vunpack.c.h.b16 %v1429
    %v5067 = vunpack.c.l.b16 %v1430
    %v5068 = vunpack.c.h.b16 %v1430
    %v5069 = vunpack.c.l.b16 %v1431
    %v5070 = vunpack.c.h.b16 %v1431
    %v5071 = vunpack.c.l.b16 %v1432
    %v5072 = vunpack.c.h.b16 %v1432
    %v5073 = vunpack.c.l.b16 %v1433
    %v5074 = vunpack.c.h.b16 %v1433
    %v5075 = vunpack.c.l.b16 %v1434
    %v5076 = vunpack.c.l.b16 %v1435
    %v5077 = vunpack.c.h.b16 %v1435
    %v5078 = vunpack.c.l.b16 %v1436
    %v5079 = vunpack.c.h.b16 %v1436
    %v5080 = vunpack.c.l.b16 %v1437
    %v5081 = vunpack.c.h.b16 %v1437
    %v5082 = vunpack.c.l.b16 %v1438
    %v5083 = vunpack.c.h.b16 %v1438
    %v5084 = vunpack.c.l.b16 %v1439
    %v5085 = vunpack.c.h.b16 %v1439
    %v5086 = vunpack.c.l.b16 %v1440
    %v5087 = vunpack.c.h.b16 %v1440
    %v5088 = vunpack.c.l.b16 %v1441
    %v5089 = vunpack.c.l.b16 %v1442
    %v5090 = vunpack.c.h.b16 %v1442
    %v5091 = vunpack.c.l.b16 %v1443
    %v5092 = vunpack.c.h.b16 %v1443
    %v5093 = vunpack.c.l.b16 %v1444
    %v5094 = vunpack.c.h.b16 %v1444
    %v5095 = vunpack.c.l.b16 %v1445
    %v5096 = vunpack.c.h.b16 %v1445
    %v5097 = vunpack.c.l.b16 %v1446
    %v5098 = vunpack.c.h.b16 %v1446
    %v5099 = vunpack.c.l.b16 %v1447
    %v5100 = vunpack.c.h.b16 %v1447
    %v5101 = vunpack.c.l.b16 %v1448
    %v5102 = vunpack.c.l.b16 %v1449
    %v5103 = vunpack.c.h.b16 %v1449
    %v5104 = vunpack.c.l.b16 %v1450
    %v5105 = vunpack.c.h.b16 %v1450
    %v5106 = vunpack.c.l.b16 %v1451
    %v5107 = vunpack.c.h.b16 %v1451
    %v5108 = vunpack.c.l.b16 %v1452
    %v5109 = vunpack.c.h.b16 %v1452
    %v5110 = vunpack.c.l.b16 %v1453
    %v5111 = vunpack.c.h.b16 %v1453
    %v5112 = vunpack.c.l.b16 %v1454
    %v5113 = vunpack.c.h.b16 %v1454
    %v5114 = vunpack.c.l.b16 %v1455
    %v5115 = vunpack.c.l.b16 %v1456
    %v5116 = vunpack.c.h.b16 %v1456
    %v5117 = vunpack.c.l.b16 %v1457
    %v5118 = vunpack.c.h.b16 %v1457
    %v5119 = vunpack.c.l.b16 %v1458
    %v5120 = vunpack.c.h.b16 %v1458
    %v5121 = vunpack.c.l.b16 %v1459
    %v5122 = vunpack.c.h.b16 %v1459
    %v5123 = vunpack.c.l.b16 %v1460
    %v5124 = vunpack.c.h.b16 %v1460
    %v5125 = vunpack.c.l.b16 %v1461
    %v5126 = vunpack.c.h.b16 %v1461
    %v5127 = vunpack.c.l.b16 %v1462
    %v5128 = vunpack.c.l.b16 %v1463
    %v5129 = vunpack.c.h.b16 %v1463
    %v5130 = vunpack.c.l.b16 %v1464
    %v5131 = vunpack.c.h.b16 %v1464
    %v5132 = vunpack.c.l.b16 %v1465
    %v5133 = vunpack.c.h.b16 %v1465
    %v5134 = vunpack.c.l.b16 %v1466
    %v5135 = vunpack.c.h.b16 %v1466
    %v5136 = vunpack.c.l.b16 %v1467
    %v5137 = vunpack.c.h.b16 %v1467
    %v5138 = vunpack.c.l.b16 %v1468
    %v5139 = vunpack.c.h.b16 %v1468
    %v5140 = vunpack.c.l.b16 %v1469
    %v5141 = vunpack.c.l.b16 %v1470
    %v5142 = vunpack.c.h.b16 %v1470
    %v5143 = vunpack.c.l.b16 %v1471
    %v5144 = vunpack.c.h.b16 %v1471
    %v5145 = vunpack.c.l.b16 %v1472
    %v5146 = vunpack.c.h.b16 %v1472
    %v5147 = vunpack.c.l.b16 %v1473
    %v5148 = vunpack.c.h.b16 %v1473
    %v5149 = vunpack.c.l.b16 %v1474
    %v5150 = vunpack.c.h.b16 %v1474
    %v5151 = vunpack.c.l.b16 %v1475
    %v5152 = vunpack.c.h.b16 %v1475
    %v5153 = vunpack.c.l.b16 %v1476
    %v5154 = vunpack.c.l.b16 %v1477
    %v5155 = vunpack.c.h.b16 %v1477
    %v5156 = vunpack.c.l.b16 %v1478
    %v5157 = vunpack.c.h.b16 %v1478
    %v5158 = vunpack.c.l.b16 %v1479
    %v5159 = vunpack.c.h.b16 %v1479
    %v5160 = vunpack.c.l.b16 %v1480
    %v5161 = vunpack.c.h.b16 %v1480
    %v5162 = vunpack.c.l.b16 %v1481
    %v5163 = vunpack.c.h.b16 %v1481
    %v5164 = vunpack.c.l.b16 %v1482
    %v5165 = vunpack.c.h.b16 %v1482
    %v5166 = vunpack.c.l.b16 %v1483
    %v5167 = vunpack.c.l.b16 %v1484
    %v5168 = vunpack.c.h.b16 %v1484
    %v5169 = vunpack.c.l.b16 %v1485
    %v5170 = vunpack.c.h.b16 %v1485
    %v5171 = vunpack.c.l.b16 %v1486
    %v5172 = vunpack.c.h.b16 %v1486
    %v5173 = vunpack.c.l.b16 %v1487
    %v5174 = vunpack.c.h.b16 %v1487
    %v5175 = vunpack.c.l.b16 %v1488
    %v5176 = vunpack.c.h.b16 %v1488
    %v5177 = vunpack.c.l.b16 %v1489
    %v5178 = vunpack.c.h.b16 %v1489
    %v5179 = vunpack.c.l.b16 %v1490
    %v5180 = vunpack.c.l.b16 %v1491
    %v5181 = vunpack.c.h.b16 %v1491
    %v5182 = vunpack.c.l.b16 %v1492
    %v5183 = vunpack.c.h.b16 %v1492
    %v5184 = vunpack.c.l.b16 %v1493
    %v5185 = vunpack.c.h.b16 %v1493
    %v5186 = vunpack.c.l.b16 %v1494
    %v5187 = vunpack.c.h.b16 %v1494
    %v5188 = vunpack.c.l.b16 %v1495
    %v5189 = vunpack.c.h.b16 %v1495
    %v5190 = vunpack.c.l.b16 %v1496
    %v5191 = vunpack.c.h.b16 %v1496
    %v5192 = vunpack.c.l.b16 %v1497
    %v5193 = vunpack.c.l.b16 %v1498
    %v5194 = vunpack.c.h.b16 %v1498
    %v5195 = vunpack.c.l.b16 %v1499
    %v5196 = vunpack.c.h.b16 %v1499
    %v5197 = vunpack.c.l.b16 %v1500
    %v5198 = vunpack.c.h.b16 %v1500
    %v5199 = vunpack.c.l.b16 %v1501
    %v5200 = vunpack.c.h.b16 %v1501
    %v5201 = vunpack.c.l.b16 %v1502
    %v5202 = vunpack.c.h.b16 %v1502
    %v5203 = vunpack.c.l.b16 %v1503
    %v5204 = vunpack.c.h.b16 %v1503
    %v5205 = vunpack.c.l.b16 %v1504
    %v5206 = vunpack.c.l.b16 %v1505
    %v5207 = vunpack.c.h.b16 %v1505
    %v5208 = vunpack.c.l.b16 %v1506
    %v5209 = vunpack.c.h.b16 %v1506
    %v5210 = vunpack.c.l.b16 %v1507
    %v5211 = vunpack.c.h.b16 %v1507
    %v5212 = vunpack.c.l.b16 %v1508
    %v5213 = vunpack.c.h.b16 %v1508
    %v5214 = vunpack.c.l.b16 %v1509
    %v5215 = vunpack.c.h.b16 %v1509
    %v5216 = vunpack.c.l.b16 %v1510
    %v5217 = vunpack.c.h.b16 %v1510
    %v5218 = vunpack.c.l.b16 %v1511
    %v5219 = vunpack.c.l.b16 %v1512
    %v5220 = vunpack.c.h.b16 %v1512
    %v5221 = vunpack.c.l.b16 %v1513
    %v5222 = vunpack.c.h.b16 %v1513
    %v5223 = vunpack.c.l.b16 %v1514
    %v5224 = vunpack.c.h.b16 %v1514
    %v5225 = vunpack.c.l.b16 %v1515
    %v5226 = vunpack.c.h.b16 %v1515
    %v5227 = vunpack.c.l.b16 %v1516
    %v5228 = vunpack.c.h.b16 %v1516
    %v5229 = vunpack.c.l.b16 %v1517
    %v5230 = vunpack.c.h.b16 %v1517
    %v5231 = vunpack.c.l.b16 %v1518
    %v5232 = vunpack.c.l.b16 %v1519
    %v5233 = vunpack.c.h.b16 %v1519
    %v5234 = vunpack.c.l.b16 %v1520
    %v5235 = vunpack.c.h.b16 %v1520
    %v5236 = vunpack.c.l.b16 %v1521
    %v5237 = vunpack.c.h.b16 %v1521
    %v5238 = vunpack.c.l.b16 %v1522
    %v5239 = vunpack.c.h.b16 %v1522
    %v5240 = vunpack.c.l.b16 %v1523
    %v5241 = vunpack.c.h.b16 %v1523
    %v5242 = vunpack.c.l.b16 %v1524
    %v5243 = vunpack.c.h.b16 %v1524
    %v5244 = vunpack.c.l.b16 %v1525
    %v5245 = vunpack.c.l.b16 %v1526
    %v5246 = vunpack.c.h.b16 %v1526
    %v5247 = vunpack.c.l.b16 %v1527
    %v5248 = vunpack.c.h.b16 %v1527
    %v5249 = vunpack.c.l.b16 %v1528
    %v5250 = vunpack.c.h.b16 %v1528
    %v5251 = vunpack.c.l.b16 %v1529
    %v5252 = vunpack.c.h.b16 %v1529
    %v5253 = vunpack.c.l.b16 %v1530
    %v5254 = vunpack.c.h.b16 %v1530
    %v5255 = vunpack.c.l.b16 %v1531
    %v5256 = vunpack.c.h.b16 %v1531
    %v5257 = vunpack.c.l.b16 %v1532
    %v5258 = vunpack.c.l.b16 %v1533
    %v5259 = vunpack.c.h.b16 %v1533
    %v5260 = vunpack.c.l.b16 %v1534
    %v5261 = vunpack.c.h.b16 %v1534
    %v5262 = vunpack.c.l.b16 %v1535
    %v5263 = vunpack.c.h.b16 %v1535
    %v5264 = vunpack.c.l.b16 %v1536
    %v5265 = vunpack.c.h.b16 %v1536
    %v5266 = vunpack.c.l.b16 %v1537
    %v5267 = vunpack.c.h.b16 %v1537
    %v5268 = vunpack.c.l.b16 %v1538
    %v5269 = vunpack.c.h.b16 %v1538
    %v5270 = vunpack.c.l.b16 %v1539
    %v5271 = vunpack.c.l.b16 %v1540
    %v5272 = vunpack.c.h.b16 %v1540
    %v5273 = vunpack.c.l.b16 %v1541
    %v5274 = vunpack.c.h.b16 %v1541
    %v5275 = vunpack.c.l.b16 %v1542
    %v5276 = vunpack.c.h.b16 %v1542
    %v5277 = vunpack.c.l.b16 %v1543
    %v5278 = vunpack.c.h.b16 %v1543
    %v5279 = vunpack.c.l.b16 %v1544
    %v5280 = vunpack.c.h.b16 %v1544
    %v5281 = vunpack.c.l.b16 %v1545
    %v5282 = vunpack.c.h.b16 %v1545
    %v5283 = vunpack.c.l.b16 %v1546
    %v5284 = vunpack.c.l.b16 %v1547
    %v5285 = vunpack.c.h.b16 %v1547
    %v5286 = vunpack.c.l.b16 %v1548
    %v5287 = vunpack.c.h.b16 %v1548
    %v5288 = vunpack.c.l.b16 %v1549
    %v5289 = vunpack.c.h.b16 %v1549
    %v5290 = vunpack.c.l.b16 %v1550
    %v5291 = vunpack.c.h.b16 %v1550
    %v5292 = vunpack.c.l.b16 %v1551
    %v5293 = vunpack.c.h.b16 %v1551
    %v5294 = vunpack.c.l.b16 %v1552
    %v5295 = vunpack.c.h.b16 %v1552
    %v5296 = vunpack.c.l.b16 %v1553
    %v5297 = vunpack.c.l.b16 %v1554
    %v5298 = vunpack.c.h.b16 %v1554
    %v5299 = vunpack.c.l.b16 %v1555
    %v5300 = vunpack.c.h.b16 %v1555
    %v5301 = vunpack.c.l.b16 %v1556
    %v5302 = vunpack.c.h.b16 %v1556
    %v5303 = vunpack.c.l.b16 %v1557
    %v5304 = vunpack.c.h.b16 %v1557
    %v5305 = vunpack.c.l.b16 %v1558
    %v5306 = vunpack.c.h.b16 %v1558
    %v5307 = vunpack.c.l.b16 %v1559
    %v5308 = vunpack.c.h.b16 %v1559
    %v5309 = vunpack.c.l.b16 %v1560
    %v5310 = vunpack.c.l.b16 %v1561
    %v5311 = vunpack.c.h.b16 %v1561
    %v5312 = vunpack.c.l.b16 %v1562
    %v5313 = vunpack.c.h.b16 %v1562
    %v5314 = vunpack.c.l.b16 %v1563
    %v5315 = vunpack.c.h.b16 %v1563
    %v5316 = vunpack.c.l.b16 %v1564
    %v5317 = vunpack.c.h.b16 %v1564
    %v5318 = vunpack.c.l.b16 %v1565
    %v5319 = vunpack.c.h.b16 %v1565
    %v5320 = vunpack.c.l.b16 %v1566
    %v5321 = vunpack.c.h.b16 %v1566
    %v5322 = vunpack.c.l.b16 %v1567
    %v5323 = vunpack.c.l.b16 %v1568
    %v5324 = vunpack.c.h.b16 %v1568
    %v5325 = vunpack.c.l.b16 %v1569
    %v5326 = vunpack.c.h.b16 %v1569
    %v5327 = vunpack.c.l.b16 %v1570
    %v5328 = vunpack.c.h.b16 %v1570
    %v5329 = vunpack.c.l.b16 %v1571
    %v5330 = vunpack.c.h.b16 %v1571
    %v5331 = vunpack.c.l.b16 %v1572
    %v5332 = vunpack.c.h.b16 %v1572
    %v5333 = vunpack.c.l.b16 %v1573
    %v5334 = vunpack.c.h.b16 %v1573
    %v5335 = vunpack.c.l.b16 %v1574
    %v5336 = vunpack.c.l.b16 %v1575
    %v5337 = vunpack.c.h.b16 %v1575
    %v5338 = vunpack.c.l.b16 %v1576
    %v5339 = vunpack.c.h.b16 %v1576
    %v5340 = vunpack.c.l.b16 %v1577
    %v5341 = vunpack.c.h.b16 %v1577
    %v5342 = vunpack.c.l.b16 %v1578
    %v5343 = vunpack.c.h.b16 %v1578
    %v5344 = vunpack.c.l.b16 %v1579
    %v5345 = vunpack.c.h.b16 %v1579
    %v5346 = vunpack.c.l.b16 %v1580
    %v5347 = vunpack.c.h.b16 %v1580
    %v5348 = vunpack.c.l.b16 %v1581
    %v5349 = vunpack.c.l.b16 %v1582
    %v5350 = vunpack.c.h.b16 %v1582
    %v5351 = vunpack.c.l.b16 %v1583
    %v5352 = vunpack.c.h.b16 %v1583
    %v5353 = vunpack.c.l.b16 %v1584
    %v5354 = vunpack.c.h.b16 %v1584
    %v5355 = vunpack.c.l.b16 %v1585
    %v5356 = vunpack.c.h.b16 %v1585
    %v5357 = vunpack.c.l.b16 %v1586
    %v5358 = vunpack.c.h.b16 %v1586
    %v5359 = vunpack.c.l.b16 %v1587
    %v5360 = vunpack.c.h.b16 %v1587
    %v5361 = vunpack.c.l.b16 %v1588
    %v5362 = vunpack.c.l.b16 %v1589
    %v5363 = vunpack.c.h.b16 %v1589
    %v5364 = vunpack.c.l.b16 %v1590
    %v5365 = vunpack.c.h.b16 %v1590
    %v5366 = vunpack.c.l.b16 %v1591
    %v5367 = vunpack.c.h.b16 %v1591
    %v5368 = vunpack.c.l.b16 %v1592
    %v5369 = vunpack.c.h.b16 %v1592
    %v5370 = vunpack.c.l.b16 %v1593
    %v5371 = vunpack.c.h.b16 %v1593
    %v5372 = vunpack.c.l.b16 %v1594
    %v5373 = vunpack.c.h.b16 %v1594
    %v5374 = vunpack.c.l.b16 %v1595
    %v5375 = vunpack.c.l.b16 %v1596
    %v5376 = vunpack.c.h.b16 %v1596
    %v5377 = vunpack.c.l.b16 %v1597
    %v5378 = vunpack.c.h.b16 %v1597
    %v5379 = vunpack.c.l.b16 %v1598
    %v5380 = vunpack.c.h.b16 %v1598
    %v5381 = vunpack.c.l.b16 %v1599
    %v5382 = vunpack.c.h.b16 %v1599
    %v5383 = vunpack.c.l.b16 %v1600
    %v5384 = vunpack.c.h.b16 %v1600
    %v5385 = vunpack.c.l.b16 %v1601
    %v5386 = vunpack.c.h.b16 %v1601
    %v5387 = vunpack.c.l.b16 %v1602
    %v5388 = vunpack.c.l.b16 %v1603
    %v5389 = vunpack.c.h.b16 %v1603
    %v5390 = vunpack.c.l.b16 %v1604
    %v5391 = vunpack.c.h.b16 %v1604
    %v5392 = vunpack.c.l.b16 %v1605
    %v5393 = vunpack.c.h.b16 %v1605
    %v5394 = vunpack.c.l.b16 %v1606
    %v5395 = vunpack.c.h.b16 %v1606
    %v5396 = vunpack.c.l.b16 %v1607
    %v5397 = vunpack.c.h.b16 %v1607
    %v5398 = vunpack.c.l.b16 %v1608
    %v5399 = vunpack.c.h.b16 %v1608
    %v5400 = vunpack.c.l.b16 %v1609
    %v5401 = vunpack.c.l.b16 %v1610
    %v5402 = vunpack.c.h.b16 %v1610
    %v5403 = vunpack.c.l.b16 %v1611
    %v5404 = vunpack.c.h.b16 %v1611
    %v5405 = vunpack.c.l.b16 %v1612
    %v5406 = vunpack.c.h.b16 %v1612
    %v5407 = vunpack.c.l.b16 %v1613
    %v5408 = vunpack.c.h.b16 %v1613
    %v5409 = vunpack.c.l.b16 %v1614
    %v5410 = vunpack.c.h.b16 %v1614
    %v5411 = vunpack.c.l.b16 %v1615
    %v5412 = vunpack.c.h.b16 %v1615
    %v5413 = vunpack.c.l.b16 %v1616
    %v5414 = vunpack.c.l.b16 %v1617
    %v5415 = vunpack.c.h.b16 %v1617
    %v5416 = vunpack.c.l.b16 %v1618
    %v5417 = vunpack.c.h.b16 %v1618
    %v5418 = vunpack.c.l.b16 %v1619
    %v5419 = vunpack.c.h.b16 %v1619
    %v5420 = vunpack.c.l.b16 %v1620
    %v5421 = vunpack.c.h.b16 %v1620
    %v5422 = vunpack.c.l.b16 %v1621
    %v5423 = vunpack.c.h.b16 %v1621
    %v5424 = vunpack.c.l.b16 %v1622
    %v5425 = vunpack.c.h.b16 %v1622
    %v5426 = vunpack.c.l.b16 %v1623
    %v5427 = vunpack.c.l.b16 %v1624
    %v5428 = vunpack.c.h.b16 %v1624
    %v5429 = vunpack.c.l.b16 %v1625
    %v5430 = vunpack.c.h.b16 %v1625
    %v5431 = vunpack.c.l.b16 %v1626
    %v5432 = vunpack.c.h.b16 %v1626
    %v5433 = vunpack.c.l.b16 %v1627
    %v5434 = vunpack.c.h.b16 %v1627
    %v5435 = vunpack.c.l.b16 %v1628
    %v5436 = vunpack.c.h.b16 %v1628
    %v5437 = vunpack.c.l.b16 %v1629
    %v5438 = vunpack.c.h.b16 %v1629
    %v5439 = vunpack.c.l.b16 %v1630
    %v5440 = vunpack.c.l.b16 %v1631
    %v5441 = vunpack.c.h.b16 %v1631
    %v5442 = vunpack.c.l.b16 %v1632
    %v5443 = vunpack.c.h.b16 %v1632
    %v5444 = vunpack.c.l.b16 %v1633
    %v5445 = vunpack.c.h.b16 %v1633
    %v5446 = vunpack.c.l.b16 %v1634
    %v5447 = vunpack.c.h.b16 %v1634
    %v5448 = vunpack.c.l.b16 %v1635
    %v5449 = vunpack.c.h.b16 %v1635
    %v5450 = vunpack.c.l.b16 %v1636
    %v5451 = vunpack.c.h.b16 %v1636
    %v5452 = vunpack.c.l.b16 %v1637
    %v5453 = vunpack.c.l.b16 %v1638
    %v5454 = vunpack.c.h.b16 %v1638
    %v5455 = vunpack.c.l.b16 %v1639
    %v5456 = vunpack.c.h.b16 %v1639
    %v5457 = vunpack.c.l.b16 %v1640
    %v5458 = vunpack.c.h.b16 %v1640
    %v5459 = vunpack.c.l.b16 %v1641
    %v5460 = vunpack.c.h.b16 %v1641
    %v5461 = vunpack.c.l.b16 %v1642
    %v5462 = vunpack.c.h.b16 %v1642
    %v5463 = vunpack.c.l.b16 %v1643
    %v5464 = vunpack.c.h.b16 %v1643
    %v5465 = vunpack.c.l.b16 %v1644
    %v5466 = vunpack.c.l.b16 %v1645
    %v5467 = vunpack.c.h.b16 %v1645
    %v5468 = vunpack.c.l.b16 %v1646
    %v5469 = vunpack.c.h.b16 %v1646
    %v5470 = vunpack.c.l.b16 %v1647
    %v5471 = vunpack.c.h.b16 %v1647
    %v5472 = vunpack.c.l.b16 %v1648
    %v5473 = vunpack.c.h.b16 %v1648
    %v5474 = vunpack.c.l.b16 %v1649
    %v5475 = vunpack.c.h.b16 %v1649
    %v5476 = vunpack.c.l.b16 %v1650
    %v5477 = vunpack.c.h.b16 %v1650
    %v5478 = vunpack.c.l.b16 %v1651
    %v5479 = vunpack.c.l.b16 %v1652
    %v5480 = vunpack.c.h.b16 %v1652
    %v5481 = vunpack.c.l.b16 %v1653
    %v5482 = vunpack.c.h.b16 %v1653
    %v5483 = vunpack.c.l.b16 %v1654
    %v5484 = vunpack.c.h.b16 %v1654
    %v5485 = vunpack.c.l.b16 %v1655
    %v5486 = vunpack.c.h.b16 %v1655
    %v5487 = vunpack.c.l.b16 %v1656
    %v5488 = vunpack.c.h.b16 %v1656
    %v5489 = vunpack.c.l.b16 %v1657
    %v5490 = vunpack.c.h.b16 %v1657
    %v5491 = vunpack.c.l.b16 %v1658
    %v5492 = vunpack.c.l.b16 %v1659
    %v5493 = vunpack.c.h.b16 %v1659
    %v5494 = vunpack.c.l.b16 %v1660
    %v5495 = vunpack.c.h.b16 %v1660
    %v5496 = vunpack.c.l.b16 %v1661
    %v5497 = vunpack.c.h.b16 %v1661
    %v5498 = vunpack.c.l.b16 %v1662
    %v5499 = vunpack.c.h.b16 %v1662
    %v5500 = vunpack.c.l.b16 %v1663
    %v5501 = vunpack.c.h.b16 %v1663
    %v5502 = vunpack.c.l.b16 %v1664
    %v5503 = vunpack.c.h.b16 %v1664
    %v5504 = vunpack.c.l.b16 %v1665
    %v5505 = vunpack.c.l.b16 %v1666
    %v5506 = vunpack.c.h.b16 %v1666
    %v5507 = vunpack.c.l.b16 %v1667
    %v5508 = vunpack.c.h.b16 %v1667
    %v5509 = vunpack.c.l.b16 %v1668
    %v5510 = vunpack.c.h.b16 %v1668
    %v5511 = vunpack.c.l.b16 %v1669
    %v5512 = vunpack.c.h.b16 %v1669
    %v5513 = vunpack.c.l.b16 %v1670
    %v5514 = vunpack.c.h.b16 %v1670
    %v5515 = vunpack.c.l.b16 %v1671
    %v5516 = vunpack.c.h.b16 %v1671
    %v5517 = vunpack.c.l.b16 %v1672
    %v5518 = vunpack.c.l.b16 %v1673
    %v5519 = vunpack.c.h.b16 %v1673
    %v5520 = vunpack.c.l.b16 %v1674
    %v5521 = vunpack.c.h.b16 %v1674
    %v5522 = vunpack.c.l.b16 %v1675
    %v5523 = vunpack.c.h.b16 %v1675
    %v5524 = vunpack.c.l.b16 %v1676
    %v5525 = vunpack.c.h.b16 %v1676
    %v5526 = vunpack.c.l.b16 %v1677
    %v5527 = vunpack.c.h.b16 %v1677
    %v5528 = vunpack.c.l.b16 %v1678
    %v5529 = vunpack.c.h.b16 %v1678
    %v5530 = vunpack.c.l.b16 %v1679
    %v5531 = vunpack.c.l.b16 %v1680
    %v5532 = vunpack.c.h.b16 %v1680
    %v5533 = vunpack.c.l.b16 %v1681
    %v5534 = vunpack.c.h.b16 %v1681
    %v5535 = vunpack.c.l.b16 %v1682
    %v5536 = vunpack.c.h.b16 %v1682
    %v5537 = vunpack.c.l.b16 %v1683
    %v5538 = vunpack.c.h.b16 %v1683
    %v5539 = vunpack.c.l.b16 %v1684
    %v5540 = vunpack.c.h.b16 %v1684
    %v5541 = vunpack.c.l.b16 %v1685
    %v5542 = vunpack.c.h.b16 %v1685
    %v5543 = vunpack.c.l.b16 %v1686
    %v5544 = vunpack.c.l.b16 %v1687
    %v5545 = vunpack.c.h.b16 %v1687
    %v5546 = vunpack.c.l.b16 %v1688
    %v5547 = vunpack.c.h.b16 %v1688
    %v5548 = vunpack.c.l.b16 %v1689
    %v5549 = vunpack.c.h.b16 %v1689
    %v5550 = vunpack.c.l.b16 %v1690
    %v5551 = vunpack.c.h.b16 %v1690
    %v5552 = vunpack.c.l.b16 %v1691
    %v5553 = vunpack.c.h.b16 %v1691
    %v5554 = vunpack.c.l.b16 %v1692
    %v5555 = vunpack.c.h.b16 %v1692
    %v5556 = vunpack.c.l.b16 %v1693
    %v5557 = vunpack.c.l.b16 %v1694
    %v5558 = vunpack.c.h.b16 %v1694
    %v5559 = vunpack.c.l.b16 %v1695
    %v5560 = vunpack.c.h.b16 %v1695
    %v5561 = vunpack.c.l.b16 %v1696
    %v5562 = vunpack.c.h.b16 %v1696
    %v5563 = vunpack.c.l.b16 %v1697
    %v5564 = vunpack.c.h.b16 %v1697
    %v5565 = vunpack.c.l.b16 %v1698
    %v5566 = vunpack.c.h.b16 %v1698
    %v5567 = vunpack.c.l.b16 %v1699
    %v5568 = vunpack.c.h.b16 %v1699
    %v5569 = vunpack.c.l.b16 %v1700
    %v5570 = vunpack.c.l.b16 %v1701
    %v5571 = vunpack.c.h.b16 %v1701
    %v5572 = vunpack.c.l.b16 %v1702
    %v5573 = vunpack.c.h.b16 %v1702
    %v5574 = vunpack.c.l.b16 %v1703
    %v5575 = vunpack.c.h.b16 %v1703
    %v5576 = vunpack.c.l.b16 %v1704
    %v5577 = vunpack.c.h.b16 %v1704
    %v5578 = vunpack.c.l.b16 %v1705
    %v5579 = vunpack.c.h.b16 %v1705
    %v5580 = vunpack.c.l.b16 %v1706
    %v5581 = vunpack.c.h.b16 %v1706
    %v5582 = vunpack.c.l.b16 %v1707
    %v5583 = vunpack.c.l.b16 %v1708
    %v5584 = vunpack.c.h.b16 %v1708
    %v5585 = vunpack.c.l.b16 %v1709
    %v5586 = vunpack.c.h.b16 %v1709
    %v5587 = vunpack.c.l.b16 %v1710
    %v5588 = vunpack.c.h.b16 %v1710
    %v5589 = vunpack.c.l.b16 %v1711
    %v5590 = vunpack.c.h.b16 %v1711
    %v5591 = vunpack.c.l.b16 %v1712
    %v5592 = vunpack.c.h.b16 %v1712
    %v5593 = vunpack.c.l.b16 %v1713
    %v5594 = vunpack.c.h.b16 %v1713
    %v5595 = vunpack.c.l.b16 %v1714
    %v5596 = vunpack.c.l.b16 %v1715
    %v5597 = vunpack.c.h.b16 %v1715
    %v5598 = vunpack.c.l.b16 %v1716
    %v5599 = vunpack.c.h.b16 %v1716
    %v5600 = vunpack.c.l.b16 %v1717
    %v5601 = vunpack.c.h.b16 %v1717
    %v5602 = vunpack.c.l.b16 %v1718
    %v5603 = vunpack.c.h.b16 %v1718
    %v5604 = vunpack.c.l.b16 %v1719
    %v5605 = vunpack.c.h.b16 %v1719
    %v5606 = vunpack.c.l.b16 %v1720
    %v5607 = vunpack.c.h.b16 %v1720
    %v5608 = vunpack.c.l.b16 %v1721
    %v5609 = vunpack.c.l.b16 %v1722
    %v5610 = vunpack.c.h.b16 %v1722
    %v5611 = vunpack.c.l.b16 %v1723
    %v5612 = vunpack.c.h.b16 %v1723
    %v5613 = vunpack.c.l.b16 %v1724
    %v5614 = vunpack.c.h.b16 %v1724
    %v5615 = vunpack.c.l.b16 %v1725
    %v5616 = vunpack.c.h.b16 %v1725
    %v5617 = vunpack.c.l.b16 %v1726
    %v5618 = vunpack.c.h.b16 %v1726
    %v5619 = vunpack.c.l.b16 %v1727
    %v5620 = vunpack.c.h.b16 %v1727
    %v5621 = vunpack.c.l.b16 %v1728
    %v5622 = vunpack.c.l.b16 %v1729
    %v5623 = vunpack.c.h.b16 %v1729
    %v5624 = vunpack.c.l.b16 %v1730
    %v5625 = vunpack.c.h.b16 %v1730
    %v5626 = vunpack.c.l.b16 %v1731
    %v5627 = vunpack.c.h.b16 %v1731
    %v5628 = vunpack.c.l.b16 %v1732
    %v5629 = vunpack.c.h.b16 %v1732
    %v5630 = vunpack.c.l.b16 %v1733
    %v5631 = vunpack.c.h.b16 %v1733
    %v5632 = vunpack.c.l.b16 %v1734
    %v5633 = vunpack.c.h.b16 %v1734
    %v5634 = vunpack.c.l.b16 %v1735
    %v5635 = vunpack.c.l.b16 %v1736
    %v5636 = vunpack.c.h.b16 %v1736
    %v5637 = vunpack.c.l.b16 %v1737
    %v5638 = vunpack.c.h.b16 %v1737
    %v5639 = vunpack.c.l.b16 %v1738
    %v5640 = vunpack.c.h.b16 %v1738
    %v5641 = vunpack.c.l.b16 %v1739
    %v5642 = vunpack.c.h.b16 %v1739
    %v5643 = vunpack.c.l.b16 %v1740
    %v5644 = vunpack.c.h.b16 %v1740
    %v5645 = vunpack.c.l.b16 %v1741
    %v5646 = vunpack.c.h.b16 %v1741
    %v5647 = vunpack.c.l.b16 %v1742
    %v5648 = vunpack.c.l.b16 %v1743
    %v5649 = vunpack.c.h.b16 %v1743
    %v5650 = vunpack.c.l.b16 %v1744
    %v5651 = vunpack.c.h.b16 %v1744
    %v5652 = vunpack.c.l.b16 %v1745
    %v5653 = vunpack.c.h.b16 %v1745
    %v5654 = vunpack.c.l.b16 %v1746
    %v5655 = vunpack.c.h.b16 %v1746
    %v5656 = vunpack.c.l.b16 %v1747
    %v5657 = vunpack.c.h.b16 %v1747
    %v5658 = vunpack.c.l.b16 %v1748
    %v5659 = vunpack.c.h.b16 %v1748
    %v5660 = vunpack.c.l.b16 %v1749
    %v5661 = vunpack.c.l.b16 %v1750
    %v5662 = vunpack.c.h.b16 %v1750
    %v5663 = vunpack.c.l.b16 %v1751
    %v5664 = vunpack.c.h.b16 %v1751
    %v5665 = vunpack.c.l.b16 %v1752
    %v5666 = vunpack.c.h.b16 %v1752
    %v5667 = vunpack.c.l.b16 %v1753
    %v5668 = vunpack.c.h.b16 %v1753
    %v5669 = vunpack.c.l.b16 %v1754
    %v5670 = vunpack.c.h.b16 %v1754
    %v5671 = vunpack.c.l.b16 %v1755
    %v5672 = vunpack.c.h.b16 %v1755
    %v5673 = vunpack.c.l.b16 %v1756
    %v5674 = vunpack.c.l.b16 %v1757
    %v5675 = vunpack.c.h.b16 %v1757
    %v5676 = vunpack.c.l.b16 %v1758
    %v5677 = vunpack.c.h.b16 %v1758
    %v5678 = vunpack.c.l.b16 %v1759
    %v5679 = vunpack.c.h.b16 %v1759
    %v5680 = vunpack.c.l.b16 %v1760
    %v5681 = vunpack.c.h.b16 %v1760
    %v5682 = vunpack.c.l.b16 %v1761
    %v5683 = vunpack.c.h.b16 %v1761
    %v5684 = vunpack.c.l.b16 %v1762
    %v5685 = vunpack.c.h.b16 %v1762
    %v5686 = vunpack.c.l.b16 %v1763
    %v5687 = vunpack.c.l.b16 %v1764
    %v5688 = vunpack.c.h.b16 %v1764
    %v5689 = vunpack.c.l.b16 %v1765
    %v5690 = vunpack.c.h.b16 %v1765
    %v5691 = vunpack.c.l.b16 %v1766
    %v5692 = vunpack.c.h.b16 %v1766
    %v5693 = vunpack.c.l.b16 %v1767
    %v5694 = vunpack.c.h.b16 %v1767
    %v5695 = vunpack.c.l.b16 %v1768
    %v5696 = vunpack.c.h.b16 %v1768
    %v5697 = vunpack.c.l.b16 %v1769
    %v5698 = vunpack.c.h.b16 %v1769
    %v5699 = vunpack.c.l.b16 %v1770
    %v5700 = vunpack.c.l.b16 %v1771
    %v5701 = vunpack.c.h.b16 %v1771
    %v5702 = vunpack.c.l.b16 %v1772
    %v5703 = vunpack.c.h.b16 %v1772
    %v5704 = vunpack.c.l.b16 %v1773
    %v5705 = vunpack.c.h.b16 %v1773
    %v5706 = vunpack.c.l.b16 %v1774
    %v5707 = vunpack.c.h.b16 %v1774
    %v5708 = vunpack.c.l.b16 %v1775
    %v5709 = vunpack.c.h.b16 %v1775
    %v5710 = vunpack.c.l.b16 %v1776
    %v5711 = vunpack.c.h.b16 %v1776
    %v5712 = vunpack.c.l.b16 %v1777
    %v5713 = vunpack.c.l.b16 %v1778
    %v5714 = vunpack.c.h.b16 %v1778
    %v5715 = vunpack.c.l.b16 %v1779
    %v5716 = vunpack.c.h.b16 %v1779
    %v5717 = vunpack.c.l.b16 %v1780
    %v5718 = vunpack.c.h.b16 %v1780
    %v5719 = vunpack.c.l.b16 %v1781
    %v5720 = vunpack.c.h.b16 %v1781
    %v5721 = vunpack.c.l.b16 %v1782
    %v5722 = vunpack.c.h.b16 %v1782
    %v5723 = vunpack.c.l.b16 %v1783
    %v5724 = vunpack.c.h.b16 %v1783
    %v5725 = vunpack.c.l.b16 %v1784
    %v5726 = vunpack.c.l.b16 %v1785
    %v5727 = vunpack.c.h.b16 %v1785
    %v5728 = vunpack.c.l.b16 %v1786
    %v5729 = vunpack.c.h.b16 %v1786
    %v5730 = vunpack.c.l.b16 %v1787
    %v5731 = vunpack.c.h.b16 %v1787
    %v5732 = vunpack.c.l.b16 %v1788
    %v5733 = vunpack.c.h.b16 %v1788
    %v5734 = vunpack.c.l.b16 %v1789
    %v5735 = vunpack.c.h.b16 %v1789
    %v5736 = vunpack.c.l.b16 %v1790
    %v5737 = vunpack.c.h.b16 %v1790
    %v5738 = vunpack.c.l.b16 %v1791
    %v5739 = vunpack.c.l.b16 %v1792
    %v5740 = vunpack.c.h.b16 %v1792
    %v5741 = vunpack.c.l.b16 %v1793
    %v5742 = vunpack.c.h.b16 %v1793
    %v5743 = vunpack.c.l.b16 %v1794
    %v5744 = vunpack.c.h.b16 %v1794
    %v5745 = vunpack.c.l.b16 %v1795
    %v5746 = vunpack.c.h.b16 %v1795
    %v5747 = vunpack.c.l.b16 %v1796
    %v5748 = vunpack.c.h.b16 %v1796
    %v5749 = vunpack.c.l.b16 %v1797
    %v5750 = vunpack.c.h.b16 %v1797
    %v5751 = vunpack.c.l.b16 %v1798
    %v5752 = vunpack.c.l.b16 %v1799
    %v5753 = vunpack.c.h.b16 %v1799
    %v5754 = vunpack.c.l.b16 %v1800
    %v5755 = vunpack.c.h.b16 %v1800
    %v5756 = vunpack.c.l.b16 %v1801
    %v5757 = vunpack.c.h.b16 %v1801
    %v5758 = vunpack.c.l.b16 %v1802
    %v5759 = vunpack.c.h.b16 %v1802
    %v5760 = vunpack.c.l.b16 %v1803
    %v5761 = vunpack.c.h.b16 %v1803
    %v5762 = vunpack.c.l.b16 %v1804
    %v5763 = vunpack.c.h.b16 %v1804
    %v5764 = vunpack.c.l.b16 %v1805
    %v5765 = vunpack.c.l.b16 %v1806
    %v5766 = vunpack.c.h.b16 %v1806
    %v5767 = vunpack.c.l.b16 %v1807
    %v5768 = vunpack.c.h.b16 %v1807
    %v5769 = vunpack.c.l.b16 %v1808
    %v5770 = vunpack.c.h.b16 %v1808
    %v5771 = vunpack.c.l.b16 %v1809
    %v5772 = vunpack.c.h.b16 %v1809
    %v5773 = vunpack.c.l.b16 %v1810
    %v5774 = vunpack.c.h.b16 %v1810
    %v5775 = vunpack.c.l.b16 %v1811
    %v5776 = vunpack.c.h.b16 %v1811
    %v5777 = vunpack.c.l.b16 %v1812
    %v5778 = vunpack.c.l.b16 %v1813
    %v5779 = vunpack.c.h.b16 %v1813
    %v5780 = vunpack.c.l.b16 %v1814
    %v5781 = vunpack.c.h.b16 %v1814
    %v5782 = vunpack.c.l.b16 %v1815
    %v5783 = vunpack.c.h.b16 %v1815
    %v5784 = vunpack.c.l.b16 %v1816
    %v5785 = vunpack.c.h.b16 %v1816
    %v5786 = vunpack.c.l.b16 %v1817
    %v5787 = vunpack.c.h.b16 %v1817
    %v5788 = vunpack.c.l.b16 %v1818
    %v5789 = vunpack.c.h.b16 %v1818
    %v5790 = vunpack.c.l.b16 %v1819
    %v5791 = vunpack.c.l.b16 %v1820
    %v5792 = vunpack.c.h.b16 %v1820
    %v5793 = vunpack.c.l.b16 %v1821
    %v5794 = vunpack.c.h.b16 %v1821
    %v5795 = vunpack.c.l.b16 %v1822
    %v5796 = vunpack.c.h.b16 %v1822
    %v5797 = vunpack.c.l.b16 %v1823
    %v5798 = vunpack.c.h.b16 %v1823
    %v5799 = vunpack.c.l.b16 %v1824
    %v5800 = vunpack.c.h.b16 %v1824
    %v5801 = vunpack.c.l.b16 %v1825
    %v5802 = vunpack.c.h.b16 %v1825
    %v5803 = vunpack.c.l.b16 %v1826
    %v5804 = vunpack.c.l.b16 %v1827
    %v5805 = vunpack.c.h.b16 %v1827
    %v5806 = vunpack.c.l.b16 %v1828
    %v5807 = vunpack.c.h.b16 %v1828
    %v5808 = vunpack.c.l.b16 %v1829
    %v5809 = vunpack.c.h.b16 %v1829
    %v5810 = vunpack.c.l.b16 %v1830
    %v5811 = vunpack.c.h.b16 %v1830
    %v5812 = vunpack.c.l.b16 %v1831
    %v5813 = vunpack.c.h.b16 %v1831
    %v5814 = vunpack.c.l.b16 %v1832
    %v5815 = vunpack.c.h.b16 %v1832
    %v5816 = vunpack.c.l.b16 %v1833
    %v5817 = vunpack.c.l.b16 %v1834
    %v5818 = vunpack.c.h.b16 %v1834
    %v5819 = vunpack.c.l.b16 %v1835
    %v5820 = vunpack.c.h.b16 %v1835
    %v5821 = vunpack.c.l.b16 %v1836
    %v5822 = vunpack.c.h.b16 %v1836
    %v5823 = vunpack.c.l.b16 %v1837
    %v5824 = vunpack.c.h.b16 %v1837
    %v5825 = vunpack.c.l.b16 %v1838
    %v5826 = vunpack.c.h.b16 %v1838
    %v5827 = vunpack.c.l.b16 %v1839
    %v5828 = vunpack.c.h.b16 %v1839
    %v5829 = vunpack.c.l.b16 %v1840
    %v5830 = vunpack.c.l.b16 %v1841
    %v5831 = vunpack.c.h.b16 %v1841
    %v5832 = vunpack.c.l.b16 %v1842
    %v5833 = vunpack.c.h.b16 %v1842
    %v5834 = vunpack.c.l.b16 %v1843
    %v5835 = vunpack.c.h.b16 %v1843
    %v5836 = vunpack.c.l.b16 %v1844
    %v5837 = vunpack.c.h.b16 %v1844
    %v5838 = vunpack.c.l.b16 %v1845
    %v5839 = vunpack.c.h.b16 %v1845
    %v5840 = vunpack.c.l.b16 %v1846
    %v5841 = vunpack.c.h.b16 %v1846
    %v5842 = vunpack.c.l.b16 %v1847
    %v5843 = vunpack.c.l.b16 %v1848
    %v5844 = vunpack.c.h.b16 %v1848
    %v5845 = vunpack.c.l.b16 %v1849
    %v5846 = vunpack.c.h.b16 %v1849
    %v5847 = vunpack.c.l.b16 %v1850
    %v5848 = vunpack.c.h.b16 %v1850
    %v5849 = vunpack.c.l.b16 %v1851
    %v5850 = vunpack.c.h.b16 %v1851
    %v5851 = vunpack.c.l.b16 %v1852
    %v5852 = vunpack.c.h.b16 %v1852
    %v5853 = vunpack.c.l.b16 %v1853
    %v5854 = vunpack.c.h.b16 %v1853
    %v5855 = vunpack.c.l.b16 %v1854
    %v5856 = vunpack.c.l.b16 %v1855
    %v5857 = vunpack.c.h.b16 %v1855
    %v5858 = vunpack.c.l.b16 %v1856
    %v5859 = vunpack.c.h.b16 %v1856
    %v5860 = vunpack.c.l.b16 %v1857
    %v5861 = vunpack.c.h.b16 %v1857
    %v5862 = vunpack.c.l.b16 %v1858
    %v5863 = vunpack.c.h.b16 %v1858
    %v5864 = vunpack.c.l.b16 %v1859
    %v5865 = vunpack.c.h.b16 %v1859
    %v5866 = vunpack.c.l.b16 %v1860
    %v5867 = vunpack.c.h.b16 %v1860
    %v5868 = vunpack.c.l.b16 %v1861
    %v5869 = vunpack.c.l.b16 %v1862
    %v5870 = vunpack.c.h.b16 %v1862
    %v5871 = vunpack.c.l.b16 %v1863
    %v5872 = vunpack.c.h.b16 %v1863
    %v5873 = vunpack.c.l.b16 %v1864
    %v5874 = vunpack.c.h.b16 %v1864
    %v5875 = vunpack.c.l.b16 %v1865
    %v5876 = vunpack.c.h.b16 %v1865
    %v5877 = vunpack.c.l.b16 %v1866
    %v5878 = vunpack.c.h.b16 %v1866
    %v5879 = vunpack.c.l.b16 %v1867
    %v5880 = vunpack.c.h.b16 %v1867
    %v5881 = vunpack.c.l.b16 %v1868
    %v5882 = vunpack.c.l.b16 %v1869
    %v5883 = vunpack.c.h.b16 %v1869
    %v5884 = vunpack.c.l.b16 %v1870
    %v5885 = vunpack.c.h.b16 %v1870
    %v5886 = vunpack.c.l.b16 %v1871
    %v5887 = vunpack.c.h.b16 %v1871
    %v5888 = vunpack.c.l.b16 %v1872
    %v5889 = vunpack.c.h.b16 %v1872
    %v5890 = vunpack.c.l.b16 %v1873
    %v5891 = vunpack.c.h.b16 %v1873
    %v5892 = vunpack.c.l.b16 %v1874
    %v5893 = vunpack.c.h.b16 %v1874
    %v5894 = vunpack.c.l.b16 %v1875
    %v5895 = vunpack.c.l.b16 %v1876
    %v5896 = vunpack.c.h.b16 %v1876
    %v5897 = vunpack.c.l.b16 %v1877
    %v5898 = vunpack.c.h.b16 %v1877
    %v5899 = vunpack.c.l.b16 %v1878
    %v5900 = vunpack.c.h.b16 %v1878
    %v5901 = vunpack.c.l.b16 %v1879
    %v5902 = vunpack.c.h.b16 %v1879
    %v5903 = vunpack.c.l.b16 %v1880
    %v5904 = vunpack.c.h.b16 %v1880
    %v5905 = vunpack.c.l.b16 %v1881
    %v5906 = vunpack.c.h.b16 %v1881
    %v5907 = vunpack.c.l.b16 %v1882
    %v5908 = vunpack.c.l.b16 %v1883
    %v5909 = vunpack.c.h.b16 %v1883
    %v5910 = vunpack.c.l.b16 %v1884
    %v5911 = vunpack.c.h.b16 %v1884
    %v5912 = vunpack.c.l.b16 %v1885
    %v5913 = vunpack.c.h.b16 %v1885
    %v5914 = vunpack.c.l.b16 %v1886
    %v5915 = vunpack.c.h.b16 %v1886
    %v5916 = vunpack.c.l.b16 %v1887
    %v5917 = vunpack.c.h.b16 %v1887
    %v5918 = vunpack.c.l.b16 %v1888
    %v5919 = vunpack.c.h.b16 %v1888
    %v5920 = vunpack.c.l.b16 %v1889
    %v5921 = vunpack.c.l.b16 %v1890
    %v5922 = vunpack.c.h.b16 %v1890
    %v5923 = vunpack.c.l.b16 %v1891
    %v5924 = vunpack.c.h.b16 %v1891
    %v5925 = vunpack.c.l.b16 %v1892
    %v5926 = vunpack.c.h.b16 %v1892
    %v5927 = vunpack.c.l.b16 %v1893
    %v5928 = vunpack.c.h.b16 %v1893
    %v5929 = vunpack.c.l.b16 %v1894
    %v5930 = vunpack.c.h.b16 %v1894
    %v5931 = vunpack.c.l.b16 %v1895
    %v5932 = vunpack.c.h.b16 %v1895
    %v5933 = vunpack.c.l.b16 %v1896
    %v5934 = vunpack.c.l.b16 %v1897
    %v5935 = vunpack.c.h.b16 %v1897
    %v5936 = vunpack.c.l.b16 %v1898
    %v5937 = vunpack.c.h.b16 %v1898
    %v5938 = vunpack.c.l.b16 %v1899
    %v5939 = vunpack.c.h.b16 %v1899
    %v5940 = vunpack.c.l.b16 %v1900
    %v5941 = vunpack.c.h.b16 %v1900
    %v5942 = vunpack.c.l.b16 %v1901
    %v5943 = vunpack.c.h.b16 %v1901
    %v5944 = vunpack.c.l.b16 %v1902
    %v5945 = vunpack.c.h.b16 %v1902
    %v5946 = vunpack.c.l.b16 %v1903
    %v5947 = vunpack.c.l.b16 %v1904
    %v5948 = vunpack.c.h.b16 %v1904
    %v5949 = vunpack.c.l.b16 %v1905
    %v5950 = vunpack.c.h.b16 %v1905
    %v5951 = vunpack.c.l.b16 %v1906
    %v5952 = vunpack.c.h.b16 %v1906
    %v5953 = vunpack.c.l.b16 %v1907
    %v5954 = vunpack.c.h.b16 %v1907
    %v5955 = vunpack.c.l.b16 %v1908
    %v5956 = vunpack.c.h.b16 %v1908
    %v5957 = vunpack.c.l.b16 %v1909
    %v5958 = vunpack.c.h.b16 %v1909
    %v5959 = vunpack.c.l.b16 %v1910
    %v5960 = vunpack.c.l.b16 %v1911
    %v5961 = vunpack.c.h.b16 %v1911
    %v5962 = vunpack.c.l.b16 %v1912
    %v5963 = vunpack.c.h.b16 %v1912
    %v5964 = vunpack.c.l.b16 %v1913
    %v5965 = vunpack.c.h.b16 %v1913
    %v5966 = vunpack.c.l.b16 %v1914
    %v5967 = vunpack.c.h.b16 %v1914
    %v5968 = vunpack.c.l.b16 %v1915
    %v5969 = vunpack.c.h.b16 %v1915
    %v5970 = vunpack.c.l.b16 %v1916
    %v5971 = vunpack.c.h.b16 %v1916
    %v5972 = vunpack.c.l.b16 %v1917
    %v5973 = vunpack.c.l.b16 %v1918
    %v5974 = vunpack.c.h.b16 %v1918
    %v5975 = vunpack.c.l.b16 %v1919
    %v5976 = vunpack.c.h.b16 %v1919
    %v5977 = vunpack.c.l.b16 %v1920
    %v5978 = vunpack.c.h.b16 %v1920
    %v5979 = vunpack.c.l.b16 %v1921
    %v5980 = vunpack.c.h.b16 %v1921
    %v5981 = vunpack.c.l.b16 %v1922
    %v5982 = vunpack.c.h.b16 %v1922
    %v5983 = vunpack.c.l.b16 %v1923
    %v5984 = vunpack.c.h.b16 %v1923
    %v5985 = vunpack.c.l.b16 %v1924
    %v5986 = vunpack.c.l.b16 %v1925
    %v5987 = vunpack.c.h.b16 %v1925
    %v5988 = vunpack.c.l.b16 %v1926
    %v5989 = vunpack.c.h.b16 %v1926
    %v5990 = vunpack.c.l.b16 %v1927
    %v5991 = vunpack.c.h.b16 %v1927
    %v5992 = vunpack.c.l.b16 %v1928
    %v5993 = vunpack.c.h.b16 %v1928
    %v5994 = vunpack.c.l.b16 %v1929
    %v5995 = vunpack.c.h.b16 %v1929
    %v5996 = vunpack.c.l.b16 %v1930
    %v5997 = vunpack.c.h.b16 %v1930
    %v5998 = vunpack.c.l.b16 %v1931
    %v5999 = vunpack.c.l.b16 %v1932
    %v6000 = vunpack.c.h.b16 %v1932
    %v6001 = vunpack.c.l.b16 %v1933
    %v6002 = vunpack.c.h.b16 %v1933
    %v6003 = vunpack.c.l.b16 %v1934
    %v6004 = vunpack.c.h.b16 %v1934
    %v6005 = vunpack.c.l.b16 %v1935
    %v6006 = vunpack.c.h.b16 %v1935
    %v6007 = vunpack.c.l.b16 %v1936
    %v6008 = vunpack.c.h.b16 %v1936
    %v6009 = vunpack.c.l.b16 %v1937
    %v6010 = vunpack.c.h.b16 %v1937
    %v6011 = vunpack.c.l.b16 %v1938
    %v6012 = vunpack.c.l.b16 %v1939
    %v6013 = vunpack.c.h.b16 %v1939
    %v6014 = vunpack.c.l.b16 %v1940
    %v6015 = vunpack.c.h.b16 %v1940
    %v6016 = vunpack.c.l.b16 %v1941
    %v6017 = vunpack.c.h.b16 %v1941
    %v6018 = vunpack.c.l.b16 %v1942
    %v6019 = vunpack.c.h.b16 %v1942
    %v6020 = vunpack.c.l.b16 %v1943
    %v6021 = vunpack.c.h.b16 %v1943
    %v6022 = vunpack.c.l.b16 %v1944
    %v6023 = vunpack.c.h.b16 %v1944
    %v6024 = vunpack.c.l.b16 %v1945
    %v6025 = vunpack.c.l.b16 %v1946
    %v6026 = vunpack.c.h.b16 %v1946
    %v6027 = vunpack.c.l.b16 %v1947
    %v6028 = vunpack.c.h.b16 %v1947
    %v6029 = vunpack.c.l.b16 %v1948
    %v6030 = vunpack.c.h.b16 %v1948
    %v6031 = vunpack.c.l.b16 %v1949
    %v6032 = vunpack.c.h.b16 %v1949
    %v6033 = vunpack.c.l.b16 %v1950
    %v6034 = vunpack.c.h.b16 %v1950
    %v6035 = vunpack.c.l.b16 %v1951
    %v6036 = vunpack.c.h.b16 %v1951
    %v6037 = vunpack.c.l.b16 %v1952
    %v6038 = vunpack.c.l.b16 %v1953
    %v6039 = vunpack.c.h.b16 %v1953
    %v6040 = vunpack.c.l.b16 %v1954
    %v6041 = vunpack.c.h.b16 %v1954
    %v6042 = vunpack.c.l.b16 %v1955
    %v6043 = vunpack.c.h.b16 %v1955
    %v6044 = vunpack.c.l.b16 %v1956
    %v6045 = vunpack.c.h.b16 %v1956
    %v6046 = vunpack.c.l.b16 %v1957
    %v6047 = vunpack.c.h.b16 %v1957
    %v6048 = vunpack.c.l.b16 %v1958
    %v6049 = vunpack.c.h.b16 %v1958
    %v6050 = vunpack.c.l.b16 %v1959
    %v6051 = vunpack.c.l.b16 %v1960
    %v6052 = vunpack.c.h.b16 %v1960
    %v6053 = vunpack.c.l.b16 %v1961
    %v6054 = vunpack.c.h.b16 %v1961
    %v6055 = vunpack.c.l.b16 %v1962
    %v6056 = vunpack.c.h.b16 %v1962
    %v6057 = vunpack.c.l.b16 %v1963
    %v6058 = vunpack.c.h.b16 %v1963
    %v6059 = vunpack.c.l.b16 %v1964
    %v6060 = vunpack.c.h.b16 %v1964
    %v6061 = vunpack.c.l.b16 %v1965
    %v6062 = vunpack.c.h.b16 %v1965
    %v6063 = vunpack.c.l.b16 %v1966
    %v6064 = vunpack.c.l.b16 %v1967
    %v6065 = vunpack.c.h.b16 %v1967
    %v6066 = vunpack.c.l.b16 %v1968
    %v6067 = vunpack.c.h.b16 %v1968
    %v6068 = vunpack.c.l.b16 %v1969
    %v6069 = vunpack.c.h.b16 %v1969
    %v6070 = vunpack.c.l.b16 %v1970
    %v6071 = vunpack.c.h.b16 %v1970
    %v6072 = vunpack.c.l.b16 %v1971
    %v6073 = vunpack.c.h.b16 %v1971
    %v6074 = vunpack.c.l.b16 %v1972
    %v6075 = vunpack.c.h.b16 %v1972
    %v6076 = vunpack.c.l.b16 %v1973
    %v6077 = vunpack.c.l.b16 %v1974
    %v6078 = vunpack.c.h.b16 %v1974
    %v6079 = vunpack.c.l.b16 %v1975
    %v6080 = vunpack.c.h.b16 %v1975
    %v6081 = vunpack.c.l.b16 %v1976
    %v6082 = vunpack.c.h.b16 %v1976
    %v6083 = vunpack.c.l.b16 %v1977
    %v6084 = vunpack.c.h.b16 %v1977
    %v6085 = vunpack.c.l.b16 %v1978
    %v6086 = vunpack.c.h.b16 %v1978
    %v6087 = vunpack.c.l.b16 %v1979
    %v6088 = vunpack.c.h.b16 %v1979
    %v6089 = vunpack.c.l.b16 %v1980
    %v6090 = vunpack.c.l.b16 %v1981
    %v6091 = vunpack.c.h.b16 %v1981
    %v6092 = vunpack.c.l.b16 %v1982
    %v6093 = vunpack.c.h.b16 %v1982
    %v6094 = vunpack.c.l.b16 %v1983
    %v6095 = vunpack.c.h.b16 %v1983
    %v6096 = vunpack.c.l.b16 %v1984
    %v6097 = vunpack.c.h.b16 %v1984
    %v6098 = vunpack.c.l.b16 %v1985
    %v6099 = vunpack.c.h.b16 %v1985
    %v6100 = vunpack.c.l.b16 %v1986
    %v6101 = vunpack.c.h.b16 %v1986
    %v6102 = vunpack.c.l.b16 %v1987
    %v6103 = vunpack.c.l.b16 %v1988
    %v6104 = vunpack.c.h.b16 %v1988
    %v6105 = vunpack.c.l.b16 %v1989
    %v6106 = vunpack.c.h.b16 %v1989
    %v6107 = vunpack.c.l.b16 %v1990
    %v6108 = vunpack.c.h.b16 %v1990
    %v6109 = vunpack.c.l.b16 %v1991
    %v6110 = vunpack.c.h.b16 %v1991
    %v6111 = vunpack.c.l.b16 %v1992
    %v6112 = vunpack.c.h.b16 %v1992
    %v6113 = vunpack.c.l.b16 %v1993
    %v6114 = vunpack.c.h.b16 %v1993
    %v6115 = vunpack.c.l.b16 %v1994
    %v6116 = vunpack.c.l.b16 %v1995
    %v6117 = vunpack.c.h.b16 %v1995
    %v6118 = vunpack.c.l.b16 %v1996
    %v6119 = vunpack.c.h.b16 %v1996
    %v6120 = vunpack.c.l.b16 %v1997
    %v6121 = vunpack.c.h.b16 %v1997
    %v6122 = vunpack.c.l.b16 %v1998
    %v6123 = vunpack.c.h.b16 %v1998
    %v6124 = vunpack.c.l.b16 %v1999
    %v6125 = vunpack.c.h.b16 %v1999
    %v6126 = vunpack.c.l.b16 %v2000
    %v6127 = vunpack.c.h.b16 %v2000
    %v6128 = vunpack.c.l.b16 %v2001
    %v6129 = vunpack.c.l.b16 %v2002
    %v6130 = vunpack.c.h.b16 %v2002
    %v6131 = vunpack.c.l.b16 %v2003
    %v6132 = vunpack.c.h.b16 %v2003
    %v6133 = vunpack.c.l.b16 %v2004
    %v6134 = vunpack.c.h.b16 %v2004
    %v6135 = vunpack.c.l.b16 %v2005
    %v6136 = vunpack.c.h.b16 %v2005
    %v6137 = vunpack.c.l.b16 %v2006
    %v6138 = vunpack.c.h.b16 %v2006
    %v6139 = vunpack.c.l.b16 %v2007
    %v6140 = vunpack.c.h.b16 %v2007
    %v6141 = vunpack.c.l.b16 %v2008
    %v6142 = vunpack.c.l.b16 %v2009
    %v6143 = vunpack.c.h.b16 %v2009
    %v6144 = vunpack.c.l.b16 %v2010
    %v6145 = vunpack.c.h.b16 %v2010
    %v6146 = vunpack.c.l.b16 %v2011
    %v6147 = vunpack.c.h.b16 %v2011
    %v6148 = vunpack.c.l.b16 %v2012
    %v6149 = vunpack.c.h.b16 %v2012
    %v6150 = vunpack.c.l.b16 %v2013
    %v6151 = vunpack.c.h.b16 %v2013
    %v6152 = vunpack.c.l.b16 %v2014
    %v6153 = vunpack.c.h.b16 %v2014
    %v6154 = vunpack.c.l.b16 %v2015
    %v6155 = vunpack.c.l.b16 %v2016
    %v6156 = vunpack.c.h.b16 %v2016
    %v6157 = vunpack.c.l.b16 %v2017
    %v6158 = vunpack.c.h.b16 %v2017
    %v6159 = vunpack.c.l.b16 %v2018
    %v6160 = vunpack.c.h.b16 %v2018
    %v6161 = vunpack.c.l.b16 %v2019
    %v6162 = vunpack.c.h.b16 %v2019
    %v6163 = vunpack.c.l.b16 %v2020
    %v6164 = vunpack.c.h.b16 %v2020
    %v6165 = vunpack.c.l.b16 %v2021
    %v6166 = vunpack.c.h.b16 %v2021
    %v6167 = vunpack.c.l.b16 %v2022
    %v6168 = vunpack.c.l.b16 %v2023
    %v6169 = vunpack.c.h.b16 %v2023
    %v6170 = vunpack.c.l.b16 %v2024
    %v6171 = vunpack.c.h.b16 %v2024
    %v6172 = vunpack.c.l.b16 %v2025
    %v6173 = vunpack.c.h.b16 %v2025
    %v6174 = vunpack.c.l.b16 %v2026
    %v6175 = vunpack.c.h.b16 %v2026
    %v6176 = vunpack.c.l.b16 %v2027
    %v6177 = vunpack.c.h.b16 %v2027
    %v6178 = vunpack.c.l.b16 %v2028
    %v6179 = vunpack.c.h.b16 %v2028
    %v6180 = vunpack.c.l.b16 %v2029
    %v6181 = vunpack.c.l.b16 %v2030
    %v6182 = vunpack.c.h.b16 %v2030
    %v6183 = vunpack.c.l.b16 %v2031
    %v6184 = vunpack.c.h.b16 %v2031
    %v6185 = vunpack.c.l.b16 %v2032
    %v6186 = vunpack.c.h.b16 %v2032
    %v6187 = vunpack.c.l.b16 %v2033
    %v6188 = vunpack.c.h.b16 %v2033
    %v6189 = vunpack.c.l.b16 %v2034
    %v6190 = vunpack.c.h.b16 %v2034
    %v6191 = vunpack.c.l.b16 %v2035
    %v6192 = vunpack.c.h.b16 %v2035
    %v6193 = vunpack.c.l.b16 %v2036
    %v6194 = vunpack.c.l.b16 %v2037
    %v6195 = vunpack.c.h.b16 %v2037
    %v6196 = vunpack.c.l.b16 %v2038
    %v6197 = vunpack.c.h.b16 %v2038
    %v6198 = vunpack.c.l.b16 %v2039
    %v6199 = vunpack.c.h.b16 %v2039
    %v6200 = vunpack.c.l.b16 %v2040
    %v6201 = vunpack.c.h.b16 %v2040
    %v6202 = vunpack.c.l.b16 %v2041
    %v6203 = vunpack.c.h.b16 %v2041
    %v6204 = vunpack.c.l.b16 %v2042
    %v6205 = vunpack.c.h.b16 %v2042
    %v6206 = vunpack.c.l.b16 %v2043
    %v6207 = vunpack.c.l.b16 %v2044
    %v6208 = vunpack.c.h.b16 %v2044
    %v6209 = vunpack.c.l.b16 %v2045
    %v6210 = vunpack.c.h.b16 %v2045
    %v6211 = vunpack.c.l.b16 %v2046
    %v6212 = vunpack.c.h.b16 %v2046
    %v6213 = vunpack.c.l.b16 %v2047
    %v6214 = vunpack.c.h.b16 %v2047
    %v6215 = vunpack.c.l.b16 %v2048
    %v6216 = vunpack.c.h.b16 %v2048
    %v6217 = vunpack.c.l.b16 %v2049
    %v6218 = vunpack.c.h.b16 %v2049
    %v6219 = vunpack.c.l.b16 %v2050
    %v6220 = vunpack.c.l.b16 %v2051
    %v6221 = vunpack.c.h.b16 %v2051
    %v6222 = vunpack.c.l.b16 %v2052
    %v6223 = vunpack.c.h.b16 %v2052
    %v6224 = vunpack.c.l.b16 %v2053
    %v6225 = vunpack.c.h.b16 %v2053
    %v6226 = vunpack.c.l.b16 %v2054
    %v6227 = vunpack.c.h.b16 %v2054
    %v6228 = vunpack.c.l.b16 %v2055
    %v6229 = vunpack.c.h.b16 %v2055
    %v6230 = vunpack.c.l.b16 %v2056
    %v6231 = vunpack.c.h.b16 %v2056
    %v6232 = vunpack.c.l.b16 %v2057
    %v6233 = vunpack.c.l.b16 %v2058
    %v6234 = vunpack.c.h.b16 %v2058
    %v6235 = vunpack.c.l.b16 %v2059
    %v6236 = vunpack.c.h.b16 %v2059
    %v6237 = vunpack.c.l.b16 %v2060
    %v6238 = vunpack.c.h.b16 %v2060
    %v6239 = vunpack.c.l.b16 %v2061
    %v6240 = vunpack.c.h.b16 %v2061
    %v6241 = vunpack.c.l.b16 %v2062
    %v6242 = vunpack.c.h.b16 %v2062
    %v6243 = vunpack.c.l.b16 %v2063
    %v6244 = vunpack.c.h.b16 %v2063
    %v6245 = vunpack.c.l.b16 %v2064
    %v6246 = vunpack.c.l.b16 %v2065
    %v6247 = vunpack.c.h.b16 %v2065
    %v6248 = vunpack.c.l.b16 %v2066
    %v6249 = vunpack.c.h.b16 %v2066
    %v6250 = vunpack.c.l.b16 %v2067
    %v6251 = vunpack.c.h.b16 %v2067
    %v6252 = vunpack.c.l.b16 %v2068
    %v6253 = vunpack.c.h.b16 %v2068
    %v6254 = vunpack.c.l.b16 %v2069
    %v6255 = vunpack.c.h.b16 %v2069
    %v6256 = vunpack.c.l.b16 %v2070
    %v6257 = vunpack.c.h.b16 %v2070
    %v6258 = vunpack.c.l.b16 %v2071
    %v6259 = vunpack.c.l.b16 %v2072
    %v6260 = vunpack.c.h.b16 %v2072
    %v6261 = vunpack.c.l.b16 %v2073
    %v6262 = vunpack.c.h.b16 %v2073
    %v6263 = vunpack.c.l.b16 %v2074
    %v6264 = vunpack.c.h.b16 %v2074
    %v6265 = vunpack.c.l.b16 %v2075
    %v6266 = vunpack.c.h.b16 %v2075
    %v6267 = vunpack.c.l.b16 %v2076
    %v6268 = vunpack.c.h.b16 %v2076
    %v6269 = vunpack.c.l.b16 %v2077
    %v6270 = vunpack.c.h.b16 %v2077
    %v6271 = vunpack.c.l.b16 %v2078
    %v6272 = vunpack.c.l.b16 %v2079
    %v6273 = vunpack.c.h.b16 %v2079
    %v6274 = vunpack.c.l.b16 %v2080
    %v6275 = vunpack.c.h.b16 %v2080
    %v6276 = vunpack.c.l.b16 %v2081
    %v6277 = vunpack.c.h.b16 %v2081
    %v6278 = vunpack.c.l.b16 %v2082
    %v6279 = vunpack.c.h.b16 %v2082
    %v6280 = vunpack.c.l.b16 %v2083
    %v6281 = vunpack.c.h.b16 %v2083
    %v6282 = vunpack.c.l.b16 %v2084
    %v6283 = vunpack.c.h.b16 %v2084
    %v6284 = vunpack.c.l.b16 %v2085
    %v6285 = vunpack.c.l.b16 %v2086
    %v6286 = vunpack.c.h.b16 %v2086
    %v6287 = vunpack.c.l.b16 %v2087
    %v6288 = vunpack.c.h.b16 %v2087
    %v6289 = vunpack.c.l.b16 %v2088
    %v6290 = vunpack.c.h.b16 %v2088
    %v6291 = vunpack.c.l.b16 %v2089
    %v6292 = vunpack.c.h.b16 %v2089
    %v6293 = vunpack.c.l.b16 %v2090
    %v6294 = vunpack.c.h.b16 %v2090
    %v6295 = vunpack.c.l.b16 %v2091
    %v6296 = vunpack.c.h.b16 %v2091
    %v6297 = vunpack.c.l.b16 %v2092
    %v6298 = vunpack.c.l.b16 %v2093
    %v6299 = vunpack.c.h.b16 %v2093
    %v6300 = vunpack.c.l.b16 %v2094
    %v6301 = vunpack.c.h.b16 %v2094
    %v6302 = vunpack.c.l.b16 %v2095
    %v6303 = vunpack.c.h.b16 %v2095
    %v6304 = vunpack.c.l.b16 %v2096
    %v6305 = vunpack.c.h.b16 %v2096
    %v6306 = vunpack.c.l.b16 %v2097
    %v6307 = vunpack.c.h.b16 %v2097
    %v6308 = vunpack.c.l.b16 %v2098
    %v6309 = vunpack.c.h.b16 %v2098
    %v6310 = vunpack.c.l.b16 %v2099
    %v6311 = vunpack.c.l.b16 %v2100
    %v6312 = vunpack.c.h.b16 %v2100
    %v6313 = vunpack.c.l.b16 %v2101
    %v6314 = vunpack.c.h.b16 %v2101
    %v6315 = vunpack.c.l.b16 %v2102
    %v6316 = vunpack.c.h.b16 %v2102
    %v6317 = vunpack.c.l.b16 %v2103
    %v6318 = vunpack.c.h.b16 %v2103
    %v6319 = vunpack.c.l.b16 %v2104
    %v6320 = vunpack.c.h.b16 %v2104
    %v6321 = vunpack.c.l.b16 %v2105
    %v6322 = vunpack.c.h.b16 %v2105
    %v6323 = vunpack.c.l.b16 %v2106
    %v6324 = vunpack.c.l.b16 %v2107
    %v6325 = vunpack.c.h.b16 %v2107
    %v6326 = vunpack.c.l.b16 %v2108
    %v6327 = vunpack.c.h.b16 %v2108
    %v6328 = vunpack.c.l.b16 %v2109
    %v6329 = vunpack.c.h.b16 %v2109
    %v6330 = vunpack.c.l.b16 %v2110
    %v6331 = vunpack.c.h.b16 %v2110
    %v6332 = vunpack.c.l.b16 %v2111
    %v6333 = vunpack.c.h.b16 %v2111
    %v6334 = vunpack.c.l.b16 %v2112
    %v6335 = vunpack.c.h.b16 %v2112
    %v6336 = vunpack.c.l.b16 %v2113
    %v6337 = vunpack.c.l.b16 %v2114
    %v6338 = vunpack.c.h.b16 %v2114
    %v6339 = vunpack.c.l.b16 %v2115
    %v6340 = vunpack.c.h.b16 %v2115
    %v6341 = vunpack.c.l.b16 %v2116
    %v6342 = vunpack.c.h.b16 %v2116
    %v6343 = vunpack.c.l.b16 %v2117
    %v6344 = vunpack.c.h.b16 %v2117
    %v6345 = vunpack.c.l.b16 %v2118
    %v6346 = vunpack.c.h.b16 %v2118
    %v6347 = vunpack.c.l.b16 %v2119
    %v6348 = vunpack.c.h.b16 %v2119
    %v6349 = vunpack.c.l.b16 %v2120
    %v6350 = vpack.c.b16 %v3659, %v3646
    %v6351 = vpack.c.b16 %v3660, %v3647
    %v6352 = vpack.c.b16 %v3661, %v3648
    %v6353 = vpack.c.b16 %v3662, %v3649
    %v6354 = vpack.c.b16 %v3663, %v3650
    %v6355 = vpack.c.b16 %v3664, %v3651
    %v6356 = vpack.c.b16 %v3665, %v3652
    %v6357 = vpack.c.b16 %v3666, %v3653
    %v6358 = vpack.c.b16 %v3667, %v3654
    %v6359 = vpack.c.b16 %v3668, %v3655
    %v6360 = vpack.c.b16 %v3669, %v3656
    %v6361 = vpack.c.b16 %v3670, %v3657
    %v6362 = vpack.c.b16 %v3671, %v3658
    %v6363 = vpack.c.b16 %v3685, %v3672
    %v6364 = vpack.c.b16 %v3686, %v3673
    %v6365 = vpack.c.b16 %v3687, %v3674
    %v6366 = vpack.c.b16 %v3688, %v3675
    %v6367 = vpack.c.b16 %v3689, %v3676
    %v6368 = vpack.c.b16 %v3690, %v3677
    %v6369 = vpack.c.b16 %v3691, %v3678
    %v6370 = vpack.c.b16 %v3692, %v3679
    %v6371 = vpack.c.b16 %v3693, %v3680
    %v6372 = vpack.c.b16 %v3694, %v3681
    %v6373 = vpack.c.b16 %v3695, %v3682
    %v6374 = vpack.c.b16 %v3696, %v3683
    %v6375 = vpack.c.b16 %v3697, %v3684
    %v6376 = vpack.c.b16 %v3711, %v3698
    %v6377 = vpack.c.b16 %v3712, %v3699
    %v6378 = vpack.c.b16 %v3713, %v3700
    %v6379 = vpack.c.b16 %v3714, %v3701
    %v6380 = vpack.c.b16 %v3715, %v3702
    %v6381 = vpack.c.b16 %v3716, %v3703
    %v6382 = vpack.c.b16 %v3717, %v3704
    %v6383 = vpack.c.b16 %v3718, %v3705
    %v6384 = vpack.c.b16 %v3719, %v3706
    %v6385 = vpack.c.b16 %v3720, %v3707
    %v6386 = vpack.c.b16 %v3721, %v3708
    %v6387 = vpack.c.b16 %v3722, %v3709
    %v6388 = vpack.c.b16 %v3723, %v3710
    %v6389 = vpack.c.b16 %v3737, %v3724
    %v6390 = vpack.c.b16 %v3738, %v3725
    %v6391 = vpack.c.b16 %v3739, %v3726
    %v6392 = vpack.c.b16 %v3740, %v3727
    %v6393 = vpack.c.b16 %v3741, %v3728
    %v6394 = vpack.c.b16 %v3742, %v3729
    %v6395 = vpack.c.b16 %v3743, %v3730
    %v6396 = vpack.c.b16 %v3744, %v3731
    %v6397 = vpack.c.b16 %v3745, %v3732
    %v6398 = vpack.c.b16 %v3746, %v3733
    %v6399 = vpack.c.b16 %v3747, %v3734
    %v6400 = vpack.c.b16 %v3748, %v3735
    %v6401 = vpack.c.b16 %v3749, %v3736
    %v6402 = vpack.c.b16 %v3763, %v3750
    %v6403 = vpack.c.b16 %v3764, %v3751
    %v6404 = vpack.c.b16 %v3765, %v3752
    %v6405 = vpack.c.b16 %v3766, %v3753
    %v6406 = vpack.c.b16 %v3767, %v3754
    %v6407 = vpack.c.b16 %v3768, %v3755
    %v6408 = vpack.c.b16 %v3769, %v3756
    %v6409 = vpack.c.b16 %v3770, %v3757
    %v6410 = vpack.c.b16 %v3771, %v3758
    %v6411 = vpack.c.b16 %v3772, %v3759
    %v6412 = vpack.c.b16 %v3773, %v3760
    %v6413 = vpack.c.b16 %v3774, %v3761
    %v6414 = vpack.c.b16 %v3775, %v3762
    %v6415 = vpack.c.b16 %v3789, %v3776
    %v6416 = vpack.c.b16 %v3790, %v3777
    %v6417 = vpack.c.b16 %v3791, %v3778
    %v6418 = vpack.c.b16 %v3792, %v3779
    %v6419 = vpack.c.b16 %v3793, %v3780
    %v6420 = vpack.c.b16 %v3794, %v3781
    %v6421 = vpack.c.b16 %v3795, %v3782
    %v6422 = vpack.c.b16 %v3796, %v3783
    %v6423 = vpack.c.b16 %v3797, %v3784
    %v6424 = vpack.c.b16 %v3798, %v3785
    %v6425 = vpack.c.b16 %v3799, %v3786
    %v6426 = vpack.c.b16 %v3800, %v3787
    %v6427 = vpack.c.b16 %v3801, %v3788
    %v6428 = vpack.c.b16 %v3815, %v3802
    %v6429 = vpack.c.b16 %v3816, %v3803
    %v6430 = vpack.c.b16 %v3817, %v3804
    %v6431 = vpack.c.b16 %v3818, %v3805
    %v6432 = vpack.c.b16 %v3819, %v3806
    %v6433 = vpack.c.b16 %v3820, %v3807
    %v6434 = vpack.c.b16 %v3821, %v3808
    %v6435 = vpack.c.b16 %v3822, %v3809
    %v6436 = vpack.c.b16 %v3823, %v3810
    %v6437 = vpack.c.b16 %v3824, %v3811
    %v6438 = vpack.c.b16 %v3825, %v3812
    %v6439 = vpack.c.b16 %v3826, %v3813
    %v6440 = vpack.c.b16 %v3827, %v3814
    %v6441 = vpack.c.b16 %v3841, %v3828
    %v6442 = vpack.c.b16 %v3842, %v3829
    %v6443 = vpack.c.b16 %v3843, %v3830
    %v6444 = vpack.c.b16 %v3844, %v3831
    %v6445 = vpack.c.b16 %v3845, %v3832
    %v6446 = vpack.c.b16 %v3846, %v3833
    %v6447 = vpack.c.b16 %v3847, %v3834
    %v6448 = vpack.c.b16 %v3848, %v3835
    %v6449 = vpack.c.b16 %v3849, %v3836
    %v6450 = vpack.c.b16 %v3850, %v3837
    %v6451 = vpack.c.b16 %v3851, %v3838
    %v6452 = vpack.c.b16 %v3852, %v3839
    %v6453 = vpack.c.b16 %v3853, %v3840
    %v6454 = vpack.c.b16 %v3867, %v3854
    %v6455 = vpack.c.b16 %v3868, %v3855
    %v6456 = vpack.c.b16 %v3869, %v3856
    %v6457 = vpack.c.b16 %v3870, %v3857
    %v6458 = vpack.c.b16 %v3871, %v3858
    %v6459 = vpack.c.b16 %v3872, %v3859
    %v6460 = vpack.c.b16 %v3873, %v3860
    %v6461 = vpack.c.b16 %v3874, %v3861
    %v6462 = vpack.c.b16 %v3875, %v3862
    %v6463 = vpack.c.b16 %v3876, %v3863
    %v6464 = vpack.c.b16 %v3877, %v3864
    %v6465 = vpack.c.b16 %v3878, %v3865
    %v6466 = vpack.c.b16 %v3879, %v3866
    %v6467 = vpack.c.b16 %v3893, %v3880
    %v6468 = vpack.c.b16 %v3894, %v3881
    %v6469 = vpack.c.b16 %v3895, %v3882
    %v6470 = vpack.c.b16 %v3896, %v3883
    %v6471 = vpack.c.b16 %v3897, %v3884
    %v6472 = vpack.c.b16 %v3898, %v3885
    %v6473 = vpack.c.b16 %v3899, %v3886
    %v6474 = vpack.c.b16 %v3900, %v3887
    %v6475 = vpack.c.b16 %v3901, %v3888
    %v6476 = vpack.c.b16 %v3902, %v3889
    %v6477 = vpack.c.b16 %v3903, %v3890
    %v6478 = vpack.c.b16 %v3904, %v3891
    %v6479 = vpack.c.b16 %v3905, %v3892
    %v6480 = vpack.c.b16 %v3919, %v3906
    %v6481 = vpack.c.b16 %v3920, %v3907
    %v6482 = vpack.c.b16 %v3921, %v3908
    %v6483 = vpack.c.b16 %v3922, %v3909
    %v6484 = vpack.c.b16 %v3923, %v3910
    %v6485 = vpack.c.b16 %v3924, %v3911
    %v6486 = vpack.c.b16 %v3925, %v3912
    %v6487 = vpack.c.b16 %v3926, %v3913
    %v6488 = vpack.c.b16 %v3927, %v3914
    %v6489 = vpack.c.b16 %v3928, %v3915
    %v6490 = vpack.c.b16 %v3929, %v3916
    %v6491 = vpack.c.b16 %v3930, %v3917
    %v6492 = vpack.c.b16 %v3931, %v3918
    %v6493 = vpack.c.b16 %v3945, %v3932
    %v6494 = vpack.c.b16 %v3946, %v3933
    %v6495 = vpack.c.b16 %v3947, %v3934
    %v6496 = vpack.c.b16 %v3948, %v3935
    %v6497 = vpack.c.b16 %v3949, %v3936
    %v6498 = vpack.c.b16 %v3950, %v3937
    %v6499 = vpack.c.b16 %v3951, %v3938
    %v6500 = vpack.c.b16 %v3952, %v3939
    %v6501 = vpack.c.b16 %v3953, %v3940
    %v6502 = vpack.c.b16 %v3954, %v3941
    %v6503 = vpack.c.b16 %v3955, %v3942
    %v6504 = vpack.c.b16 %v3956, %v3943
    %v6505 = vpack.c.b16 %v3957, %v3944
    %v6506 = vpack.c.b16 %v3971, %v3958
    %v6507 = vpack.c.b16 %v3972, %v3959
    %v6508 = vpack.c.b16 %v3973, %v3960
    %v6509 = vpack.c.b16 %v3974, %v3961
    %v6510 = vpack.c.b16 %v3975, %v3962
    %v6511 = vpack.c.b16 %v3976, %v3963
    %v6512 = vpack.c.b16 %v3977, %v3964
    %v6513 = vpack.c.b16 %v3978, %v3965
    %v6514 = vpack.c.b16 %v3979, %v3966
    %v6515 = vpack.c.b16 %v3980, %v3967
    %v6516 = vpack.c.b16 %v3981, %v3968
    %v6517 = vpack.c.b16 %v3982, %v3969
    %v6518 = vpack.c.b16 %v3983, %v3970
    %v6519 = vpack.c.b16 %v3997, %v3984
    %v6520 = vpack.c.b16 %v3998, %v3985
    %v6521 = vpack.c.b16 %v3999, %v3986
    %v6522 = vpack.c.b16 %v4000, %v3987
    %v6523 = vpack.c.b16 %v4001, %v3988
    %v6524 = vpack.c.b16 %v4002, %v3989
    %v6525 = vpack.c.b16 %v4003, %v3990
    %v6526 = vpack.c.b16 %v4004, %v3991
    %v6527 = vpack.c.b16 %v4005, %v3992
    %v6528 = vpack.c.b16 %v4006, %v3993
    %v6529 = vpack.c.b16 %v4007, %v3994
    %v6530 = vpack.c.b16 %v4008, %v3995
    %v6531 = vpack.c.b16 %v4009, %v3996
    %v6532 = vpack.c.b16 %v4023, %v4010
    %v6533 = vpack.c.b16 %v4024, %v4011
    %v6534 = vpack.c.b16 %v4025, %v4012
    %v6535 = vpack.c.b16 %v4026, %v4013
    %v6536 = vpack.c.b16 %v4027, %v4014
    %v6537 = vpack.c.b16 %v4028, %v4015
    %v6538 = vpack.c.b16 %v4029, %v4016
    %v6539 = vpack.c.b16 %v4030, %v4017
    %v6540 = vpack.c.b16 %v4031, %v4018
    %v6541 = vpack.c.b16 %v4032, %v4019
    %v6542 = vpack.c.b16 %v4033, %v4020
    %v6543 = vpack.c.b16 %v4034, %v4021
    %v6544 = vpack.c.b16 %v4035, %v4022
    %v6545 = vpack.c.b16 %v4049, %v4036
    %v6546 = vpack.c.b16 %v4050, %v4037
    %v6547 = vpack.c.b16 %v4051, %v4038
    %v6548 = vpack.c.b16 %v4052, %v4039
    %v6549 = vpack.c.b16 %v4053, %v4040
    %v6550 = vpack.c.b16 %v4054, %v4041
    %v6551 = vpack.c.b16 %v4055, %v4042
    %v6552 = vpack.c.b16 %v4056, %v4043
    %v6553 = vpack.c.b16 %v4057, %v4044
    %v6554 = vpack.c.b16 %v4058, %v4045
    %v6555 = vpack.c.b16 %v4059, %v4046
    %v6556 = vpack.c.b16 %v4060, %v4047
    %v6557 = vpack.c.b16 %v4061, %v4048
    %v6558 = vpack.c.b16 %v4075, %v4062
    %v6559 = vpack.c.b16 %v4076, %v4063
    %v6560 = vpack.c.b16 %v4077, %v4064
    %v6561 = vpack.c.b16 %v4078, %v4065
    %v6562 = vpack.c.b16 %v4079, %v4066
    %v6563 = vpack.c.b16 %v4080, %v4067
    %v6564 = vpack.c.b16 %v4081, %v4068
    %v6565 = vpack.c.b16 %v4082, %v4069
    %v6566 = vpack.c.b16 %v4083, %v4070
    %v6567 = vpack.c.b16 %v4084, %v4071
    %v6568 = vpack.c.b16 %v4085, %v4072
    %v6569 = vpack.c.b16 %v4086, %v4073
    %v6570 = vpack.c.b16 %v4087, %v4074
    %v6571 = vpack.c.b16 %v4101, %v4088
    %v6572 = vpack.c.b16 %v4102, %v4089
    %v6573 = vpack.c.b16 %v4103, %v4090
    %v6574 = vpack.c.b16 %v4104, %v4091
    %v6575 = vpack.c.b16 %v4105, %v4092
    %v6576 = vpack.c.b16 %v4106, %v4093
    %v6577 = vpack.c.b16 %v4107, %v4094
    %v6578 = vpack.c.b16 %v4108, %v4095
    %v6579 = vpack.c.b16 %v4109, %v4096
    %v6580 = vpack.c.b16 %v4110, %v4097
    %v6581 = vpack.c.b16 %v4111, %v4098
    %v6582 = vpack.c.b16 %v4112, %v4099
    %v6583 = vpack.c.b16 %v4113, %v4100
    %v6584 = vpack.c.b16 %v4127, %v4114
    %v6585 = vpack.c.b16 %v4128, %v4115
    %v6586 = vpack.c.b16 %v4129, %v4116
    %v6587 = vpack.c.b16 %v4130, %v4117
    %v6588 = vpack.c.b16 %v4131, %v4118
    %v6589 = vpack.c.b16 %v4132, %v4119
    %v6590 = vpack.c.b16 %v4133, %v4120
    %v6591 = vpack.c.b16 %v4134, %v4121
    %v6592 = vpack.c.b16 %v4135, %v4122
    %v6593 = vpack.c.b16 %v4136, %v4123
    %v6594 = vpack.c.b16 %v4137, %v4124
    %v6595 = vpack.c.b16 %v4138, %v4125
    %v6596 = vpack.c.b16 %v4139, %v4126
    %v6597 = vpack.c.b16 %v4153, %v4140
    %v6598 = vpack.c.b16 %v4154, %v4141
    %v6599 = vpack.c.b16 %v4155, %v4142
    %v6600 = vpack.c.b16 %v4156, %v4143
    %v6601 = vpack.c.b16 %v4157, %v4144
    %v6602 = vpack.c.b16 %v4158, %v4145
    %v6603 = vpack.c.b16 %v4159, %v4146
    %v6604 = vpack.c.b16 %v4160, %v4147
    %v6605 = vpack.c.b16 %v4161, %v4148
    %v6606 = vpack.c.b16 %v4162, %v4149
    %v6607 = vpack.c.b16 %v4163, %v4150
    %v6608 = vpack.c.b16 %v4164, %v4151
    %v6609 = vpack.c.b16 %v4165, %v4152
    %v6610 = vpack.c.b16 %v4179, %v4166
    %v6611 = vpack.c.b16 %v4180, %v4167
    %v6612 = vpack.c.b16 %v4181, %v4168
    %v6613 = vpack.c.b16 %v4182, %v4169
    %v6614 = vpack.c.b16 %v4183, %v4170
    %v6615 = vpack.c.b16 %v4184, %v4171
    %v6616 = vpack.c.b16 %v4185, %v4172
    %v6617 = vpack.c.b16 %v4186, %v4173
    %v6618 = vpack.c.b16 %v4187, %v4174
    %v6619 = vpack.c.b16 %v4188, %v4175
    %v6620 = vpack.c.b16 %v4189, %v4176
    %v6621 = vpack.c.b16 %v4190, %v4177
    %v6622 = vpack.c.b16 %v4191, %v4178
    %v6623 = vpack.c.b16 %v4205, %v4192
    %v6624 = vpack.c.b16 %v4206, %v4193
    %v6625 = vpack.c.b16 %v4207, %v4194
    %v6626 = vpack.c.b16 %v4208, %v4195
    %v6627 = vpack.c.b16 %v4209, %v4196
    %v6628 = vpack.c.b16 %v4210, %v4197
    %v6629 = vpack.c.b16 %v4211, %v4198
    %v6630 = vpack.c.b16 %v4212, %v4199
    %v6631 = vpack.c.b16 %v4213, %v4200
    %v6632 = vpack.c.b16 %v4214, %v4201
    %v6633 = vpack.c.b16 %v4215, %v4202
    %v6634 = vpack.c.b16 %v4216, %v4203
    %v6635 = vpack.c.b16 %v4217, %v4204
    %v6636 = vpack.c.b16 %v4231, %v4218
    %v6637 = vpack.c.b16 %v4232, %v4219
    %v6638 = vpack.c.b16 %v4233, %v4220
    %v6639 = vpack.c.b16 %v4234, %v4221
    %v6640 = vpack.c.b16 %v4235, %v4222
    %v6641 = vpack.c.b16 %v4236, %v4223
    %v6642 = vpack.c.b16 %v4237, %v4224
    %v6643 = vpack.c.b16 %v4238, %v4225
    %v6644 = vpack.c.b16 %v4239, %v4226
    %v6645 = vpack.c.b16 %v4240, %v4227
    %v6646 = vpack.c.b16 %v4241, %v4228
    %v6647 = vpack.c.b16 %v4242, %v4229
    %v6648 = vpack.c.b16 %v4243, %v4230
    %v6649 = vpack.c.b16 %v4257, %v4244
    %v6650 = vpack.c.b16 %v4258, %v4245
    %v6651 = vpack.c.b16 %v4259, %v4246
    %v6652 = vpack.c.b16 %v4260, %v4247
    %v6653 = vpack.c.b16 %v4261, %v4248
    %v6654 = vpack.c.b16 %v4262, %v4249
    %v6655 = vpack.c.b16 %v4263, %v4250
    %v6656 = vpack.c.b16 %v4264, %v4251
    %v6657 = vpack.c.b16 %v4265, %v4252
    %v6658 = vpack.c.b16 %v4266, %v4253
    %v6659 = vpack.c.b16 %v4267, %v4254
    %v6660 = vpack.c.b16 %v4268, %v4255
    %v6661 = vpack.c.b16 %v4269, %v4256
    %v6662 = vpack.c.b16 %v4283, %v4270
    %v6663 = vpack.c.b16 %v4284, %v4271
    %v6664 = vpack.c.b16 %v4285, %v4272
    %v6665 = vpack.c.b16 %v4286, %v4273
    %v6666 = vpack.c.b16 %v4287, %v4274
    %v6667 = vpack.c.b16 %v4288, %v4275
    %v6668 = vpack.c.b16 %v4289, %v4276
    %v6669 = vpack.c.b16 %v4290, %v4277
    %v6670 = vpack.c.b16 %v4291, %v4278
    %v6671 = vpack.c.b16 %v4292, %v4279
    %v6672 = vpack.c.b16 %v4293, %v4280
    %v6673 = vpack.c.b16 %v4294, %v4281
    %v6674 = vpack.c.b16 %v4295, %v4282
    %v6675 = vpack.c.b16 %v4309, %v4296
    %v6676 = vpack.c.b16 %v4310, %v4297
    %v6677 = vpack.c.b16 %v4311, %v4298
    %v6678 = vpack.c.b16 %v4312, %v4299
    %v6679 = vpack.c.b16 %v4313, %v4300
    %v6680 = vpack.c.b16 %v4314, %v4301
    %v6681 = vpack.c.b16 %v4315, %v4302
    %v6682 = vpack.c.b16 %v4316, %v4303
    %v6683 = vpack.c.b16 %v4317, %v4304
    %v6684 = vpack.c.b16 %v4318, %v4305
    %v6685 = vpack.c.b16 %v4319, %v4306
    %v6686 = vpack.c.b16 %v4320, %v4307
    %v6687 = vpack.c.b16 %v4321, %v4308
    %v6688 = vpack.c.b16 %v4335, %v4322
    %v6689 = vpack.c.b16 %v4336, %v4323
    %v6690 = vpack.c.b16 %v4337, %v4324
    %v6691 = vpack.c.b16 %v4338, %v4325
    %v6692 = vpack.c.b16 %v4339, %v4326
    %v6693 = vpack.c.b16 %v4340, %v4327
    %v6694 = vpack.c.b16 %v4341, %v4328
    %v6695 = vpack.c.b16 %v4342, %v4329
    %v6696 = vpack.c.b16 %v4343, %v4330
    %v6697 = vpack.c.b16 %v4344, %v4331
    %v6698 = vpack.c.b16 %v4345, %v4332
    %v6699 = vpack.c.b16 %v4346, %v4333
    %v6700 = vpack.c.b16 %v4347, %v4334
    %v6701 = vpack.c.b16 %v4361, %v4348
    %v6702 = vpack.c.b16 %v4362, %v4349
    %v6703 = vpack.c.b16 %v4363, %v4350
    %v6704 = vpack.c.b16 %v4364, %v4351
    %v6705 = vpack.c.b16 %v4365, %v4352
    %v6706 = vpack.c.b16 %v4366, %v4353
    %v6707 = vpack.c.b16 %v4367, %v4354
    %v6708 = vpack.c.b16 %v4368, %v4355
    %v6709 = vpack.c.b16 %v4369, %v4356
    %v6710 = vpack.c.b16 %v4370, %v4357
    %v6711 = vpack.c.b16 %v4371, %v4358
    %v6712 = vpack.c.b16 %v4372, %v4359
    %v6713 = vpack.c.b16 %v4373, %v4360
    %v6714 = vpack.c.b16 %v4387, %v4374
    %v6715 = vpack.c.b16 %v4388, %v4375
    %v6716 = vpack.c.b16 %v4389, %v4376
    %v6717 = vpack.c.b16 %v4390, %v4377
    %v6718 = vpack.c.b16 %v4391, %v4378
    %v6719 = vpack.c.b16 %v4392, %v4379
    %v6720 = vpack.c.b16 %v4393, %v4380
    %v6721 = vpack.c.b16 %v4394, %v4381
    %v6722 = vpack.c.b16 %v4395, %v4382
    %v6723 = vpack.c.b16 %v4396, %v4383
    %v6724 = vpack.c.b16 %v4397, %v4384
    %v6725 = vpack.c.b16 %v4398, %v4385
    %v6726 = vpack.c.b16 %v4399, %v4386
    %v6727 = vpack.c.b16 %v4413, %v4400
    %v6728 = vpack.c.b16 %v4414, %v4401
    %v6729 = vpack.c.b16 %v4415, %v4402
    %v6730 = vpack.c.b16 %v4416, %v4403
    %v6731 = vpack.c.b16 %v4417, %v4404
    %v6732 = vpack.c.b16 %v4418, %v4405
    %v6733 = vpack.c.b16 %v4419, %v4406
    %v6734 = vpack.c.b16 %v4420, %v4407
    %v6735 = vpack.c.b16 %v4421, %v4408
    %v6736 = vpack.c.b16 %v4422, %v4409
    %v6737 = vpack.c.b16 %v4423, %v4410
    %v6738 = vpack.c.b16 %v4424, %v4411
    %v6739 = vpack.c.b16 %v4425, %v4412
    %v6740 = vpack.c.b16 %v4439, %v4426
    %v6741 = vpack.c.b16 %v4440, %v4427
    %v6742 = vpack.c.b16 %v4441, %v4428
    %v6743 = vpack.c.b16 %v4442, %v4429
    %v6744 = vpack.c.b16 %v4443, %v4430
    %v6745 = vpack.c.b16 %v4444, %v4431
    %v6746 = vpack.c.b16 %v4445, %v4432
    %v6747 = vpack.c.b16 %v4446, %v4433
    %v6748 = vpack.c.b16 %v4447, %v4434
    %v6749 = vpack.c.b16 %v4448, %v4435
    %v6750 = vpack.c.b16 %v4449, %v4436
    %v6751 = vpack.c.b16 %v4450, %v4437
    %v6752 = vpack.c.b16 %v4451, %v4438
    %v6753 = vpack.c.b16 %v4465, %v4452
    %v6754 = vpack.c.b16 %v4466, %v4453
    %v6755 = vpack.c.b16 %v4467, %v4454
    %v6756 = vpack.c.b16 %v4468, %v4455
    %v6757 = vpack.c.b16 %v4469, %v4456
    %v6758 = vpack.c.b16 %v4470, %v4457
    %v6759 = vpack.c.b16 %v4471, %v4458
    %v6760 = vpack.c.b16 %v4472, %v4459
    %v6761 = vpack.c.b16 %v4473, %v4460
    %v6762 = vpack.c.b16 %v4474, %v4461
    %v6763 = vpack.c.b16 %v4475, %v4462
    %v6764 = vpack.c.b16 %v4476, %v4463
    %v6765 = vpack.c.b16 %v4477, %v4464
    %v6766 = vpack.c.b16 %v4491, %v4478
    %v6767 = vpack.c.b16 %v4492, %v4479
    %v6768 = vpack.c.b16 %v4493, %v4480
    %v6769 = vpack.c.b16 %v4494, %v4481
    %v6770 = vpack.c.b16 %v4495, %v4482
    %v6771 = vpack.c.b16 %v4496, %v4483
    %v6772 = vpack.c.b16 %v4497, %v4484
    %v6773 = vpack.c.b16 %v4498, %v4485
    %v6774 = vpack.c.b16 %v4499, %v4486
    %v6775 = vpack.c.b16 %v4500, %v4487
    %v6776 = vpack.c.b16 %v4501, %v4488
    %v6777 = vpack.c.b16 %v4502, %v4489
    %v6778 = vpack.c.b16 %v4503, %v4490
    %v6779 = vpack.c.b16 %v4517, %v4504
    %v6780 = vpack.c.b16 %v4518, %v4505
    %v6781 = vpack.c.b16 %v4519, %v4506
    %v6782 = vpack.c.b16 %v4520, %v4507
    %v6783 = vpack.c.b16 %v4521, %v4508
    %v6784 = vpack.c.b16 %v4522, %v4509
    %v6785 = vpack.c.b16 %v4523, %v4510
    %v6786 = vpack.c.b16 %v4524, %v4511
    %v6787 = vpack.c.b16 %v4525, %v4512
    %v6788 = vpack.c.b16 %v4526, %v4513
    %v6789 = vpack.c.b16 %v4527, %v4514
    %v6790 = vpack.c.b16 %v4528, %v4515
    %v6791 = vpack.c.b16 %v4529, %v4516
    %v6792 = vpack.c.b16 %v4543, %v4530
    %v6793 = vpack.c.b16 %v4544, %v4531
    %v6794 = vpack.c.b16 %v4545, %v4532
    %v6795 = vpack.c.b16 %v4546, %v4533
    %v6796 = vpack.c.b16 %v4547, %v4534
    %v6797 = vpack.c.b16 %v4548, %v4535
    %v6798 = vpack.c.b16 %v4549, %v4536
    %v6799 = vpack.c.b16 %v4550, %v4537
    %v6800 = vpack.c.b16 %v4551, %v4538
    %v6801 = vpack.c.b16 %v4552, %v4539
    %v6802 = vpack.c.b16 %v4553, %v4540
    %v6803 = vpack.c.b16 %v4554, %v4541
    %v6804 = vpack.c.b16 %v4555, %v4542
    %v6805 = vpack.c.b16 %v4569, %v4556
    %v6806 = vpack.c.b16 %v4570, %v4557
    %v6807 = vpack.c.b16 %v4571, %v4558
    %v6808 = vpack.c.b16 %v4572, %v4559
    %v6809 = vpack.c.b16 %v4573, %v4560
    %v6810 = vpack.c.b16 %v4574, %v4561
    %v6811 = vpack.c.b16 %v4575, %v4562
    %v6812 = vpack.c.b16 %v4576, %v4563
    %v6813 = vpack.c.b16 %v4577, %v4564
    %v6814 = vpack.c.b16 %v4578, %v4565
    %v6815 = vpack.c.b16 %v4579, %v4566
    %v6816 = vpack.c.b16 %v4580, %v4567
    %v6817 = vpack.c.b16 %v4581, %v4568
    %v6818 = vpack.c.b16 %v4595, %v4582
    %v6819 = vpack.c.b16 %v4596, %v4583
    %v6820 = vpack.c.b16 %v4597, %v4584
    %v6821 = vpack.c.b16 %v4598, %v4585
    %v6822 = vpack.c.b16 %v4599, %v4586
    %v6823 = vpack.c.b16 %v4600, %v4587
    %v6824 = vpack.c.b16 %v4601, %v4588
    %v6825 = vpack.c.b16 %v4602, %v4589
    %v6826 = vpack.c.b16 %v4603, %v4590
    %v6827 = vpack.c.b16 %v4604, %v4591
    %v6828 = vpack.c.b16 %v4605, %v4592
    %v6829 = vpack.c.b16 %v4606, %v4593
    %v6830 = vpack.c.b16 %v4607, %v4594
    %v6831 = vpack.c.b16 %v4621, %v4608
    %v6832 = vpack.c.b16 %v4622, %v4609
    %v6833 = vpack.c.b16 %v4623, %v4610
    %v6834 = vpack.c.b16 %v4624, %v4611
    %v6835 = vpack.c.b16 %v4625, %v4612
    %v6836 = vpack.c.b16 %v4626, %v4613
    %v6837 = vpack.c.b16 %v4627, %v4614
    %v6838 = vpack.c.b16 %v4628, %v4615
    %v6839 = vpack.c.b16 %v4629, %v4616
    %v6840 = vpack.c.b16 %v4630, %v4617
    %v6841 = vpack.c.b16 %v4631, %v4618
    %v6842 = vpack.c.b16 %v4632, %v4619
    %v6843 = vpack.c.b16 %v4633, %v4620
    %v6844 = vpack.c.b16 %v4647, %v4634
    %v6845 = vpack.c.b16 %v4648, %v4635
    %v6846 = vpack.c.b16 %v4649, %v4636
    %v6847 = vpack.c.b16 %v4650, %v4637
    %v6848 = vpack.c.b16 %v4651, %v4638
    %v6849 = vpack.c.b16 %v4652, %v4639
    %v6850 = vpack.c.b16 %v4653, %v4640
    %v6851 = vpack.c.b16 %v4654, %v4641
    %v6852 = vpack.c.b16 %v4655, %v4642
    %v6853 = vpack.c.b16 %v4656, %v4643
    %v6854 = vpack.c.b16 %v4657, %v4644
    %v6855 = vpack.c.b16 %v4658, %v4645
    %v6856 = vpack.c.b16 %v4659, %v4646
    %v6857 = vpack.c.b16 %v4673, %v4660
    %v6858 = vpack.c.b16 %v4674, %v4661
    %v6859 = vpack.c.b16 %v4675, %v4662
    %v6860 = vpack.c.b16 %v4676, %v4663
    %v6861 = vpack.c.b16 %v4677, %v4664
    %v6862 = vpack.c.b16 %v4678, %v4665
    %v6863 = vpack.c.b16 %v4679, %v4666
    %v6864 = vpack.c.b16 %v4680, %v4667
    %v6865 = vpack.c.b16 %v4681, %v4668
    %v6866 = vpack.c.b16 %v4682, %v4669
    %v6867 = vpack.c.b16 %v4683, %v4670
    %v6868 = vpack.c.b16 %v4684, %v4671
    %v6869 = vpack.c.b16 %v4685, %v4672
    %v6870 = vpack.c.b16 %v4699, %v4686
    %v6871 = vpack.c.b16 %v4700, %v4687
    %v6872 = vpack.c.b16 %v4701, %v4688
    %v6873 = vpack.c.b16 %v4702, %v4689
    %v6874 = vpack.c.b16 %v4703, %v4690
    %v6875 = vpack.c.b16 %v4704, %v4691
    %v6876 = vpack.c.b16 %v4705, %v4692
    %v6877 = vpack.c.b16 %v4706, %v4693
    %v6878 = vpack.c.b16 %v4707, %v4694
    %v6879 = vpack.c.b16 %v4708, %v4695
    %v6880 = vpack.c.b16 %v4709, %v4696
    %v6881 = vpack.c.b16 %v4710, %v4697
    %v6882 = vpack.c.b16 %v4711, %v4698
    %v6883 = vpack.c.b16 %v4725, %v4712
    %v6884 = vpack.c.b16 %v4726, %v4713
    %v6885 = vpack.c.b16 %v4727, %v4714
    %v6886 = vpack.c.b16 %v4728, %v4715
    %v6887 = vpack.c.b16 %v4729, %v4716
    %v6888 = vpack.c.b16 %v4730, %v4717
    %v6889 = vpack.c.b16 %v4731, %v4718
    %v6890 = vpack.c.b16 %v4732, %v4719
    %v6891 = vpack.c.b16 %v4733, %v4720
    %v6892 = vpack.c.b16 %v4734, %v4721
    %v6893 = vpack.c.b16 %v4735, %v4722
    %v6894 = vpack.c.b16 %v4736, %v4723
    %v6895 = vpack.c.b16 %v4737, %v4724
    %v6896 = vpack.c.b16 %v4751, %v4738
    %v6897 = vpack.c.b16 %v4752, %v4739
    %v6898 = vpack.c.b16 %v4753, %v4740
    %v6899 = vpack.c.b16 %v4754, %v4741
    %v6900 = vpack.c.b16 %v4755, %v4742
    %v6901 = vpack.c.b16 %v4756, %v4743
    %v6902 = vpack.c.b16 %v4757, %v4744
    %v6903 = vpack.c.b16 %v4758, %v4745
    %v6904 = vpack.c.b16 %v4759, %v4746
    %v6905 = vpack.c.b16 %v4760, %v4747
    %v6906 = vpack.c.b16 %v4761, %v4748
    %v6907 = vpack.c.b16 %v4762, %v4749
    %v6908 = vpack.c.b16 %v4763, %v4750
    %v6909 = vpack.c.b16 %v4777, %v4764
    %v6910 = vpack.c.b16 %v4778, %v4765
    %v6911 = vpack.c.b16 %v4779, %v4766
    %v6912 = vpack.c.b16 %v4780, %v4767
    %v6913 = vpack.c.b16 %v4781, %v4768
    %v6914 = vpack.c.b16 %v4782, %v4769
    %v6915 = vpack.c.b16 %v4783, %v4770
    %v6916 = vpack.c.b16 %v4784, %v4771
    %v6917 = vpack.c.b16 %v4785, %v4772
    %v6918 = vpack.c.b16 %v4786, %v4773
    %v6919 = vpack.c.b16 %v4787, %v4774
    %v6920 = vpack.c.b16 %v4788, %v4775
    %v6921 = vpack.c.b16 %v4789, %v4776
    %v6922 = vpack.c.b16 %v4803, %v4790
    %v6923 = vpack.c.b16 %v4804, %v4791
    %v6924 = vpack.c.b16 %v4805, %v4792
    %v6925 = vpack.c.b16 %v4806, %v4793
    %v6926 = vpack.c.b16 %v4807, %v4794
    %v6927 = vpack.c.b16 %v4808, %v4795
    %v6928 = vpack.c.b16 %v4809, %v4796
    %v6929 = vpack.c.b16 %v4810, %v4797
    %v6930 = vpack.c.b16 %v4811, %v4798
    %v6931 = vpack.c.b16 %v4812, %v4799
    %v6932 = vpack.c.b16 %v4813, %v4800
    %v6933 = vpack.c.b16 %v4814, %v4801
    %v6934 = vpack.c.b16 %v4815, %v4802
    %v6935 = vpack.c.b16 %v4829, %v4816
    %v6936 = vpack.c.b16 %v4830, %v4817
    %v6937 = vpack.c.b16 %v4831, %v4818
    %v6938 = vpack.c.b16 %v4832, %v4819
    %v6939 = vpack.c.b16 %v4833, %v4820
    %v6940 = vpack.c.b16 %v4834, %v4821
    %v6941 = vpack.c.b16 %v4835, %v4822
    %v6942 = vpack.c.b16 %v4836, %v4823
    %v6943 = vpack.c.b16 %v4837, %v4824
    %v6944 = vpack.c.b16 %v4838, %v4825
    %v6945 = vpack.c.b16 %v4839, %v4826
    %v6946 = vpack.c.b16 %v4840, %v4827
    %v6947 = vpack.c.b16 %v4841, %v4828
    %v6948 = vpack.c.b16 %v4855, %v4842
    %v6949 = vpack.c.b16 %v4856, %v4843
    %v6950 = vpack.c.b16 %v4857, %v4844
    %v6951 = vpack.c.b16 %v4858, %v4845
    %v6952 = vpack.c.b16 %v4859, %v4846
    %v6953 = vpack.c.b16 %v4860, %v4847
    %v6954 = vpack.c.b16 %v4861, %v4848
    %v6955 = vpack.c.b16 %v4862, %v4849
    %v6956 = vpack.c.b16 %v4863, %v4850
    %v6957 = vpack.c.b16 %v4864, %v4851
    %v6958 = vpack.c.b16 %v4865, %v4852
    %v6959 = vpack.c.b16 %v4866, %v4853
    %v6960 = vpack.c.b16 %v4867, %v4854
    %v6961 = vpack.c.b16 %v4881, %v4868
    %v6962 = vpack.c.b16 %v4882, %v4869
    %v6963 = vpack.c.b16 %v4883, %v4870
    %v6964 = vpack.c.b16 %v4884, %v4871
    %v6965 = vpack.c.b16 %v4885, %v4872
    %v6966 = vpack.c.b16 %v4886, %v4873
    %v6967 = vpack.c.b16 %v4887, %v4874
    %v6968 = vpack.c.b16 %v4888, %v4875
    %v6969 = vpack.c.b16 %v4889, %v4876
    %v6970 = vpack.c.b16 %v4890, %v4877
    %v6971 = vpack.c.b16 %v4891, %v4878
    %v6972 = vpack.c.b16 %v4892, %v4879
    %v6973 = vpack.c.b16 %v4893, %v4880
    %v6974 = vpack.c.b16 %v4907, %v4894
    %v6975 = vpack.c.b16 %v4908, %v4895
    %v6976 = vpack.c.b16 %v4909, %v4896
    %v6977 = vpack.c.b16 %v4910, %v4897
    %v6978 = vpack.c.b16 %v4911, %v4898
    %v6979 = vpack.c.b16 %v4912, %v4899
    %v6980 = vpack.c.b16 %v4913, %v4900
    %v6981 = vpack.c.b16 %v4914, %v4901
    %v6982 = vpack.c.b16 %v4915, %v4902
    %v6983 = vpack.c.b16 %v4916, %v4903
    %v6984 = vpack.c.b16 %v4917, %v4904
    %v6985 = vpack.c.b16 %v4918, %v4905
    %v6986 = vpack.c.b16 %v4919, %v4906
    %v6987 = vpack.c.b16 %v4933, %v4920
    %v6988 = vpack.c.b16 %v4934, %v4921
    %v6989 = vpack.c.b16 %v4935, %v4922
    %v6990 = vpack.c.b16 %v4936, %v4923
    %v6991 = vpack.c.b16 %v4937, %v4924
    %v6992 = vpack.c.b16 %v4938, %v4925
    %v6993 = vpack.c.b16 %v4939, %v4926
    %v6994 = vpack.c.b16 %v4940, %v4927
    %v6995 = vpack.c.b16 %v4941, %v4928
    %v6996 = vpack.c.b16 %v4942, %v4929
    %v6997 = vpack.c.b16 %v4943, %v4930
    %v6998 = vpack.c.b16 %v4944, %v4931
    %v6999 = vpack.c.b16 %v4945, %v4932
    %v7000 = vpack.c.b16 %v4959, %v4946
    %v7001 = vpack.c.b16 %v4960, %v4947
    %v7002 = vpack.c.b16 %v4961, %v4948
    %v7003 = vpack.c.b16 %v4962, %v4949
    %v7004 = vpack.c.b16 %v4963, %v4950
    %v7005 = vpack.c.b16 %v4964, %v4951
    %v7006 = vpack.c.b16 %v4965, %v4952
    %v7007 = vpack.c.b16 %v4966, %v4953
    %v7008 = vpack.c.b16 %v4967, %v4954
    %v7009 = vpack.c.b16 %v4968, %v4955
    %v7010 = vpack.c.b16 %v4969, %v4956
    %v7011 = vpack.c.b16 %v4970, %v4957
    %v7012 = vpack.c.b16 %v4971, %v4958
    %v7013 = vpack.c.b16 %v4985, %v4972
    %v7014 = vpack.c.b16 %v4986, %v4973
    %v7015 = vpack.c.b16 %v4987, %v4974
    %v7016 = vpack.c.b16 %v4988, %v4975
    %v7017 = vpack.c.b16 %v4989, %v4976
    %v7018 = vpack.c.b16 %v4990, %v4977
    %v7019 = vpack.c.b16 %v4991, %v4978
    %v7020 = vpack.c.b16 %v4992, %v4979
    %v7021 = vpack.c.b16 %v4993, %v4980
    %v7022 = vpack.c.b16 %v4994, %v4981
    %v7023 = vpack.c.b16 %v4995, %v4982
    %v7024 = vpack.c.b16 %v4996, %v4983
    %v7025 = vpack.c.b16 %v4997, %v4984
    %v7026 = vpack.c.b16 %v5011, %v4998
    %v7027 = vpack.c.b16 %v5012, %v4999
    %v7028 = vpack.c.b16 %v5013, %v5000
    %v7029 = vpack.c.b16 %v5014, %v5001
    %v7030 = vpack.c.b16 %v5015, %v5002
    %v7031 = vpack.c.b16 %v5016, %v5003
    %v7032 = vpack.c.b16 %v5017, %v5004
    %v7033 = vpack.c.b16 %v5018, %v5005
    %v7034 = vpack.c.b16 %v5019, %v5006
    %v7035 = vpack.c.b16 %v5020, %v5007
    %v7036 = vpack.c.b16 %v5021, %v5008
    %v7037 = vpack.c.b16 %v5022, %v5009
    %v7038 = vpack.c.b16 %v5023, %v5010
    %v7039 = vpack.c.b16 %v5037, %v5024
    %v7040 = vpack.c.b16 %v5038, %v5025
    %v7041 = vpack.c.b16 %v5039, %v5026
    %v7042 = vpack.c.b16 %v5040, %v5027
    %v7043 = vpack.c.b16 %v5041, %v5028
    %v7044 = vpack.c.b16 %v5042, %v5029
    %v7045 = vpack.c.b16 %v5043, %v5030
    %v7046 = vpack.c.b16 %v5044, %v5031
    %v7047 = vpack.c.b16 %v5045, %v5032
    %v7048 = vpack.c.b16 %v5046, %v5033
    %v7049 = vpack.c.b16 %v5047, %v5034
    %v7050 = vpack.c.b16 %v5048, %v5035
    %v7051 = vpack.c.b16 %v5049, %v5036
    %v7052 = vpack.c.b16 %v5063, %v5050
    %v7053 = vpack.c.b16 %v5064, %v5051
    %v7054 = vpack.c.b16 %v5065, %v5052
    %v7055 = vpack.c.b16 %v5066, %v5053
    %v7056 = vpack.c.b16 %v5067, %v5054
    %v7057 = vpack.c.b16 %v5068, %v5055
    %v7058 = vpack.c.b16 %v5069, %v5056
    %v7059 = vpack.c.b16 %v5070, %v5057
    %v7060 = vpack.c.b16 %v5071, %v5058
    %v7061 = vpack.c.b16 %v5072, %v5059
    %v7062 = vpack.c.b16 %v5073, %v5060
    %v7063 = vpack.c.b16 %v5074, %v5061
    %v7064 = vpack.c.b16 %v5075, %v5062
    %v7065 = vpack.c.b16 %v5089, %v5076
    %v7066 = vpack.c.b16 %v5090, %v5077
    %v7067 = vpack.c.b16 %v5091, %v5078
    %v7068 = vpack.c.b16 %v5092, %v5079
    %v7069 = vpack.c.b16 %v5093, %v5080
    %v7070 = vpack.c.b16 %v5094, %v5081
    %v7071 = vpack.c.b16 %v5095, %v5082
    %v7072 = vpack.c.b16 %v5096, %v5083
    %v7073 = vpack.c.b16 %v5097, %v5084
    %v7074 = vpack.c.b16 %v5098, %v5085
    %v7075 = vpack.c.b16 %v5099, %v5086
    %v7076 = vpack.c.b16 %v5100, %v5087
    %v7077 = vpack.c.b16 %v5101, %v5088
    %v7078 = vpack.c.b16 %v5115, %v5102
    %v7079 = vpack.c.b16 %v5116, %v5103
    %v7080 = vpack.c.b16 %v5117, %v5104
    %v7081 = vpack.c.b16 %v5118, %v5105
    %v7082 = vpack.c.b16 %v5119, %v5106
    %v7083 = vpack.c.b16 %v5120, %v5107
    %v7084 = vpack.c.b16 %v5121, %v5108
    %v7085 = vpack.c.b16 %v5122, %v5109
    %v7086 = vpack.c.b16 %v5123, %v5110
    %v7087 = vpack.c.b16 %v5124, %v5111
    %v7088 = vpack.c.b16 %v5125, %v5112
    %v7089 = vpack.c.b16 %v5126, %v5113
    %v7090 = vpack.c.b16 %v5127, %v5114
    %v7091 = vpack.c.b16 %v5141, %v5128
    %v7092 = vpack.c.b16 %v5142, %v5129
    %v7093 = vpack.c.b16 %v5143, %v5130
    %v7094 = vpack.c.b16 %v5144, %v5131
    %v7095 = vpack.c.b16 %v5145, %v5132
    %v7096 = vpack.c.b16 %v5146, %v5133
    %v7097 = vpack.c.b16 %v5147, %v5134
    %v7098 = vpack.c.b16 %v5148, %v5135
    %v7099 = vpack.c.b16 %v5149, %v5136
    %v7100 = vpack.c.b16 %v5150, %v5137
    %v7101 = vpack.c.b16 %v5151, %v5138
    %v7102 = vpack.c.b16 %v5152, %v5139
    %v7103 = vpack.c.b16 %v5153, %v5140
    %v7104 = vpack.c.b16 %v5167, %v5154
    %v7105 = vpack.c.b16 %v5168, %v5155
    %v7106 = vpack.c.b16 %v5169, %v5156
    %v7107 = vpack.c.b16 %v5170, %v5157
    %v7108 = vpack.c.b16 %v5171, %v5158
    %v7109 = vpack.c.b16 %v5172, %v5159
    %v7110 = vpack.c.b16 %v5173, %v5160
    %v7111 = vpack.c.b16 %v5174, %v5161
    %v7112 = vpack.c.b16 %v5175, %v5162
    %v7113 = vpack.c.b16 %v5176, %v5163
    %v7114 = vpack.c.b16 %v5177, %v5164
    %v7115 = vpack.c.b16 %v5178, %v5165
    %v7116 = vpack.c.b16 %v5179, %v5166
    %v7117 = vpack.c.b16 %v5193, %v5180
    %v7118 = vpack.c.b16 %v5194, %v5181
    %v7119 = vpack.c.b16 %v5195, %v5182
    %v7120 = vpack.c.b16 %v5196, %v5183
    %v7121 = vpack.c.b16 %v5197, %v5184
    %v7122 = vpack.c.b16 %v5198, %v5185
    %v7123 = vpack.c.b16 %v5199, %v5186
    %v7124 = vpack.c.b16 %v5200, %v5187
    %v7125 = vpack.c.b16 %v5201, %v5188
    %v7126 = vpack.c.b16 %v5202, %v5189
    %v7127 = vpack.c.b16 %v5203, %v5190
    %v7128 = vpack.c.b16 %v5204, %v5191
    %v7129 = vpack.c.b16 %v5205, %v5192
    %v7130 = vpack.c.b16 %v5219, %v5206
    %v7131 = vpack.c.b16 %v5220, %v5207
    %v7132 = vpack.c.b16 %v5221, %v5208
    %v7133 = vpack.c.b16 %v5222, %v5209
    %v7134 = vpack.c.b16 %v5223, %v5210
    %v7135 = vpack.c.b16 %v5224, %v5211
    %v7136 = vpack.c.b16 %v5225, %v5212
    %v7137 = vpack.c.b16 %v5226, %v5213
    %v7138 = vpack.c.b16 %v5227, %v5214
    %v7139 = vpack.c.b16 %v5228, %v5215
    %v7140 = vpack.c.b16 %v5229, %v5216
    %v7141 = vpack.c.b16 %v5230, %v5217
    %v7142 = vpack.c.b16 %v5231, %v5218
    %v7143 = vpack.c.b16 %v5245, %v5232
    %v7144 = vpack.c.b16 %v5246, %v5233
    %v7145 = vpack.c.b16 %v5247, %v5234
    %v7146 = vpack.c.b16 %v5248, %v5235
    %v7147 = vpack.c.b16 %v5249, %v5236
    %v7148 = vpack.c.b16 %v5250, %v5237
    %v7149 = vpack.c.b16 %v5251, %v5238
    %v7150 = vpack.c.b16 %v5252, %v5239
    %v7151 = vpack.c.b16 %v5253, %v5240
    %v7152 = vpack.c.b16 %v5254, %v5241
    %v7153 = vpack.c.b16 %v5255, %v5242
    %v7154 = vpack.c.b16 %v5256, %v5243
    %v7155 = vpack.c.b16 %v5257, %v5244
    %v7156 = vpack.c.b16 %v5271, %v5258
    %v7157 = vpack.c.b16 %v5272, %v5259
    %v7158 = vpack.c.b16 %v5273, %v5260
    %v7159 = vpack.c.b16 %v5274, %v5261
    %v7160 = vpack.c.b16 %v5275, %v5262
    %v7161 = vpack.c.b16 %v5276, %v5263
    %v7162 = vpack.c.b16 %v5277, %v5264
    %v7163 = vpack.c.b16 %v5278, %v5265
    %v7164 = vpack.c.b16 %v5279, %v5266
    %v7165 = vpack.c.b16 %v5280, %v5267
    %v7166 = vpack.c.b16 %v5281, %v5268
    %v7167 = vpack.c.b16 %v5282, %v5269
    %v7168 = vpack.c.b16 %v5283, %v5270
    %v7169 = vpack.c.b16 %v5297, %v5284
    %v7170 = vpack.c.b16 %v5298, %v5285
    %v7171 = vpack.c.b16 %v5299, %v5286
    %v7172 = vpack.c.b16 %v5300, %v5287
    %v7173 = vpack.c.b16 %v5301, %v5288
    %v7174 = vpack.c.b16 %v5302, %v5289
    %v7175 = vpack.c.b16 %v5303, %v5290
    %v7176 = vpack.c.b16 %v5304, %v5291
    %v7177 = vpack.c.b16 %v5305, %v5292
    %v7178 = vpack.c.b16 %v5306, %v5293
    %v7179 = vpack.c.b16 %v5307, %v5294
    %v7180 = vpack.c.b16 %v5308, %v5295
    %v7181 = vpack.c.b16 %v5309, %v5296
    %v7182 = vpack.c.b16 %v5323, %v5310
    %v7183 = vpack.c.b16 %v5324, %v5311
    %v7184 = vpack.c.b16 %v5325, %v5312
    %v7185 = vpack.c.b16 %v5326, %v5313
    %v7186 = vpack.c.b16 %v5327, %v5314
    %v7187 = vpack.c.b16 %v5328, %v5315
    %v7188 = vpack.c.b16 %v5329, %v5316
    %v7189 = vpack.c.b16 %v5330, %v5317
    %v7190 = vpack.c.b16 %v5331, %v5318
    %v7191 = vpack.c.b16 %v5332, %v5319
    %v7192 = vpack.c.b16 %v5333, %v5320
    %v7193 = vpack.c.b16 %v5334, %v5321
    %v7194 = vpack.c.b16 %v5335, %v5322
    %v7195 = vpack.c.b16 %v5349, %v5336
    %v7196 = vpack.c.b16 %v5350, %v5337
    %v7197 = vpack.c.b16 %v5351, %v5338
    %v7198 = vpack.c.b16 %v5352, %v5339
    %v7199 = vpack.c.b16 %v5353, %v5340
    %v7200 = vpack.c.b16 %v5354, %v5341
    %v7201 = vpack.c.b16 %v5355, %v5342
    %v7202 = vpack.c.b16 %v5356, %v5343
    %v7203 = vpack.c.b16 %v5357, %v5344
    %v7204 = vpack.c.b16 %v5358, %v5345
    %v7205 = vpack.c.b16 %v5359, %v5346
    %v7206 = vpack.c.b16 %v5360, %v5347
    %v7207 = vpack.c.b16 %v5361, %v5348
    %v7208 = vpack.c.b16 %v5375, %v5362
    %v7209 = vpack.c.b16 %v5376, %v5363
    %v7210 = vpack.c.b16 %v5377, %v5364
    %v7211 = vpack.c.b16 %v5378, %v5365
    %v7212 = vpack.c.b16 %v5379, %v5366
    %v7213 = vpack.c.b16 %v5380, %v5367
    %v7214 = vpack.c.b16 %v5381, %v5368
    %v7215 = vpack.c.b16 %v5382, %v5369
    %v7216 = vpack.c.b16 %v5383, %v5370
    %v7217 = vpack.c.b16 %v5384, %v5371
    %v7218 = vpack.c.b16 %v5385, %v5372
    %v7219 = vpack.c.b16 %v5386, %v5373
    %v7220 = vpack.c.b16 %v5387, %v5374
    %v7221 = vpack.c.b16 %v5401, %v5388
    %v7222 = vpack.c.b16 %v5402, %v5389
    %v7223 = vpack.c.b16 %v5403, %v5390
    %v7224 = vpack.c.b16 %v5404, %v5391
    %v7225 = vpack.c.b16 %v5405, %v5392
    %v7226 = vpack.c.b16 %v5406, %v5393
    %v7227 = vpack.c.b16 %v5407, %v5394
    %v7228 = vpack.c.b16 %v5408, %v5395
    %v7229 = vpack.c.b16 %v5409, %v5396
    %v7230 = vpack.c.b16 %v5410, %v5397
    %v7231 = vpack.c.b16 %v5411, %v5398
    %v7232 = vpack.c.b16 %v5412, %v5399
    %v7233 = vpack.c.b16 %v5413, %v5400
    %v7234 = vpack.c.b16 %v5427, %v5414
    %v7235 = vpack.c.b16 %v5428, %v5415
    %v7236 = vpack.c.b16 %v5429, %v5416
    %v7237 = vpack.c.b16 %v5430, %v5417
    %v7238 = vpack.c.b16 %v5431, %v5418
    %v7239 = vpack.c.b16 %v5432, %v5419
    %v7240 = vpack.c.b16 %v5433, %v5420
    %v7241 = vpack.c.b16 %v5434, %v5421
    %v7242 = vpack.c.b16 %v5435, %v5422
    %v7243 = vpack.c.b16 %v5436, %v5423
    %v7244 = vpack.c.b16 %v5437, %v5424
    %v7245 = vpack.c.b16 %v5438, %v5425
    %v7246 = vpack.c.b16 %v5439, %v5426
    %v7247 = vpack.c.b16 %v5453, %v5440
    %v7248 = vpack.c.b16 %v5454, %v5441
    %v7249 = vpack.c.b16 %v5455, %v5442
    %v7250 = vpack.c.b16 %v5456, %v5443
    %v7251 = vpack.c.b16 %v5457, %v5444
    %v7252 = vpack.c.b16 %v5458, %v5445
    %v7253 = vpack.c.b16 %v5459, %v5446
    %v7254 = vpack.c.b16 %v5460, %v5447
    %v7255 = vpack.c.b16 %v5461, %v5448
    %v7256 = vpack.c.b16 %v5462, %v5449
    %v7257 = vpack.c.b16 %v5463, %v5450
    %v7258 = vpack.c.b16 %v5464, %v5451
    %v7259 = vpack.c.b16 %v5465, %v5452
    %v7260 = vpack.c.b16 %v5479, %v5466
    %v7261 = vpack.c.b16 %v5480, %v5467
    %v7262 = vpack.c.b16 %v5481, %v5468
    %v7263 = vpack.c.b16 %v5482, %v5469
    %v7264 = vpack.c.b16 %v5483, %v5470
    %v7265 = vpack.c.b16 %v5484, %v5471
    %v7266 = vpack.c.b16 %v5485, %v5472
    %v7267 = vpack.c.b16 %v5486, %v5473
    %v7268 = vpack.c.b16 %v5487, %v5474
    %v7269 = vpack.c.b16 %v5488, %v5475
    %v7270 = vpack.c.b16 %v5489, %v5476
    %v7271 = vpack.c.b16 %v5490, %v5477
    %v7272 = vpack.c.b16 %v5491, %v5478
    %v7273 = vpack.c.b16 %v5505, %v5492
    %v7274 = vpack.c.b16 %v5506, %v5493
    %v7275 = vpack.c.b16 %v5507, %v5494
    %v7276 = vpack.c.b16 %v5508, %v5495
    %v7277 = vpack.c.b16 %v5509, %v5496
    %v7278 = vpack.c.b16 %v5510, %v5497
    %v7279 = vpack.c.b16 %v5511, %v5498
    %v7280 = vpack.c.b16 %v5512, %v5499
    %v7281 = vpack.c.b16 %v5513, %v5500
    %v7282 = vpack.c.b16 %v5514, %v5501
    %v7283 = vpack.c.b16 %v5515, %v5502
    %v7284 = vpack.c.b16 %v5516, %v5503
    %v7285 = vpack.c.b16 %v5517, %v5504
    %v7286 = vpack.c.b16 %v5531, %v5518
    %v7287 = vpack.c.b16 %v5532, %v5519
    %v7288 = vpack.c.b16 %v5533, %v5520
    %v7289 = vpack.c.b16 %v5534, %v5521
    %v7290 = vpack.c.b16 %v5535, %v5522
    %v7291 = vpack.c.b16 %v5536, %v5523
    %v7292 = vpack.c.b16 %v5537, %v5524
    %v7293 = vpack.c.b16 %v5538, %v5525
    %v7294 = vpack.c.b16 %v5539, %v5526
    %v7295 = vpack.c.b16 %v5540, %v5527
    %v7296 = vpack.c.b16 %v5541, %v5528
    %v7297 = vpack.c.b16 %v5542, %v5529
    %v7298 = vpack.c.b16 %v5543, %v5530
    %v7299 = vpack.c.b16 %v5557, %v5544
    %v7300 = vpack.c.b16 %v5558, %v5545
    %v7301 = vpack.c.b16 %v5559, %v5546
    %v7302 = vpack.c.b16 %v5560, %v5547
    %v7303 = vpack.c.b16 %v5561, %v5548
    %v7304 = vpack.c.b16 %v5562, %v5549
    %v7305 = vpack.c.b16 %v5563, %v5550
    %v7306 = vpack.c.b16 %v5564, %v5551
    %v7307 = vpack.c.b16 %v5565, %v5552
    %v7308 = vpack.c.b16 %v5566, %v5553
    %v7309 = vpack.c.b16 %v5567, %v5554
    %v7310 = vpack.c.b16 %v5568, %v5555
    %v7311 = vpack.c.b16 %v5569, %v5556
    %v7312 = vpack.c.b16 %v5583, %v5570
    %v7313 = vpack.c.b16 %v5584, %v5571
    %v7314 = vpack.c.b16 %v5585, %v5572
    %v7315 = vpack.c.b16 %v5586, %v5573
    %v7316 = vpack.c.b16 %v5587, %v5574
    %v7317 = vpack.c.b16 %v5588, %v5575
    %v7318 = vpack.c.b16 %v5589, %v5576
    %v7319 = vpack.c.b16 %v5590, %v5577
    %v7320 = vpack.c.b16 %v5591, %v5578
    %v7321 = vpack.c.b16 %v5592, %v5579
    %v7322 = vpack.c.b16 %v5593, %v5580
    %v7323 = vpack.c.b16 %v5594, %v5581
    %v7324 = vpack.c.b16 %v5595, %v5582
    %v7325 = vpack.c.b16 %v5609, %v5596
    %v7326 = vpack.c.b16 %v5610, %v5597
    %v7327 = vpack.c.b16 %v5611, %v5598
    %v7328 = vpack.c.b16 %v5612, %v5599
    %v7329 = vpack.c.b16 %v5613, %v5600
    %v7330 = vpack.c.b16 %v5614, %v5601
    %v7331 = vpack.c.b16 %v5615, %v5602
    %v7332 = vpack.c.b16 %v5616, %v5603
    %v7333 = vpack.c.b16 %v5617, %v5604
    %v7334 = vpack.c.b16 %v5618, %v5605
    %v7335 = vpack.c.b16 %v5619, %v5606
    %v7336 = vpack.c.b16 %v5620, %v5607
    %v7337 = vpack.c.b16 %v5621, %v5608
    %v7338 = vpack.c.b16 %v5635, %v5622
    %v7339 = vpack.c.b16 %v5636, %v5623
    %v7340 = vpack.c.b16 %v5637, %v5624
    %v7341 = vpack.c.b16 %v5638, %v5625
    %v7342 = vpack.c.b16 %v5639, %v5626
    %v7343 = vpack.c.b16 %v5640, %v5627
    %v7344 = vpack.c.b16 %v5641, %v5628
    %v7345 = vpack.c.b16 %v5642, %v5629
    %v7346 = vpack.c.b16 %v5643, %v5630
    %v7347 = vpack.c.b16 %v5644, %v5631
    %v7348 = vpack.c.b16 %v5645, %v5632
    %v7349 = vpack.c.b16 %v5646, %v5633
    %v7350 = vpack.c.b16 %v5647, %v5634
    %v7351 = vpack.c.b16 %v5661, %v5648
    %v7352 = vpack.c.b16 %v5662, %v5649
    %v7353 = vpack.c.b16 %v5663, %v5650
    %v7354 = vpack.c.b16 %v5664, %v5651
    %v7355 = vpack.c.b16 %v5665, %v5652
    %v7356 = vpack.c.b16 %v5666, %v5653
    %v7357 = vpack.c.b16 %v5667, %v5654
    %v7358 = vpack.c.b16 %v5668, %v5655
    %v7359 = vpack.c.b16 %v5669, %v5656
    %v7360 = vpack.c.b16 %v5670, %v5657
    %v7361 = vpack.c.b16 %v5671, %v5658
    %v7362 = vpack.c.b16 %v5672, %v5659
    %v7363 = vpack.c.b16 %v5673, %v5660
    %v7364 = vpack.c.b16 %v5687, %v5674
    %v7365 = vpack.c.b16 %v5688, %v5675
    %v7366 = vpack.c.b16 %v5689, %v5676
    %v7367 = vpack.c.b16 %v5690, %v5677
    %v7368 = vpack.c.b16 %v5691, %v5678
    %v7369 = vpack.c.b16 %v5692, %v5679
    %v7370 = vpack.c.b16 %v5693, %v5680
    %v7371 = vpack.c.b16 %v5694, %v5681
    %v7372 = vpack.c.b16 %v5695, %v5682
    %v7373 = vpack.c.b16 %v5696, %v5683
    %v7374 = vpack.c.b16 %v5697, %v5684
    %v7375 = vpack.c.b16 %v5698, %v5685
    %v7376 = vpack.c.b16 %v5699, %v5686
    %v7377 = vpack.c.b16 %v5713, %v5700
    %v7378 = vpack.c.b16 %v5714, %v5701
    %v7379 = vpack.c.b16 %v5715, %v5702
    %v7380 = vpack.c.b16 %v5716, %v5703
    %v7381 = vpack.c.b16 %v5717, %v5704
    %v7382 = vpack.c.b16 %v5718, %v5705
    %v7383 = vpack.c.b16 %v5719, %v5706
    %v7384 = vpack.c.b16 %v5720, %v5707
    %v7385 = vpack.c.b16 %v5721, %v5708
    %v7386 = vpack.c.b16 %v5722, %v5709
    %v7387 = vpack.c.b16 %v5723, %v5710
    %v7388 = vpack.c.b16 %v5724, %v5711
    %v7389 = vpack.c.b16 %v5725, %v5712
    %v7390 = vpack.c.b16 %v5739, %v5726
    %v7391 = vpack.c.b16 %v5740, %v5727
    %v7392 = vpack.c.b16 %v5741, %v5728
    %v7393 = vpack.c.b16 %v5742, %v5729
    %v7394 = vpack.c.b16 %v5743, %v5730
    %v7395 = vpack.c.b16 %v5744, %v5731
    %v7396 = vpack.c.b16 %v5745, %v5732
    %v7397 = vpack.c.b16 %v5746, %v5733
    %v7398 = vpack.c.b16 %v5747, %v5734
    %v7399 = vpack.c.b16 %v5748, %v5735
    %v7400 = vpack.c.b16 %v5749, %v5736
    %v7401 = vpack.c.b16 %v5750, %v5737
    %v7402 = vpack.c.b16 %v5751, %v5738
    %v7403 = vpack.c.b16 %v5765, %v5752
    %v7404 = vpack.c.b16 %v5766, %v5753
    %v7405 = vpack.c.b16 %v5767, %v5754
    %v7406 = vpack.c.b16 %v5768, %v5755
    %v7407 = vpack.c.b16 %v5769, %v5756
    %v7408 = vpack.c.b16 %v5770, %v5757
    %v7409 = vpack.c.b16 %v5771, %v5758
    %v7410 = vpack.c.b16 %v5772, %v5759
    %v7411 = vpack.c.b16 %v5773, %v5760
    %v7412 = vpack.c.b16 %v5774, %v5761
    %v7413 = vpack.c.b16 %v5775, %v5762
    %v7414 = vpack.c.b16 %v5776, %v5763
    %v7415 = vpack.c.b16 %v5777, %v5764
    %v7416 = vpack.c.b16 %v5791, %v5778
    %v7417 = vpack.c.b16 %v5792, %v5779
    %v7418 = vpack.c.b16 %v5793, %v5780
    %v7419 = vpack.c.b16 %v5794, %v5781
    %v7420 = vpack.c.b16 %v5795, %v5782
    %v7421 = vpack.c.b16 %v5796, %v5783
    %v7422 = vpack.c.b16 %v5797, %v5784
    %v7423 = vpack.c.b16 %v5798, %v5785
    %v7424 = vpack.c.b16 %v5799, %v5786
    %v7425 = vpack.c.b16 %v5800, %v5787
    %v7426 = vpack.c.b16 %v5801, %v5788
    %v7427 = vpack.c.b16 %v5802, %v5789
    %v7428 = vpack.c.b16 %v5803, %v5790
    %v7429 = vpack.c.b16 %v5817, %v5804
    %v7430 = vpack.c.b16 %v5818, %v5805
    %v7431 = vpack.c.b16 %v5819, %v5806
    %v7432 = vpack.c.b16 %v5820, %v5807
    %v7433 = vpack.c.b16 %v5821, %v5808
    %v7434 = vpack.c.b16 %v5822, %v5809
    %v7435 = vpack.c.b16 %v5823, %v5810
    %v7436 = vpack.c.b16 %v5824, %v5811
    %v7437 = vpack.c.b16 %v5825, %v5812
    %v7438 = vpack.c.b16 %v5826, %v5813
    %v7439 = vpack.c.b16 %v5827, %v5814
    %v7440 = vpack.c.b16 %v5828, %v5815
    %v7441 = vpack.c.b16 %v5829, %v5816
    %v7442 = vpack.c.b16 %v5843, %v5830
    %v7443 = vpack.c.b16 %v5844, %v5831
    %v7444 = vpack.c.b16 %v5845, %v5832
    %v7445 = vpack.c.b16 %v5846, %v5833
    %v7446 = vpack.c.b16 %v5847, %v5834
    %v7447 = vpack.c.b16 %v5848, %v5835
    %v7448 = vpack.c.b16 %v5849, %v5836
    %v7449 = vpack.c.b16 %v5850, %v5837
    %v7450 = vpack.c.b16 %v5851, %v5838
    %v7451 = vpack.c.b16 %v5852, %v5839
    %v7452 = vpack.c.b16 %v5853, %v5840
    %v7453 = vpack.c.b16 %v5854, %v5841
    %v7454 = vpack.c.b16 %v5855, %v5842
    %v7455 = vpack.c.b16 %v5869, %v5856
    %v7456 = vpack.c.b16 %v5870, %v5857
    %v7457 = vpack.c.b16 %v5871, %v5858
    %v7458 = vpack.c.b16 %v5872, %v5859
    %v7459 = vpack.c.b16 %v5873, %v5860
    %v7460 = vpack.c.b16 %v5874, %v5861
    %v7461 = vpack.c.b16 %v5875, %v5862
    %v7462 = vpack.c.b16 %v5876, %v5863
    %v7463 = vpack.c.b16 %v5877, %v5864
    %v7464 = vpack.c.b16 %v5878, %v5865
    %v7465 = vpack.c.b16 %v5879, %v5866
    %v7466 = vpack.c.b16 %v5880, %v5867
    %v7467 = vpack.c.b16 %v5881, %v5868
    %v7468 = vpack.c.b16 %v5895, %v5882
    %v7469 = vpack.c.b16 %v5896, %v5883
    %v7470 = vpack.c.b16 %v5897, %v5884
    %v7471 = vpack.c.b16 %v5898, %v5885
    %v7472 = vpack.c.b16 %v5899, %v5886
    %v7473 = vpack.c.b16 %v5900, %v5887
    %v7474 = vpack.c.b16 %v5901, %v5888
    %v7475 = vpack.c.b16 %v5902, %v5889
    %v7476 = vpack.c.b16 %v5903, %v5890
    %v7477 = vpack.c.b16 %v5904, %v5891
    %v7478 = vpack.c.b16 %v5905, %v5892
    %v7479 = vpack.c.b16 %v5906, %v5893
    %v7480 = vpack.c.b16 %v5907, %v5894
    %v7481 = vpack.c.b16 %v5921, %v5908
    %v7482 = vpack.c.b16 %v5922, %v5909
    %v7483 = vpack.c.b16 %v5923, %v5910
    %v7484 = vpack.c.b16 %v5924, %v5911
    %v7485 = vpack.c.b16 %v5925, %v5912
    %v7486 = vpack.c.b16 %v5926, %v5913
    %v7487 = vpack.c.b16 %v5927, %v5914
    %v7488 = vpack.c.b16 %v5928, %v5915
    %v7489 = vpack.c.b16 %v5929, %v5916
    %v7490 = vpack.c.b16 %v5930, %v5917
    %v7491 = vpack.c.b16 %v5931, %v5918
    %v7492 = vpack.c.b16 %v5932, %v5919
    %v7493 = vpack.c.b16 %v5933, %v5920
    %v7494 = vpack.c.b16 %v5947, %v5934
    %v7495 = vpack.c.b16 %v5948, %v5935
    %v7496 = vpack.c.b16 %v5949, %v5936
    %v7497 = vpack.c.b16 %v5950, %v5937
    %v7498 = vpack.c.b16 %v5951, %v5938
    %v7499 = vpack.c.b16 %v5952, %v5939
    %v7500 = vpack.c.b16 %v5953, %v5940
    %v7501 = vpack.c.b16 %v5954, %v5941
    %v7502 = vpack.c.b16 %v5955, %v5942
    %v7503 = vpack.c.b16 %v5956, %v5943
    %v7504 = vpack.c.b16 %v5957, %v5944
    %v7505 = vpack.c.b16 %v5958, %v5945
    %v7506 = vpack.c.b16 %v5959, %v5946
    %v7507 = vpack.c.b16 %v5973, %v5960
    %v7508 = vpack.c.b16 %v5974, %v5961
    %v7509 = vpack.c.b16 %v5975, %v5962
    %v7510 = vpack.c.b16 %v5976, %v5963
    %v7511 = vpack.c.b16 %v5977, %v5964
    %v7512 = vpack.c.b16 %v5978, %v5965
    %v7513 = vpack.c.b16 %v5979, %v5966
    %v7514 = vpack.c.b16 %v5980, %v5967
    %v7515 = vpack.c.b16 %v5981, %v5968
    %v7516 = vpack.c.b16 %v5982, %v5969
    %v7517 = vpack.c.b16 %v5983, %v5970
    %v7518 = vpack.c.b16 %v5984, %v5971
    %v7519 = vpack.c.b16 %v5985, %v5972
    %v7520 = vpack.c.b16 %v5999, %v5986
    %v7521 = vpack.c.b16 %v6000, %v5987
    %v7522 = vpack.c.b16 %v6001, %v5988
    %v7523 = vpack.c.b16 %v6002, %v5989
    %v7524 = vpack.c.b16 %v6003, %v5990
    %v7525 = vpack.c.b16 %v6004, %v5991
    %v7526 = vpack.c.b16 %v6005, %v5992
    %v7527 = vpack.c.b16 %v6006, %v5993
    %v7528 = vpack.c.b16 %v6007, %v5994
    %v7529 = vpack.c.b16 %v6008, %v5995
    %v7530 = vpack.c.b16 %v6009, %v5996
    %v7531 = vpack.c.b16 %v6010, %v5997
    %v7532 = vpack.c.b16 %v6011, %v5998
    %v7533 = vpack.c.b16 %v6025, %v6012
    %v7534 = vpack.c.b16 %v6026, %v6013
    %v7535 = vpack.c.b16 %v6027, %v6014
    %v7536 = vpack.c.b16 %v6028, %v6015
    %v7537 = vpack.c.b16 %v6029, %v6016
    %v7538 = vpack.c.b16 %v6030, %v6017
    %v7539 = vpack.c.b16 %v6031, %v6018
    %v7540 = vpack.c.b16 %v6032, %v6019
    %v7541 = vpack.c.b16 %v6033, %v6020
    %v7542 = vpack.c.b16 %v6034, %v6021
    %v7543 = vpack.c.b16 %v6035, %v6022
    %v7544 = vpack.c.b16 %v6036, %v6023
    %v7545 = vpack.c.b16 %v6037, %v6024
    %v7546 = vpack.c.b16 %v6051, %v6038
    %v7547 = vpack.c.b16 %v6052, %v6039
    %v7548 = vpack.c.b16 %v6053, %v6040
    %v7549 = vpack.c.b16 %v6054, %v6041
    %v7550 = vpack.c.b16 %v6055, %v6042
    %v7551 = vpack.c.b16 %v6056, %v6043
    %v7552 = vpack.c.b16 %v6057, %v6044
    %v7553 = vpack.c.b16 %v6058, %v6045
    %v7554 = vpack.c.b16 %v6059, %v6046
    %v7555 = vpack.c.b16 %v6060, %v6047
    %v7556 = vpack.c.b16 %v6061, %v6048
    %v7557 = vpack.c.b16 %v6062, %v6049
    %v7558 = vpack.c.b16 %v6063, %v6050
    %v7559 = vpack.c.b16 %v6077, %v6064
    %v7560 = vpack.c.b16 %v6078, %v6065
    %v7561 = vpack.c.b16 %v6079, %v6066
    %v7562 = vpack.c.b16 %v6080, %v6067
    %v7563 = vpack.c.b16 %v6081, %v6068
    %v7564 = vpack.c.b16 %v6082, %v6069
    %v7565 = vpack.c.b16 %v6083, %v6070
    %v7566 = vpack.c.b16 %v6084, %v6071
    %v7567 = vpack.c.b16 %v6085, %v6072
    %v7568 = vpack.c.b16 %v6086, %v6073
    %v7569 = vpack.c.b16 %v6087, %v6074
    %v7570 = vpack.c.b16 %v6088, %v6075
    %v7571 = vpack.c.b16 %v6089, %v6076
    %v7572 = vpack.c.b16 %v6103, %v6090
    %v7573 = vpack.c.b16 %v6104, %v6091
    %v7574 = vpack.c.b16 %v6105, %v6092
    %v7575 = vpack.c.b16 %v6106, %v6093
    %v7576 = vpack.c.b16 %v6107, %v6094
    %v7577 = vpack.c.b16 %v6108, %v6095
    %v7578 = vpack.c.b16 %v6109, %v6096
    %v7579 = vpack.c.b16 %v6110, %v6097
    %v7580 = vpack.c.b16 %v6111, %v6098
    %v7581 = vpack.c.b16 %v6112, %v6099
    %v7582 = vpack.c.b16 %v6113, %v6100
    %v7583 = vpack.c.b16 %v6114, %v6101
    %v7584 = vpack.c.b16 %v6115, %v6102
    %v7585 = vpack.c.b16 %v6129, %v6116
    %v7586 = vpack.c.b16 %v6130, %v6117
    %v7587 = vpack.c.b16 %v6131, %v6118
    %v7588 = vpack.c.b16 %v6132, %v6119
    %v7589 = vpack.c.b16 %v6133, %v6120
    %v7590 = vpack.c.b16 %v6134, %v6121
    %v7591 = vpack.c.b16 %v6135, %v6122
    %v7592 = vpack.c.b16 %v6136, %v6123
    %v7593 = vpack.c.b16 %v6137, %v6124
    %v7594 = vpack.c.b16 %v6138, %v6125
    %v7595 = vpack.c.b16 %v6139, %v6126
    %v7596 = vpack.c.b16 %v6140, %v6127
    %v7597 = vpack.c.b16 %v6141, %v6128
    %v7598 = vpack.c.b16 %v6155, %v6142
    %v7599 = vpack.c.b16 %v6156, %v6143
    %v7600 = vpack.c.b16 %v6157, %v6144
    %v7601 = vpack.c.b16 %v6158, %v6145
    %v7602 = vpack.c.b16 %v6159, %v6146
    %v7603 = vpack.c.b16 %v6160, %v6147
    %v7604 = vpack.c.b16 %v6161, %v6148
    %v7605 = vpack.c.b16 %v6162, %v6149
    %v7606 = vpack.c.b16 %v6163, %v6150
    %v7607 = vpack.c.b16 %v6164, %v6151
    %v7608 = vpack.c.b16 %v6165, %v6152
    %v7609 = vpack.c.b16 %v6166, %v6153
    %v7610 = vpack.c.b16 %v6167, %v6154
    %v7611 = vpack.c.b16 %v6181, %v6168
    %v7612 = vpack.c.b16 %v6182, %v6169
    %v7613 = vpack.c.b16 %v6183, %v6170
    %v7614 = vpack.c.b16 %v6184, %v6171
    %v7615 = vpack.c.b16 %v6185, %v6172
    %v7616 = vpack.c.b16 %v6186, %v6173
    %v7617 = vpack.c.b16 %v6187, %v6174
    %v7618 = vpack.c.b16 %v6188, %v6175
    %v7619 = vpack.c.b16 %v6189, %v6176
    %v7620 = vpack.c.b16 %v6190, %v6177
    %v7621 = vpack.c.b16 %v6191, %v6178
    %v7622 = vpack.c.b16 %v6192, %v6179
    %v7623 = vpack.c.b16 %v6193, %v6180
    %v7624 = vpack.c.b16 %v6207, %v6194
    %v7625 = vpack.c.b16 %v6208, %v6195
    %v7626 = vpack.c.b16 %v6209, %v6196
    %v7627 = vpack.c.b16 %v6210, %v6197
    %v7628 = vpack.c.b16 %v6211, %v6198
    %v7629 = vpack.c.b16 %v6212, %v6199
    %v7630 = vpack.c.b16 %v6213, %v6200
    %v7631 = vpack.c.b16 %v6214, %v6201
    %v7632 = vpack.c.b16 %v6215, %v6202
    %v7633 = vpack.c.b16 %v6216, %v6203
    %v7634 = vpack.c.b16 %v6217, %v6204
    %v7635 = vpack.c.b16 %v6218, %v6205
    %v7636 = vpack.c.b16 %v6219, %v6206
    %v7637 = vpack.c.b16 %v6233, %v6220
    %v7638 = vpack.c.b16 %v6234, %v6221
    %v7639 = vpack.c.b16 %v6235, %v6222
    %v7640 = vpack.c.b16 %v6236, %v6223
    %v7641 = vpack.c.b16 %v6237, %v6224
    %v7642 = vpack.c.b16 %v6238, %v6225
    %v7643 = vpack.c.b16 %v6239, %v6226
    %v7644 = vpack.c.b16 %v6240, %v6227
    %v7645 = vpack.c.b16 %v6241, %v6228
    %v7646 = vpack.c.b16 %v6242, %v6229
    %v7647 = vpack.c.b16 %v6243, %v6230
    %v7648 = vpack.c.b16 %v6244, %v6231
    %v7649 = vpack.c.b16 %v6245, %v6232
    %v7650 = vpack.c.b16 %v6259, %v6246
    %v7651 = vpack.c.b16 %v6260, %v6247
    %v7652 = vpack.c.b16 %v6261, %v6248
    %v7653 = vpack.c.b16 %v6262, %v6249
    %v7654 = vpack.c.b16 %v6263, %v6250
    %v7655 = vpack.c.b16 %v6264, %v6251
    %v7656 = vpack.c.b16 %v6265, %v6252
    %v7657 = vpack.c.b16 %v6266, %v6253
    %v7658 = vpack.c.b16 %v6267, %v6254
    %v7659 = vpack.c.b16 %v6268, %v6255
    %v7660 = vpack.c.b16 %v6269, %v6256
    %v7661 = vpack.c.b16 %v6270, %v6257
    %v7662 = vpack.c.b16 %v6271, %v6258
    %v7663 = vpack.c.b16 %v6285, %v6272
    %v7664 = vpack.c.b16 %v6286, %v6273
    %v7665 = vpack.c.b16 %v6287, %v6274
    %v7666 = vpack.c.b16 %v6288, %v6275
    %v7667 = vpack.c.b16 %v6289, %v6276
    %v7668 = vpack.c.b16 %v6290, %v6277
    %v7669 = vpack.c.b16 %v6291, %v6278
    %v7670 = vpack.c.b16 %v6292, %v6279
    %v7671 = vpack.c.b16 %v6293, %v6280
    %v7672 = vpack.c.b16 %v6294, %v6281
    %v7673 = vpack.c.b16 %v6295, %v6282
    %v7674 = vpack.c.b16 %v6296, %v6283
    %v7675 = vpack.c.b16 %v6297, %v6284
    %v7676 = vpack.c.b16 %v6311, %v6298
    %v7677 = vpack.c.b16 %v6312, %v6299
    %v7678 = vpack.c.b16 %v6313, %v6300
    %v7679 = vpack.c.b16 %v6314, %v6301
    %v7680 = vpack.c.b16 %v6315, %v6302
    %v7681 = vpack.c.b16 %v6316, %v6303
    %v7682 = vpack.c.b16 %v6317, %v6304
    %v7683 = vpack.c.b16 %v6318, %v6305
    %v7684 = vpack.c.b16 %v6319, %v6306
    %v7685 = vpack.c.b16 %v6320, %v6307
    %v7686 = vpack.c.b16 %v6321, %v6308
    %v7687 = vpack.c.b16 %v6322, %v6309
    %v7688 = vpack.c.b16 %v6323, %v6310
    %v7689 = vpack.c.b16 %v6337, %v6324
    %v7690 = vpack.c.b16 %v6338, %v6325
    %v7691 = vpack.c.b16 %v6339, %v6326
    %v7692 = vpack.c.b16 %v6340, %v6327
    %v7693 = vpack.c.b16 %v6341, %v6328
    %v7694 = vpack.c.b16 %v6342, %v6329
    %v7695 = vpack.c.b16 %v6343, %v6330
    %v7696 = vpack.c.b16 %v6344, %v6331
    %v7697 = vpack.c.b16 %v6345, %v6332
    %v7698 = vpack.c.b16 %v6346, %v6333
    %v7699 = vpack.c.b16 %v6347, %v6334
    %v7700 = vpack.c.b16 %v6348, %v6335
    %v7701 = vpack.c.b16 %v6349, %v6336
    %9054 = vmatprep.subr.bf16.mxu0 %v6351
    %9055 = vmatpush1.bf16.msra.mxu0 %v6350
    %9056 = vmatprep.subr.bf16.mxu0 %v6364
    %9057 = vmatpush1.bf16.msra.mxu0 %v6363
    %9058 = vmatprep.subr.bf16.mxu0 %v6377
    %9059 = vmatpush1.bf16.msra.mxu0 %v6376
    %9060 = vmatprep.subr.bf16.mxu0 %v6390
    %9061 = vmatpush1.bf16.msra.mxu0 %v6389
    %9062 = vmatprep.subr.bf16.mxu0 %v6403
    %9063 = vmatpush1.bf16.msra.mxu0 %v6402
    %9064 = vmatprep.subr.bf16.mxu0 %v6416
    %9065 = vmatpush1.bf16.msra.mxu0 %v6415
    %9066 = vmatprep.subr.bf16.mxu0 %v6429
    %9067 = vmatpush1.bf16.msra.mxu0 %v6428
    %9068 = vmatprep.subr.bf16.mxu0 %v6442
    %9069 = vmatpush1.bf16.msra.mxu0 %v6441
    %9070 = vmatprep.subr.bf16.mxu0 %v6455
    %9071 = vmatpush1.bf16.msra.mxu0 %v6454
    %9072 = vmatprep.subr.bf16.mxu0 %v6468
    %9073 = vmatpush1.bf16.msra.mxu0 %v6467
    %9074 = vmatprep.subr.bf16.mxu0 %v6481
    %9075 = vmatpush1.bf16.msra.mxu0 %v6480
    %9076 = vmatprep.subr.bf16.mxu0 %v6494
    %9077 = vmatpush1.bf16.msra.mxu0 %v6493
    %9078 = vmatprep.subr.bf16.mxu0 %v6507
    %9079 = vmatpush1.bf16.msra.mxu0 %v6506
    %9080 = vmatprep.subr.bf16.mxu0 %v6520
    %9081 = vmatpush1.bf16.msra.mxu0 %v6519
    %9082 = vmatprep.subr.bf16.mxu0 %v6533
    %9083 = vmatpush1.bf16.msra.mxu0 %v6532
    %9084 = vmatprep.subr.bf16.mxu0 %v6546
    %9085 = vmatpush1.bf16.msra.mxu0 %v6545
    %9086 = vmatprep.mubr.bf16.mxu0 %v653
    %9087 = vmatmul.mubr.bf16.gmra.mrb[0].mxu0 %v652
    %v9088 = vpop.f32.mrb[0].mxu0
    %v9089 = vadd.f32 %v2128, %v9088
    %v9090 = vpop.f32.mrb[0].mxu0
    %v9091 = vadd.f32 %v2132, %v9090
    %v9092 = vpop.f32.mrb[0].mxu0
    %v9093 = vpop.f32.mrb[0].mxu0
    %9094 = vdwg.mxu0
    %9095 = vmatprep.subr.bf16.mxu0 %v6559
    %9096 = vmatpush1.bf16.msra.mxu0 %v6558
    %9097 = vmatprep.subr.bf16.mxu0 %v6572
    %9098 = vmatpush1.bf16.msra.mxu0 %v6571
    %9099 = vmatprep.subr.bf16.mxu0 %v6585
    %9100 = vmatpush1.bf16.msra.mxu0 %v6584
    %9101 = vmatprep.subr.bf16.mxu0 %v6598
    %9102 = vmatpush1.bf16.msra.mxu0 %v6597
    %9103 = vmatprep.subr.bf16.mxu0 %v6611
    %9104 = vmatpush1.bf16.msra.mxu0 %v6610
    %9105 = vmatprep.subr.bf16.mxu0 %v6624
    %9106 = vmatpush1.bf16.msra.mxu0 %v6623
    %9107 = vmatprep.subr.bf16.mxu0 %v6637
    %9108 = vmatpush1.bf16.msra.mxu0 %v6636
    %9109 = vmatprep.subr.bf16.mxu0 %v6650
    %9110 = vmatpush1.bf16.msra.mxu0 %v6649
    %9111 = vmatprep.subr.bf16.mxu0 %v6663
    %9112 = vmatpush1.bf16.msra.mxu0 %v6662
    %9113 = vmatprep.subr.bf16.mxu0 %v6676
    %9114 = vmatpush1.bf16.msra.mxu0 %v6675
    %9115 = vmatprep.subr.bf16.mxu0 %v6689
    %9116 = vmatpush1.bf16.msra.mxu0 %v6688
    %9117 = vmatprep.subr.bf16.mxu0 %v6702
    %9118 = vmatpush1.bf16.msra.mxu0 %v6701
    %9119 = vmatprep.subr.bf16.mxu0 %v6715
    %9120 = vmatpush1.bf16.msra.mxu0 %v6714
    %9121 = vmatprep.subr.bf16.mxu0 %v6728
    %9122 = vmatpush1.bf16.msra.mxu0 %v6727
    %9123 = vmatprep.subr.bf16.mxu0 %v6741
    %9124 = vmatpush1.bf16.msra.mxu0 %v6740
    %9125 = vmatprep.subr.bf16.mxu0 %v6754
    %9126 = vmatpush1.bf16.msra.mxu0 %v6753
    %9127 = vmatprep.mubr.bf16.mxu0 %v655
    %9128 = vmatmul.mubr.bf16.gmra.mrb[0].mxu0 %v654
    %v9129 = vpop.f32.mrb[0].mxu0
    %v9130 = vadd.f32 %v9089, %v9129
    %v9131 = vpop.f32.mrb[0].mxu0
    %v9132 = vadd.f32 %v9091, %v9131
    %v9133 = vpop.f32.mrb[0].mxu0
    %v9134 = vpop.f32.mrb[0].mxu0
    %9135 = vdwg.mxu0
    %9136 = vmatprep.subr.bf16.mxu0 %v6767
    %9137 = vmatpush1.bf16.msra.mxu0 %v6766
    %9138 = vmatprep.subr.bf16.mxu0 %v6780
    %9139 = vmatpush1.bf16.msra.mxu0 %v6779
    %9140 = vmatprep.subr.bf16.mxu0 %v6793
    %9141 = vmatpush1.bf16.msra.mxu0 %v6792
    %9142 = vmatprep.subr.bf16.mxu0 %v6806
    %9143 = vmatpush1.bf16.msra.mxu0 %v6805
    %9144 = vmatprep.subr.bf16.mxu0 %v6819
    %9145 = vmatpush1.bf16.msra.mxu0 %v6818
    %9146 = vmatprep.subr.bf16.mxu0 %v6832
    %9147 = vmatpush1.bf16.msra.mxu0 %v6831
    %9148 = vmatprep.subr.bf16.mxu0 %v6845
    %9149 = vmatpush1.bf16.msra.mxu0 %v6844
    %9150 = vmatprep.subr.bf16.mxu0 %v6858
    %9151 = vmatpush1.bf16.msra.mxu0 %v6857
    %9152 = vmatprep.subr.bf16.mxu0 %v6871
    %9153 = vmatpush1.bf16.msra.mxu0 %v6870
    %9154 = vmatprep.subr.bf16.mxu0 %v6884
    %9155 = vmatpush1.bf16.msra.mxu0 %v6883
    %9156 = vmatprep.subr.bf16.mxu0 %v6897
    %9157 = vmatpush1.bf16.msra.mxu0 %v6896
    %9158 = vmatprep.subr.bf16.mxu0 %v6910
    %9159 = vmatpush1.bf16.msra.mxu0 %v6909
    %9160 = vmatprep.subr.bf16.mxu0 %v6923
    %9161 = vmatpush1.bf16.msra.mxu0 %v6922
    %9162 = vmatprep.subr.bf16.mxu0 %v6936
    %9163 = vmatpush1.bf16.msra.mxu0 %v6935
    %9164 = vmatprep.subr.bf16.mxu0 %v6949
    %9165 = vmatpush1.bf16.msra.mxu0 %v6948
    %9166 = vmatprep.subr.bf16.mxu0 %v6962
    %9167 = vmatpush1.bf16.msra.mxu0 %v6961
    %9168 = vmatprep.mubr.bf16.mxu0 %v657
    %9169 = vmatmul.mubr.bf16.gmra.mrb[0].mxu0 %v656
    %v9170 = vpop.f32.mrb[0].mxu0
    %v9171 = vadd.f32 %v9130, %v9170
    %v9172 = vpop.f32.mrb[0].mxu0
    %v9173 = vadd.f32 %v9132, %v9172
    %v9174 = vpop.f32.mrb[0].mxu0
    %v9175 = vpop.f32.mrb[0].mxu0
    %9176 = vdwg.mxu0
    %9177 = vmatprep.subr.bf16.mxu0 %v6975
    %9178 = vmatpush1.bf16.msra.mxu0 %v6974
    %9179 = vmatprep.subr.bf16.mxu0 %v6988
    %9180 = vmatpush1.bf16.msra.mxu0 %v6987
    %9181 = vmatprep.subr.bf16.mxu0 %v7001
    %9182 = vmatpush1.bf16.msra.mxu0 %v7000
    %9183 = vmatprep.subr.bf16.mxu0 %v7014
    %9184 = vmatpush1.bf16.msra.mxu0 %v7013
    %9185 = vmatprep.subr.bf16.mxu0 %v7027
    %9186 = vmatpush1.bf16.msra.mxu0 %v7026
    %9187 = vmatprep.subr.bf16.mxu0 %v7040
    %9188 = vmatpush1.bf16.msra.mxu0 %v7039
    %9189 = vmatprep.subr.bf16.mxu0 %v7053
    %9190 = vmatpush1.bf16.msra.mxu0 %v7052
    %9191 = vmatprep.subr.bf16.mxu0 %v7066
    %9192 = vmatpush1.bf16.msra.mxu0 %v7065
    %9193 = vmatprep.subr.bf16.mxu0 %v7079
    %9194 = vmatpush1.bf16.msra.mxu0 %v7078
    %9195 = vmatprep.subr.bf16.mxu0 %v7092
    %9196 = vmatpush1.bf16.msra.mxu0 %v7091
    %9197 = vmatprep.subr.bf16.mxu0 %v7105
    %9198 = vmatpush1.bf16.msra.mxu0 %v7104
    %9199 = vmatprep.subr.bf16.mxu0 %v7118
    %9200 = vmatpush1.bf16.msra.mxu0 %v7117
    %9201 = vmatprep.subr.bf16.mxu0 %v7131
    %9202 = vmatpush1.bf16.msra.mxu0 %v7130
    %9203 = vmatprep.subr.bf16.mxu0 %v7144
    %9204 = vmatpush1.bf16.msra.mxu0 %v7143
    %9205 = vmatprep.subr.bf16.mxu0 %v7157
    %9206 = vmatpush1.bf16.msra.mxu0 %v7156
    %9207 = vmatprep.subr.bf16.mxu0 %v7170
    %9208 = vmatpush1.bf16.msra.mxu0 %v7169
    %9209 = vmatprep.mubr.bf16.mxu0 %v659
    %9210 = vmatmul.mubr.bf16.gmra.mrb[0].mxu0 %v658
    %v9211 = vpop.f32.mrb[0].mxu0
    %v9212 = vadd.f32 %v9171, %v9211
    %v9213 = vpop.f32.mrb[0].mxu0
    %v9214 = vadd.f32 %v9173, %v9213
    %v9215 = vpop.f32.mrb[0].mxu0
    %v9216 = vpop.f32.mrb[0].mxu0
    %9217 = vdwg.mxu0
    %9218 = vmatprep.subr.bf16.mxu0 %v7183
    %9219 = vmatpush1.bf16.msra.mxu0 %v7182
    %9220 = vmatprep.subr.bf16.mxu0 %v7196
    %9221 = vmatpush1.bf16.msra.mxu0 %v7195
    %9222 = vmatprep.subr.bf16.mxu0 %v7209
    %9223 = vmatpush1.bf16.msra.mxu0 %v7208
    %9224 = vmatprep.subr.bf16.mxu0 %v7222
    %9225 = vmatpush1.bf16.msra.mxu0 %v7221
    %9226 = vmatprep.subr.bf16.mxu0 %v7235
    %9227 = vmatpush1.bf16.msra.mxu0 %v7234
    %9228 = vmatprep.subr.bf16.mxu0 %v7248
    %9229 = vmatpush1.bf16.msra.mxu0 %v7247
    %9230 = vmatprep.subr.bf16.mxu0 %v7261
    %9231 = vmatpush1.bf16.msra.mxu0 %v7260
    %9232 = vmatprep.subr.bf16.mxu0 %v7274
    %9233 = vmatpush1.bf16.msra.mxu0 %v7273
    %9234 = vmatprep.subr.bf16.mxu0 %v7287
    %9235 = vmatpush1.bf16.msra.mxu0 %v7286
    %9236 = vmatprep.subr.bf16.mxu0 %v7300
    %9237 = vmatpush1.bf16.msra.mxu0 %v7299
    %9238 = vmatprep.subr.bf16.mxu0 %v7313
    %9239 = vmatpush1.bf16.msra.mxu0 %v7312
    %9240 = vmatprep.subr.bf16.mxu0 %v7326
    %9241 = vmatpush1.bf16.msra.mxu0 %v7325
    %9242 = vmatprep.subr.bf16.mxu0 %v7339
    %9243 = vmatpush1.bf16.msra.mxu0 %v7338
    %9244 = vmatprep.subr.bf16.mxu0 %v7352
    %9245 = vmatpush1.bf16.msra.mxu0 %v7351
    %9246 = vmatprep.subr.bf16.mxu0 %v7365
    %9247 = vmatpush1.bf16.msra.mxu0 %v7364
    %9248 = vmatprep.subr.bf16.mxu0 %v7378
    %9249 = vmatpush1.bf16.msra.mxu0 %v7377
    %9250 = vmatprep.mubr.bf16.mxu0 %v661
    %9251 = vmatmul.mubr.bf16.gmra.mrb[0].mxu0 %v660
    %v9252 = vpop.f32.mrb[0].mxu0
    %v9253 = vadd.f32 %v9212, %v9252
    %v9254 = vpop.f32.mrb[0].mxu0
    %v9255 = vadd.f32 %v9214, %v9254
    %v9256 = vpop.f32.mrb[0].mxu0
    %v9257 = vpop.f32.mrb[0].mxu0
    %9258 = vdwg.mxu0
    %9259 = vmatprep.subr.bf16.mxu0 %v7391
    %9260 = vmatpush1.bf16.msra.mxu0 %v7390
    %9261 = vmatprep.subr.bf16.mxu0 %v7404
    %9262 = vmatpush1.bf16.msra.mxu0 %v7403
    %9263 = vmatprep.subr.bf16.mxu0 %v7417
    %9264 = vmatpush1.bf16.msra.mxu0 %v7416
    %9265 = vmatprep.subr.bf16.mxu0 %v7430
    %9266 = vmatpush1.bf16.msra.mxu0 %v7429
    %9267 = vmatprep.subr.bf16.mxu0 %v7443
    %9268 = vmatpush1.bf16.msra.mxu0 %v7442
    %9269 = vmatprep.subr.bf16.mxu0 %v7456
    %9270 = vmatpush1.bf16.msra.mxu0 %v7455
    %9271 = vmatprep.subr.bf16.mxu0 %v7469
    %9272 = vmatpush1.bf16.msra.mxu0 %v7468
    %9273 = vmatprep.subr.bf16.mxu0 %v7482
    %9274 = vmatpush1.bf16.msra.mxu0 %v7481
    %9275 = vmatprep.subr.bf16.mxu0 %v7495
    %9276 = vmatpush1.bf16.msra.mxu0 %v7494
    %9277 = vmatprep.subr.bf16.mxu0 %v7508
    %9278 = vmatpush1.bf16.msra.mxu0 %v7507
    %9279 = vmatprep.subr.bf16.mxu0 %v7521
    %9280 = vmatpush1.bf16.msra.mxu0 %v7520
    %9281 = vmatprep.subr.bf16.mxu0 %v7534
    %9282 = vmatpush1.bf16.msra.mxu0 %v7533
    %9283 = vmatprep.subr.bf16.mxu0 %v7547
    %9284 = vmatpush1.bf16.msra.mxu0 %v7546
    %9285 = vmatprep.subr.bf16.mxu0 %v7560
    %9286 = vmatpush1.bf16.msra.mxu0 %v7559
    %9287 = vmatprep.subr.bf16.mxu0 %v7573
    %9288 = vmatpush1.bf16.msra.mxu0 %v7572
    %9289 = vmatprep.subr.bf16.mxu0 %v7586
    %9290 = vmatpush1.bf16.msra.mxu0 %v7585
    %9291 = vmatprep.mubr.bf16.mxu0 %v663
    %9292 = vmatmul.mubr.bf16.gmra.mrb[0].mxu0 %v662
    %v9293 = vpop.f32.mrb[0].mxu0
    %v9294 = vadd.f32 %v9253, %v9293
    %v9295 = vpop.f32.mrb[0].mxu0
    %v9296 = vadd.f32 %v9255, %v9295
    %v9297 = vpop.f32.mrb[0].mxu0
    %v9298 = vpop.f32.mrb[0].mxu0
    %9299 = vdwg.mxu0
    %9300 = vmatprep.subr.bf16.mxu0 %v7599
    %9301 = vmatpush1.bf16.msra.mxu0 %v7598
    %9302 = vmatprep.subr.bf16.mxu0 %v7612
    %9303 = vmatpush1.bf16.msra.mxu0 %v7611
    %9304 = vmatprep.subr.bf16.mxu0 %v7625
    %9305 = vmatpush1.bf16.msra.mxu0 %v7624
    %9306 = vmatprep.subr.bf16.mxu0 %v7638
    %9307 = vmatpush1.bf16.msra.mxu0 %v7637
    %9308 = vmatprep.subr.bf16.mxu0 %v7651
    %9309 = vmatpush1.bf16.msra.mxu0 %v7650
    %9310 = vmatprep.subr.bf16.mxu0 %v7664
    %9311 = vmatpush1.bf16.msra.mxu0 %v7663
    %9312 = vmatprep.subr.bf16.mxu0 %v7677
    %9313 = vmatpush1.bf16.msra.mxu0 %v7676
    %9314 = vmatprep.subr.bf16.mxu0 %v7690
    %9315 = vmatpush1.bf16.msra.mxu0 %v7689
    %9316 = vmatprep.subr.bf16.mxu0 0
    %9317 = vmatpush1.bf16.msra.mxu0 0
    %9318 = vmatprep.subr.bf16.mxu0 0
    %9319 = vmatpush1.bf16.msra.mxu0 0
    %9320 = vmatprep.subr.bf16.mxu0 0
    %9321 = vmatpush1.bf16.msra.mxu0 0
    %9322 = vmatprep.subr.bf16.mxu0 0
    %9323 = vmatpush1.bf16.msra.mxu0 0
    %9324 = vmatprep.subr.bf16.mxu0 0
    %9325 = vmatpush1.bf16.msra.mxu0 0
    %9326 = vmatprep.subr.bf16.mxu0 0
    %9327 = vmatpush1.bf16.msra.mxu0 0
    %9328 = vmatprep.subr.bf16.mxu0 0
    %9329 = vmatpush1.bf16.msra.mxu0 0
    %9330 = vmatprep.subr.bf16.mxu0 0
    %9331 = vmatpush1.bf16.msra.mxu0 0
    %9332 = vmatprep.mubr.bf16.mxu0 0
    %9333 = vmatmul.mubr.bf16.gmra.mrb[0].mxu0 %v664
    %v9334 = vpop.f32.mrb[0].mxu0
    %v9335 = vadd.f32 %v9294, %v9334
    %v9336 = vpop.f32.mrb[0].mxu0
    %v9337 = vadd.f32 %v9296, %v9336
    %v9338 = vpop.f32.mrb[0].mxu0
    %v9339 = vpop.f32.mrb[0].mxu0
    %9340 = vdwg.mxu0
    %9341 = vmatprep.subr.bf16.mxu0 %v6353
    %9342 = vmatpush1.bf16.msra.mxu0 %v6352
    %9343 = vmatprep.subr.bf16.mxu0 %v6366
    %9344 = vmatpush1.bf16.msra.mxu0 %v6365
    %9345 = vmatprep.subr.bf16.mxu0 %v6379
    %9346 = vmatpush1.bf16.msra.mxu0 %v6378
    %9347 = vmatprep.subr.bf16.mxu0 %v6392
    %9348 = vmatpush1.bf16.msra.mxu0 %v6391
    %9349 = vmatprep.subr.bf16.mxu0 %v6405
    %9350 = vmatpush1.bf16.msra.mxu0 %v6404
    %9351 = vmatprep.subr.bf16.mxu0 %v6418
    %9352 = vmatpush1.bf16.msra.mxu0 %v6417
    %9353 = vmatprep.subr.bf16.mxu0 %v6431
    %9354 = vmatpush1.bf16.msra.mxu0 %v6430
    %9355 = vmatprep.subr.bf16.mxu0 %v6444
    %9356 = vmatpush1.bf16.msra.mxu0 %v6443
    %9357 = vmatprep.subr.bf16.mxu0 %v6457
    %9358 = vmatpush1.bf16.msra.mxu0 %v6456
    %9359 = vmatprep.subr.bf16.mxu0 %v6470
    %9360 = vmatpush1.bf16.msra.mxu0 %v6469
    %9361 = vmatprep.subr.bf16.mxu0 %v6483
    %9362 = vmatpush1.bf16.msra.mxu0 %v6482
    %9363 = vmatprep.subr.bf16.mxu0 %v6496
    %9364 = vmatpush1.bf16.msra.mxu0 %v6495
    %9365 = vmatprep.subr.bf16.mxu0 %v6509
    %9366 = vmatpush1.bf16.msra.mxu0 %v6508
    %9367 = vmatprep.subr.bf16.mxu0 %v6522
    %9368 = vmatpush1.bf16.msra.mxu0 %v6521
    %9369 = vmatprep.subr.bf16.mxu0 %v6535
    %9370 = vmatpush1.bf16.msra.mxu0 %v6534
    %9371 = vmatprep.subr.bf16.mxu0 %v6548
    %9372 = vmatpush1.bf16.msra.mxu0 %v6547
    %9373 = vmatprep.mubr.bf16.mxu0 %v653
    %9374 = vmatmul.mubr.bf16.gmra.mrb[0].mxu0 %v652
    %v9375 = vpop.f32.mrb[0].mxu0
    %v9376 = vadd.f32 %v2136, %v9375
    %v9377 = vpop.f32.mrb[0].mxu0
    %v9378 = vadd.f32 %v2140, %v9377
    %v9379 = vpop.f32.mrb[0].mxu0
    %v9380 = vpop.f32.mrb[0].mxu0
    %9381 = vdwg.mxu0
    %9382 = vmatprep.subr.bf16.mxu0 %v6561
    %9383 = vmatpush1.bf16.msra.mxu0 %v6560
    %9384 = vmatprep.subr.bf16.mxu0 %v6574
    %9385 = vmatpush1.bf16.msra.mxu0 %v6573
    %9386 = vmatprep.subr.bf16.mxu0 %v6587
    %9387 = vmatpush1.bf16.msra.mxu0 %v6586
    %9388 = vmatprep.subr.bf16.mxu0 %v6600
    %9389 = vmatpush1.bf16.msra.mxu0 %v6599
    %9390 = vmatprep.subr.bf16.mxu0 %v6613
    %9391 = vmatpush1.bf16.msra.mxu0 %v6612
    %9392 = vmatprep.subr.bf16.mxu0 %v6626
    %9393 = vmatpush1.bf16.msra.mxu0 %v6625
    %9394 = vmatprep.subr.bf16.mxu0 %v6639
    %9395 = vmatpush1.bf16.msra.mxu0 %v6638
    %9396 = vmatprep.subr.bf16.mxu0 %v6652
    %9397 = vmatpush1.bf16.msra.mxu0 %v6651
    %9398 = vmatprep.subr.bf16.mxu0 %v6665
    %9399 = vmatpush1.bf16.msra.mxu0 %v6664
    %9400 = vmatprep.subr.bf16.mxu0 %v6678
    %9401 = vmatpush1.bf16.msra.mxu0 %v6677
    %9402 = vmatprep.subr.bf16.mxu0 %v6691
    %9403 = vmatpush1.bf16.msra.mxu0 %v6690
    %9404 = vmatprep.subr.bf16.mxu0 %v6704
    %9405 = vmatpush1.bf16.msra.mxu0 %v6703
    %9406 = vmatprep.subr.bf16.mxu0 %v6717
    %9407 = vmatpush1.bf16.msra.mxu0 %v6716
    %9408 = vmatprep.subr.bf16.mxu0 %v6730
    %9409 = vmatpush1.bf16.msra.mxu0 %v6729
    %9410 = vmatprep.subr.bf16.mxu0 %v6743
    %9411 = vmatpush1.bf16.msra.mxu0 %v6742
    %9412 = vmatprep.subr.bf16.mxu0 %v6756
    %9413 = vmatpush1.bf16.msra.mxu0 %v6755
    %9414 = vmatprep.mubr.bf16.mxu0 %v655
    %9415 = vmatmul.mubr.bf16.gmra.mrb[0].mxu0 %v654
    %v9416 = vpop.f32.mrb[0].mxu0
    %v9417 = vadd.f32 %v9376, %v9416
    %v9418 = vpop.f32.mrb[0].mxu0
    %v9419 = vadd.f32 %v9378, %v9418
    %v9420 = vpop.f32.mrb[0].mxu0
    %v9421 = vpop.f32.mrb[0].mxu0
    %9422 = vdwg.mxu0
    %9423 = vmatprep.subr.bf16.mxu0 %v6769
    %9424 = vmatpush1.bf16.msra.mxu0 %v6768
    %9425 = vmatprep.subr.bf16.mxu0 %v6782
    %9426 = vmatpush1.bf16.msra.mxu0 %v6781
    %9427 = vmatprep.subr.bf16.mxu0 %v6795
    %9428 = vmatpush1.bf16.msra.mxu0 %v6794
    %9429 = vmatprep.subr.bf16.mxu0 %v6808
    %9430 = vmatpush1.bf16.msra.mxu0 %v6807
    %9431 = vmatprep.subr.bf16.mxu0 %v6821
    %9432 = vmatpush1.bf16.msra.mxu0 %v6820
    %9433 = vmatprep.subr.bf16.mxu0 %v6834
    %9434 = vmatpush1.bf16.msra.mxu0 %v6833
    %9435 = vmatprep.subr.bf16.mxu0 %v6847
    %9436 = vmatpush1.bf16.msra.mxu0 %v6846
    %9437 = vmatprep.subr.bf16.mxu0 %v6860
    %9438 = vmatpush1.bf16.msra.mxu0 %v6859
    %9439 = vmatprep.subr.bf16.mxu0 %v6873
    %9440 = vmatpush1.bf16.msra.mxu0 %v6872
    %9441 = vmatprep.subr.bf16.mxu0 %v6886
    %9442 = vmatpush1.bf16.msra.mxu0 %v6885
    %9443 = vmatprep.subr.bf16.mxu0 %v6899
    %9444 = vmatpush1.bf16.msra.mxu0 %v6898
    %9445 = vmatprep.subr.bf16.mxu0 %v6912
    %9446 = vmatpush1.bf16.msra.mxu0 %v6911
    %9447 = vmatprep.subr.bf16.mxu0 %v6925
    %9448 = vmatpush1.bf16.msra.mxu0 %v6924
    %9449 = vmatprep.subr.bf16.mxu0 %v6938
    %9450 = vmatpush1.bf16.msra.mxu0 %v6937
    %9451 = vmatprep.subr.bf16.mxu0 %v6951
    %9452 = vmatpush1.bf16.msra.mxu0 %v6950
    %9453 = vmatprep.subr.bf16.mxu0 %v6964
    %9454 = vmatpush1.bf16.msra.mxu0 %v6963
    %9455 = vmatprep.mubr.bf16.mxu0 %v657
    %9456 = vmatmul.mubr.bf16.gmra.mrb[0].mxu0 %v656
    %v9457 = vpop.f32.mrb[0].mxu0
    %v9458 = vadd.f32 %v9417, %v9457
    %v9459 = vpop.f32.mrb[0].mxu0
    %v9460 = vadd.f32 %v9419, %v9459
    %v9461 = vpop.f32.mrb[0].mxu0
    %v9462 = vpop.f32.mrb[0].mxu0
    %9463 = vdwg.mxu0
    %9464 = vmatprep.subr.bf16.mxu0 %v6977
    %9465 = vmatpush1.bf16.msra.mxu0 %v6976
    %9466 = vmatprep.subr.bf16.mxu0 %v6990
    %9467 = vmatpush1.bf16.msra.mxu0 %v6989
    %9468 = vmatprep.subr.bf16.mxu0 %v7003
    %9469 = vmatpush1.bf16.msra.mxu0 %v7002
    %9470 = vmatprep.subr.bf16.mxu0 %v7016
    %9471 = vmatpush1.bf16.msra.mxu0 %v7015
    %9472 = vmatprep.subr.bf16.mxu0 %v7029
    %9473 = vmatpush1.bf16.msra.mxu0 %v7028
    %9474 = vmatprep.subr.bf16.mxu0 %v7042
    %9475 = vmatpush1.bf16.msra.mxu0 %v7041
    %9476 = vmatprep.subr.bf16.mxu0 %v7055
    %9477 = vmatpush1.bf16.msra.mxu0 %v7054
    %9478 = vmatprep.subr.bf16.mxu0 %v7068
    %9479 = vmatpush1.bf16.msra.mxu0 %v7067
    %9480 = vmatprep.subr.bf16.mxu0 %v7081
    %9481 = vmatpush1.bf16.msra.mxu0 %v7080
    %9482 = vmatprep.subr.bf16.mxu0 %v7094
    %9483 = vmatpush1.bf16.msra.mxu0 %v7093
    %9484 = vmatprep.subr.bf16.mxu0 %v7107
    %9485 = vmatpush1.bf16.msra.mxu0 %v7106
    %9486 = vmatprep.subr.bf16.mxu0 %v7120
    %9487 = vmatpush1.bf16.msra.mxu0 %v7119
    %9488 = vmatprep.subr.bf16.mxu0 %v7133
    %9489 = vmatpush1.bf16.msra.mxu0 %v7132
    %9490 = vmatprep.subr.bf16.mxu0 %v7146
    %9491 = vmatpush1.bf16.msra.mxu0 %v7145
    %9492 = vmatprep.subr.bf16.mxu0 %v7159
    %9493 = vmatpush1.bf16.msra.mxu0 %v7158
    %9494 = vmatprep.subr.bf16.mxu0 %v7172
    %9495 = vmatpush1.bf16.msra.mxu0 %v7171
    %9496 = vmatprep.mubr.bf16.mxu0 %v659
    %9497 = vmatmul.mubr.bf16.gmra.mrb[0].mxu0 %v658
    %v9498 = vpop.f32.mrb[0].mxu0
    %v9499 = vadd.f32 %v9458, %v9498
    %v9500 = vpop.f32.mrb[0].mxu0
    %v9501 = vadd.f32 %v9460, %v9500
    %v9502 = vpop.f32.mrb[0].mxu0
    %v9503 = vpop.f32.mrb[0].mxu0
    %9504 = vdwg.mxu0
    %9505 = vmatprep.subr.bf16.mxu0 %v7185
    %9506 = vmatpush1.bf16.msra.mxu0 %v7184
    %9507 = vmatprep.subr.bf16.mxu0 %v7198
    %9508 = vmatpush1.bf16.msra.mxu0 %v7197
    %9509 = vmatprep.subr.bf16.mxu0 %v7211
    %9510 = vmatpush1.bf16.msra.mxu0 %v7210
    %9511 = vmatprep.subr.bf16.mxu0 %v7224
    %9512 = vmatpush1.bf16.msra.mxu0 %v7223
    %9513 = vmatprep.subr.bf16.mxu0 %v7237
    %9514 = vmatpush1.bf16.msra.mxu0 %v7236
    %9515 = vmatprep.subr.bf16.mxu0 %v7250
    %9516 = vmatpush1.bf16.msra.mxu0 %v7249
    %9517 = vmatprep.subr.bf16.mxu0 %v7263
    %9518 = vmatpush1.bf16.msra.mxu0 %v7262
    %9519 = vmatprep.subr.bf16.mxu0 %v7276
    %9520 = vmatpush1.bf16.msra.mxu0 %v7275
    %9521 = vmatprep.subr.bf16.mxu0 %v7289
    %9522 = vmatpush1.bf16.msra.mxu0 %v7288
    %9523 = vmatprep.subr.bf16.mxu0 %v7302
    %9524 = vmatpush1.bf16.msra.mxu0 %v7301
    %9525 = vmatprep.subr.bf16.mxu0 %v7315
    %9526 = vmatpush1.bf16.msra.mxu0 %v7314
    %9527 = vmatprep.subr.bf16.mxu0 %v7328
    %9528 = vmatpush1.bf16.msra.mxu0 %v7327
    %9529 = vmatprep.subr.bf16.mxu0 %v7341
    %9530 = vmatpush1.bf16.msra.mxu0 %v7340
    %9531 = vmatprep.subr.bf16.mxu0 %v7354
    %9532 = vmatpush1.bf16.msra.mxu0 %v7353
    %9533 = vmatprep.subr.bf16.mxu0 %v7367
    %9534 = vmatpush1.bf16.msra.mxu0 %v7366
    %9535 = vmatprep.subr.bf16.mxu0 %v7380
    %9536 = vmatpush1.bf16.msra.mxu0 %v7379
    %9537 = vmatprep.mubr.bf16.mxu0 %v661
    %9538 = vmatmul.mubr.bf16.gmra.mrb[0].mxu0 %v660
    %v9539 = vpop.f32.mrb[0].mxu0
    %v9540 = vadd.f32 %v9499, %v9539
    %v9541 = vpop.f32.mrb[0].mxu0
    %v9542 = vadd.f32 %v9501, %v9541
    %v9543 = vpop.f32.mrb[0].mxu0
    %v9544 = vpop.f32.mrb[0].mxu0
    %9545 = vdwg.mxu0
    %9546 = vmatprep.subr.bf16.mxu0 %v7393
    %9547 = vmatpush1.bf16.msra.mxu0 %v7392
    %9548 = vmatprep.subr.bf16.mxu0 %v7406
    %9549 = vmatpush1.bf16.msra.mxu0 %v7405
    %9550 = vmatprep.subr.bf16.mxu0 %v7419
    %9551 = vmatpush1.bf16.msra.mxu0 %v7418
    %9552 = vmatprep.subr.bf16.mxu0 %v7432
    %9553 = vmatpush1.bf16.msra.mxu0 %v7431
    %9554 = vmatprep.subr.bf16.mxu0 %v7445
    %9555 = vmatpush1.bf16.msra.mxu0 %v7444
    %9556 = vmatprep.subr.bf16.mxu0 %v7458
    %9557 = vmatpush1.bf16.msra.mxu0 %v7457
    %9558 = vmatprep.subr.bf16.mxu0 %v7471
    %9559 = vmatpush1.bf16.msra.mxu0 %v7470
    %9560 = vmatprep.subr.bf16.mxu0 %v7484
    %9561 = vmatpush1.bf16.msra.mxu0 %v7483
    %9562 = vmatprep.subr.bf16.mxu0 %v7497
    %9563 = vmatpush1.bf16.msra.mxu0 %v7496
    %9564 = vmatprep.subr.bf16.mxu0 %v7510
    %9565 = vmatpush1.bf16.msra.mxu0 %v7509
    %9566 = vmatprep.subr.bf16.mxu0 %v7523
    %9567 = vmatpush1.bf16.msra.mxu0 %v7522
    %9568 = vmatprep.subr.bf16.mxu0 %v7536
    %9569 = vmatpush1.bf16.msra.mxu0 %v7535
    %9570 = vmatprep.subr.bf16.mxu0 %v7549
    %9571 = vmatpush1.bf16.msra.mxu0 %v7548
    %9572 = vmatprep.subr.bf16.mxu0 %v7562
    %9573 = vmatpush1.bf16.msra.mxu0 %v7561
    %9574 = vmatprep.subr.bf16.mxu0 %v7575
    %9575 = vmatpush1.bf16.msra.mxu0 %v7574
    %9576 = vmatprep.subr.bf16.mxu0 %v7588
    %9577 = vmatpush1.bf16.msra.mxu0 %v7587
    %9578 = vmatprep.mubr.bf16.mxu0 %v663
    %9579 = vmatmul.mubr.bf16.gmra.mrb[0].mxu0 %v662
    %v9580 = vpop.f32.mrb[0].mxu0
    %v9581 = vadd.f32 %v9540, %v9580
    %v9582 = vpop.f32.mrb[0].mxu0
    %v9583 = vadd.f32 %v9542, %v9582
    %v9584 = vpop.f32.mrb[0].mxu0
    %v9585 = vpop.f32.mrb[0].mxu0
    %9586 = vdwg.mxu0
    %9587 = vmatprep.subr.bf16.mxu0 %v7601
    %9588 = vmatpush1.bf16.msra.mxu0 %v7600
    %9589 = vmatprep.subr.bf16.mxu0 %v7614
    %9590 = vmatpush1.bf16.msra.mxu0 %v7613
    %9591 = vmatprep.subr.bf16.mxu0 %v7627
    %9592 = vmatpush1.bf16.msra.mxu0 %v7626
    %9593 = vmatprep.subr.bf16.mxu0 %v7640
    %9594 = vmatpush1.bf16.msra.mxu0 %v7639
    %9595 = vmatprep.subr.bf16.mxu0 %v7653
    %9596 = vmatpush1.bf16.msra.mxu0 %v7652
    %9597 = vmatprep.subr.bf16.mxu0 %v7666
    %9598 = vmatpush1.bf16.msra.mxu0 %v7665
    %9599 = vmatprep.subr.bf16.mxu0 %v7679
    %9600 = vmatpush1.bf16.msra.mxu0 %v7678
    %9601 = vmatprep.subr.bf16.mxu0 %v7692
    %9602 = vmatpush1.bf16.msra.mxu0 %v7691
    %9603 = vmatprep.subr.bf16.mxu0 0
    %9604 = vmatpush1.bf16.msra.mxu0 0
    %9605 = vmatprep.subr.bf16.mxu0 0
    %9606 = vmatpush1.bf16.msra.mxu0 0
    %9607 = vmatprep.subr.bf16.mxu0 0
    %9608 = vmatpush1.bf16.msra.mxu0 0
    %9609 = vmatprep.subr.bf16.mxu0 0
    %9610 = vmatpush1.bf16.msra.mxu0 0
    %9611 = vmatprep.subr.bf16.mxu0 0
    %9612 = vmatpush1.bf16.msra.mxu0 0
    %9613 = vmatprep.subr.bf16.mxu0 0
    %9614 = vmatpush1.bf16.msra.mxu0 0
    %9615 = vmatprep.subr.bf16.mxu0 0
    %9616 = vmatpush1.bf16.msra.mxu0 0
    %9617 = vmatprep.subr.bf16.mxu0 0
    %9618 = vmatpush1.bf16.msra.mxu0 0
    %9619 = vmatprep.mubr.bf16.mxu0 0
    %9620 = vmatmul.mubr.bf16.gmra.mrb[0].mxu0 %v664
    %v9621 = vpop.f32.mrb[0].mxu0
    %v9622 = vadd.f32 %v9581, %v9621
    %v9623 = vpop.f32.mrb[0].mxu0
    %v9624 = vadd.f32 %v9583, %v9623
    %v9625 = vpop.f32.mrb[0].mxu0
    %v9626 = vpop.f32.mrb[0].mxu0
    %9627 = vdwg.mxu0
    %9628 = vmatprep.subr.bf16.mxu0 %v6355
    %9629 = vmatpush1.bf16.msra.mxu0 %v6354
    %9630 = vmatprep.subr.bf16.mxu0 %v6368
    %9631 = vmatpush1.bf16.msra.mxu0 %v6367
    %9632 = vmatprep.subr.bf16.mxu0 %v6381
    %9633 = vmatpush1.bf16.msra.mxu0 %v6380
    %9634 = vmatprep.subr.bf16.mxu0 %v6394
    %9635 = vmatpush1.bf16.msra.mxu0 %v6393
    %9636 = vmatprep.subr.bf16.mxu0 %v6407
    %9637 = vmatpush1.bf16.msra.mxu0 %v6406
    %9638 = vmatprep.subr.bf16.mxu0 %v6420
    %9639 = vmatpush1.bf16.msra.mxu0 %v6419
    %9640 = vmatprep.subr.bf16.mxu0 %v6433
    %9641 = vmatpush1.bf16.msra.mxu0 %v6432
    %9642 = vmatprep.subr.bf16.mxu0 %v6446
    %9643 = vmatpush1.bf16.msra.mxu0 %v6445
    %9644 = vmatprep.subr.bf16.mxu0 %v6459
    %9645 = vmatpush1.bf16.msra.mxu0 %v6458
    %9646 = vmatprep.subr.bf16.mxu0 %v6472
    %9647 = vmatpush1.bf16.msra.mxu0 %v6471
    %9648 = vmatprep.subr.bf16.mxu0 %v6485
    %9649 = vmatpush1.bf16.msra.mxu0 %v6484
    %9650 = vmatprep.subr.bf16.mxu0 %v6498
    %9651 = vmatpush1.bf16.msra.mxu0 %v6497
    %9652 = vmatprep.subr.bf16.mxu0 %v6511
    %9653 = vmatpush1.bf16.msra.mxu0 %v6510
    %9654 = vmatprep.subr.bf16.mxu0 %v6524
    %9655 = vmatpush1.bf16.msra.mxu0 %v6523
    %9656 = vmatprep.subr.bf16.mxu0 %v6537
    %9657 = vmatpush1.bf16.msra.mxu0 %v6536
    %9658 = vmatprep.subr.bf16.mxu0 %v6550
    %9659 = vmatpush1.bf16.msra.mxu0 %v6549
    %9660 = vmatprep.mubr.bf16.mxu0 %v653
    %9661 = vmatmul.mubr.bf16.gmra.mrb[0].mxu0 %v652
    %v9662 = vpop.f32.mrb[0].mxu0
    %v9663 = vadd.f32 %v2144, %v9662
    %v9664 = vpop.f32.mrb[0].mxu0
    %v9665 = vadd.f32 %v2148, %v9664
    %v9666 = vpop.f32.mrb[0].mxu0
    %v9667 = vpop.f32.mrb[0].mxu0
    %9668 = vdwg.mxu0
    %9669 = vmatprep.subr.bf16.mxu0 %v6563
    %9670 = vmatpush1.bf16.msra.mxu0 %v6562
    %9671 = vmatprep.subr.bf16.mxu0 %v6576
    %9672 = vmatpush1.bf16.msra.mxu0 %v6575
    %9673 = vmatprep.subr.bf16.mxu0 %v6589
    %9674 = vmatpush1.bf16.msra.mxu0 %v6588
    %9675 = vmatprep.subr.bf16.mxu0 %v6602
    %9676 = vmatpush1.bf16.msra.mxu0 %v6601
    %9677 = vmatprep.subr.bf16.mxu0 %v6615
    %9678 = vmatpush1.bf16.msra.mxu0 %v6614
    %9679 = vmatprep.subr.bf16.mxu0 %v6628
    %9680 = vmatpush1.bf16.msra.mxu0 %v6627
    %9681 = vmatprep.subr.bf16.mxu0 %v6641
    %9682 = vmatpush1.bf16.msra.mxu0 %v6640
    %9683 = vmatprep.subr.bf16.mxu0 %v6654
    %9684 = vmatpush1.bf16.msra.mxu0 %v6653
    %9685 = vmatprep.subr.bf16.mxu0 %v6667
    %9686 = vmatpush1.bf16.msra.mxu0 %v6666
    %9687 = vmatprep.subr.bf16.mxu0 %v6680
    %9688 = vmatpush1.bf16.msra.mxu0 %v6679
    %9689 = vmatprep.subr.bf16.mxu0 %v6693
    %9690 = vmatpush1.bf16.msra.mxu0 %v6692
    %9691 = vmatprep.subr.bf16.mxu0 %v6706
    %9692 = vmatpush1.bf16.msra.mxu0 %v6705
    %9693 = vmatprep.subr.bf16.mxu0 %v6719
    %9694 = vmatpush1.bf16.msra.mxu0 %v6718
    %9695 = vmatprep.subr.bf16.mxu0 %v6732
    %9696 = vmatpush1.bf16.msra.mxu0 %v6731
    %9697 = vmatprep.subr.bf16.mxu0 %v6745
    %9698 = vmatpush1.bf16.msra.mxu0 %v6744
    %9699 = vmatprep.subr.bf16.mxu0 %v6758
    %9700 = vmatpush1.bf16.msra.mxu0 %v6757
    %9701 = vmatprep.mubr.bf16.mxu0 %v655
    %9702 = vmatmul.mubr.bf16.gmra.mrb[0].mxu0 %v654
    %v9703 = vpop.f32.mrb[0].mxu0
    %v9704 = vadd.f32 %v9663, %v9703
    %v9705 = vpop.f32.mrb[0].mxu0
    %v9706 = vadd.f32 %v9665, %v9705
    %v9707 = vpop.f32.mrb[0].mxu0
    %v9708 = vpop.f32.mrb[0].mxu0
    %9709 = vdwg.mxu0
    %9710 = vmatprep.subr.bf16.mxu0 %v6771
    %9711 = vmatpush1.bf16.msra.mxu0 %v6770
    %9712 = vmatprep.subr.bf16.mxu0 %v6784
    %9713 = vmatpush1.bf16.msra.mxu0 %v6783
    %9714 = vmatprep.subr.bf16.mxu0 %v6797
    %9715 = vmatpush1.bf16.msra.mxu0 %v6796
    %9716 = vmatprep.subr.bf16.mxu0 %v6810
    %9717 = vmatpush1.bf16.msra.mxu0 %v6809
    %9718 = vmatprep.subr.bf16.mxu0 %v6823
    %9719 = vmatpush1.bf16.msra.mxu0 %v6822
    %9720 = vmatprep.subr.bf16.mxu0 %v6836
    %9721 = vmatpush1.bf16.msra.mxu0 %v6835
    %9722 = vmatprep.subr.bf16.mxu0 %v6849
    %9723 = vmatpush1.bf16.msra.mxu0 %v6848
    %9724 = vmatprep.subr.bf16.mxu0 %v6862
    %9725 = vmatpush1.bf16.msra.mxu0 %v6861
    %9726 = vmatprep.subr.bf16.mxu0 %v6875
    %9727 = vmatpush1.bf16.msra.mxu0 %v6874
    %9728 = vmatprep.subr.bf16.mxu0 %v6888
    %9729 = vmatpush1.bf16.msra.mxu0 %v6887
    %9730 = vmatprep.subr.bf16.mxu0 %v6901
    %9731 = vmatpush1.bf16.msra.mxu0 %v6900
    %9732 = vmatprep.subr.bf16.mxu0 %v6914
    %9733 = vmatpush1.bf16.msra.mxu0 %v6913
    %9734 = vmatprep.subr.bf16.mxu0 %v6927
    %9735 = vmatpush1.bf16.msra.mxu0 %v6926
    %9736 = vmatprep.subr.bf16.mxu0 %v6940
    %9737 = vmatpush1.bf16.msra.mxu0 %v6939
    %9738 = vmatprep.subr.bf16.mxu0 %v6953
    %9739 = vmatpush1.bf16.msra.mxu0 %v6952
    %9740 = vmatprep.subr.bf16.mxu0 %v6966
    %9741 = vmatpush1.bf16.msra.mxu0 %v6965
    %9742 = vmatprep.mubr.bf16.mxu0 %v657
    %9743 = vmatmul.mubr.bf16.gmra.mrb[0].mxu0 %v656
    %v9744 = vpop.f32.mrb[0].mxu0
    %v9745 = vadd.f32 %v9704, %v9744
    %v9746 = vpop.f32.mrb[0].mxu0
    %v9747 = vadd.f32 %v9706, %v9746
    %v9748 = vpop.f32.mrb[0].mxu0
    %v9749 = vpop.f32.mrb[0].mxu0
    %9750 = vdwg.mxu0
    %9751 = vmatprep.subr.bf16.mxu0 %v6979
    %9752 = vmatpush1.bf16.msra.mxu0 %v6978
    %9753 = vmatprep.subr.bf16.mxu0 %v6992
    %9754 = vmatpush1.bf16.msra.mxu0 %v6991
    %9755 = vmatprep.subr.bf16.mxu0 %v7005
    %9756 = vmatpush1.bf16.msra.mxu0 %v7004
    %9757 = vmatprep.subr.bf16.mxu0 %v7018
    %9758 = vmatpush1.bf16.msra.mxu0 %v7017
    %9759 = vmatprep.subr.bf16.mxu0 %v7031
    %9760 = vmatpush1.bf16.msra.mxu0 %v7030
    %9761 = vmatprep.subr.bf16.mxu0 %v7044
    %9762 = vmatpush1.bf16.msra.mxu0 %v7043
    %9763 = vmatprep.subr.bf16.mxu0 %v7057
    %9764 = vmatpush1.bf16.msra.mxu0 %v7056
    %9765 = vmatprep.subr.bf16.mxu0 %v7070
    %9766 = vmatpush1.bf16.msra.mxu0 %v7069
    %9767 = vmatprep.subr.bf16.mxu0 %v7083
    %9768 = vmatpush1.bf16.msra.mxu0 %v7082
    %9769 = vmatprep.subr.bf16.mxu0 %v7096
    %9770 = vmatpush1.bf16.msra.mxu0 %v7095
    %9771 = vmatprep.subr.bf16.mxu0 %v7109
    %9772 = vmatpush1.bf16.msra.mxu0 %v7108
    %9773 = vmatprep.subr.bf16.mxu0 %v7122
    %9774 = vmatpush1.bf16.msra.mxu0 %v7121
    %9775 = vmatprep.subr.bf16.mxu0 %v7135
    %9776 = vmatpush1.bf16.msra.mxu0 %v7134
    %9777 = vmatprep.subr.bf16.mxu0 %v7148
    %9778 = vmatpush1.bf16.msra.mxu0 %v7147
    %9779 = vmatprep.subr.bf16.mxu0 %v7161
    %9780 = vmatpush1.bf16.msra.mxu0 %v7160
    %9781 = vmatprep.subr.bf16.mxu0 %v7174
    %9782 = vmatpush1.bf16.msra.mxu0 %v7173
    %9783 = vmatprep.mubr.bf16.mxu0 %v659
    %9784 = vmatmul.mubr.bf16.gmra.mrb[0].mxu0 %v658
    %v9785 = vpop.f32.mrb[0].mxu0
    %v9786 = vadd.f32 %v9745, %v9785
    %v9787 = vpop.f32.mrb[0].mxu0
    %v9788 = vadd.f32 %v9747, %v9787
    %v9789 = vpop.f32.mrb[0].mxu0
    %v9790 = vpop.f32.mrb[0].mxu0
    %9791 = vdwg.mxu0
    %9792 = vmatprep.subr.bf16.mxu0 %v7187
    %9793 = vmatpush1.bf16.msra.mxu0 %v7186
    %9794 = vmatprep.subr.bf16.mxu0 %v7200
    %9795 = vmatpush1.bf16.msra.mxu0 %v7199
    %9796 = vmatprep.subr.bf16.mxu0 %v7213
    %9797 = vmatpush1.bf16.msra.mxu0 %v7212
    %9798 = vmatprep.subr.bf16.mxu0 %v7226
    %9799 = vmatpush1.bf16.msra.mxu0 %v7225
    %9800 = vmatprep.subr.bf16.mxu0 %v7239
    %9801 = vmatpush1.bf16.msra.mxu0 %v7238
    %9802 = vmatprep.subr.bf16.mxu0 %v7252
    %9803 = vmatpush1.bf16.msra.mxu0 %v7251
    %9804 = vmatprep.subr.bf16.mxu0 %v7265
    %9805 = vmatpush1.bf16.msra.mxu0 %v7264
    %9806 = vmatprep.subr.bf16.mxu0 %v7278
    %9807 = vmatpush1.bf16.msra.mxu0 %v7277
    %9808 = vmatprep.subr.bf16.mxu0 %v7291
    %9809 = vmatpush1.bf16.msra.mxu0 %v7290
    %9810 = vmatprep.subr.bf16.mxu0 %v7304
    %9811 = vmatpush1.bf16.msra.mxu0 %v7303
    %9812 = vmatprep.subr.bf16.mxu0 %v7317
    %9813 = vmatpush1.bf16.msra.mxu0 %v7316
    %9814 = vmatprep.subr.bf16.mxu0 %v7330
    %9815 = vmatpush1.bf16.msra.mxu0 %v7329
    %9816 = vmatprep.subr.bf16.mxu0 %v7343
    %9817 = vmatpush1.bf16.msra.mxu0 %v7342
    %9818 = vmatprep.subr.bf16.mxu0 %v7356
    %9819 = vmatpush1.bf16.msra.mxu0 %v7355
    %9820 = vmatprep.subr.bf16.mxu0 %v7369
    %9821 = vmatpush1.bf16.msra.mxu0 %v7368
    %9822 = vmatprep.subr.bf16.mxu0 %v7382
    %9823 = vmatpush1.bf16.msra.mxu0 %v7381
    %9824 = vmatprep.mubr.bf16.mxu0 %v661
    %9825 = vmatmul.mubr.bf16.gmra.mrb[0].mxu0 %v660
    %v9826 = vpop.f32.mrb[0].mxu0
    %v9827 = vadd.f32 %v9786, %v9826
    %v9828 = vpop.f32.mrb[0].mxu0
    %v9829 = vadd.f32 %v9788, %v9828
    %v9830 = vpop.f32.mrb[0].mxu0
    %v9831 = vpop.f32.mrb[0].mxu0
    %9832 = vdwg.mxu0
    %9833 = vmatprep.subr.bf16.mxu0 %v7395
    %9834 = vmatpush1.bf16.msra.mxu0 %v7394
    %9835 = vmatprep.subr.bf16.mxu0 %v7408
    %9836 = vmatpush1.bf16.msra.mxu0 %v7407
    %9837 = vmatprep.subr.bf16.mxu0 %v7421
    %9838 = vmatpush1.bf16.msra.mxu0 %v7420
    %9839 = vmatprep.subr.bf16.mxu0 %v7434
    %9840 = vmatpush1.bf16.msra.mxu0 %v7433
    %9841 = vmatprep.subr.bf16.mxu0 %v7447
    %9842 = vmatpush1.bf16.msra.mxu0 %v7446
    %9843 = vmatprep.subr.bf16.mxu0 %v7460
    %9844 = vmatpush1.bf16.msra.mxu0 %v7459
    %9845 = vmatprep.subr.bf16.mxu0 %v7473
    %9846 = vmatpush1.bf16.msra.mxu0 %v7472
    %9847 = vmatprep.subr.bf16.mxu0 %v7486
    %9848 = vmatpush1.bf16.msra.mxu0 %v7485
    %9849 = vmatprep.subr.bf16.mxu0 %v7499
    %9850 = vmatpush1.bf16.msra.mxu0 %v7498
    %9851 = vmatprep.subr.bf16.mxu0 %v7512
    %9852 = vmatpush1.bf16.msra.mxu0 %v7511
    %9853 = vmatprep.subr.bf16.mxu0 %v7525
    %9854 = vmatpush1.bf16.msra.mxu0 %v7524
    %9855 = vmatprep.subr.bf16.mxu0 %v7538
    %9856 = vmatpush1.bf16.msra.mxu0 %v7537
    %9857 = vmatprep.subr.bf16.mxu0 %v7551
    %9858 = vmatpush1.bf16.msra.mxu0 %v7550
    %9859 = vmatprep.subr.bf16.mxu0 %v7564
    %9860 = vmatpush1.bf16.msra.mxu0 %v7563
    %9861 = vmatprep.subr.bf16.mxu0 %v7577
    %9862 = vmatpush1.bf16.msra.mxu0 %v7576
    %9863 = vmatprep.subr.bf16.mxu0 %v7590
    %9864 = vmatpush1.bf16.msra.mxu0 %v7589
    %9865 = vmatprep.mubr.bf16.mxu0 %v663
    %9866 = vmatmul.mubr.bf16.gmra.mrb[0].mxu0 %v662
    %v9867 = vpop.f32.mrb[0].mxu0
    %v9868 = vadd.f32 %v9827, %v9867
    %v9869 = vpop.f32.mrb[0].mxu0
    %v9870 = vadd.f32 %v9829, %v9869
    %v9871 = vpop.f32.mrb[0].mxu0
    %v9872 = vpop.f32.mrb[0].mxu0
    %9873 = vdwg.mxu0
    %9874 = vmatprep.subr.bf16.mxu0 %v7603
    %9875 = vmatpush1.bf16.msra.mxu0 %v7602
    %9876 = vmatprep.subr.bf16.mxu0 %v7616
    %9877 = vmatpush1.bf16.msra.mxu0 %v7615
    %9878 = vmatprep.subr.bf16.mxu0 %v7629
    %9879 = vmatpush1.bf16.msra.mxu0 %v7628
    %9880 = vmatprep.subr.bf16.mxu0 %v7642
    %9881 = vmatpush1.bf16.msra.mxu0 %v7641
    %9882 = vmatprep.subr.bf16.mxu0 %v7655
    %9883 = vmatpush1.bf16.msra.mxu0 %v7654
    %9884 = vmatprep.subr.bf16.mxu0 %v7668
    %9885 = vmatpush1.bf16.msra.mxu0 %v7667
    %9886 = vmatprep.subr.bf16.mxu0 %v7681
    %9887 = vmatpush1.bf16.msra.mxu0 %v7680
    %9888 = vmatprep.subr.bf16.mxu0 %v7694
    %9889 = vmatpush1.bf16.msra.mxu0 %v7693
    %9890 = vmatprep.subr.bf16.mxu0 0
    %9891 = vmatpush1.bf16.msra.mxu0 0
    %9892 = vmatprep.subr.bf16.mxu0 0
    %9893 = vmatpush1.bf16.msra.mxu0 0
    %9894 = vmatprep.subr.bf16.mxu0 0
    %9895 = vmatpush1.bf16.msra.mxu0 0
    %9896 = vmatprep.subr.bf16.mxu0 0
    %9897 = vmatpush1.bf16.msra.mxu0 0
    %9898 = vmatprep.subr.bf16.mxu0 0
    %9899 = vmatpush1.bf16.msra.mxu0 0
    %9900 = vmatprep.subr.bf16.mxu0 0
    %9901 = vmatpush1.bf16.msra.mxu0 0
    %9902 = vmatprep.subr.bf16.mxu0 0
    %9903 = vmatpush1.bf16.msra.mxu0 0
    %9904 = vmatprep.subr.bf16.mxu0 0
    %9905 = vmatpush1.bf16.msra.mxu0 0
    %9906 = vmatprep.mubr.bf16.mxu0 0
    %9907 = vmatmul.mubr.bf16.gmra.mrb[0].mxu0 %v664
    %v9908 = vpop.f32.mrb[0].mxu0
    %v9909 = vadd.f32 %v9868, %v9908
    %v9910 = vpop.f32.mrb[0].mxu0
    %v9911 = vadd.f32 %v9870, %v9910
    %v9912 = vpop.f32.mrb[0].mxu0
    %v9913 = vpop.f32.mrb[0].mxu0
    %9914 = vdwg.mxu0
    %9915 = vmatprep.subr.bf16.mxu0 %v6357
    %9916 = vmatpush1.bf16.msra.mxu0 %v6356
    %9917 = vmatprep.subr.bf16.mxu0 %v6370
    %9918 = vmatpush1.bf16.msra.mxu0 %v6369
    %9919 = vmatprep.subr.bf16.mxu0 %v6383
    %9920 = vmatpush1.bf16.msra.mxu0 %v6382
    %9921 = vmatprep.subr.bf16.mxu0 %v6396
    %9922 = vmatpush1.bf16.msra.mxu0 %v6395
    %9923 = vmatprep.subr.bf16.mxu0 %v6409
    %9924 = vmatpush1.bf16.msra.mxu0 %v6408
    %9925 = vmatprep.subr.bf16.mxu0 %v6422
    %9926 = vmatpush1.bf16.msra.mxu0 %v6421
    %9927 = vmatprep.subr.bf16.mxu0 %v6435
    %9928 = vmatpush1.bf16.msra.mxu0 %v6434
    %9929 = vmatprep.subr.bf16.mxu0 %v6448
    %9930 = vmatpush1.bf16.msra.mxu0 %v6447
    %9931 = vmatprep.subr.bf16.mxu0 %v6461
    %9932 = vmatpush1.bf16.msra.mxu0 %v6460
    %9933 = vmatprep.subr.bf16.mxu0 %v6474
    %9934 = vmatpush1.bf16.msra.mxu0 %v6473
    %9935 = vmatprep.subr.bf16.mxu0 %v6487
    %9936 = vmatpush1.bf16.msra.mxu0 %v6486
    %9937 = vmatprep.subr.bf16.mxu0 %v6500
    %9938 = vmatpush1.bf16.msra.mxu0 %v6499
    %9939 = vmatprep.subr.bf16.mxu0 %v6513
    %9940 = vmatpush1.bf16.msra.mxu0 %v6512
    %9941 = vmatprep.subr.bf16.mxu0 %v6526
    %9942 = vmatpush1.bf16.msra.mxu0 %v6525
    %9943 = vmatprep.subr.bf16.mxu0 %v6539
    %9944 = vmatpush1.bf16.msra.mxu0 %v6538
    %9945 = vmatprep.subr.bf16.mxu0 %v6552
    %9946 = vmatpush1.bf16.msra.mxu0 %v6551
    %9947 = vmatprep.mubr.bf16.mxu0 %v653
    %9948 = vmatmul.mubr.bf16.gmra.mrb[0].mxu0 %v652
    %v9949 = vpop.f32.mrb[0].mxu0
    %v9950 = vadd.f32 %v2152, %v9949
    %v9951 = vpop.f32.mrb[0].mxu0
    %v9952 = vadd.f32 %v2156, %v9951
    %v9953 = vpop.f32.mrb[0].mxu0
    %v9954 = vpop.f32.mrb[0].mxu0
    %9955 = vdwg.mxu0
    %9956 = vmatprep.subr.bf16.mxu0 %v6565
    %9957 = vmatpush1.bf16.msra.mxu0 %v6564
    %9958 = vmatprep.subr.bf16.mxu0 %v6578
    %9959 = vmatpush1.bf16.msra.mxu0 %v6577
    %9960 = vmatprep.subr.bf16.mxu0 %v6591
    %9961 = vmatpush1.bf16.msra.mxu0 %v6590
    %9962 = vmatprep.subr.bf16.mxu0 %v6604
    %9963 = vmatpush1.bf16.msra.mxu0 %v6603
    %9964 = vmatprep.subr.bf16.mxu0 %v6617
    %9965 = vmatpush1.bf16.msra.mxu0 %v6616
    %9966 = vmatprep.subr.bf16.mxu0 %v6630
    %9967 = vmatpush1.bf16.msra.mxu0 %v6629
    %9968 = vmatprep.subr.bf16.mxu0 %v6643
    %9969 = vmatpush1.bf16.msra.mxu0 %v6642
    %9970 = vmatprep.subr.bf16.mxu0 %v6656
    %9971 = vmatpush1.bf16.msra.mxu0 %v6655
    %9972 = vmatprep.subr.bf16.mxu0 %v6669
    %9973 = vmatpush1.bf16.msra.mxu0 %v6668
    %9974 = vmatprep.subr.bf16.mxu0 %v6682
    %9975 = vmatpush1.bf16.msra.mxu0 %v6681
    %9976 = vmatprep.subr.bf16.mxu0 %v6695
    %9977 = vmatpush1.bf16.msra.mxu0 %v6694
    %9978 = vmatprep.subr.bf16.mxu0 %v6708
    %9979 = vmatpush1.bf16.msra.mxu0 %v6707
    %9980 = vmatprep.subr.bf16.mxu0 %v6721
    %9981 = vmatpush1.bf16.msra.mxu0 %v6720
    %9982 = vmatprep.subr.bf16.mxu0 %v6734
    %9983 = vmatpush1.bf16.msra.mxu0 %v6733
    %9984 = vmatprep.subr.bf16.mxu0 %v6747
    %9985 = vmatpush1.bf16.msra.mxu0 %v6746
    %9986 = vmatprep.subr.bf16.mxu0 %v6760
    %9987 = vmatpush1.bf16.msra.mxu0 %v6759
    %9988 = vmatprep.mubr.bf16.mxu0 %v655
    %9989 = vmatmul.mubr.bf16.gmra.mrb[0].mxu0 %v654
    %v9990 = vpop.f32.mrb[0].mxu0
    %v9991 = vadd.f32 %v9950, %v9990
    %v9992 = vpop.f32.mrb[0].mxu0
    %v9993 = vadd.f32 %v9952, %v9992
    %v9994 = vpop.f32.mrb[0].mxu0
    %v9995 = vpop.f32.mrb[0].mxu0
    %9996 = vdwg.mxu0
    %9997 = vmatprep.subr.bf16.mxu0 %v6773
    %9998 = vmatpush1.bf16.msra.mxu0 %v6772
    %9999 = vmatprep.subr.bf16.mxu0 %v6786
    %10000 = vmatpush1.bf16.msra.mxu0 %v6785
    %10001 = vmatprep.subr.bf16.mxu0 %v6799
    %10002 = vmatpush1.bf16.msra.mxu0 %v6798
    %10003 = vmatprep.subr.bf16.mxu0 %v6812
    %10004 = vmatpush1.bf16.msra.mxu0 %v6811
    %10005 = vmatprep.subr.bf16.mxu0 %v6825
    %10006 = vmatpush1.bf16.msra.mxu0 %v6824
    %10007 = vmatprep.subr.bf16.mxu0 %v6838
    %10008 = vmatpush1.bf16.msra.mxu0 %v6837
    %10009 = vmatprep.subr.bf16.mxu0 %v6851
    %10010 = vmatpush1.bf16.msra.mxu0 %v6850
    %10011 = vmatprep.subr.bf16.mxu0 %v6864
    %10012 = vmatpush1.bf16.msra.mxu0 %v6863
    %10013 = vmatprep.subr.bf16.mxu0 %v6877
    %10014 = vmatpush1.bf16.msra.mxu0 %v6876
    %10015 = vmatprep.subr.bf16.mxu0 %v6890
    %10016 = vmatpush1.bf16.msra.mxu0 %v6889
    %10017 = vmatprep.subr.bf16.mxu0 %v6903
    %10018 = vmatpush1.bf16.msra.mxu0 %v6902
    %10019 = vmatprep.subr.bf16.mxu0 %v6916
    %10020 = vmatpush1.bf16.msra.mxu0 %v6915
    %10021 = vmatprep.subr.bf16.mxu0 %v6929
    %10022 = vmatpush1.bf16.msra.mxu0 %v6928
    %10023 = vmatprep.subr.bf16.mxu0 %v6942
    %10024 = vmatpush1.bf16.msra.mxu0 %v6941
    %10025 = vmatprep.subr.bf16.mxu0 %v6955
    %10026 = vmatpush1.bf16.msra.mxu0 %v6954
    %10027 = vmatprep.subr.bf16.mxu0 %v6968
    %10028 = vmatpush1.bf16.msra.mxu0 %v6967
    %10029 = vmatprep.mubr.bf16.mxu0 %v657
    %10030 = vmatmul.mubr.bf16.gmra.mrb[0].mxu0 %v656
    %v10031 = vpop.f32.mrb[0].mxu0
    %v10032 = vadd.f32 %v9991, %v10031
    %v10033 = vpop.f32.mrb[0].mxu0
    %v10034 = vadd.f32 %v9993, %v10033
    %v10035 = vpop.f32.mrb[0].mxu0
    %v10036 = vpop.f32.mrb[0].mxu0
    %10037 = vdwg.mxu0
    %10038 = vmatprep.subr.bf16.mxu0 %v6981
    %10039 = vmatpush1.bf16.msra.mxu0 %v6980
    %10040 = vmatprep.subr.bf16.mxu0 %v6994
    %10041 = vmatpush1.bf16.msra.mxu0 %v6993
    %10042 = vmatprep.subr.bf16.mxu0 %v7007
    %10043 = vmatpush1.bf16.msra.mxu0 %v7006
    %10044 = vmatprep.subr.bf16.mxu0 %v7020
    %10045 = vmatpush1.bf16.msra.mxu0 %v7019
    %10046 = vmatprep.subr.bf16.mxu0 %v7033
    %10047 = vmatpush1.bf16.msra.mxu0 %v7032
    %10048 = vmatprep.subr.bf16.mxu0 %v7046
    %10049 = vmatpush1.bf16.msra.mxu0 %v7045
    %10050 = vmatprep.subr.bf16.mxu0 %v7059
    %10051 = vmatpush1.bf16.msra.mxu0 %v7058
    %10052 = vmatprep.subr.bf16.mxu0 %v7072
    %10053 = vmatpush1.bf16.msra.mxu0 %v7071
    %10054 = vmatprep.subr.bf16.mxu0 %v7085
    %10055 = vmatpush1.bf16.msra.mxu0 %v7084
    %10056 = vmatprep.subr.bf16.mxu0 %v7098
    %10057 = vmatpush1.bf16.msra.mxu0 %v7097
    %10058 = vmatprep.subr.bf16.mxu0 %v7111
    %10059 = vmatpush1.bf16.msra.mxu0 %v7110
    %10060 = vmatprep.subr.bf16.mxu0 %v7124
    %10061 = vmatpush1.bf16.msra.mxu0 %v7123
    %10062 = vmatprep.subr.bf16.mxu0 %v7137
    %10063 = vmatpush1.bf16.msra.mxu0 %v7136
    %10064 = vmatprep.subr.bf16.mxu0 %v7150
    %10065 = vmatpush1.bf16.msra.mxu0 %v7149
    %10066 = vmatprep.subr.bf16.mxu0 %v7163
    %10067 = vmatpush1.bf16.msra.mxu0 %v7162
    %10068 = vmatprep.subr.bf16.mxu0 %v7176
    %10069 = vmatpush1.bf16.msra.mxu0 %v7175
    %10070 = vmatprep.mubr.bf16.mxu0 %v659
    %10071 = vmatmul.mubr.bf16.gmra.mrb[0].mxu0 %v658
    %v10072 = vpop.f32.mrb[0].mxu0
    %v10073 = vadd.f32 %v10032, %v10072
    %v10074 = vpop.f32.mrb[0].mxu0
    %v10075 = vadd.f32 %v10034, %v10074
    %v10076 = vpop.f32.mrb[0].mxu0
    %v10077 = vpop.f32.mrb[0].mxu0
    %10078 = vdwg.mxu0
    %10079 = vmatprep.subr.bf16.mxu0 %v7189
    %10080 = vmatpush1.bf16.msra.mxu0 %v7188
    %10081 = vmatprep.subr.bf16.mxu0 %v7202
    %10082 = vmatpush1.bf16.msra.mxu0 %v7201
    %10083 = vmatprep.subr.bf16.mxu0 %v7215
    %10084 = vmatpush1.bf16.msra.mxu0 %v7214
    %10085 = vmatprep.subr.bf16.mxu0 %v7228
    %10086 = vmatpush1.bf16.msra.mxu0 %v7227
    %10087 = vmatprep.subr.bf16.mxu0 %v7241
    %10088 = vmatpush1.bf16.msra.mxu0 %v7240
    %10089 = vmatprep.subr.bf16.mxu0 %v7254
    %10090 = vmatpush1.bf16.msra.mxu0 %v7253
    %10091 = vmatprep.subr.bf16.mxu0 %v7267
    %10092 = vmatpush1.bf16.msra.mxu0 %v7266
    %10093 = vmatprep.subr.bf16.mxu0 %v7280
    %10094 = vmatpush1.bf16.msra.mxu0 %v7279
    %10095 = vmatprep.subr.bf16.mxu0 %v7293
    %10096 = vmatpush1.bf16.msra.mxu0 %v7292
    %10097 = vmatprep.subr.bf16.mxu0 %v7306
    %10098 = vmatpush1.bf16.msra.mxu0 %v7305
    %10099 = vmatprep.subr.bf16.mxu0 %v7319
    %10100 = vmatpush1.bf16.msra.mxu0 %v7318
    %10101 = vmatprep.subr.bf16.mxu0 %v7332
    %10102 = vmatpush1.bf16.msra.mxu0 %v7331
    %10103 = vmatprep.subr.bf16.mxu0 %v7345
    %10104 = vmatpush1.bf16.msra.mxu0 %v7344
    %10105 = vmatprep.subr.bf16.mxu0 %v7358
    %10106 = vmatpush1.bf16.msra.mxu0 %v7357
    %10107 = vmatprep.subr.bf16.mxu0 %v7371
    %10108 = vmatpush1.bf16.msra.mxu0 %v7370
    %10109 = vmatprep.subr.bf16.mxu0 %v7384
    %10110 = vmatpush1.bf16.msra.mxu0 %v7383
    %10111 = vmatprep.mubr.bf16.mxu0 %v661
    %10112 = vmatmul.mubr.bf16.gmra.mrb[0].mxu0 %v660
    %v10113 = vpop.f32.mrb[0].mxu0
    %v10114 = vadd.f32 %v10073, %v10113
    %v10115 = vpop.f32.mrb[0].mxu0
    %v10116 = vadd.f32 %v10075, %v10115
    %v10117 = vpop.f32.mrb[0].mxu0
    %v10118 = vpop.f32.mrb[0].mxu0
    %10119 = vdwg.mxu0
    %10120 = vmatprep.subr.bf16.mxu0 %v7397
    %10121 = vmatpush1.bf16.msra.mxu0 %v7396
    %10122 = vmatprep.subr.bf16.mxu0 %v7410
    %10123 = vmatpush1.bf16.msra.mxu0 %v7409
    %10124 = vmatprep.subr.bf16.mxu0 %v7423
    %10125 = vmatpush1.bf16.msra.mxu0 %v7422
    %10126 = vmatprep.subr.bf16.mxu0 %v7436
    %10127 = vmatpush1.bf16.msra.mxu0 %v7435
    %10128 = vmatprep.subr.bf16.mxu0 %v7449
    %10129 = vmatpush1.bf16.msra.mxu0 %v7448
    %10130 = vmatprep.subr.bf16.mxu0 %v7462
    %10131 = vmatpush1.bf16.msra.mxu0 %v7461
    %10132 = vmatprep.subr.bf16.mxu0 %v7475
    %10133 = vmatpush1.bf16.msra.mxu0 %v7474
    %10134 = vmatprep.subr.bf16.mxu0 %v7488
    %10135 = vmatpush1.bf16.msra.mxu0 %v7487
    %10136 = vmatprep.subr.bf16.mxu0 %v7501
    %10137 = vmatpush1.bf16.msra.mxu0 %v7500
    %10138 = vmatprep.subr.bf16.mxu0 %v7514
    %10139 = vmatpush1.bf16.msra.mxu0 %v7513
    %10140 = vmatprep.subr.bf16.mxu0 %v7527
    %10141 = vmatpush1.bf16.msra.mxu0 %v7526
    %10142 = vmatprep.subr.bf16.mxu0 %v7540
    %10143 = vmatpush1.bf16.msra.mxu0 %v7539
    %10144 = vmatprep.subr.bf16.mxu0 %v7553
    %10145 = vmatpush1.bf16.msra.mxu0 %v7552
    %10146 = vmatprep.subr.bf16.mxu0 %v7566
    %10147 = vmatpush1.bf16.msra.mxu0 %v7565
    %10148 = vmatprep.subr.bf16.mxu0 %v7579
    %10149 = vmatpush1.bf16.msra.mxu0 %v7578
    %10150 = vmatprep.subr.bf16.mxu0 %v7592
    %10151 = vmatpush1.bf16.msra.mxu0 %v7591
    %10152 = vmatprep.mubr.bf16.mxu0 %v663
    %10153 = vmatmul.mubr.bf16.gmra.mrb[0].mxu0 %v662
    %v10154 = vpop.f32.mrb[0].mxu0
    %v10155 = vadd.f32 %v10114, %v10154
    %v10156 = vpop.f32.mrb[0].mxu0
    %v10157 = vadd.f32 %v10116, %v10156
    %v10158 = vpop.f32.mrb[0].mxu0
    %v10159 = vpop.f32.mrb[0].mxu0
    %10160 = vdwg.mxu0
    %10161 = vmatprep.subr.bf16.mxu0 %v7605
    %10162 = vmatpush1.bf16.msra.mxu0 %v7604
    %10163 = vmatprep.subr.bf16.mxu0 %v7618
    %10164 = vmatpush1.bf16.msra.mxu0 %v7617
    %10165 = vmatprep.subr.bf16.mxu0 %v7631
    %10166 = vmatpush1.bf16.msra.mxu0 %v7630
    %10167 = vmatprep.subr.bf16.mxu0 %v7644
    %10168 = vmatpush1.bf16.msra.mxu0 %v7643
    %10169 = vmatprep.subr.bf16.mxu0 %v7657
    %10170 = vmatpush1.bf16.msra.mxu0 %v7656
    %10171 = vmatprep.subr.bf16.mxu0 %v7670
    %10172 = vmatpush1.bf16.msra.mxu0 %v7669
    %10173 = vmatprep.subr.bf16.mxu0 %v7683
    %10174 = vmatpush1.bf16.msra.mxu0 %v7682
    %10175 = vmatprep.subr.bf16.mxu0 %v7696
    %10176 = vmatpush1.bf16.msra.mxu0 %v7695
    %10177 = vmatprep.subr.bf16.mxu0 0
    %10178 = vmatpush1.bf16.msra.mxu0 0
    %10179 = vmatprep.subr.bf16.mxu0 0
    %10180 = vmatpush1.bf16.msra.mxu0 0
    %10181 = vmatprep.subr.bf16.mxu0 0
    %10182 = vmatpush1.bf16.msra.mxu0 0
    %10183 = vmatprep.subr.bf16.mxu0 0
    %10184 = vmatpush1.bf16.msra.mxu0 0
    %10185 = vmatprep.subr.bf16.mxu0 0
    %10186 = vmatpush1.bf16.msra.mxu0 0
    %10187 = vmatprep.subr.bf16.mxu0 0
    %10188 = vmatpush1.bf16.msra.mxu0 0
    %10189 = vmatprep.subr.bf16.mxu0 0
    %10190 = vmatpush1.bf16.msra.mxu0 0
    %10191 = vmatprep.subr.bf16.mxu0 0
    %10192 = vmatpush1.bf16.msra.mxu0 0
    %10193 = vmatprep.mubr.bf16.mxu0 0
    %10194 = vmatmul.mubr.bf16.gmra.mrb[0].mxu0 %v664
    %v10195 = vpop.f32.mrb[0].mxu0
    %v10196 = vadd.f32 %v10155, %v10195
    %v10197 = vpop.f32.mrb[0].mxu0
    %v10198 = vadd.f32 %v10157, %v10197
    %v10199 = vpop.f32.mrb[0].mxu0
    %v10200 = vpop.f32.mrb[0].mxu0
    %10201 = vdwg.mxu0
    %10202 = vmatprep.subr.bf16.mxu0 %v6359
    %10203 = vmatpush1.bf16.msra.mxu0 %v6358
    %10204 = vmatprep.subr.bf16.mxu0 %v6372
    %10205 = vmatpush1.bf16.msra.mxu0 %v6371
    %10206 = vmatprep.subr.bf16.mxu0 %v6385
    %10207 = vmatpush1.bf16.msra.mxu0 %v6384
    %10208 = vmatprep.subr.bf16.mxu0 %v6398
    %10209 = vmatpush1.bf16.msra.mxu0 %v6397
    %10210 = vmatprep.subr.bf16.mxu0 %v6411
    %10211 = vmatpush1.bf16.msra.mxu0 %v6410
    %10212 = vmatprep.subr.bf16.mxu0 %v6424
    %10213 = vmatpush1.bf16.msra.mxu0 %v6423
    %10214 = vmatprep.subr.bf16.mxu0 %v6437
    %10215 = vmatpush1.bf16.msra.mxu0 %v6436
    %10216 = vmatprep.subr.bf16.mxu0 %v6450
    %10217 = vmatpush1.bf16.msra.mxu0 %v6449
    %10218 = vmatprep.subr.bf16.mxu0 %v6463
    %10219 = vmatpush1.bf16.msra.mxu0 %v6462
    %10220 = vmatprep.subr.bf16.mxu0 %v6476
    %10221 = vmatpush1.bf16.msra.mxu0 %v6475
    %10222 = vmatprep.subr.bf16.mxu0 %v6489
    %10223 = vmatpush1.bf16.msra.mxu0 %v6488
    %10224 = vmatprep.subr.bf16.mxu0 %v6502
    %10225 = vmatpush1.bf16.msra.mxu0 %v6501
    %10226 = vmatprep.subr.bf16.mxu0 %v6515
    %10227 = vmatpush1.bf16.msra.mxu0 %v6514
    %10228 = vmatprep.subr.bf16.mxu0 %v6528
    %10229 = vmatpush1.bf16.msra.mxu0 %v6527
    %10230 = vmatprep.subr.bf16.mxu0 %v6541
    %10231 = vmatpush1.bf16.msra.mxu0 %v6540
    %10232 = vmatprep.subr.bf16.mxu0 %v6554
    %10233 = vmatpush1.bf16.msra.mxu0 %v6553
    %10234 = vmatprep.mubr.bf16.mxu0 %v653
    %10235 = vmatmul.mubr.bf16.gmra.mrb[0].mxu0 %v652
    %v10236 = vpop.f32.mrb[0].mxu0
    %v10237 = vadd.f32 %v2160, %v10236
    %v10238 = vpop.f32.mrb[0].mxu0
    %v10239 = vadd.f32 %v2164, %v10238
    %v10240 = vpop.f32.mrb[0].mxu0
    %v10241 = vpop.f32.mrb[0].mxu0
    %10242 = vdwg.mxu0
    %10243 = vmatprep.subr.bf16.mxu0 %v6567
    %10244 = vmatpush1.bf16.msra.mxu0 %v6566
    %10245 = vmatprep.subr.bf16.mxu0 %v6580
    %10246 = vmatpush1.bf16.msra.mxu0 %v6579
    %10247 = vmatprep.subr.bf16.mxu0 %v6593
    %10248 = vmatpush1.bf16.msra.mxu0 %v6592
    %10249 = vmatprep.subr.bf16.mxu0 %v6606
    %10250 = vmatpush1.bf16.msra.mxu0 %v6605
    %10251 = vmatprep.subr.bf16.mxu0 %v6619
    %10252 = vmatpush1.bf16.msra.mxu0 %v6618
    %10253 = vmatprep.subr.bf16.mxu0 %v6632
    %10254 = vmatpush1.bf16.msra.mxu0 %v6631
    %10255 = vmatprep.subr.bf16.mxu0 %v6645
    %10256 = vmatpush1.bf16.msra.mxu0 %v6644
    %10257 = vmatprep.subr.bf16.mxu0 %v6658
    %10258 = vmatpush1.bf16.msra.mxu0 %v6657
    %10259 = vmatprep.subr.bf16.mxu0 %v6671
    %10260 = vmatpush1.bf16.msra.mxu0 %v6670
    %10261 = vmatprep.subr.bf16.mxu0 %v6684
    %10262 = vmatpush1.bf16.msra.mxu0 %v6683
    %10263 = vmatprep.subr.bf16.mxu0 %v6697
    %10264 = vmatpush1.bf16.msra.mxu0 %v6696
    %10265 = vmatprep.subr.bf16.mxu0 %v6710
    %10266 = vmatpush1.bf16.msra.mxu0 %v6709
    %10267 = vmatprep.subr.bf16.mxu0 %v6723
    %10268 = vmatpush1.bf16.msra.mxu0 %v6722
    %10269 = vmatprep.subr.bf16.mxu0 %v6736
    %10270 = vmatpush1.bf16.msra.mxu0 %v6735
    %10271 = vmatprep.subr.bf16.mxu0 %v6749
    %10272 = vmatpush1.bf16.msra.mxu0 %v6748
    %10273 = vmatprep.subr.bf16.mxu0 %v6762
    %10274 = vmatpush1.bf16.msra.mxu0 %v6761
    %10275 = vmatprep.mubr.bf16.mxu0 %v655
    %10276 = vmatmul.mubr.bf16.gmra.mrb[0].mxu0 %v654
    %v10277 = vpop.f32.mrb[0].mxu0
    %v10278 = vadd.f32 %v10237, %v10277
    %v10279 = vpop.f32.mrb[0].mxu0
    %v10280 = vadd.f32 %v10239, %v10279
    %v10281 = vpop.f32.mrb[0].mxu0
    %v10282 = vpop.f32.mrb[0].mxu0
    %10283 = vdwg.mxu0
    %10284 = vmatprep.subr.bf16.mxu0 %v6775
    %10285 = vmatpush1.bf16.msra.mxu0 %v6774
    %10286 = vmatprep.subr.bf16.mxu0 %v6788
    %10287 = vmatpush1.bf16.msra.mxu0 %v6787
    %10288 = vmatprep.subr.bf16.mxu0 %v6801
    %10289 = vmatpush1.bf16.msra.mxu0 %v6800
    %10290 = vmatprep.subr.bf16.mxu0 %v6814
    %10291 = vmatpush1.bf16.msra.mxu0 %v6813
    %10292 = vmatprep.subr.bf16.mxu0 %v6827
    %10293 = vmatpush1.bf16.msra.mxu0 %v6826
    %10294 = vmatprep.subr.bf16.mxu0 %v6840
    %10295 = vmatpush1.bf16.msra.mxu0 %v6839
    %10296 = vmatprep.subr.bf16.mxu0 %v6853
    %10297 = vmatpush1.bf16.msra.mxu0 %v6852
    %10298 = vmatprep.subr.bf16.mxu0 %v6866
    %10299 = vmatpush1.bf16.msra.mxu0 %v6865
    %10300 = vmatprep.subr.bf16.mxu0 %v6879
    %10301 = vmatpush1.bf16.msra.mxu0 %v6878
    %10302 = vmatprep.subr.bf16.mxu0 %v6892
    %10303 = vmatpush1.bf16.msra.mxu0 %v6891
    %10304 = vmatprep.subr.bf16.mxu0 %v6905
    %10305 = vmatpush1.bf16.msra.mxu0 %v6904
    %10306 = vmatprep.subr.bf16.mxu0 %v6918
    %10307 = vmatpush1.bf16.msra.mxu0 %v6917
    %10308 = vmatprep.subr.bf16.mxu0 %v6931
    %10309 = vmatpush1.bf16.msra.mxu0 %v6930
    %10310 = vmatprep.subr.bf16.mxu0 %v6944
    %10311 = vmatpush1.bf16.msra.mxu0 %v6943
    %10312 = vmatprep.subr.bf16.mxu0 %v6957
    %10313 = vmatpush1.bf16.msra.mxu0 %v6956
    %10314 = vmatprep.subr.bf16.mxu0 %v6970
    %10315 = vmatpush1.bf16.msra.mxu0 %v6969
    %10316 = vmatprep.mubr.bf16.mxu0 %v657
    %10317 = vmatmul.mubr.bf16.gmra.mrb[0].mxu0 %v656
    %v10318 = vpop.f32.mrb[0].mxu0
    %v10319 = vadd.f32 %v10278, %v10318
    %v10320 = vpop.f32.mrb[0].mxu0
    %v10321 = vadd.f32 %v10280, %v10320
    %v10322 = vpop.f32.mrb[0].mxu0
    %v10323 = vpop.f32.mrb[0].mxu0
    %10324 = vdwg.mxu0
    %10325 = vmatprep.subr.bf16.mxu0 %v6983
    %10326 = vmatpush1.bf16.msra.mxu0 %v6982
    %10327 = vmatprep.subr.bf16.mxu0 %v6996
    %10328 = vmatpush1.bf16.msra.mxu0 %v6995
    %10329 = vmatprep.subr.bf16.mxu0 %v7009
    %10330 = vmatpush1.bf16.msra.mxu0 %v7008
    %10331 = vmatprep.subr.bf16.mxu0 %v7022
    %10332 = vmatpush1.bf16.msra.mxu0 %v7021
    %10333 = vmatprep.subr.bf16.mxu0 %v7035
    %10334 = vmatpush1.bf16.msra.mxu0 %v7034
    %10335 = vmatprep.subr.bf16.mxu0 %v7048
    %10336 = vmatpush1.bf16.msra.mxu0 %v7047
    %10337 = vmatprep.subr.bf16.mxu0 %v7061
    %10338 = vmatpush1.bf16.msra.mxu0 %v7060
    %10339 = vmatprep.subr.bf16.mxu0 %v7074
    %10340 = vmatpush1.bf16.msra.mxu0 %v7073
    %10341 = vmatprep.subr.bf16.mxu0 %v7087
    %10342 = vmatpush1.bf16.msra.mxu0 %v7086
    %10343 = vmatprep.subr.bf16.mxu0 %v7100
    %10344 = vmatpush1.bf16.msra.mxu0 %v7099
    %10345 = vmatprep.subr.bf16.mxu0 %v7113
    %10346 = vmatpush1.bf16.msra.mxu0 %v7112
    %10347 = vmatprep.subr.bf16.mxu0 %v7126
    %10348 = vmatpush1.bf16.msra.mxu0 %v7125
    %10349 = vmatprep.subr.bf16.mxu0 %v7139
    %10350 = vmatpush1.bf16.msra.mxu0 %v7138
    %10351 = vmatprep.subr.bf16.mxu0 %v7152
    %10352 = vmatpush1.bf16.msra.mxu0 %v7151
    %10353 = vmatprep.subr.bf16.mxu0 %v7165
    %10354 = vmatpush1.bf16.msra.mxu0 %v7164
    %10355 = vmatprep.subr.bf16.mxu0 %v7178
    %10356 = vmatpush1.bf16.msra.mxu0 %v7177
    %10357 = vmatprep.mubr.bf16.mxu0 %v659
    %10358 = vmatmul.mubr.bf16.gmra.mrb[0].mxu0 %v658
    %v10359 = vpop.f32.mrb[0].mxu0
    %v10360 = vadd.f32 %v10319, %v10359
    %v10361 = vpop.f32.mrb[0].mxu0
    %v10362 = vadd.f32 %v10321, %v10361
    %v10363 = vpop.f32.mrb[0].mxu0
    %v10364 = vpop.f32.mrb[0].mxu0
    %10365 = vdwg.mxu0
    %10366 = vmatprep.subr.bf16.mxu0 %v7191
    %10367 = vmatpush1.bf16.msra.mxu0 %v7190
    %10368 = vmatprep.subr.bf16.mxu0 %v7204
    %10369 = vmatpush1.bf16.msra.mxu0 %v7203
    %10370 = vmatprep.subr.bf16.mxu0 %v7217
    %10371 = vmatpush1.bf16.msra.mxu0 %v7216
    %10372 = vmatprep.subr.bf16.mxu0 %v7230
    %10373 = vmatpush1.bf16.msra.mxu0 %v7229
    %10374 = vmatprep.subr.bf16.mxu0 %v7243
    %10375 = vmatpush1.bf16.msra.mxu0 %v7242
    %10376 = vmatprep.subr.bf16.mxu0 %v7256
    %10377 = vmatpush1.bf16.msra.mxu0 %v7255
    %10378 = vmatprep.subr.bf16.mxu0 %v7269
    %10379 = vmatpush1.bf16.msra.mxu0 %v7268
    %10380 = vmatprep.subr.bf16.mxu0 %v7282
    %10381 = vmatpush1.bf16.msra.mxu0 %v7281
    %10382 = vmatprep.subr.bf16.mxu0 %v7295
    %10383 = vmatpush1.bf16.msra.mxu0 %v7294
    %10384 = vmatprep.subr.bf16.mxu0 %v7308
    %10385 = vmatpush1.bf16.msra.mxu0 %v7307
    %10386 = vmatprep.subr.bf16.mxu0 %v7321
    %10387 = vmatpush1.bf16.msra.mxu0 %v7320
    %10388 = vmatprep.subr.bf16.mxu0 %v7334
    %10389 = vmatpush1.bf16.msra.mxu0 %v7333
    %10390 = vmatprep.subr.bf16.mxu0 %v7347
    %10391 = vmatpush1.bf16.msra.mxu0 %v7346
    %10392 = vmatprep.subr.bf16.mxu0 %v7360
    %10393 = vmatpush1.bf16.msra.mxu0 %v7359
    %10394 = vmatprep.subr.bf16.mxu0 %v7373
    %10395 = vmatpush1.bf16.msra.mxu0 %v7372
    %10396 = vmatprep.subr.bf16.mxu0 %v7386
    %10397 = vmatpush1.bf16.msra.mxu0 %v7385
    %10398 = vmatprep.mubr.bf16.mxu0 %v661
    %10399 = vmatmul.mubr.bf16.gmra.mrb[0].mxu0 %v660
    %v10400 = vpop.f32.mrb[0].mxu0
    %v10401 = vadd.f32 %v10360, %v10400
    %v10402 = vpop.f32.mrb[0].mxu0
    %v10403 = vadd.f32 %v10362, %v10402
    %v10404 = vpop.f32.mrb[0].mxu0
    %v10405 = vpop.f32.mrb[0].mxu0
    %10406 = vdwg.mxu0
    %10407 = vmatprep.subr.bf16.mxu0 %v7399
    %10408 = vmatpush1.bf16.msra.mxu0 %v7398
    %10409 = vmatprep.subr.bf16.mxu0 %v7412
    %10410 = vmatpush1.bf16.msra.mxu0 %v7411
    %10411 = vmatprep.subr.bf16.mxu0 %v7425
    %10412 = vmatpush1.bf16.msra.mxu0 %v7424
    %10413 = vmatprep.subr.bf16.mxu0 %v7438
    %10414 = vmatpush1.bf16.msra.mxu0 %v7437
    %10415 = vmatprep.subr.bf16.mxu0 %v7451
    %10416 = vmatpush1.bf16.msra.mxu0 %v7450
    %10417 = vmatprep.subr.bf16.mxu0 %v7464
    %10418 = vmatpush1.bf16.msra.mxu0 %v7463
    %10419 = vmatprep.subr.bf16.mxu0 %v7477
    %10420 = vmatpush1.bf16.msra.mxu0 %v7476
    %10421 = vmatprep.subr.bf16.mxu0 %v7490
    %10422 = vmatpush1.bf16.msra.mxu0 %v7489
    %10423 = vmatprep.subr.bf16.mxu0 %v7503
    %10424 = vmatpush1.bf16.msra.mxu0 %v7502
    %10425 = vmatprep.subr.bf16.mxu0 %v7516
    %10426 = vmatpush1.bf16.msra.mxu0 %v7515
    %10427 = vmatprep.subr.bf16.mxu0 %v7529
    %10428 = vmatpush1.bf16.msra.mxu0 %v7528
    %10429 = vmatprep.subr.bf16.mxu0 %v7542
    %10430 = vmatpush1.bf16.msra.mxu0 %v7541
    %10431 = vmatprep.subr.bf16.mxu0 %v7555
    %10432 = vmatpush1.bf16.msra.mxu0 %v7554
    %10433 = vmatprep.subr.bf16.mxu0 %v7568
    %10434 = vmatpush1.bf16.msra.mxu0 %v7567
    %10435 = vmatprep.subr.bf16.mxu0 %v7581
    %10436 = vmatpush1.bf16.msra.mxu0 %v7580
    %10437 = vmatprep.subr.bf16.mxu0 %v7594
    %10438 = vmatpush1.bf16.msra.mxu0 %v7593
    %10439 = vmatprep.mubr.bf16.mxu0 %v663
    %10440 = vmatmul.mubr.bf16.gmra.mrb[0].mxu0 %v662
    %v10441 = vpop.f32.mrb[0].mxu0
    %v10442 = vadd.f32 %v10401, %v10441
    %v10443 = vpop.f32.mrb[0].mxu0
    %v10444 = vadd.f32 %v10403, %v10443
    %v10445 = vpop.f32.mrb[0].mxu0
    %v10446 = vpop.f32.mrb[0].mxu0
    %10447 = vdwg.mxu0
    %10448 = vmatprep.subr.bf16.mxu0 %v7607
    %10449 = vmatpush1.bf16.msra.mxu0 %v7606
    %10450 = vmatprep.subr.bf16.mxu0 %v7620
    %10451 = vmatpush1.bf16.msra.mxu0 %v7619
    %10452 = vmatprep.subr.bf16.mxu0 %v7633
    %10453 = vmatpush1.bf16.msra.mxu0 %v7632
    %10454 = vmatprep.subr.bf16.mxu0 %v7646
    %10455 = vmatpush1.bf16.msra.mxu0 %v7645
    %10456 = vmatprep.subr.bf16.mxu0 %v7659
    %10457 = vmatpush1.bf16.msra.mxu0 %v7658
    %10458 = vmatprep.subr.bf16.mxu0 %v7672
    %10459 = vmatpush1.bf16.msra.mxu0 %v7671
    %10460 = vmatprep.subr.bf16.mxu0 %v7685
    %10461 = vmatpush1.bf16.msra.mxu0 %v7684
    %10462 = vmatprep.subr.bf16.mxu0 %v7698
    %10463 = vmatpush1.bf16.msra.mxu0 %v7697
    %10464 = vmatprep.subr.bf16.mxu0 0
    %10465 = vmatpush1.bf16.msra.mxu0 0
    %10466 = vmatprep.subr.bf16.mxu0 0
    %10467 = vmatpush1.bf16.msra.mxu0 0
    %10468 = vmatprep.subr.bf16.mxu0 0
    %10469 = vmatpush1.bf16.msra.mxu0 0
    %10470 = vmatprep.subr.bf16.mxu0 0
    %10471 = vmatpush1.bf16.msra.mxu0 0
    %10472 = vmatprep.subr.bf16.mxu0 0
    %10473 = vmatpush1.bf16.msra.mxu0 0
    %10474 = vmatprep.subr.bf16.mxu0 0
    %10475 = vmatpush1.bf16.msra.mxu0 0
    %10476 = vmatprep.subr.bf16.mxu0 0
    %10477 = vmatpush1.bf16.msra.mxu0 0
    %10478 = vmatprep.subr.bf16.mxu0 0
    %10479 = vmatpush1.bf16.msra.mxu0 0
    %10480 = vmatprep.mubr.bf16.mxu0 0
    %10481 = vmatmul.mubr.bf16.gmra.mrb[0].mxu0 %v664
    %v10482 = vpop.f32.mrb[0].mxu0
    %v10483 = vadd.f32 %v10442, %v10482
    %v10484 = vpop.f32.mrb[0].mxu0
    %v10485 = vadd.f32 %v10444, %v10484
    %v10486 = vpop.f32.mrb[0].mxu0
    %v10487 = vpop.f32.mrb[0].mxu0
    %10488 = vdwg.mxu0
    %10489 = vmatprep.subr.bf16.mxu0 %v6361
    %10490 = vmatpush1.bf16.msra.mxu0 %v6360
    %10491 = vmatprep.subr.bf16.mxu0 %v6374
    %10492 = vmatpush1.bf16.msra.mxu0 %v6373
    %10493 = vmatprep.subr.bf16.mxu0 %v6387
    %10494 = vmatpush1.bf16.msra.mxu0 %v6386
    %10495 = vmatprep.subr.bf16.mxu0 %v6400
    %10496 = vmatpush1.bf16.msra.mxu0 %v6399
    %10497 = vmatprep.subr.bf16.mxu0 %v6413
    %10498 = vmatpush1.bf16.msra.mxu0 %v6412
    %10499 = vmatprep.subr.bf16.mxu0 %v6426
    %10500 = vmatpush1.bf16.msra.mxu0 %v6425
    %10501 = vmatprep.subr.bf16.mxu0 %v6439
    %10502 = vmatpush1.bf16.msra.mxu0 %v6438
    %10503 = vmatprep.subr.bf16.mxu0 %v6452
    %10504 = vmatpush1.bf16.msra.mxu0 %v6451
    %10505 = vmatprep.subr.bf16.mxu0 %v6465
    %10506 = vmatpush1.bf16.msra.mxu0 %v6464
    %10507 = vmatprep.subr.bf16.mxu0 %v6478
    %10508 = vmatpush1.bf16.msra.mxu0 %v6477
    %10509 = vmatprep.subr.bf16.mxu0 %v6491
    %10510 = vmatpush1.bf16.msra.mxu0 %v6490
    %10511 = vmatprep.subr.bf16.mxu0 %v6504
    %10512 = vmatpush1.bf16.msra.mxu0 %v6503
    %10513 = vmatprep.subr.bf16.mxu0 %v6517
    %10514 = vmatpush1.bf16.msra.mxu0 %v6516
    %10515 = vmatprep.subr.bf16.mxu0 %v6530
    %10516 = vmatpush1.bf16.msra.mxu0 %v6529
    %10517 = vmatprep.subr.bf16.mxu0 %v6543
    %10518 = vmatpush1.bf16.msra.mxu0 %v6542
    %10519 = vmatprep.subr.bf16.mxu0 %v6556
    %10520 = vmatpush1.bf16.msra.mxu0 %v6555
    %10521 = vmatprep.mubr.bf16.mxu0 %v653
    %10522 = vmatmul.mubr.bf16.gmra.mrb[0].mxu0 %v652
    %v10523 = vpop.f32.mrb[0].mxu0
    %v10524 = vadd.f32 %v2168, %v10523
    %v10525 = vpop.f32.mrb[0].mxu0
    %v10526 = vadd.f32 %v2172, %v10525
    %v10527 = vpop.f32.mrb[0].mxu0
    %v10528 = vpop.f32.mrb[0].mxu0
    %10529 = vdwg.mxu0
    %10530 = vmatprep.subr.bf16.mxu0 %v6569
    %10531 = vmatpush1.bf16.msra.mxu0 %v6568
    %10532 = vmatprep.subr.bf16.mxu0 %v6582
    %10533 = vmatpush1.bf16.msra.mxu0 %v6581
    %10534 = vmatprep.subr.bf16.mxu0 %v6595
    %10535 = vmatpush1.bf16.msra.mxu0 %v6594
    %10536 = vmatprep.subr.bf16.mxu0 %v6608
    %10537 = vmatpush1.bf16.msra.mxu0 %v6607
    %10538 = vmatprep.subr.bf16.mxu0 %v6621
    %10539 = vmatpush1.bf16.msra.mxu0 %v6620
    %10540 = vmatprep.subr.bf16.mxu0 %v6634
    %10541 = vmatpush1.bf16.msra.mxu0 %v6633
    %10542 = vmatprep.subr.bf16.mxu0 %v6647
    %10543 = vmatpush1.bf16.msra.mxu0 %v6646
    %10544 = vmatprep.subr.bf16.mxu0 %v6660
    %10545 = vmatpush1.bf16.msra.mxu0 %v6659
    %10546 = vmatprep.subr.bf16.mxu0 %v6673
    %10547 = vmatpush1.bf16.msra.mxu0 %v6672
    %10548 = vmatprep.subr.bf16.mxu0 %v6686
    %10549 = vmatpush1.bf16.msra.mxu0 %v6685
    %10550 = vmatprep.subr.bf16.mxu0 %v6699
    %10551 = vmatpush1.bf16.msra.mxu0 %v6698
    %10552 = vmatprep.subr.bf16.mxu0 %v6712
    %10553 = vmatpush1.bf16.msra.mxu0 %v6711
    %10554 = vmatprep.subr.bf16.mxu0 %v6725
    %10555 = vmatpush1.bf16.msra.mxu0 %v6724
    %10556 = vmatprep.subr.bf16.mxu0 %v6738
    %10557 = vmatpush1.bf16.msra.mxu0 %v6737
    %10558 = vmatprep.subr.bf16.mxu0 %v6751
    %10559 = vmatpush1.bf16.msra.mxu0 %v6750
    %10560 = vmatprep.subr.bf16.mxu0 %v6764
    %10561 = vmatpush1.bf16.msra.mxu0 %v6763
    %10562 = vmatprep.mubr.bf16.mxu0 %v655
    %10563 = vmatmul.mubr.bf16.gmra.mrb[0].mxu0 %v654
    %v10564 = vpop.f32.mrb[0].mxu0
    %v10565 = vadd.f32 %v10524, %v10564
    %v10566 = vpop.f32.mrb[0].mxu0
    %v10567 = vadd.f32 %v10526, %v10566
    %v10568 = vpop.f32.mrb[0].mxu0
    %v10569 = vpop.f32.mrb[0].mxu0
    %10570 = vdwg.mxu0
    %10571 = vmatprep.subr.bf16.mxu0 %v6777
    %10572 = vmatpush1.bf16.msra.mxu0 %v6776
    %10573 = vmatprep.subr.bf16.mxu0 %v6790
    %10574 = vmatpush1.bf16.msra.mxu0 %v6789
    %10575 = vmatprep.subr.bf16.mxu0 %v6803
    %10576 = vmatpush1.bf16.msra.mxu0 %v6802
    %10577 = vmatprep.subr.bf16.mxu0 %v6816
    %10578 = vmatpush1.bf16.msra.mxu0 %v6815
    %10579 = vmatprep.subr.bf16.mxu0 %v6829
    %10580 = vmatpush1.bf16.msra.mxu0 %v6828
    %10581 = vmatprep.subr.bf16.mxu0 %v6842
    %10582 = vmatpush1.bf16.msra.mxu0 %v6841
    %10583 = vmatprep.subr.bf16.mxu0 %v6855
    %10584 = vmatpush1.bf16.msra.mxu0 %v6854
    %10585 = vmatprep.subr.bf16.mxu0 %v6868
    %10586 = vmatpush1.bf16.msra.mxu0 %v6867
    %10587 = vmatprep.subr.bf16.mxu0 %v6881
    %10588 = vmatpush1.bf16.msra.mxu0 %v6880
    %10589 = vmatprep.subr.bf16.mxu0 %v6894
    %10590 = vmatpush1.bf16.msra.mxu0 %v6893
    %10591 = vmatprep.subr.bf16.mxu0 %v6907
    %10592 = vmatpush1.bf16.msra.mxu0 %v6906
    %10593 = vmatprep.subr.bf16.mxu0 %v6920
    %10594 = vmatpush1.bf16.msra.mxu0 %v6919
    %10595 = vmatprep.subr.bf16.mxu0 %v6933
    %10596 = vmatpush1.bf16.msra.mxu0 %v6932
    %10597 = vmatprep.subr.bf16.mxu0 %v6946
    %10598 = vmatpush1.bf16.msra.mxu0 %v6945
    %10599 = vmatprep.subr.bf16.mxu0 %v6959
    %10600 = vmatpush1.bf16.msra.mxu0 %v6958
    %10601 = vmatprep.subr.bf16.mxu0 %v6972
    %10602 = vmatpush1.bf16.msra.mxu0 %v6971
    %10603 = vmatprep.mubr.bf16.mxu0 %v657
    %10604 = vmatmul.mubr.bf16.gmra.mrb[0].mxu0 %v656
    %v10605 = vpop.f32.mrb[0].mxu0
    %v10606 = vadd.f32 %v10565, %v10605
    %v10607 = vpop.f32.mrb[0].mxu0
    %v10608 = vadd.f32 %v10567, %v10607
    %v10609 = vpop.f32.mrb[0].mxu0
    %v10610 = vpop.f32.mrb[0].mxu0
    %10611 = vdwg.mxu0
    %10612 = vmatprep.subr.bf16.mxu0 %v6985
    %10613 = vmatpush1.bf16.msra.mxu0 %v6984
    %10614 = vmatprep.subr.bf16.mxu0 %v6998
    %10615 = vmatpush1.bf16.msra.mxu0 %v6997
    %10616 = vmatprep.subr.bf16.mxu0 %v7011
    %10617 = vmatpush1.bf16.msra.mxu0 %v7010
    %10618 = vmatprep.subr.bf16.mxu0 %v7024
    %10619 = vmatpush1.bf16.msra.mxu0 %v7023
    %10620 = vmatprep.subr.bf16.mxu0 %v7037
    %10621 = vmatpush1.bf16.msra.mxu0 %v7036
    %10622 = vmatprep.subr.bf16.mxu0 %v7050
    %10623 = vmatpush1.bf16.msra.mxu0 %v7049
    %10624 = vmatprep.subr.bf16.mxu0 %v7063
    %10625 = vmatpush1.bf16.msra.mxu0 %v7062
    %10626 = vmatprep.subr.bf16.mxu0 %v7076
    %10627 = vmatpush1.bf16.msra.mxu0 %v7075
    %10628 = vmatprep.subr.bf16.mxu0 %v7089
    %10629 = vmatpush1.bf16.msra.mxu0 %v7088
    %10630 = vmatprep.subr.bf16.mxu0 %v7102
    %10631 = vmatpush1.bf16.msra.mxu0 %v7101
    %10632 = vmatprep.subr.bf16.mxu0 %v7115
    %10633 = vmatpush1.bf16.msra.mxu0 %v7114
    %10634 = vmatprep.subr.bf16.mxu0 %v7128
    %10635 = vmatpush1.bf16.msra.mxu0 %v7127
    %10636 = vmatprep.subr.bf16.mxu0 %v7141
    %10637 = vmatpush1.bf16.msra.mxu0 %v7140
    %10638 = vmatprep.subr.bf16.mxu0 %v7154
    %10639 = vmatpush1.bf16.msra.mxu0 %v7153
    %10640 = vmatprep.subr.bf16.mxu0 %v7167
    %10641 = vmatpush1.bf16.msra.mxu0 %v7166
    %10642 = vmatprep.subr.bf16.mxu0 %v7180
    %10643 = vmatpush1.bf16.msra.mxu0 %v7179
    %10644 = vmatprep.mubr.bf16.mxu0 %v659
    %10645 = vmatmul.mubr.bf16.gmra.mrb[0].mxu0 %v658
    %v10646 = vpop.f32.mrb[0].mxu0
    %v10647 = vadd.f32 %v10606, %v10646
    %v10648 = vpop.f32.mrb[0].mxu0
    %v10649 = vadd.f32 %v10608, %v10648
    %v10650 = vpop.f32.mrb[0].mxu0
    %v10651 = vpop.f32.mrb[0].mxu0
    %10652 = vdwg.mxu0
    %10653 = vmatprep.subr.bf16.mxu0 %v7193
    %10654 = vmatpush1.bf16.msra.mxu0 %v7192
    %10655 = vmatprep.subr.bf16.mxu0 %v7206
    %10656 = vmatpush1.bf16.msra.mxu0 %v7205
    %10657 = vmatprep.subr.bf16.mxu0 %v7219
    %10658 = vmatpush1.bf16.msra.mxu0 %v7218
    %10659 = vmatprep.subr.bf16.mxu0 %v7232
    %10660 = vmatpush1.bf16.msra.mxu0 %v7231
    %10661 = vmatprep.subr.bf16.mxu0 %v7245
    %10662 = vmatpush1.bf16.msra.mxu0 %v7244
    %10663 = vmatprep.subr.bf16.mxu0 %v7258
    %10664 = vmatpush1.bf16.msra.mxu0 %v7257
    %10665 = vmatprep.subr.bf16.mxu0 %v7271
    %10666 = vmatpush1.bf16.msra.mxu0 %v7270
    %10667 = vmatprep.subr.bf16.mxu0 %v7284
    %10668 = vmatpush1.bf16.msra.mxu0 %v7283
    %10669 = vmatprep.subr.bf16.mxu0 %v7297
    %10670 = vmatpush1.bf16.msra.mxu0 %v7296
    %10671 = vmatprep.subr.bf16.mxu0 %v7310
    %10672 = vmatpush1.bf16.msra.mxu0 %v7309
    %10673 = vmatprep.subr.bf16.mxu0 %v7323
    %10674 = vmatpush1.bf16.msra.mxu0 %v7322
    %10675 = vmatprep.subr.bf16.mxu0 %v7336
    %10676 = vmatpush1.bf16.msra.mxu0 %v7335
    %10677 = vmatprep.subr.bf16.mxu0 %v7349
    %10678 = vmatpush1.bf16.msra.mxu0 %v7348
    %10679 = vmatprep.subr.bf16.mxu0 %v7362
    %10680 = vmatpush1.bf16.msra.mxu0 %v7361
    %10681 = vmatprep.subr.bf16.mxu0 %v7375
    %10682 = vmatpush1.bf16.msra.mxu0 %v7374
    %10683 = vmatprep.subr.bf16.mxu0 %v7388
    %10684 = vmatpush1.bf16.msra.mxu0 %v7387
    %10685 = vmatprep.mubr.bf16.mxu0 %v661
    %10686 = vmatmul.mubr.bf16.gmra.mrb[0].mxu0 %v660
    %v10687 = vpop.f32.mrb[0].mxu0
    %v10688 = vadd.f32 %v10647, %v10687
    %v10689 = vpop.f32.mrb[0].mxu0
    %v10690 = vadd.f32 %v10649, %v10689
    %v10691 = vpop.f32.mrb[0].mxu0
    %v10692 = vpop.f32.mrb[0].mxu0
    %10693 = vdwg.mxu0
    %10694 = vmatprep.subr.bf16.mxu0 %v7401
    %10695 = vmatpush1.bf16.msra.mxu0 %v7400
    %10696 = vmatprep.subr.bf16.mxu0 %v7414
    %10697 = vmatpush1.bf16.msra.mxu0 %v7413
    %10698 = vmatprep.subr.bf16.mxu0 %v7427
    %10699 = vmatpush1.bf16.msra.mxu0 %v7426
    %10700 = vmatprep.subr.bf16.mxu0 %v7440
    %10701 = vmatpush1.bf16.msra.mxu0 %v7439
    %10702 = vmatprep.subr.bf16.mxu0 %v7453
    %10703 = vmatpush1.bf16.msra.mxu0 %v7452
    %10704 = vmatprep.subr.bf16.mxu0 %v7466
    %10705 = vmatpush1.bf16.msra.mxu0 %v7465
    %10706 = vmatprep.subr.bf16.mxu0 %v7479
    %10707 = vmatpush1.bf16.msra.mxu0 %v7478
    %10708 = vmatprep.subr.bf16.mxu0 %v7492
    %10709 = vmatpush1.bf16.msra.mxu0 %v7491
    %10710 = vmatprep.subr.bf16.mxu0 %v7505
    %10711 = vmatpush1.bf16.msra.mxu0 %v7504
    %10712 = vmatprep.subr.bf16.mxu0 %v7518
    %10713 = vmatpush1.bf16.msra.mxu0 %v7517
    %10714 = vmatprep.subr.bf16.mxu0 %v7531
    %10715 = vmatpush1.bf16.msra.mxu0 %v7530
    %10716 = vmatprep.subr.bf16.mxu0 %v7544
    %10717 = vmatpush1.bf16.msra.mxu0 %v7543
    %10718 = vmatprep.subr.bf16.mxu0 %v7557
    %10719 = vmatpush1.bf16.msra.mxu0 %v7556
    %10720 = vmatprep.subr.bf16.mxu0 %v7570
    %10721 = vmatpush1.bf16.msra.mxu0 %v7569
    %10722 = vmatprep.subr.bf16.mxu0 %v7583
    %10723 = vmatpush1.bf16.msra.mxu0 %v7582
    %10724 = vmatprep.subr.bf16.mxu0 %v7596
    %10725 = vmatpush1.bf16.msra.mxu0 %v7595
    %10726 = vmatprep.mubr.bf16.mxu0 %v663
    %10727 = vmatmul.mubr.bf16.gmra.mrb[0].mxu0 %v662
    %v10728 = vpop.f32.mrb[0].mxu0
    %v10729 = vadd.f32 %v10688, %v10728
    %v10730 = vpop.f32.mrb[0].mxu0
    %v10731 = vadd.f32 %v10690, %v10730
    %v10732 = vpop.f32.mrb[0].mxu0
    %v10733 = vpop.f32.mrb[0].mxu0
    %10734 = vdwg.mxu0
    %10735 = vmatprep.subr.bf16.mxu0 %v7609
    %10736 = vmatpush1.bf16.msra.mxu0 %v7608
    %10737 = vmatprep.subr.bf16.mxu0 %v7622
    %10738 = vmatpush1.bf16.msra.mxu0 %v7621
    %10739 = vmatprep.subr.bf16.mxu0 %v7635
    %10740 = vmatpush1.bf16.msra.mxu0 %v7634
    %10741 = vmatprep.subr.bf16.mxu0 %v7648
    %10742 = vmatpush1.bf16.msra.mxu0 %v7647
    %10743 = vmatprep.subr.bf16.mxu0 %v7661
    %10744 = vmatpush1.bf16.msra.mxu0 %v7660
    %10745 = vmatprep.subr.bf16.mxu0 %v7674
    %10746 = vmatpush1.bf16.msra.mxu0 %v7673
    %10747 = vmatprep.subr.bf16.mxu0 %v7687
    %10748 = vmatpush1.bf16.msra.mxu0 %v7686
    %10749 = vmatprep.subr.bf16.mxu0 %v7700
    %10750 = vmatpush1.bf16.msra.mxu0 %v7699
    %10751 = vmatprep.subr.bf16.mxu0 0
    %10752 = vmatpush1.bf16.msra.mxu0 0
    %10753 = vmatprep.subr.bf16.mxu0 0
    %10754 = vmatpush1.bf16.msra.mxu0 0
    %10755 = vmatprep.subr.bf16.mxu0 0
    %10756 = vmatpush1.bf16.msra.mxu0 0
    %10757 = vmatprep.subr.bf16.mxu0 0
    %10758 = vmatpush1.bf16.msra.mxu0 0
    %10759 = vmatprep.subr.bf16.mxu0 0
    %10760 = vmatpush1.bf16.msra.mxu0 0
    %10761 = vmatprep.subr.bf16.mxu0 0
    %10762 = vmatpush1.bf16.msra.mxu0 0
    %10763 = vmatprep.subr.bf16.mxu0 0
    %10764 = vmatpush1.bf16.msra.mxu0 0
    %10765 = vmatprep.subr.bf16.mxu0 0
    %10766 = vmatpush1.bf16.msra.mxu0 0
    %10767 = vmatprep.mubr.bf16.mxu0 0
    %10768 = vmatmul.mubr.bf16.gmra.mrb[0].mxu0 %v664
    %v10769 = vpop.f32.mrb[0].mxu0
    %v10770 = vadd.f32 %v10729, %v10769
    %v10771 = vpop.f32.mrb[0].mxu0
    %v10772 = vadd.f32 %v10731, %v10771
    %v10773 = vpop.f32.mrb[0].mxu0
    %v10774 = vpop.f32.mrb[0].mxu0
    %10775 = vdwg.mxu0
    %10776 = vmatprep.subr.bf16.mxu0 0
    %10777 = vmatpush1.bf16.msra.mxu0 %v6362
    %10778 = vmatprep.subr.bf16.mxu0 0
    %10779 = vmatpush1.bf16.msra.mxu0 %v6375
    %10780 = vmatprep.subr.bf16.mxu0 0
    %10781 = vmatpush1.bf16.msra.mxu0 %v6388
    %10782 = vmatprep.subr.bf16.mxu0 0
    %10783 = vmatpush1.bf16.msra.mxu0 %v6401
    %10784 = vmatprep.subr.bf16.mxu0 0
    %10785 = vmatpush1.bf16.msra.mxu0 %v6414
    %10786 = vmatprep.subr.bf16.mxu0 0
    %10787 = vmatpush1.bf16.msra.mxu0 %v6427
    %10788 = vmatprep.subr.bf16.mxu0 0
    %10789 = vmatpush1.bf16.msra.mxu0 %v6440
    %10790 = vmatprep.subr.bf16.mxu0 0
    %10791 = vmatpush1.bf16.msra.mxu0 %v6453
    %10792 = vmatprep.subr.bf16.mxu0 0
    %10793 = vmatpush1.bf16.msra.mxu0 %v6466
    %10794 = vmatprep.subr.bf16.mxu0 0
    %10795 = vmatpush1.bf16.msra.mxu0 %v6479
    %10796 = vmatprep.subr.bf16.mxu0 0
    %10797 = vmatpush1.bf16.msra.mxu0 %v6492
    %10798 = vmatprep.subr.bf16.mxu0 0
    %10799 = vmatpush1.bf16.msra.mxu0 %v6505
    %10800 = vmatprep.subr.bf16.mxu0 0
    %10801 = vmatpush1.bf16.msra.mxu0 %v6518
    %10802 = vmatprep.subr.bf16.mxu0 0
    %10803 = vmatpush1.bf16.msra.mxu0 %v6531
    %10804 = vmatprep.subr.bf16.mxu0 0
    %10805 = vmatpush1.bf16.msra.mxu0 %v6544
    %10806 = vmatprep.subr.bf16.mxu0 0
    %10807 = vmatpush1.bf16.msra.mxu0 %v6557
    %10808 = vmatprep.mubr.bf16.mxu0 %v653
    %10809 = vmatmul.mubr.bf16.gmra.mrb[0].mxu0 %v652
    %v10810 = vpop.f32.mrb[0].mxu0
    %v10811 = vadd.f32 %v2176, %v10810
    %v10812 = vpop.f32.mrb[0].mxu0
    %v10813 = vpop.f32.mrb[0].mxu0
    %v10814 = vpop.f32.mrb[0].mxu0
    %10815 = vdwg.mxu0
    %10816 = vmatprep.subr.bf16.mxu0 0
    %10817 = vmatpush1.bf16.msra.mxu0 %v6570
    %10818 = vmatprep.subr.bf16.mxu0 0
    %10819 = vmatpush1.bf16.msra.mxu0 %v6583
    %10820 = vmatprep.subr.bf16.mxu0 0
    %10821 = vmatpush1.bf16.msra.mxu0 %v6596
    %10822 = vmatprep.subr.bf16.mxu0 0
    %10823 = vmatpush1.bf16.msra.mxu0 %v6609
    %10824 = vmatprep.subr.bf16.mxu0 0
    %10825 = vmatpush1.bf16.msra.mxu0 %v6622
    %10826 = vmatprep.subr.bf16.mxu0 0
    %10827 = vmatpush1.bf16.msra.mxu0 %v6635
    %10828 = vmatprep.subr.bf16.mxu0 0
    %10829 = vmatpush1.bf16.msra.mxu0 %v6648
    %10830 = vmatprep.subr.bf16.mxu0 0
    %10831 = vmatpush1.bf16.msra.mxu0 %v6661
    %10832 = vmatprep.subr.bf16.mxu0 0
    %10833 = vmatpush1.bf16.msra.mxu0 %v6674
    %10834 = vmatprep.subr.bf16.mxu0 0
    %10835 = vmatpush1.bf16.msra.mxu0 %v6687
    %10836 = vmatprep.subr.bf16.mxu0 0
    %10837 = vmatpush1.bf16.msra.mxu0 %v6700
    %10838 = vmatprep.subr.bf16.mxu0 0
    %10839 = vmatpush1.bf16.msra.mxu0 %v6713
    %10840 = vmatprep.subr.bf16.mxu0 0
    %10841 = vmatpush1.bf16.msra.mxu0 %v6726
    %10842 = vmatprep.subr.bf16.mxu0 0
    %10843 = vmatpush1.bf16.msra.mxu0 %v6739
    %10844 = vmatprep.subr.bf16.mxu0 0
    %10845 = vmatpush1.bf16.msra.mxu0 %v6752
    %10846 = vmatprep.subr.bf16.mxu0 0
    %10847 = vmatpush1.bf16.msra.mxu0 %v6765
    %10848 = vmatprep.mubr.bf16.mxu0 %v655
    %10849 = vmatmul.mubr.bf16.gmra.mrb[0].mxu0 %v654
    %v10850 = vpop.f32.mrb[0].mxu0
    %v10851 = vadd.f32 %v10811, %v10850
    %v10852 = vpop.f32.mrb[0].mxu0
    %v10853 = vpop.f32.mrb[0].mxu0
    %v10854 = vpop.f32.mrb[0].mxu0
    %10855 = vdwg.mxu0
    %10856 = vmatprep.subr.bf16.mxu0 0
    %10857 = vmatpush1.bf16.msra.mxu0 %v6778
    %10858 = vmatprep.subr.bf16.mxu0 0
    %10859 = vmatpush1.bf16.msra.mxu0 %v6791
    %10860 = vmatprep.subr.bf16.mxu0 0
    %10861 = vmatpush1.bf16.msra.mxu0 %v6804
    %10862 = vmatprep.subr.bf16.mxu0 0
    %10863 = vmatpush1.bf16.msra.mxu0 %v6817
    %10864 = vmatprep.subr.bf16.mxu0 0
    %10865 = vmatpush1.bf16.msra.mxu0 %v6830
    %10866 = vmatprep.subr.bf16.mxu0 0
    %10867 = vmatpush1.bf16.msra.mxu0 %v6843
    %10868 = vmatprep.subr.bf16.mxu0 0
    %10869 = vmatpush1.bf16.msra.mxu0 %v6856
    %10870 = vmatprep.subr.bf16.mxu0 0
    %10871 = vmatpush1.bf16.msra.mxu0 %v6869
    %10872 = vmatprep.subr.bf16.mxu0 0
    %10873 = vmatpush1.bf16.msra.mxu0 %v6882
    %10874 = vmatprep.subr.bf16.mxu0 0
    %10875 = vmatpush1.bf16.msra.mxu0 %v6895
    %10876 = vmatprep.subr.bf16.mxu0 0
    %10877 = vmatpush1.bf16.msra.mxu0 %v6908
    %10878 = vmatprep.subr.bf16.mxu0 0
    %10879 = vmatpush1.bf16.msra.mxu0 %v6921
    %10880 = vmatprep.subr.bf16.mxu0 0
    %10881 = vmatpush1.bf16.msra.mxu0 %v6934
    %10882 = vmatprep.subr.bf16.mxu0 0
    %10883 = vmatpush1.bf16.msra.mxu0 %v6947
    %10884 = vmatprep.subr.bf16.mxu0 0
    %10885 = vmatpush1.bf16.msra.mxu0 %v6960
    %10886 = vmatprep.subr.bf16.mxu0 0
    %10887 = vmatpush1.bf16.msra.mxu0 %v6973
    %10888 = vmatprep.mubr.bf16.mxu0 %v657
    %10889 = vmatmul.mubr.bf16.gmra.mrb[0].mxu0 %v656
    %v10890 = vpop.f32.mrb[0].mxu0
    %v10891 = vadd.f32 %v10851, %v10890
    %v10892 = vpop.f32.mrb[0].mxu0
    %v10893 = vpop.f32.mrb[0].mxu0
    %v10894 = vpop.f32.mrb[0].mxu0
    %10895 = vdwg.mxu0
    %10896 = vmatprep.subr.bf16.mxu0 0
    %10897 = vmatpush1.bf16.msra.mxu0 %v6986
    %10898 = vmatprep.subr.bf16.mxu0 0
    %10899 = vmatpush1.bf16.msra.mxu0 %v6999
    %10900 = vmatprep.subr.bf16.mxu0 0
    %10901 = vmatpush1.bf16.msra.mxu0 %v7012
    %10902 = vmatprep.subr.bf16.mxu0 0
    %10903 = vmatpush1.bf16.msra.mxu0 %v7025
    %10904 = vmatprep.subr.bf16.mxu0 0
    %10905 = vmatpush1.bf16.msra.mxu0 %v7038
    %10906 = vmatprep.subr.bf16.mxu0 0
    %10907 = vmatpush1.bf16.msra.mxu0 %v7051
    %10908 = vmatprep.subr.bf16.mxu0 0
    %10909 = vmatpush1.bf16.msra.mxu0 %v7064
    %10910 = vmatprep.subr.bf16.mxu0 0
    %10911 = vmatpush1.bf16.msra.mxu0 %v7077
    %10912 = vmatprep.subr.bf16.mxu0 0
    %10913 = vmatpush1.bf16.msra.mxu0 %v7090
    %10914 = vmatprep.subr.bf16.mxu0 0
    %10915 = vmatpush1.bf16.msra.mxu0 %v7103
    %10916 = vmatprep.subr.bf16.mxu0 0
    %10917 = vmatpush1.bf16.msra.mxu0 %v7116
    %10918 = vmatprep.subr.bf16.mxu0 0
    %10919 = vmatpush1.bf16.msra.mxu0 %v7129
    %10920 = vmatprep.subr.bf16.mxu0 0
    %10921 = vmatpush1.bf16.msra.mxu0 %v7142
    %10922 = vmatprep.subr.bf16.mxu0 0
    %10923 = vmatpush1.bf16.msra.mxu0 %v7155
    %10924 = vmatprep.subr.bf16.mxu0 0
    %10925 = vmatpush1.bf16.msra.mxu0 %v7168
    %10926 = vmatprep.subr.bf16.mxu0 0
    %10927 = vmatpush1.bf16.msra.mxu0 %v7181
    %10928 = vmatprep.mubr.bf16.mxu0 %v659
    %10929 = vmatmul.mubr.bf16.gmra.mrb[0].mxu0 %v658
    %v10930 = vpop.f32.mrb[0].mxu0
    %v10931 = vadd.f32 %v10891, %v10930
    %v10932 = vpop.f32.mrb[0].mxu0
    %v10933 = vpop.f32.mrb[0].mxu0
    %v10934 = vpop.f32.mrb[0].mxu0
    %10935 = vdwg.mxu0
    %10936 = vmatprep.subr.bf16.mxu0 0
    %10937 = vmatpush1.bf16.msra.mxu0 %v7194
    %10938 = vmatprep.subr.bf16.mxu0 0
    %10939 = vmatpush1.bf16.msra.mxu0 %v7207
    %10940 = vmatprep.subr.bf16.mxu0 0
    %10941 = vmatpush1.bf16.msra.mxu0 %v7220
    %10942 = vmatprep.subr.bf16.mxu0 0
    %10943 = vmatpush1.bf16.msra.mxu0 %v7233
    %10944 = vmatprep.subr.bf16.mxu0 0
    %10945 = vmatpush1.bf16.msra.mxu0 %v7246
    %10946 = vmatprep.subr.bf16.mxu0 0
    %10947 = vmatpush1.bf16.msra.mxu0 %v7259
    %10948 = vmatprep.subr.bf16.mxu0 0
    %10949 = vmatpush1.bf16.msra.mxu0 %v7272
    %10950 = vmatprep.subr.bf16.mxu0 0
    %10951 = vmatpush1.bf16.msra.mxu0 %v7285
    %10952 = vmatprep.subr.bf16.mxu0 0
    %10953 = vmatpush1.bf16.msra.mxu0 %v7298
    %10954 = vmatprep.subr.bf16.mxu0 0
    %10955 = vmatpush1.bf16.msra.mxu0 %v7311
    %10956 = vmatprep.subr.bf16.mxu0 0
    %10957 = vmatpush1.bf16.msra.mxu0 %v7324
    %10958 = vmatprep.subr.bf16.mxu0 0
    %10959 = vmatpush1.bf16.msra.mxu0 %v7337
    %10960 = vmatprep.subr.bf16.mxu0 0
    %10961 = vmatpush1.bf16.msra.mxu0 %v7350
    %10962 = vmatprep.subr.bf16.mxu0 0
    %10963 = vmatpush1.bf16.msra.mxu0 %v7363
    %10964 = vmatprep.subr.bf16.mxu0 0
    %10965 = vmatpush1.bf16.msra.mxu0 %v7376
    %10966 = vmatprep.subr.bf16.mxu0 0
    %10967 = vmatpush1.bf16.msra.mxu0 %v7389
    %10968 = vmatprep.mubr.bf16.mxu0 %v661
    %10969 = vmatmul.mubr.bf16.gmra.mrb[0].mxu0 %v660
    %v10970 = vpop.f32.mrb[0].mxu0
    %v10971 = vadd.f32 %v10931, %v10970
    %v10972 = vpop.f32.mrb[0].mxu0
    %v10973 = vpop.f32.mrb[0].mxu0
    %v10974 = vpop.f32.mrb[0].mxu0
    %10975 = vdwg.mxu0
    %10976 = vmatprep.subr.bf16.mxu0 0
    %10977 = vmatpush1.bf16.msra.mxu0 %v7402
    %10978 = vmatprep.subr.bf16.mxu0 0
    %10979 = vmatpush1.bf16.msra.mxu0 %v7415
    %10980 = vmatprep.subr.bf16.mxu0 0
    %10981 = vmatpush1.bf16.msra.mxu0 %v7428
    %10982 = vmatprep.subr.bf16.mxu0 0
    %10983 = vmatpush1.bf16.msra.mxu0 %v7441
    %10984 = vmatprep.subr.bf16.mxu0 0
    %10985 = vmatpush1.bf16.msra.mxu0 %v7454
    %10986 = vmatprep.subr.bf16.mxu0 0
    %10987 = vmatpush1.bf16.msra.mxu0 %v7467
    %10988 = vmatprep.subr.bf16.mxu0 0
    %10989 = vmatpush1.bf16.msra.mxu0 %v7480
    %10990 = vmatprep.subr.bf16.mxu0 0
    %10991 = vmatpush1.bf16.msra.mxu0 %v7493
    %10992 = vmatprep.subr.bf16.mxu0 0
    %10993 = vmatpush1.bf16.msra.mxu0 %v7506
    %10994 = vmatprep.subr.bf16.mxu0 0
    %10995 = vmatpush1.bf16.msra.mxu0 %v7519
    %10996 = vmatprep.subr.bf16.mxu0 0
    %10997 = vmatpush1.bf16.msra.mxu0 %v7532
    %10998 = vmatprep.subr.bf16.mxu0 0
    %10999 = vmatpush1.bf16.msra.mxu0 %v7545
    %11000 = vmatprep.subr.bf16.mxu0 0
    %11001 = vmatpush1.bf16.msra.mxu0 %v7558
    %11002 = vmatprep.subr.bf16.mxu0 0
    %11003 = vmatpush1.bf16.msra.mxu0 %v7571
    %11004 = vmatprep.subr.bf16.mxu0 0
    %11005 = vmatpush1.bf16.msra.mxu0 %v7584
    %11006 = vmatprep.subr.bf16.mxu0 0
    %11007 = vmatpush1.bf16.msra.mxu0 %v7597
    %11008 = vmatprep.mubr.bf16.mxu0 %v663
    %11009 = vmatmul.mubr.bf16.gmra.mrb[0].mxu0 %v662
    %v11010 = vpop.f32.mrb[0].mxu0
    %v11011 = vadd.f32 %v10971, %v11010
    %v11012 = vpop.f32.mrb[0].mxu0
    %v11013 = vpop.f32.mrb[0].mxu0
    %v11014 = vpop.f32.mrb[0].mxu0
    %11015 = vdwg.mxu0
    %11016 = vmatprep.subr.bf16.mxu0 0
    %11017 = vmatpush1.bf16.msra.mxu0 %v7610
    %11018 = vmatprep.subr.bf16.mxu0 0
    %11019 = vmatpush1.bf16.msra.mxu0 %v7623
    %11020 = vmatprep.subr.bf16.mxu0 0
    %11021 = vmatpush1.bf16.msra.mxu0 %v7636
    %11022 = vmatprep.subr.bf16.mxu0 0
    %11023 = vmatpush1.bf16.msra.mxu0 %v7649
    %11024 = vmatprep.subr.bf16.mxu0 0
    %11025 = vmatpush1.bf16.msra.mxu0 %v7662
    %11026 = vmatprep.subr.bf16.mxu0 0
    %11027 = vmatpush1.bf16.msra.mxu0 %v7675
    %11028 = vmatprep.subr.bf16.mxu0 0
    %11029 = vmatpush1.bf16.msra.mxu0 %v7688
    %11030 = vmatprep.subr.bf16.mxu0 0
    %11031 = vmatpush1.bf16.msra.mxu0 %v7701
    %11032 = vmatprep.subr.bf16.mxu0 0
    %11033 = vmatpush1.bf16.msra.mxu0 0
    %11034 = vmatprep.subr.bf16.mxu0 0
    %11035 = vmatpush1.bf16.msra.mxu0 0
    %11036 = vmatprep.subr.bf16.mxu0 0
    %11037 = vmatpush1.bf16.msra.mxu0 0
    %11038 = vmatprep.subr.bf16.mxu0 0
    %11039 = vmatpush1.bf16.msra.mxu0 0
    %11040 = vmatprep.subr.bf16.mxu0 0
    %11041 = vmatpush1.bf16.msra.mxu0 0
    %11042 = vmatprep.subr.bf16.mxu0 0
    %11043 = vmatpush1.bf16.msra.mxu0 0
    %11044 = vmatprep.subr.bf16.mxu0 0
    %11045 = vmatpush1.bf16.msra.mxu0 0
    %11046 = vmatprep.subr.bf16.mxu0 0
    %11047 = vmatpush1.bf16.msra.mxu0 0
    %11048 = vmatprep.mubr.bf16.mxu0 0
    %11049 = vmatmul.mubr.bf16.gmra.mrb[0].mxu0 %v664
    %v11050 = vpop.f32.mrb[0].mxu0
    %v11051 = vadd.f32 %v11011, %v11050
    %v11052 = vpop.f32.mrb[0].mxu0
    %v11053 = vpop.f32.mrb[0].mxu0
    %v11054 = vpop.f32.mrb[0].mxu0
    %11055 = vdwg.mxu0
    %v11056 = vmax.f32 %v9335, 0.0
    %v11057 = vmax.f32 %v9337, 0.0
    %v11058 = vmax.f32 %v9622, 0.0
    %v11059 = vmax.f32 %v9624, 0.0
    %v11060 = vmax.f32 %v9909, 0.0
    %v11061 = vmax.f32 %v9911, 0.0
    %v11062 = vmax.f32 %v10196, 0.0
    %v11063 = vmax.f32 %v10198, 0.0
    %v11064 = vmax.f32 %v10483, 0.0
    %v11065 = vmax.f32 %v10485, 0.0
    %v11066 = vmax.f32 %v10770, 0.0
    %v11067 = vmax.f32 %v10772, 0.0
    %v11068 = vmax.f32 %v11051, 0.0
    %v11069 = vpack.c.bf16 %v11056, %v11056
    %v11070 = vpack.c.bf16 %v11057, %v11057
    %v11071 = vpack.c.bf16 %v11058, %v11058
    %v11072 = vpack.c.bf16 %v11059, %v11059
    %v11073 = vpack.c.bf16 %v11060, %v11060
    %v11074 = vpack.c.bf16 %v11061, %v11061
    %v11075 = vpack.c.bf16 %v11062, %v11062
    %v11076 = vpack.c.bf16 %v11063, %v11063
    %v11077 = vpack.c.bf16 %v11064, %v11064
    %v11078 = vpack.c.bf16 %v11065, %v11065
    %v11079 = vpack.c.bf16 %v11066, %v11066
    %v11080 = vpack.c.bf16 %v11067, %v11067
    %v11081 = vpack.c.bf16 %v11068, %v11068
    %v11082 = vld [vmem:[%s6] sm:$0xf]
    %v11083 = vld [vmem:[%s6 + $0x4] sm:$0xf]
    %v11084 = vld [vmem:[%s6 + $0x8] sm:$0xf]
    %v11085 = vld [vmem:[%s6 + $0xc] sm:$0xf]
    %v11086 = vld [vmem:[%s6 + $0x10] sm:$0xf]
    %v11087 = vld [vmem:[%s6 + $0x14] sm:$0xf]
    %v11088 = vld [vmem:[%s6 + $0x18] sm:$0xf]
    %v11089 = vld [vmem:[%s6 + $0x1c] sm:$0xf]
    %v11090 = vld [vmem:[%s6 + $0x20] sm:$0xf]
    %v11091 = vld [vmem:[%s6 + $0x24] sm:$0xf]
    %v11092 = vld [vmem:[%s6 + $0x28] sm:$0xf]
    %v11093 = vld [vmem:[%s6 + $0x2c] sm:$0xf]
    %v11094 = vld [vmem:[%s6 + $0x30] sm:$0xf]
    %v11095 = vld [vmem:[%s6 + $0x34] sm:$0xf]
    %v11096 = vld [vmem:[%s6 + $0x38] sm:$0xf]
    %v11097 = vld [vmem:[%s6 + $0x3c] sm:$0xf]
    %v11098 = vld [vmem:[%s6 + $0x40] sm:$0xf]
    %v11099 = vld [vmem:[%s6 + $0x44] sm:$0xf]
    %v11100 = vld [vmem:[%s6 + $0x48] sm:$0xf]
    %v11101 = vld [vmem:[%s6 + $0x4c] sm:$0xf]
    %v11102 = vld [vmem:[%s6 + $0x50] sm:$0xf]
    %v11103 = vld [vmem:[%s6 + $0x54] sm:$0xf]
    %v11104 = vld [vmem:[%s6 + $0x58] sm:$0xf]
    %v11105 = vld [vmem:[%s6 + $0x5c] sm:$0xf]
    %v11106 = vld [vmem:[%s6 + $0x60] sm:$0xf]
    %v11107 = vld [vmem:[%s6 + $0x64] sm:$0xf]
    %v11108 = vld [vmem:[%s6 + $0x68] sm:$0xf]
    %v11109 = vld [vmem:[%s6 + $0x6c] sm:$0xf]
    %v11110 = vld [vmem:[%s6 + $0x70] sm:$0xf]
    %v11111 = vld [vmem:[%s6 + $0x74] sm:$0xf]
    %v11112 = vld [vmem:[%s6 + $0x78] sm:$0xf]
    %v11113 = vld [vmem:[%s6 + $0x7c] sm:$0xf]
    %v11114 = vld [vmem:[%s6 + $0x80] sm:$0xf]
    %v11115 = vld [vmem:[%s6 + $0x84] sm:$0xf]
    %v11116 = vld [vmem:[%s6 + $0x88] sm:$0xf]
    %v11117 = vld [vmem:[%s6 + $0x8c] sm:$0xf]
    %v11118 = vld [vmem:[%s6 + $0x90] sm:$0xf]
    %v11119 = vld [vmem:[%s6 + $0x94] sm:$0xf]
    %v11120 = vld [vmem:[%s6 + $0x98] sm:$0xf]
    %v11121 = vld [vmem:[%s6 + $0x9c] sm:$0xf]
    %v11122 = vld [vmem:[%s6 + $0xa0] sm:$0xf]
    %v11123 = vld [vmem:[%s6 + $0xa4] sm:$0xf]
    %v11124 = vld [vmem:[%s6 + $0xa8] sm:$0xf]
    %v11125 = vld [vmem:[%s6 + $0xac] sm:$0xf]
    %v11126 = vld [vmem:[%s6 + $0xb0] sm:$0xf]
    %v11127 = vld [vmem:[%s6 + $0xb4] sm:$0xf]
    %v11128 = vld [vmem:[%s6 + $0xb8] sm:$0xf]
    %v11129 = vld [vmem:[%s6 + $0xbc] sm:$0xf]
    %v11130 = vld [vmem:[%s6 + $0xc0] sm:$0xf]
    %v11131 = vld [vmem:[%s6 + $0xc4] sm:$0xf]
    %v11132 = vld [vmem:[%s6 + $0xc8] sm:$0xf]
    %v11133 = vld [vmem:[%s6 + $0xcc] sm:$0xf]
    %v11134 = vld [vmem:[%s6 + $0xd0] sm:$0xf]
    %v11135 = vld [vmem:[%s6 + $0xd4] sm:$0xf]
    %v11136 = vld [vmem:[%s6 + $0xd8] sm:$0xf]
    %v11137 = vld [vmem:[%s6 + $0xdc] sm:$0xf]
    %v11138 = vld [vmem:[%s6 + $0xe0] sm:$0xf]
    %v11139 = vld [vmem:[%s6 + $0xe4] sm:$0xf]
    %v11140 = vld [vmem:[%s6 + $0xe8] sm:$0xf]
    %v11141 = vld [vmem:[%s6 + $0xec] sm:$0xf]
    %v11142 = vld [vmem:[%s6 + $0xf0] sm:$0xf]
    %v11143 = vld [vmem:[%s6 + $0xf4] sm:$0xf]
    %v11144 = vld [vmem:[%s6 + $0xf8] sm:$0xf]
    %v11145 = vld [vmem:[%s6 + $0xfc] sm:$0xf]
    %v11146 = vld [vmem:[%s6 + $0x100] sm:$0xf]
    %v11147 = vld [vmem:[%s6 + $0x104] sm:$0xf]
    %v11148 = vld [vmem:[%s6 + $0x108] sm:$0xf]
    %v11149 = vld [vmem:[%s6 + $0x10c] sm:$0xf]
    %v11150 = vld [vmem:[%s6 + $0x110] sm:$0xf]
    %v11151 = vld [vmem:[%s6 + $0x114] sm:$0xf]
    %v11152 = vld [vmem:[%s6 + $0x118] sm:$0xf]
    %v11153 = vld [vmem:[%s6 + $0x11c] sm:$0xf]
    %v11154 = vld [vmem:[%s6 + $0x120] sm:$0xf]
    %v11155 = vld [vmem:[%s6 + $0x124] sm:$0xf]
    %v11156 = vld [vmem:[%s6 + $0x128] sm:$0xf]
    %v11157 = vld [vmem:[%s6 + $0x12c] sm:$0xf]
    %v11158 = vld [vmem:[%s6 + $0x130] sm:$0xf]
    %v11159 = vld [vmem:[%s6 + $0x134] sm:$0xf]
    %v11160 = vld [vmem:[%s6 + $0x138] sm:$0xf]
    %v11161 = vld [vmem:[%s6 + $0x13c] sm:$0xf]
    %v11162 = vld [vmem:[%s6 + $0x140] sm:$0xf]
    %v11163 = vld [vmem:[%s6 + $0x144] sm:$0xf]
    %v11164 = vld [vmem:[%s6 + $0x148] sm:$0xf]
    %v11165 = vld [vmem:[%s6 + $0x14c] sm:$0xf]
    %v11166 = vld [vmem:[%s6 + $0x150] sm:$0xf]
    %v11167 = vld [vmem:[%s6 + $0x154] sm:$0xf]
    %v11168 = vld [vmem:[%s6 + $0x158] sm:$0xf]
    %v11169 = vld [vmem:[%s6 + $0x15c] sm:$0xf]
    %v11170 = vld [vmem:[%s6 + $0x160] sm:$0xf]
    %v11171 = vld [vmem:[%s6 + $0x164] sm:$0xf]
    %v11172 = vld [vmem:[%s6 + $0x168] sm:$0xf]
    %v11173 = vld [vmem:[%s6 + $0x16c] sm:$0xf]
    %v11174 = vld [vmem:[%s6 + $0x170] sm:$0xf]
    %v11175 = vld [vmem:[%s6 + $0x174] sm:$0xf]
    %v11176 = vld [vmem:[%s6 + $0x178] sm:$0xf]
    %v11177 = vld [vmem:[%s6 + $0x17c] sm:$0xf]
    %v11178 = vld [vmem:[%s6 + $0x180] sm:$0xf]
    %v11179 = vld [vmem:[%s6 + $0x184] sm:$0xf]
    %v11180 = vld [vmem:[%s6 + $0x188] sm:$0xf]
    %v11181 = vld [vmem:[%s6 + $0x18c] sm:$0xf]
    %v11182 = vld [vmem:[%s6 + $0x190] sm:$0xf]
    %v11183 = vld [vmem:[%s6 + $0x194] sm:$0xf]
    %v11184 = vld [vmem:[%s6 + $0x198] sm:$0xf]
    %v11185 = vld [vmem:[%s6 + $0x19c] sm:$0xf]
    %v11186 = vld [vmem:[%s6 + $0x1a0] sm:$0xf]
    %v11187 = vld [vmem:[%s6 + $0x1a4] sm:$0xf]
    %v11188 = vld [vmem:[%s6 + $0x1a8] sm:$0xf]
    %v11189 = vld [vmem:[%s6 + $0x1ac] sm:$0xf]
    %v11190 = vld [vmem:[%s6 + $0x1b0] sm:$0xf]
    %v11191 = vld [vmem:[%s6 + $0x1b4] sm:$0xf]
    %v11192 = vld [vmem:[%s6 + $0x1b8] sm:$0xf]
    %v11193 = vld [vmem:[%s6 + $0x1bc] sm:$0xf]
    %v11194 = vld [vmem:[%s6 + $0x1c0] sm:$0xf]
    %v11195 = vld [vmem:[%s6 + $0x1c4] sm:$0xf]
    %v11196 = vld [vmem:[%s6 + $0x1c8] sm:$0xf]
    %v11197 = vld [vmem:[%s6 + $0x1cc] sm:$0xf]
    %v11198 = vld [vmem:[%s6 + $0x1d0] sm:$0xf]
    %v11199 = vld [vmem:[%s6 + $0x1d4] sm:$0xf]
    %v11200 = vld [vmem:[%s6 + $0x1d8] sm:$0xf]
    %v11201 = vld [vmem:[%s6 + $0x1dc] sm:$0xf]
    %v11202 = vld [vmem:[%s6 + $0x1e0] sm:$0xf]
    %v11203 = vld [vmem:[%s6 + $0x1e4] sm:$0xf]
    %v11204 = vld [vmem:[%s6 + $0x1e8] sm:$0xf]
    %v11205 = vld [vmem:[%s6 + $0x1ec] sm:$0xf]
    %v11206 = vld [vmem:[%s6 + $0x1f0] sm:$0xf]
    %v11207 = vld [vmem:[%s6 + $0x1f4] sm:$0xf]
    %v11208 = vld [vmem:[%s6 + $0x1f8] sm:$0xf]
    %v11209 = vld [vmem:[%s6 + $0x1fc] sm:$0xf]
    %v11210 = vld [vmem:[%s6 + $0x200] sm:$0xf]
    %v11211 = vld [vmem:[%s6 + $0x204] sm:$0xf]
    %v11212 = vld [vmem:[%s6 + $0x208] sm:$0xf]
    %v11213 = vld [vmem:[%s6 + $0x20c] sm:$0xf]
    %v11214 = vld [vmem:[%s6 + $0x210] sm:$0xf]
    %v11215 = vld [vmem:[%s6 + $0x214] sm:$0xf]
    %v11216 = vld [vmem:[%s6 + $0x218] sm:$0xf]
    %v11217 = vld [vmem:[%s6 + $0x21c] sm:$0xf]
    %v11218 = vld [vmem:[%s6 + $0x220] sm:$0xf]
    %v11219 = vld [vmem:[%s6 + $0x224] sm:$0xf]
    %v11220 = vld [vmem:[%s6 + $0x228] sm:$0xf]
    %v11221 = vld [vmem:[%s6 + $0x22c] sm:$0xf]
    %v11222 = vld [vmem:[%s6 + $0x230] sm:$0xf]
    %v11223 = vld [vmem:[%s6 + $0x234] sm:$0xf]
    %v11224 = vld [vmem:[%s6 + $0x238] sm:$0xf]
    %v11225 = vld [vmem:[%s6 + $0x23c] sm:$0xf]
    %v11226 = vld [vmem:[%s6 + $0x240] sm:$0xf]
    %v11227 = vld [vmem:[%s6 + $0x244] sm:$0xf]
    %v11228 = vld [vmem:[%s6 + $0x248] sm:$0xf]
    %v11229 = vld [vmem:[%s6 + $0x24c] sm:$0xf]
    %v11230 = vld [vmem:[%s6 + $0x250] sm:$0xf]
    %v11231 = vld [vmem:[%s6 + $0x254] sm:$0xf]
    %v11232 = vld [vmem:[%s6 + $0x258] sm:$0xf]
    %v11233 = vld [vmem:[%s6 + $0x25c] sm:$0xf]
    %v11234 = vld [vmem:[%s6 + $0x260] sm:$0xf]
    %v11235 = vld [vmem:[%s6 + $0x264] sm:$0xf]
    %v11236 = vld [vmem:[%s6 + $0x268] sm:$0xf]
    %v11237 = vld [vmem:[%s6 + $0x26c] sm:$0xf]
    %v11238 = vld [vmem:[%s6 + $0x270] sm:$0xf]
    %v11239 = vld [vmem:[%s6 + $0x274] sm:$0xf]
    %v11240 = vld [vmem:[%s6 + $0x278] sm:$0xf]
    %v11241 = vld [vmem:[%s6 + $0x27c] sm:$0xf]
    %v11242 = vld [vmem:[%s6 + $0x280] sm:$0xf]
    %v11243 = vld [vmem:[%s6 + $0x284] sm:$0xf]
    %v11244 = vld [vmem:[%s6 + $0x288] sm:$0xf]
    %v11245 = vld [vmem:[%s6 + $0x28c] sm:$0xf]
    %v11246 = vld [vmem:[%s6 + $0x290] sm:$0xf]
    %v11247 = vld [vmem:[%s6 + $0x294] sm:$0xf]
    %v11248 = vld [vmem:[%s6 + $0x298] sm:$0xf]
    %v11249 = vld [vmem:[%s6 + $0x29c] sm:$0xf]
    %v11250 = vld [vmem:[%s6 + $0x2a0] sm:$0xf]
    %v11251 = vld [vmem:[%s6 + $0x2a4] sm:$0xf]
    %v11252 = vld [vmem:[%s6 + $0x2a8] sm:$0xf]
    %v11253 = vld [vmem:[%s6 + $0x2ac] sm:$0xf]
    %v11254 = vld [vmem:[%s6 + $0x2b0] sm:$0xf]
    %v11255 = vld [vmem:[%s6 + $0x2b4] sm:$0xf]
    %v11256 = vld [vmem:[%s6 + $0x2b8] sm:$0xf]
    %v11257 = vld [vmem:[%s6 + $0x2bc] sm:$0xf]
    %v11258 = vld [vmem:[%s6 + $0x2c0] sm:$0xf]
    %v11259 = vld [vmem:[%s6 + $0x2c4] sm:$0xf]
    %v11260 = vld [vmem:[%s6 + $0x2c8] sm:$0xf]
    %v11261 = vld [vmem:[%s6 + $0x2cc] sm:$0xf]
    %v11262 = vld [vmem:[%s6 + $0x2d0] sm:$0xf]
    %v11263 = vld [vmem:[%s6 + $0x2d4] sm:$0xf]
    %v11264 = vld [vmem:[%s6 + $0x2d8] sm:$0xf]
    %v11265 = vld [vmem:[%s6 + $0x2dc] sm:$0xf]
    %v11266 = vld [vmem:[%s6 + $0x2e0] sm:$0xf]
    %v11267 = vld [vmem:[%s6 + $0x2e4] sm:$0xf]
    %v11268 = vld [vmem:[%s6 + $0x2e8] sm:$0xf]
    %v11269 = vld [vmem:[%s6 + $0x2ec] sm:$0xf]
    %v11270 = vld [vmem:[%s6 + $0x2f0] sm:$0xf]
    %v11271 = vld [vmem:[%s6 + $0x2f4] sm:$0xf]
    %v11272 = vld [vmem:[%s6 + $0x2f8] sm:$0xf]
    %v11273 = vld [vmem:[%s6 + $0x2fc] sm:$0xf]
    %v11274 = vld [vmem:[%s6 + $0x300] sm:$0xf]
    %v11275 = vld [vmem:[%s6 + $0x304] sm:$0xf]
    %v11276 = vld [vmem:[%s6 + $0x308] sm:$0xf]
    %v11277 = vld [vmem:[%s6 + $0x30c] sm:$0xf]
    %v11278 = vld [vmem:[%s6 + $0x310] sm:$0xf]
    %v11279 = vld [vmem:[%s6 + $0x314] sm:$0xf]
    %v11280 = vld [vmem:[%s6 + $0x318] sm:$0xf]
    %v11281 = vld [vmem:[%s6 + $0x31c] sm:$0xf]
    %v11282 = vld [vmem:[%s6 + $0x320] sm:$0xf]
    %v11283 = vld [vmem:[%s6 + $0x324] sm:$0xf]
    %v11284 = vld [vmem:[%s6 + $0x328] sm:$0xf]
    %v11285 = vld [vmem:[%s6 + $0x32c] sm:$0xf]
    %v11286 = vld [vmem:[%s6 + $0x330] sm:$0xf]
    %v11287 = vld [vmem:[%s6 + $0x334] sm:$0xf]
    %v11288 = vld [vmem:[%s6 + $0x338] sm:$0xf]
    %v11289 = vld [vmem:[%s6 + $0x33c] sm:$0xf]
    %v11290 = vld [vmem:[#allocation13] sm:$0x1]
    %v11292 = vlaneseq
    %v11293 = vshrl.u32 %v11292, 7
    %v11294 = vsub.s32 0, %v11293
    %v11295 = vrot.slane %v11290, %v11294
    %v11505 = vunpack.c.l.b16 %v11082
    %v11506 = vunpack.c.l.b16 %v11083
    %v11507 = vunpack.c.l.b16 %v11084
    %v11508 = vunpack.c.l.b16 %v11085
    %v11509 = vunpack.c.l.b16 %v11086
    %v11510 = vunpack.c.l.b16 %v11087
    %v11511 = vunpack.c.l.b16 %v11088
    %v11512 = vunpack.c.l.b16 %v11089
    %v11513 = vunpack.c.l.b16 %v11090
    %v11514 = vunpack.c.l.b16 %v11091
    %v11515 = vunpack.c.l.b16 %v11092
    %v11516 = vunpack.c.l.b16 %v11093
    %v11517 = vunpack.c.l.b16 %v11094
    %v11518 = vunpack.c.l.b16 %v11095
    %v11519 = vunpack.c.l.b16 %v11096
    %v11520 = vunpack.c.l.b16 %v11097
    %v11521 = vunpack.c.l.b16 %v11098
    %v11522 = vunpack.c.l.b16 %v11099
    %v11523 = vunpack.c.l.b16 %v11100
    %v11524 = vunpack.c.l.b16 %v11101
    %v11525 = vunpack.c.l.b16 %v11102
    %v11526 = vunpack.c.l.b16 %v11103
    %v11527 = vunpack.c.l.b16 %v11104
    %v11528 = vunpack.c.l.b16 %v11105
    %v11529 = vunpack.c.l.b16 %v11106
    %v11530 = vunpack.c.l.b16 %v11107
    %v11531 = vunpack.c.l.b16 %v11108
    %v11532 = vunpack.c.l.b16 %v11109
    %v11533 = vunpack.c.l.b16 %v11110
    %v11534 = vunpack.c.l.b16 %v11111
    %v11535 = vunpack.c.l.b16 %v11112
    %v11536 = vunpack.c.l.b16 %v11113
    %v11537 = vunpack.c.l.b16 %v11114
    %v11538 = vunpack.c.l.b16 %v11115
    %v11539 = vunpack.c.l.b16 %v11116
    %v11540 = vunpack.c.l.b16 %v11117
    %v11541 = vunpack.c.l.b16 %v11118
    %v11542 = vunpack.c.l.b16 %v11119
    %v11543 = vunpack.c.l.b16 %v11120
    %v11544 = vunpack.c.l.b16 %v11121
    %v11545 = vunpack.c.l.b16 %v11122
    %v11546 = vunpack.c.l.b16 %v11123
    %v11547 = vunpack.c.l.b16 %v11124
    %v11548 = vunpack.c.l.b16 %v11125
    %v11549 = vunpack.c.l.b16 %v11126
    %v11550 = vunpack.c.l.b16 %v11127
    %v11551 = vunpack.c.l.b16 %v11128
    %v11552 = vunpack.c.l.b16 %v11129
    %v11553 = vunpack.c.l.b16 %v11130
    %v11554 = vunpack.c.l.b16 %v11131
    %v11555 = vunpack.c.l.b16 %v11132
    %v11556 = vunpack.c.l.b16 %v11133
    %v11557 = vunpack.c.l.b16 %v11134
    %v11558 = vunpack.c.l.b16 %v11135
    %v11559 = vunpack.c.l.b16 %v11136
    %v11560 = vunpack.c.l.b16 %v11137
    %v11561 = vunpack.c.l.b16 %v11138
    %v11562 = vunpack.c.l.b16 %v11139
    %v11563 = vunpack.c.l.b16 %v11140
    %v11564 = vunpack.c.l.b16 %v11141
    %v11565 = vunpack.c.l.b16 %v11142
    %v11566 = vunpack.c.l.b16 %v11143
    %v11567 = vunpack.c.l.b16 %v11144
    %v11568 = vunpack.c.l.b16 %v11145
    %v11569 = vunpack.c.l.b16 %v11146
    %v11570 = vunpack.c.l.b16 %v11147
    %v11571 = vunpack.c.l.b16 %v11148
    %v11572 = vunpack.c.l.b16 %v11149
    %v11573 = vunpack.c.l.b16 %v11150
    %v11574 = vunpack.c.l.b16 %v11151
    %v11575 = vunpack.c.l.b16 %v11152
    %v11576 = vunpack.c.l.b16 %v11153
    %v11577 = vunpack.c.l.b16 %v11154
    %v11578 = vunpack.c.l.b16 %v11155
    %v11579 = vunpack.c.l.b16 %v11156
    %v11580 = vunpack.c.l.b16 %v11157
    %v11581 = vunpack.c.l.b16 %v11158
    %v11582 = vunpack.c.l.b16 %v11159
    %v11583 = vunpack.c.l.b16 %v11160
    %v11584 = vunpack.c.l.b16 %v11161
    %v11585 = vunpack.c.l.b16 %v11162
    %v11586 = vunpack.c.l.b16 %v11163
    %v11587 = vunpack.c.l.b16 %v11164
    %v11588 = vunpack.c.l.b16 %v11165
    %v11589 = vunpack.c.l.b16 %v11166
    %v11590 = vunpack.c.l.b16 %v11167
    %v11591 = vunpack.c.l.b16 %v11168
    %v11592 = vunpack.c.l.b16 %v11169
    %v11593 = vunpack.c.l.b16 %v11170
    %v11594 = vunpack.c.l.b16 %v11171
    %v11595 = vunpack.c.l.b16 %v11172
    %v11596 = vunpack.c.l.b16 %v11173
    %v11597 = vunpack.c.l.b16 %v11174
    %v11598 = vunpack.c.l.b16 %v11175
    %v11599 = vunpack.c.l.b16 %v11176
    %v11600 = vunpack.c.l.b16 %v11177
    %v11601 = vunpack.c.l.b16 %v11178
    %v11602 = vunpack.c.l.b16 %v11179
    %v11603 = vunpack.c.l.b16 %v11180
    %v11604 = vunpack.c.l.b16 %v11181
    %v11605 = vunpack.c.l.b16 %v11182
    %v11606 = vunpack.c.l.b16 %v11183
    %v11607 = vunpack.c.l.b16 %v11184
    %v11608 = vunpack.c.l.b16 %v11185
    %v11609 = vunpack.c.l.b16 %v11186
    %v11610 = vunpack.c.l.b16 %v11187
    %v11611 = vunpack.c.l.b16 %v11188
    %v11612 = vunpack.c.l.b16 %v11189
    %v11613 = vunpack.c.l.b16 %v11190
    %v11614 = vunpack.c.l.b16 %v11191
    %v11615 = vunpack.c.l.b16 %v11192
    %v11616 = vunpack.c.l.b16 %v11193
    %v11617 = vunpack.c.l.b16 %v11194
    %v11618 = vunpack.c.l.b16 %v11195
    %v11619 = vunpack.c.l.b16 %v11196
    %v11620 = vunpack.c.l.b16 %v11197
    %v11621 = vunpack.c.l.b16 %v11198
    %v11622 = vunpack.c.l.b16 %v11199
    %v11623 = vunpack.c.l.b16 %v11200
    %v11624 = vunpack.c.l.b16 %v11201
    %v11625 = vunpack.c.l.b16 %v11202
    %v11626 = vunpack.c.l.b16 %v11203
    %v11627 = vunpack.c.l.b16 %v11204
    %v11628 = vunpack.c.l.b16 %v11205
    %v11629 = vunpack.c.l.b16 %v11206
    %v11630 = vunpack.c.l.b16 %v11207
    %v11631 = vunpack.c.l.b16 %v11208
    %v11632 = vunpack.c.l.b16 %v11209
    %v11633 = vunpack.c.l.b16 %v11210
    %v11634 = vunpack.c.l.b16 %v11211
    %v11635 = vunpack.c.l.b16 %v11212
    %v11636 = vunpack.c.l.b16 %v11213
    %v11637 = vunpack.c.l.b16 %v11214
    %v11638 = vunpack.c.l.b16 %v11215
    %v11639 = vunpack.c.l.b16 %v11216
    %v11640 = vunpack.c.l.b16 %v11217
    %v11641 = vunpack.c.l.b16 %v11218
    %v11642 = vunpack.c.l.b16 %v11219
    %v11643 = vunpack.c.l.b16 %v11220
    %v11644 = vunpack.c.l.b16 %v11221
    %v11645 = vunpack.c.l.b16 %v11222
    %v11646 = vunpack.c.l.b16 %v11223
    %v11647 = vunpack.c.l.b16 %v11224
    %v11648 = vunpack.c.l.b16 %v11225
    %v11649 = vunpack.c.l.b16 %v11226
    %v11650 = vunpack.c.l.b16 %v11227
    %v11651 = vunpack.c.l.b16 %v11228
    %v11652 = vunpack.c.l.b16 %v11229
    %v11653 = vunpack.c.l.b16 %v11230
    %v11654 = vunpack.c.l.b16 %v11231
    %v11655 = vunpack.c.l.b16 %v11232
    %v11656 = vunpack.c.l.b16 %v11233
    %v11657 = vunpack.c.l.b16 %v11234
    %v11658 = vunpack.c.l.b16 %v11235
    %v11659 = vunpack.c.l.b16 %v11236
    %v11660 = vunpack.c.l.b16 %v11237
    %v11661 = vunpack.c.l.b16 %v11238
    %v11662 = vunpack.c.l.b16 %v11239
    %v11663 = vunpack.c.l.b16 %v11240
    %v11664 = vunpack.c.l.b16 %v11241
    %v11665 = vunpack.c.l.b16 %v11242
    %v11666 = vunpack.c.l.b16 %v11243
    %v11667 = vunpack.c.l.b16 %v11244
    %v11668 = vunpack.c.l.b16 %v11245
    %v11669 = vunpack.c.l.b16 %v11246
    %v11670 = vunpack.c.l.b16 %v11247
    %v11671 = vunpack.c.l.b16 %v11248
    %v11672 = vunpack.c.l.b16 %v11249
    %v11673 = vunpack.c.l.b16 %v11250
    %v11674 = vunpack.c.l.b16 %v11251
    %v11675 = vunpack.c.l.b16 %v11252
    %v11676 = vunpack.c.l.b16 %v11253
    %v11677 = vunpack.c.l.b16 %v11254
    %v11678 = vunpack.c.l.b16 %v11255
    %v11679 = vunpack.c.l.b16 %v11256
    %v11680 = vunpack.c.l.b16 %v11257
    %v11681 = vunpack.c.l.b16 %v11258
    %v11682 = vunpack.c.l.b16 %v11259
    %v11683 = vunpack.c.l.b16 %v11260
    %v11684 = vunpack.c.l.b16 %v11261
    %v11685 = vunpack.c.l.b16 %v11262
    %v11686 = vunpack.c.l.b16 %v11263
    %v11687 = vunpack.c.l.b16 %v11264
    %v11688 = vunpack.c.l.b16 %v11265
    %v11689 = vunpack.c.l.b16 %v11266
    %v11690 = vunpack.c.l.b16 %v11267
    %v11691 = vunpack.c.l.b16 %v11268
    %v11692 = vunpack.c.l.b16 %v11269
    %v11693 = vunpack.c.l.b16 %v11270
    %v11694 = vunpack.c.l.b16 %v11271
    %v11695 = vunpack.c.l.b16 %v11272
    %v11696 = vunpack.c.l.b16 %v11273
    %v11697 = vunpack.c.l.b16 %v11274
    %v11698 = vunpack.c.l.b16 %v11275
    %v11699 = vunpack.c.l.b16 %v11276
    %v11700 = vunpack.c.l.b16 %v11277
    %v11701 = vunpack.c.l.b16 %v11278
    %v11702 = vunpack.c.l.b16 %v11279
    %v11703 = vunpack.c.l.b16 %v11280
    %v11704 = vunpack.c.l.b16 %v11281
    %v11705 = vunpack.c.l.b16 %v11282
    %v11706 = vunpack.c.l.b16 %v11283
    %v11707 = vunpack.c.l.b16 %v11284
    %v11708 = vunpack.c.l.b16 %v11285
    %v11709 = vunpack.c.l.b16 %v11286
    %v11710 = vunpack.c.l.b16 %v11287
    %v11711 = vunpack.c.l.b16 %v11288
    %v11712 = vunpack.c.l.b16 %v11289
    %v11713 = vpack.c.b16 %v11506, %v11505
    %v11714 = vpack.c.b16 %v11508, %v11507
    %v11715 = vpack.c.b16 %v11510, %v11509
    %v11716 = vpack.c.b16 %v11512, %v11511
    %v11717 = vpack.c.b16 %v11514, %v11513
    %v11718 = vpack.c.b16 %v11516, %v11515
    %v11719 = vpack.c.b16 %v11518, %v11517
    %v11720 = vpack.c.b16 %v11520, %v11519
    %v11721 = vpack.c.b16 %v11522, %v11521
    %v11722 = vpack.c.b16 %v11524, %v11523
    %v11723 = vpack.c.b16 %v11526, %v11525
    %v11724 = vpack.c.b16 %v11528, %v11527
    %v11725 = vpack.c.b16 %v11530, %v11529
    %v11726 = vpack.c.b16 %v11532, %v11531
    %v11727 = vpack.c.b16 %v11534, %v11533
    %v11728 = vpack.c.b16 %v11536, %v11535
    %v11729 = vpack.c.b16 %v11538, %v11537
    %v11730 = vpack.c.b16 %v11540, %v11539
    %v11731 = vpack.c.b16 %v11542, %v11541
    %v11732 = vpack.c.b16 %v11544, %v11543
    %v11733 = vpack.c.b16 %v11546, %v11545
    %v11734 = vpack.c.b16 %v11548, %v11547
    %v11735 = vpack.c.b16 %v11550, %v11549
    %v11736 = vpack.c.b16 %v11552, %v11551
    %v11737 = vpack.c.b16 %v11554, %v11553
    %v11738 = vpack.c.b16 %v11556, %v11555
    %v11739 = vpack.c.b16 %v11558, %v11557
    %v11740 = vpack.c.b16 %v11560, %v11559
    %v11741 = vpack.c.b16 %v11562, %v11561
    %v11742 = vpack.c.b16 %v11564, %v11563
    %v11743 = vpack.c.b16 %v11566, %v11565
    %v11744 = vpack.c.b16 %v11568, %v11567
    %v11745 = vpack.c.b16 %v11570, %v11569
    %v11746 = vpack.c.b16 %v11572, %v11571
    %v11747 = vpack.c.b16 %v11574, %v11573
    %v11748 = vpack.c.b16 %v11576, %v11575
    %v11749 = vpack.c.b16 %v11578, %v11577
    %v11750 = vpack.c.b16 %v11580, %v11579
    %v11751 = vpack.c.b16 %v11582, %v11581
    %v11752 = vpack.c.b16 %v11584, %v11583
    %v11753 = vpack.c.b16 %v11586, %v11585
    %v11754 = vpack.c.b16 %v11588, %v11587
    %v11755 = vpack.c.b16 %v11590, %v11589
    %v11756 = vpack.c.b16 %v11592, %v11591
    %v11757 = vpack.c.b16 %v11594, %v11593
    %v11758 = vpack.c.b16 %v11596, %v11595
    %v11759 = vpack.c.b16 %v11598, %v11597
    %v11760 = vpack.c.b16 %v11600, %v11599
    %v11761 = vpack.c.b16 %v11602, %v11601
    %v11762 = vpack.c.b16 %v11604, %v11603
    %v11763 = vpack.c.b16 %v11606, %v11605
    %v11764 = vpack.c.b16 %v11608, %v11607
    %v11765 = vpack.c.b16 %v11610, %v11609
    %v11766 = vpack.c.b16 %v11612, %v11611
    %v11767 = vpack.c.b16 %v11614, %v11613
    %v11768 = vpack.c.b16 %v11616, %v11615
    %v11769 = vpack.c.b16 %v11618, %v11617
    %v11770 = vpack.c.b16 %v11620, %v11619
    %v11771 = vpack.c.b16 %v11622, %v11621
    %v11772 = vpack.c.b16 %v11624, %v11623
    %v11773 = vpack.c.b16 %v11626, %v11625
    %v11774 = vpack.c.b16 %v11628, %v11627
    %v11775 = vpack.c.b16 %v11630, %v11629
    %v11776 = vpack.c.b16 %v11632, %v11631
    %v11777 = vpack.c.b16 %v11634, %v11633
    %v11778 = vpack.c.b16 %v11636, %v11635
    %v11779 = vpack.c.b16 %v11638, %v11637
    %v11780 = vpack.c.b16 %v11640, %v11639
    %v11781 = vpack.c.b16 %v11642, %v11641
    %v11782 = vpack.c.b16 %v11644, %v11643
    %v11783 = vpack.c.b16 %v11646, %v11645
    %v11784 = vpack.c.b16 %v11648, %v11647
    %v11785 = vpack.c.b16 %v11650, %v11649
    %v11786 = vpack.c.b16 %v11652, %v11651
    %v11787 = vpack.c.b16 %v11654, %v11653
    %v11788 = vpack.c.b16 %v11656, %v11655
    %v11789 = vpack.c.b16 %v11658, %v11657
    %v11790 = vpack.c.b16 %v11660, %v11659
    %v11791 = vpack.c.b16 %v11662, %v11661
    %v11792 = vpack.c.b16 %v11664, %v11663
    %v11793 = vpack.c.b16 %v11666, %v11665
    %v11794 = vpack.c.b16 %v11668, %v11667
    %v11795 = vpack.c.b16 %v11670, %v11669
    %v11796 = vpack.c.b16 %v11672, %v11671
    %v11797 = vpack.c.b16 %v11674, %v11673
    %v11798 = vpack.c.b16 %v11676, %v11675
    %v11799 = vpack.c.b16 %v11678, %v11677
    %v11800 = vpack.c.b16 %v11680, %v11679
    %v11801 = vpack.c.b16 %v11682, %v11681
    %v11802 = vpack.c.b16 %v11684, %v11683
    %v11803 = vpack.c.b16 %v11686, %v11685
    %v11804 = vpack.c.b16 %v11688, %v11687
    %v11805 = vpack.c.b16 %v11690, %v11689
    %v11806 = vpack.c.b16 %v11692, %v11691
    %v11807 = vpack.c.b16 %v11694, %v11693
    %v11808 = vpack.c.b16 %v11696, %v11695
    %v11809 = vpack.c.b16 %v11698, %v11697
    %v11810 = vpack.c.b16 %v11700, %v11699
    %v11811 = vpack.c.b16 %v11702, %v11701
    %v11812 = vpack.c.b16 %v11704, %v11703
    %v11813 = vpack.c.b16 %v11706, %v11705
    %v11814 = vpack.c.b16 %v11708, %v11707
    %v11815 = vpack.c.b16 %v11710, %v11709
    %v11816 = vpack.c.b16 %v11712, %v11711
    %11921 = vmatprep.subr.bf16.mxu0 0
    %11922 = vmatpush1.bf16.msra.mxu0 %v11713
    %11923 = vmatprep.subr.bf16.mxu0 0
    %11924 = vmatpush1.bf16.msra.mxu0 %v11714
    %11925 = vmatprep.subr.bf16.mxu0 0
    %11926 = vmatpush1.bf16.msra.mxu0 %v11715
    %11927 = vmatprep.subr.bf16.mxu0 0
    %11928 = vmatpush1.bf16.msra.mxu0 %v11716
    %11929 = vmatprep.subr.bf16.mxu0 0
    %11930 = vmatpush1.bf16.msra.mxu0 %v11717
    %11931 = vmatprep.subr.bf16.mxu0 0
    %11932 = vmatpush1.bf16.msra.mxu0 %v11718
    %11933 = vmatprep.subr.bf16.mxu0 0
    %11934 = vmatpush1.bf16.msra.mxu0 %v11719
    %11935 = vmatprep.subr.bf16.mxu0 0
    %11936 = vmatpush1.bf16.msra.mxu0 %v11720
    %11937 = vmatprep.subr.bf16.mxu0 0
    %11938 = vmatpush1.bf16.msra.mxu0 %v11721
    %11939 = vmatprep.subr.bf16.mxu0 0
    %11940 = vmatpush1.bf16.msra.mxu0 %v11722
    %11941 = vmatprep.subr.bf16.mxu0 0
    %11942 = vmatpush1.bf16.msra.mxu0 %v11723
    %11943 = vmatprep.subr.bf16.mxu0 0
    %11944 = vmatpush1.bf16.msra.mxu0 %v11724
    %11945 = vmatprep.subr.bf16.mxu0 0
    %11946 = vmatpush1.bf16.msra.mxu0 %v11725
    %11947 = vmatprep.subr.bf16.mxu0 0
    %11948 = vmatpush1.bf16.msra.mxu0 %v11726
    %11949 = vmatprep.subr.bf16.mxu0 0
    %11950 = vmatpush1.bf16.msra.mxu0 %v11727
    %11951 = vmatprep.subr.bf16.mxu0 0
    %11952 = vmatpush1.bf16.msra.mxu0 %v11728
    %11953 = vmatprep.mubr.bf16.mxu0 %v11070
    %11954 = vmatmul.mubr.bf16.gmra.mrb[0].mxu0 %v11069
    %v11955 = vpop.f32.mrb[0].mxu0
    %v11956 = vadd.f32 %v11295, %v11955
    %v11957 = vpop.f32.mrb[0].mxu0
    %v11958 = vpop.f32.mrb[0].mxu0
    %v11959 = vpop.f32.mrb[0].mxu0
    %11960 = vdwg.mxu0
    %11961 = vmatprep.subr.bf16.mxu0 0
    %11962 = vmatpush1.bf16.msra.mxu0 %v11729
    %11963 = vmatprep.subr.bf16.mxu0 0
    %11964 = vmatpush1.bf16.msra.mxu0 %v11730
    %11965 = vmatprep.subr.bf16.mxu0 0
    %11966 = vmatpush1.bf16.msra.mxu0 %v11731
    %11967 = vmatprep.subr.bf16.mxu0 0
    %11968 = vmatpush1.bf16.msra.mxu0 %v11732
    %11969 = vmatprep.subr.bf16.mxu0 0
    %11970 = vmatpush1.bf16.msra.mxu0 %v11733
    %11971 = vmatprep.subr.bf16.mxu0 0
    %11972 = vmatpush1.bf16.msra.mxu0 %v11734
    %11973 = vmatprep.subr.bf16.mxu0 0
    %11974 = vmatpush1.bf16.msra.mxu0 %v11735
    %11975 = vmatprep.subr.bf16.mxu0 0
    %11976 = vmatpush1.bf16.msra.mxu0 %v11736
    %11977 = vmatprep.subr.bf16.mxu0 0
    %11978 = vmatpush1.bf16.msra.mxu0 %v11737
    %11979 = vmatprep.subr.bf16.mxu0 0
    %11980 = vmatpush1.bf16.msra.mxu0 %v11738
    %11981 = vmatprep.subr.bf16.mxu0 0
    %11982 = vmatpush1.bf16.msra.mxu0 %v11739
    %11983 = vmatprep.subr.bf16.mxu0 0
    %11984 = vmatpush1.bf16.msra.mxu0 %v11740
    %11985 = vmatprep.subr.bf16.mxu0 0
    %11986 = vmatpush1.bf16.msra.mxu0 %v11741
    %11987 = vmatprep.subr.bf16.mxu0 0
    %11988 = vmatpush1.bf16.msra.mxu0 %v11742
    %11989 = vmatprep.subr.bf16.mxu0 0
    %11990 = vmatpush1.bf16.msra.mxu0 %v11743
    %11991 = vmatprep.subr.bf16.mxu0 0
    %11992 = vmatpush1.bf16.msra.mxu0 %v11744
    %11993 = vmatprep.mubr.bf16.mxu0 %v11072
    %11994 = vmatmul.mubr.bf16.gmra.mrb[0].mxu0 %v11071
    %v11995 = vpop.f32.mrb[0].mxu0
    %v11996 = vadd.f32 %v11956, %v11995
    %v11997 = vpop.f32.mrb[0].mxu0
    %v11998 = vpop.f32.mrb[0].mxu0
    %v11999 = vpop.f32.mrb[0].mxu0
    %12000 = vdwg.mxu0
    %12001 = vmatprep.subr.bf16.mxu0 0
    %12002 = vmatpush1.bf16.msra.mxu0 %v11745
    %12003 = vmatprep.subr.bf16.mxu0 0
    %12004 = vmatpush1.bf16.msra.mxu0 %v11746
    %12005 = vmatprep.subr.bf16.mxu0 0
    %12006 = vmatpush1.bf16.msra.mxu0 %v11747
    %12007 = vmatprep.subr.bf16.mxu0 0
    %12008 = vmatpush1.bf16.msra.mxu0 %v11748
    %12009 = vmatprep.subr.bf16.mxu0 0
    %12010 = vmatpush1.bf16.msra.mxu0 %v11749
    %12011 = vmatprep.subr.bf16.mxu0 0
    %12012 = vmatpush1.bf16.msra.mxu0 %v11750
    %12013 = vmatprep.subr.bf16.mxu0 0
    %12014 = vmatpush1.bf16.msra.mxu0 %v11751
    %12015 = vmatprep.subr.bf16.mxu0 0
    %12016 = vmatpush1.bf16.msra.mxu0 %v11752
    %12017 = vmatprep.subr.bf16.mxu0 0
    %12018 = vmatpush1.bf16.msra.mxu0 %v11753
    %12019 = vmatprep.subr.bf16.mxu0 0
    %12020 = vmatpush1.bf16.msra.mxu0 %v11754
    %12021 = vmatprep.subr.bf16.mxu0 0
    %12022 = vmatpush1.bf16.msra.mxu0 %v11755
    %12023 = vmatprep.subr.bf16.mxu0 0
    %12024 = vmatpush1.bf16.msra.mxu0 %v11756
    %12025 = vmatprep.subr.bf16.mxu0 0
    %12026 = vmatpush1.bf16.msra.mxu0 %v11757
    %12027 = vmatprep.subr.bf16.mxu0 0
    %12028 = vmatpush1.bf16.msra.mxu0 %v11758
    %12029 = vmatprep.subr.bf16.mxu0 0
    %12030 = vmatpush1.bf16.msra.mxu0 %v11759
    %12031 = vmatprep.subr.bf16.mxu0 0
    %12032 = vmatpush1.bf16.msra.mxu0 %v11760
    %12033 = vmatprep.mubr.bf16.mxu0 %v11074
    %12034 = vmatmul.mubr.bf16.gmra.mrb[0].mxu0 %v11073
    %v12035 = vpop.f32.mrb[0].mxu0
    %v12036 = vadd.f32 %v11996, %v12035
    %v12037 = vpop.f32.mrb[0].mxu0
    %v12038 = vpop.f32.mrb[0].mxu0
    %v12039 = vpop.f32.mrb[0].mxu0
    %12040 = vdwg.mxu0
    %12041 = vmatprep.subr.bf16.mxu0 0
    %12042 = vmatpush1.bf16.msra.mxu0 %v11761
    %12043 = vmatprep.subr.bf16.mxu0 0
    %12044 = vmatpush1.bf16.msra.mxu0 %v11762
    %12045 = vmatprep.subr.bf16.mxu0 0
    %12046 = vmatpush1.bf16.msra.mxu0 %v11763
    %12047 = vmatprep.subr.bf16.mxu0 0
    %12048 = vmatpush1.bf16.msra.mxu0 %v11764
    %12049 = vmatprep.subr.bf16.mxu0 0
    %12050 = vmatpush1.bf16.msra.mxu0 %v11765
    %12051 = vmatprep.subr.bf16.mxu0 0
    %12052 = vmatpush1.bf16.msra.mxu0 %v11766
    %12053 = vmatprep.subr.bf16.mxu0 0
    %12054 = vmatpush1.bf16.msra.mxu0 %v11767
    %12055 = vmatprep.subr.bf16.mxu0 0
    %12056 = vmatpush1.bf16.msra.mxu0 %v11768
    %12057 = vmatprep.subr.bf16.mxu0 0
    %12058 = vmatpush1.bf16.msra.mxu0 %v11769
    %12059 = vmatprep.subr.bf16.mxu0 0
    %12060 = vmatpush1.bf16.msra.mxu0 %v11770
    %12061 = vmatprep.subr.bf16.mxu0 0
    %12062 = vmatpush1.bf16.msra.mxu0 %v11771
    %12063 = vmatprep.subr.bf16.mxu0 0
    %12064 = vmatpush1.bf16.msra.mxu0 %v11772
    %12065 = vmatprep.subr.bf16.mxu0 0
    %12066 = vmatpush1.bf16.msra.mxu0 %v11773
    %12067 = vmatprep.subr.bf16.mxu0 0
    %12068 = vmatpush1.bf16.msra.mxu0 %v11774
    %12069 = vmatprep.subr.bf16.mxu0 0
    %12070 = vmatpush1.bf16.msra.mxu0 %v11775
    %12071 = vmatprep.subr.bf16.mxu0 0
    %12072 = vmatpush1.bf16.msra.mxu0 %v11776
    %12073 = vmatprep.mubr.bf16.mxu0 %v11076
    %12074 = vmatmul.mubr.bf16.gmra.mrb[0].mxu0 %v11075
    %v12075 = vpop.f32.mrb[0].mxu0
    %v12076 = vadd.f32 %v12036, %v12075
    %v12077 = vpop.f32.mrb[0].mxu0
    %v12078 = vpop.f32.mrb[0].mxu0
    %v12079 = vpop.f32.mrb[0].mxu0
    %12080 = vdwg.mxu0
    %12081 = vmatprep.subr.bf16.mxu0 0
    %12082 = vmatpush1.bf16.msra.mxu0 %v11777
    %12083 = vmatprep.subr.bf16.mxu0 0
    %12084 = vmatpush1.bf16.msra.mxu0 %v11778
    %12085 = vmatprep.subr.bf16.mxu0 0
    %12086 = vmatpush1.bf16.msra.mxu0 %v11779
    %12087 = vmatprep.subr.bf16.mxu0 0
    %12088 = vmatpush1.bf16.msra.mxu0 %v11780
    %12089 = vmatprep.subr.bf16.mxu0 0
    %12090 = vmatpush1.bf16.msra.mxu0 %v11781
    %12091 = vmatprep.subr.bf16.mxu0 0
    %12092 = vmatpush1.bf16.msra.mxu0 %v11782
    %12093 = vmatprep.subr.bf16.mxu0 0
    %12094 = vmatpush1.bf16.msra.mxu0 %v11783
    %12095 = vmatprep.subr.bf16.mxu0 0
    %12096 = vmatpush1.bf16.msra.mxu0 %v11784
    %12097 = vmatprep.subr.bf16.mxu0 0
    %12098 = vmatpush1.bf16.msra.mxu0 %v11785
    %12099 = vmatprep.subr.bf16.mxu0 0
    %12100 = vmatpush1.bf16.msra.mxu0 %v11786
    %12101 = vmatprep.subr.bf16.mxu0 0
    %12102 = vmatpush1.bf16.msra.mxu0 %v11787
    %12103 = vmatprep.subr.bf16.mxu0 0
    %12104 = vmatpush1.bf16.msra.mxu0 %v11788
    %12105 = vmatprep.subr.bf16.mxu0 0
    %12106 = vmatpush1.bf16.msra.mxu0 %v11789
    %12107 = vmatprep.subr.bf16.mxu0 0
    %12108 = vmatpush1.bf16.msra.mxu0 %v11790
    %12109 = vmatprep.subr.bf16.mxu0 0
    %12110 = vmatpush1.bf16.msra.mxu0 %v11791
    %12111 = vmatprep.subr.bf16.mxu0 0
    %12112 = vmatpush1.bf16.msra.mxu0 %v11792
    %12113 = vmatprep.mubr.bf16.mxu0 %v11078
    %12114 = vmatmul.mubr.bf16.gmra.mrb[0].mxu0 %v11077
    %v12115 = vpop.f32.mrb[0].mxu0
    %v12116 = vadd.f32 %v12076, %v12115
    %v12117 = vpop.f32.mrb[0].mxu0
    %v12118 = vpop.f32.mrb[0].mxu0
    %v12119 = vpop.f32.mrb[0].mxu0
    %12120 = vdwg.mxu0
    %12121 = vmatprep.subr.bf16.mxu0 0
    %12122 = vmatpush1.bf16.msra.mxu0 %v11793
    %12123 = vmatprep.subr.bf16.mxu0 0
    %12124 = vmatpush1.bf16.msra.mxu0 %v11794
    %12125 = vmatprep.subr.bf16.mxu0 0
    %12126 = vmatpush1.bf16.msra.mxu0 %v11795
    %12127 = vmatprep.subr.bf16.mxu0 0
    %12128 = vmatpush1.bf16.msra.mxu0 %v11796
    %12129 = vmatprep.subr.bf16.mxu0 0
    %12130 = vmatpush1.bf16.msra.mxu0 %v11797
    %12131 = vmatprep.subr.bf16.mxu0 0
    %12132 = vmatpush1.bf16.msra.mxu0 %v11798
    %12133 = vmatprep.subr.bf16.mxu0 0
    %12134 = vmatpush1.bf16.msra.mxu0 %v11799
    %12135 = vmatprep.subr.bf16.mxu0 0
    %12136 = vmatpush1.bf16.msra.mxu0 %v11800
    %12137 = vmatprep.subr.bf16.mxu0 0
    %12138 = vmatpush1.bf16.msra.mxu0 %v11801
    %12139 = vmatprep.subr.bf16.mxu0 0
    %12140 = vmatpush1.bf16.msra.mxu0 %v11802
    %12141 = vmatprep.subr.bf16.mxu0 0
    %12142 = vmatpush1.bf16.msra.mxu0 %v11803
    %12143 = vmatprep.subr.bf16.mxu0 0
    %12144 = vmatpush1.bf16.msra.mxu0 %v11804
    %12145 = vmatprep.subr.bf16.mxu0 0
    %12146 = vmatpush1.bf16.msra.mxu0 %v11805
    %12147 = vmatprep.subr.bf16.mxu0 0
    %12148 = vmatpush1.bf16.msra.mxu0 %v11806
    %12149 = vmatprep.subr.bf16.mxu0 0
    %12150 = vmatpush1.bf16.msra.mxu0 %v11807
    %12151 = vmatprep.subr.bf16.mxu0 0
    %12152 = vmatpush1.bf16.msra.mxu0 %v11808
    %12153 = vmatprep.mubr.bf16.mxu0 %v11080
    %12154 = vmatmul.mubr.bf16.gmra.mrb[0].mxu0 %v11079
    %v12155 = vpop.f32.mrb[0].mxu0
    %v12156 = vadd.f32 %v12116, %v12155
    %v12157 = vpop.f32.mrb[0].mxu0
    %v12158 = vpop.f32.mrb[0].mxu0
    %v12159 = vpop.f32.mrb[0].mxu0
    %12160 = vdwg.mxu0
    %12161 = vmatprep.subr.bf16.mxu0 0
    %12162 = vmatpush1.bf16.msra.mxu0 %v11809
    %12163 = vmatprep.subr.bf16.mxu0 0
    %12164 = vmatpush1.bf16.msra.mxu0 %v11810
    %12165 = vmatprep.subr.bf16.mxu0 0
    %12166 = vmatpush1.bf16.msra.mxu0 %v11811
    %12167 = vmatprep.subr.bf16.mxu0 0
    %12168 = vmatpush1.bf16.msra.mxu0 %v11812
    %12169 = vmatprep.subr.bf16.mxu0 0
    %12170 = vmatpush1.bf16.msra.mxu0 %v11813
    %12171 = vmatprep.subr.bf16.mxu0 0
    %12172 = vmatpush1.bf16.msra.mxu0 %v11814
    %12173 = vmatprep.subr.bf16.mxu0 0
    %12174 = vmatpush1.bf16.msra.mxu0 %v11815
    %12175 = vmatprep.subr.bf16.mxu0 0
    %12176 = vmatpush1.bf16.msra.mxu0 %v11816
    %12177 = vmatprep.subr.bf16.mxu0 0
    %12178 = vmatpush1.bf16.msra.mxu0 0
    %12179 = vmatprep.subr.bf16.mxu0 0
    %12180 = vmatpush1.bf16.msra.mxu0 0
    %12181 = vmatprep.subr.bf16.mxu0 0
    %12182 = vmatpush1.bf16.msra.mxu0 0
    %12183 = vmatprep.subr.bf16.mxu0 0
    %12184 = vmatpush1.bf16.msra.mxu0 0
    %12185 = vmatprep.subr.bf16.mxu0 0
    %12186 = vmatpush1.bf16.msra.mxu0 0
    %12187 = vmatprep.subr.bf16.mxu0 0
    %12188 = vmatpush1.bf16.msra.mxu0 0
    %12189 = vmatprep.subr.bf16.mxu0 0
    %12190 = vmatpush1.bf16.msra.mxu0 0
    %12191 = vmatprep.subr.bf16.mxu0 0
    %12192 = vmatpush1.bf16.msra.mxu0 0
    %12193 = vmatprep.mubr.bf16.mxu0 0
    %12194 = vmatmul.mubr.bf16.gmra.mrb[0].mxu0 %v11081
    %v12195 = vpop.f32.mrb[0].mxu0
    %v12196 = vadd.f32 %v12156, %v12195
    %v12197 = vpop.f32.mrb[0].mxu0
    %v12198 = vpop.f32.mrb[0].mxu0
    %v12199 = vpop.f32.mrb[0].mxu0
    %12200 = vdwg.mxu0
    %vm12201 = vcmask 254976
    %12202 = vst.msk [vmem:[#allocation14] sm:$0x3] %vm12201, %v12196
    // Predicated region
    $region62: #{tpu_custom_call.1} parent=1 // pred_check
      _
    $region63: #{tpu_custom_call.1} parent=1 // pred_check_branch
      %12204 = sbr.rel (0) target = $region65
    $region64: #{tpu_custom_call.1} parent=1 // pred_region
      %s12206 = ssub.s32 32, 32
      %12207 = vsyncadd [#allocation4], %s12206
      %s12209 = sshll.u32 [#allocation14], 4
      %s12210 = int_to_ptr.vmem [resolvable:$true] %s12209
      %12212 = dma.vmem_to_hbm [thread:$0]  %s12210, 32, %s8, [#allocation4]
    $region65: #{tpu_custom_call.1} parent=1 // pred_fallthru
      _
    // Predicated region
    $region66: #{tpu_custom_call.1} parent=1 // pred_check
      _
    $region67: #{tpu_custom_call.1} parent=1 // pred_check_branch
      %12214 = sbr.rel (0) target = $region69
    $region68: #{tpu_custom_call.1} parent=1 // pred_region
      %12215 = dma.done [#allocation4], 32
    $region69: #{tpu_custom_call.1} parent=1 // pred_fallthru
      _
    %12216 = vsyncpa [#allocation3], 1
    %12217 = vsyncpa [#allocation6], 1
    %12218 = vsyncpa [#allocation9], 1
    %12219 = vsyncpa [#allocation12], 1
    %12220 = vsyncpa [#allocation4], 1

</llo_original>
